<compile_context>
chip_gen: v7x
topology: tpu7x:2x2x1
jax: 0.10.0
libtpu: 0.0.40
codegen_flags: <defaults>
</compile_context>

<pallas_src>
import math
import functools

import jax
import jax.numpy as jnp
from jax.experimental import pallas as pl
from jax.experimental.pallas import tpu as pltpu


KH = KW = 4       # conv kernel size (fixed by the module)
STRIDE = 2
PAD = 15
OC1 = 64          # conv1 out channels
OC2 = 128         # conv2 out channels
C1 = 4 * OC1      # parity-packed conv1 channels (rp, cp, oc1) = 256


def _round_up(v, m):
    return ((v + m - 1) // m) * m


# ------------------------------ Pallas kernel -------------------------------

def _fused_conv_kernel(x_ref, w1_ref, w2_ref, b2_ref, out_ref, lhs_ref, *,
                       r1, lr, qws):
    """conv1+ReLU+conv2+ReLU for one image, entirely in VMEM.

    x_ref:   (1, 2*r1, K1p) bf16  rows [0:r1]    = coarse im2col (col stride qws)
                                  rows [r1:2*r1] = same, shifted by one coarse col
    w1_ref:  (K1p, 256)     bf16  conv1 weights, parity-packed cols (+bias rows)
    w2_ref:  (1024, 128)    bf16  conv2 weights, 4 coarse taps stacked along K
    b2_ref:  (1, 128)       f32
    out_ref: (1, lr, 128)   bf16  flattened (o2 * qws + p2) conv2 output
    lhs_ref: (lr, 1024)     bf16  scratch: stage-2 LHS, 4 aligned column slabs
    """
    # ---- stage 1: conv1 + bias + ReLU (both column-tap copies), one GEMM ----
    h = jnp.dot(x_ref[0], w1_ref[...], preferred_element_type=jnp.float32)
    h = jnp.maximum(h, 0.0).astype(jnp.bfloat16)          # single ReLU + bf16 cast

    # ---- build the stage-2 LHS: columns [tap*256:(tap+1)*256] hold the
    # parity-packed conv1 activation at coarse offsets 0 / +1col / +1row /
    # +1row+1col, realised as sublane-ALIGNED row slices of h.
    lhs_ref[:, 0 * C1:1 * C1] = h[0:lr]                         # tap (0, 0)
    lhs_ref[:, 1 * C1:2 * C1] = h[r1:r1 + lr]                   # tap (0, 1)
    lhs_ref[:, 2 * C1:3 * C1] = h[qws:qws + lr]                 # tap (1, 0)
    lhs_ref[:, 3 * C1:4 * C1] = h[r1 + qws:r1 + qws + lr]       # tap (1, 1)

    # ---- stage 2: conv2 as ONE K=1024 GEMM + bias + ReLU, bf16 store --------
    acc = jnp.dot(lhs_ref[...], w2_ref[...], preferred_element_type=jnp.float32)
    out_ref[0] = jnp.maximum(acc + b2_ref[...], 0.0).astype(out_ref.dtype)


# ------------------------------- the module ---------------------------------

def init_conv_layers_params(key, image_channels):
    """Deterministic init mimicking nn.Conv2d default (uniform +/- 1/sqrt(fan_in))."""
    k1, k2, k3, k4 = jax.random.split(key, 4)
    fan1 = image_channels * KH * KW
    bnd1 = 1.0 / math.sqrt(fan1)
    w1 = jax.random.uniform(k1, (OC1, image_channels, KH, KW), jnp.float32, -bnd1, bnd1)
    b1 = jax.random.uniform(k2, (OC1,), jnp.float32, -bnd1, bnd1)
    fan2 = OC1 * KH * KW
    bnd2 = 1.0 / math.sqrt(fan2)
    w2 = jax.random.uniform(k3, (OC2, OC1, KH, KW), jnp.float32, -bnd2, bnd2)
    b2 = jax.random.uniform(k4, (OC2,), jnp.float32, -bnd2, bnd2)
    return {"w1": w1, "b1": b1, "w2": w2, "b2": b2}


def prepare_conv_layers_params(params):
    """One-time repack of the conv weights into the kernel's GEMM layouts
    (hoisted out of the jitted forward, per the performance review)."""
    w1, b1, w2, b2 = params["w1"], params["b1"], params["w2"], params["b2"]
    ic = w1.shape[1]
    k1 = 36 * ic + 4
    k1p = _round_up(k1, 128)                     # lane-dense contraction dim

    # conv1 -> (K1p, 256): columns packed as (rp, cp, oc1); rows = flattened
    # 6x6 coarse input window, + 4 bias/validity indicator rows, + zero pad.
    w1t = jnp.transpose(w1, (2, 3, 1, 0))                          # (i, j, ic, oc1)
    w1g = jnp.zeros((6, 6, ic, 2, 2, OC1), jnp.float32)
    for rp in (0, 1):
        for cp in (0, 1):
            w1g = w1g.at[2 * rp:2 * rp + 4, 2 * cp:2 * cp + 4, :, rp, cp, :].set(w1t)
    w1g = w1g.reshape(36 * ic, C1)
    w1bias = jnp.zeros((4, 2, 2, OC1), jnp.float32)
    for rp in (0, 1):
        for cp in (0, 1):
            w1bias = w1bias.at[2 * rp + cp, rp, cp, :].set(b1)
    w1bias = w1bias.reshape(4, C1)
    w1g = jnp.concatenate(
        [w1g, w1bias, jnp.zeros((k1p - k1, C1), jnp.float32)], axis=0)

    # conv2 -> (4*256, 128): K = 4 coarse taps (di, dj) x 256 parity-packed chans,
    # tap order (0,0),(0,1),(1,0),(1,1) matching the LHS column slabs.
    w2t = jnp.transpose(w2, (2, 3, 1, 0)).reshape(2, 2, 2, 2, OC1, OC2)   # (di,rp,dj,cp,f,g)
    w2b = w2t.transpose(0, 2, 1, 3, 4, 5).reshape(4 * C1, OC2)

    return {"w1g": w1g.astype(jnp.bfloat16),
            "w2b": w2b.astype(jnp.bfloat16),
            "b2": b2.reshape(1, OC2).astype(jnp.float32)}


@jax.jit
def conv_layers_forward(packed, x_nchw):
    w1g, w2b, b2r = packed["w1g"], packed["w2b"], packed["b2"]
    N, IC, H, W = x_nchw.shape
    assert H % 4 == 0 and W % 4 == 0, "wrapper assumes H, W divisible by 4"
    K1 = 36 * IC + 4
    K1p = w1g.shape[0]
    assert K1p == _round_up(K1, 128)

    OH1 = (H + 2 * PAD - KH) // STRIDE + 1       # 22 for H=16
    OW1 = (W + 2 * PAD - KW) // STRIDE + 1
    OH2 = (OH1 + 2 * PAD - KH) // STRIDE + 1     # 25
    OW2 = (OW1 + 2 * PAD - KW) // STRIDE + 1
    Q = (OH1 + 2 * PAD) // 2                     # coarse rows of padded conv1 act (26)
    QW = (OW1 + 2 * PAD) // 2                    # real coarse cols (26)
    QWS = _round_up(QW, 16)                      # sublane-aligned column stride (32)
    assert Q >= OH2 + 1 and QW >= OW2 + 1
    R1 = Q * QWS                                 # rows per coarse-grid copy (832)
    LR = OH2 * QWS                               # stage-2 rows per image (800)

    # ---- LHS: coarse im2col of the (tiny) input image -----------------------
    x = jnp.transpose(x_nchw, (0, 2, 3, 1))                        # NHWC
    xs_h, xs_w = 4 * Q + 2, 4 * QW + 2
    off0 = 3 * PAD                                                 # 45
    xs = jnp.pad(x, ((0, 0), (off0, xs_h - off0 - H),
                     (off0, xs_w - off0 - W), (0, 0)))
    span_h, span_w = 4 * (Q - 1) + 1, 4 * (QW - 1) + 1
    patches = jnp.stack(
        [xs[:, s:s + span_h:4, t:t + span_w:4, :]
         for s in range(6) for t in range(6)], axis=3)             # (N, Q, QW, 36, IC)
    patches = patches.reshape(N, Q, QW, 36 * IC)

    # validity indicators: 1 where the conv1 output pixel actually exists
    # (folds conv1 bias and conv2's zero padding into the same GEMM).
    rr = 2 * jnp.arange(Q) - PAD
    cc = 2 * jnp.arange(QW) - PAD
    rv = jnp.stack([(rr + rp >= 0) & (rr + rp < OH1) for rp in (0, 1)],
                   axis=-1).astype(jnp.float32)                    # (Q, 2)
    cv = jnp.stack([(cc + cp >= 0) & (cc + cp < OW1) for cp in (0, 1)],
                   axis=-1).astype(jnp.float32)                    # (QW, 2)
    ind = (rv[:, None, :, None] * cv[None, :, None, :]).reshape(Q, QW, 4)
    ind = jnp.broadcast_to(ind[None], (N, Q, QW, 4))

    xcat = jnp.concatenate([patches, ind], axis=-1)                # (N, Q, QW, K1)
    xcat = jnp.pad(xcat, ((0, 0), (0, 0), (0, QWS - QW), (0, K1p - K1)))
    xcat = xcat.reshape(N, R1, K1p)
    # One-coarse-column-shifted copy, stacked along M: stage 1 stays one GEMM
    # and every stage-2 row slice becomes sublane-aligned (no XLU rotations).
    xshift = jnp.concatenate(
        [xcat[:, 1:, :], jnp.zeros((N, 1, K1p), xcat.dtype)], axis=1)
    xboth = jnp.concatenate([xcat, xshift], axis=1).astype(jnp.bfloat16)  # (N, 2*R1, K1p)

    kernel = functools.partial(_fused_conv_kernel, r1=R1, lr=LR, qws=QWS)
    flops = 2 * N * (2 * R1 * K1p * C1 + LR * 4 * C1 * OC2)
    bytes_accessed = (N * (2 * R1 * K1p * 2 + LR * OC2 * 2)
                      + K1p * C1 * 2 + 4 * C1 * OC2 * 2 + OC2 * 4)

    out = pl.pallas_call(
        kernel,
        out_shape=jax.ShapeDtypeStruct((N, LR, OC2), jnp.bfloat16),
        grid_spec=pltpu.PrefetchScalarGridSpec(
            num_scalar_prefetch=0,
            grid=(N,),
            in_specs=[
                pl.BlockSpec((1, 2 * R1, K1p), lambda b: (b, 0, 0)),
                pl.BlockSpec((K1p, C1), lambda b: (0, 0)),
                pl.BlockSpec((4 * C1, OC2), lambda b: (0, 0)),
                pl.BlockSpec((1, OC2), lambda b: (0, 0)),
            ],
            out_specs=pl.BlockSpec((1, LR, OC2), lambda b: (b, 0, 0)),
            scratch_shapes=[pltpu.VMEM((LR, 4 * C1), jnp.bfloat16)],
        ),
        compiler_params=pltpu.CompilerParams(
            dimension_semantics=("parallel",),
            vmem_limit_bytes=32 * 1024 * 1024),
        cost_estimate=pl.CostEstimate(
            flops=flops, transcendentals=0, bytes_accessed=bytes_accessed),
    )(xboth, w1g, w2b, b2r)

    # flattened (o2*QWS + p2, 128) -> NCHW; stays bf16 (halved writeback).
    y = out.reshape(N, OH2, QWS, OC2)[:, :, :OW2, :]
    return jnp.transpose(y, (0, 3, 1, 2))                          # (N, 128, OH2, OW2)


# Pure-JAX reference (for a correctness sanity check).
def _reference_forward(params, x_nchw):
    def conv(x, w, b):
        y = jax.lax.conv_general_dilated(
            x, w, window_strides=(STRIDE, STRIDE),
            padding=((PAD, PAD), (PAD, PAD)),
            dimension_numbers=("NCHW", "OIHW", "NCHW"))
        return jax.nn.relu(y + b[None, :, None, None])
    h = conv(x_nchw, params["w1"], params["b1"])
    return conv(h, params["w2"], params["b2"])


if __name__ == "__main__":
    key = jax.random.PRNGKey(0)
    kx, kp = jax.random.split(key)

    image_channels = 3
    x = jax.random.normal(kx, (2, image_channels, 16, 16), dtype=jnp.float32)
    params = init_conv_layers_params(kp, image_channels)
    packed = prepare_conv_layers_params(params)        # one-time weight repack

    feature = jax.block_until_ready(conv_layers_forward(packed, x))
    ref = jax.block_until_ready(_reference_forward(params, x))

    assert feature.shape == ref.shape, (feature.shape, ref.shape)
    assert jnp.allclose(feature.astype(jnp.float32), ref, rtol=2e-2, atol=2e-2), \
        "mismatch vs reference"

    print("KERNEL_OK")
</pallas_src>

<mosaic_0001>
module attributes {stable_mosaic.version = 11 : i64} {
  func.func @_fused_conv_kernel(%arg0: i32, %arg1: memref<1x1664x128xbf16, #tpu.memory_space<vmem>>, %arg2: memref<128x256xbf16, #tpu.memory_space<vmem>>, %arg3: memref<1024x128xbf16, #tpu.memory_space<vmem>>, %arg4: memref<1x128xf32, #tpu.memory_space<vmem>>, %arg5: memref<1x800x128xbf16, #tpu.memory_space<vmem>>, %arg6: memref<800x1024xbf16, #tpu.memory_space<vmem>>) attributes {dimension_semantics = [#tpu.dimension_semantics<parallel>], iteration_bounds = array<i64: 2>, scalar_prefetch = 0 : i64, scratch_operands = 1 : i64, tpu.core_type = #tpu.core_type<tc>, window_params = [{transform_indices = @transform_0, window_bounds = array<i64: 1, 1664, 128>}, {pipeline_mode = #tpu.pipeline_mode<synchronous>, transform_indices = @transform_1, window_bounds = array<i64: 128, 256>}, {pipeline_mode = #tpu.pipeline_mode<synchronous>, transform_indices = @transform_2, window_bounds = array<i64: 1024, 128>}, {pipeline_mode = #tpu.pipeline_mode<synchronous>, transform_indices = @transform_3, window_bounds = array<i64: 1, 128>}, {transform_indices = @transform_4, window_bounds = array<i64: 1, 800, 128>}]} {
    %c0 = arith.constant 0 : index
    %c0_0 = arith.constant 0 : index
    %c0_1 = arith.constant 0 : index
    %0 = vector.load %arg1[%c0, %c0_0, %c0_1] : memref<1x1664x128xbf16, #tpu.memory_space<vmem>>, vector<1x1664x128xbf16>
    %1 = vector.shape_cast %0 : vector<1x1664x128xbf16> to vector<1664x128xbf16>
    %c0_2 = arith.constant 0 : index
    %c0_3 = arith.constant 0 : index
    %2 = vector.load %arg2[%c0_2, %c0_3] : memref<128x256xbf16, #tpu.memory_space<vmem>>, vector<128x256xbf16>
    %cst = arith.constant dense<0.000000e+00> : vector<1664x256xf32>
    %3 = tpu.matmul %1, %2, %cst {dimension_numbers = #tpu.dot_dimension_numbers<[1], [0], [0], [1], [0, 0, 1, 1], [], []>} : vector<1664x128xbf16>, vector<128x256xbf16>, vector<1664x256xf32> -> vector<1664x256xf32>
    %cst_4 = arith.constant 0.000000e+00 : f32
    %4 = vector.broadcast %cst_4 : f32 to vector<1664x256xf32>
    %5 = arith.maximumf %3, %4 : vector<1664x256xf32>
    %6 = arith.truncf %5 : vector<1664x256xf32> to vector<1664x256xbf16>
    %7 = vector.extract_strided_slice %6 {offsets = [0, 0], sizes = [800, 256], strides = [1, 1]} : vector<1664x256xbf16> to vector<800x256xbf16>
    %c0_5 = arith.constant 0 : index
    %c0_6 = arith.constant 0 : index
    %8 = vector.load %arg6[%c0_5, %c0_6] : memref<800x1024xbf16, #tpu.memory_space<vmem>>, vector<800x256xbf16>
    tpu.vector_store %arg6[%c0_5, %c0_6], %7 {strides = array<i32>} : memref<800x1024xbf16, #tpu.memory_space<vmem>>, vector<800x256xbf16>,
    %9 = vector.extract_strided_slice %6 {offsets = [832, 0], sizes = [800, 256], strides = [1, 1]} : vector<1664x256xbf16> to vector<800x256xbf16>
    %c0_7 = arith.constant 0 : index
    %c256 = arith.constant 256 : index
    %10 = vector.load %arg6[%c0_7, %c256] : memref<800x1024xbf16, #tpu.memory_space<vmem>>, vector<800x256xbf16>
    tpu.vector_store %arg6[%c0_7, %c256], %9 {strides = array<i32>} : memref<800x1024xbf16, #tpu.memory_space<vmem>>, vector<800x256xbf16>,
    %11 = vector.extract_strided_slice %6 {offsets = [32, 0], sizes = [800, 256], strides = [1, 1]} : vector<1664x256xbf16> to vector<800x256xbf16>
    %c0_8 = arith.constant 0 : index
    %c512 = arith.constant 512 : index
    %12 = vector.load %arg6[%c0_8, %c512] : memref<800x1024xbf16, #tpu.memory_space<vmem>>, vector<800x256xbf16>
    tpu.vector_store %arg6[%c0_8, %c512], %11 {strides = array<i32>} : memref<800x1024xbf16, #tpu.memory_space<vmem>>, vector<800x256xbf16>,
    %13 = vector.extract_strided_slice %6 {offsets = [864, 0], sizes = [800, 256], strides = [1, 1]} : vector<1664x256xbf16> to vector<800x256xbf16>
    %c0_9 = arith.constant 0 : index
    %c768 = arith.constant 768 : index
    %14 = vector.load %arg6[%c0_9, %c768] : memref<800x1024xbf16, #tpu.memory_space<vmem>>, vector<800x256xbf16>
    tpu.vector_store %arg6[%c0_9, %c768], %13 {strides = array<i32>} : memref<800x1024xbf16, #tpu.memory_space<vmem>>, vector<800x256xbf16>,
    %c0_10 = arith.constant 0 : index
    %c0_11 = arith.constant 0 : index
    %15 = vector.load %arg6[%c0_10, %c0_11] : memref<800x1024xbf16, #tpu.memory_space<vmem>>, vector<800x1024xbf16>
    %c0_12 = arith.constant 0 : index
    %c0_13 = arith.constant 0 : index
    %16 = vector.load %arg3[%c0_12, %c0_13] : memref<1024x128xbf16, #tpu.memory_space<vmem>>, vector<1024x128xbf16>
    %cst_14 = arith.constant dense<0.000000e+00> : vector<800x128xf32>
    %17 = tpu.matmul %15, %16, %cst_14 {dimension_numbers = #tpu.dot_dimension_numbers<[1], [0], [0], [1], [0, 0, 1, 1], [], []>} : vector<800x1024xbf16>, vector<1024x128xbf16>, vector<800x128xf32> -> vector<800x128xf32>
    %c0_15 = arith.constant 0 : index
    %c0_16 = arith.constant 0 : index
    %18 = vector.load %arg4[%c0_15, %c0_16] : memref<1x128xf32, #tpu.memory_space<vmem>>, vector<1x128xf32>
    %19 = vector.broadcast %18 : vector<1x128xf32> to vector<800x128xf32>
    %20 = arith.addf %17, %19 : vector<800x128xf32>
    %cst_17 = arith.constant 0.000000e+00 : f32
    %21 = vector.broadcast %cst_17 : f32 to vector<800x128xf32>
    %22 = arith.maximumf %20, %21 : vector<800x128xf32>
    %23 = arith.truncf %22 : vector<800x128xf32> to vector<800x128xbf16>
    %c0_18 = arith.constant 0 : index
    %c0_19 = arith.constant 0 : index
    %c0_20 = arith.constant 0 : index
    %24 = vector.load %arg5[%c0_18, %c0_19, %c0_20] : memref<1x800x128xbf16, #tpu.memory_space<vmem>>, vector<1x800x128xbf16>
    %25 = vector.shape_cast %24 : vector<1x800x128xbf16> to vector<800x128xbf16>
    %26 = vector.shape_cast %23 : vector<800x128xbf16> to vector<1x800x128xbf16>
    tpu.vector_store %arg5[%c0_18, %c0_19, %c0_20], %26 {strides = array<i32>} : memref<1x800x128xbf16, #tpu.memory_space<vmem>>, vector<1x800x128xbf16>,
    return
  }
  func.func @transform_0(%arg0: i32) -> (i32, i32, i32) {
    %c0_i32 = arith.constant 0 : i32
    %c0_i32_0 = arith.constant 0 : i32
    %c0_i32_1 = arith.constant 0 : i32
    return %arg0, %c0_i32, %c0_i32_0 : i32, i32, i32
  }
  func.func @transform_1(%arg0: i32) -> (i32, i32) {
    %c0_i32 = arith.constant 0 : i32
    %c0_i32_0 = arith.constant 0 : i32
    %c0_i32_1 = arith.constant 0 : i32
    return %c0_i32, %c0_i32_0 : i32, i32
  }
  func.func @transform_2(%arg0: i32) -> (i32, i32) {
    %c0_i32 = arith.constant 0 : i32
    %c0_i32_0 = arith.constant 0 : i32
    %c0_i32_1 = arith.constant 0 : i32
    return %c0_i32, %c0_i32_0 : i32, i32
  }
  func.func @transform_3(%arg0: i32) -> (i32, i32) {
    %c0_i32 = arith.constant 0 : i32
    %c0_i32_0 = arith.constant 0 : i32
    %c0_i32_1 = arith.constant 0 : i32
    return %c0_i32, %c0_i32_0 : i32, i32
  }
  func.func @transform_4(%arg0: i32) -> (i32, i32, i32) {
    %c0_i32 = arith.constant 0 : i32
    %c0_i32_0 = arith.constant 0 : i32
    %c0_i32_1 = arith.constant 0 : i32
    return %arg0, %c0_i32, %c0_i32_0 : i32, i32, i32
  }
}

</mosaic_0001>

<llo_original>
// kernel: conv_layers_forward.1
$region0: #{conv_layers_forward.1}
  #allocation0 [shape = 'u32[]', space=smem, size = 0x4, offset = 0x4, fixed_abs, tag = 'smem constant byte address 0x4 - core index']
  #allocation1 [shape = 'u32[144,128]{1,0:T(1,128)}', space=vmem, size = 0x12000, scoped, tag = 'internal scratch']
  #allocation2 [shape = 'bf16[800,1024]{1,0:T(16,128)(2,1)}', space=vmem, size = 0x190000, scoped, tag = 'scratch operand']
  %s0 = inlined_call_operand.vmem [shape: bf16[2,1664,128], index: 0, kind: input, shape index: {}]
  %s1 = inlined_call_operand.vmem [shape: bf16[128,256], index: 1, kind: input, shape index: {}]
  %s2 = inlined_call_operand.vmem [shape: bf16[1024,128], index: 2, kind: input, shape index: {}]
  %s3 = inlined_call_operand.vmem [shape: f32[1,128], index: 3, kind: input, shape index: {}]
  %s4 = inlined_call_operand.vmem [shape: bf16[2,800,128], index: 4, kind: output, shape index: {}]
  %s5 = sld [smem:[#allocation0]]
  $region49: #{conv_layers_forward.1} parent=0
    _
  %s7 = ssub.s32 1, %s5
  %s8 = scalar_select 0, %s7, %s5
  loop: start=0, step=1, limit=4
  $region2: #{conv_layers_forward.1} parent=0 // loop_pre_header
    _
  $region3: #{conv_layers_forward.1} parent=0 // loop_header
    %s10 = sphi 0, %s14
    %p11 = scmp.ge.s32.totalorder %s10, 4
    %s20 = sphi 0, %s22
    %s23 = sphi 0, %s20
    %s24 = sphi 0, %s23
    %s40 = sphi 0, %s24
    %s44 = sphi 0, %s44
    %s46 = sphi 0, %s44
    %s47 = sphi 0, %s46
    %s61 = sphi 0, %s47
    %s65 = sphi 0, %s65
    %s67 = sphi 0, %s65
    %s68 = sphi 0, %s67
    %s82 = sphi 0, %s68
    %s86 = sphi 0, %s86
    %s88 = sphi 0, %s86
    %s89 = sphi 0, %s88
    %s103 = sphi 0, %s89
    %s109 = sphi 0, %s111
    %s112 = sphi 0, %s109
    %s113 = sphi 0, %s112
    %s129 = sphi 0, %s113
  $region4: #{conv_layers_forward.1} parent=0 // loop_header_branch
    %13 = sbr.rel (%p11) target = $region8
  $region5: #{conv_layers_forward.1} parent=0 // loop_body
    %s15 = ssub.s32 %s10, 1
    %s16 = ssub.s32 %s10, 2
    %s17 = sadd.s32 %s10, 1
    %s18 = ssub.s32 %s10, %s17
    %p19 = scmp.eq.s32.totalorder %s18, 0
    %s21 = sadd.s32 %s20, 1
    %s22 = scalar_select %p19, %s20, %s21
    %p25 = pneg %p19
    %p26 = scmp.eq.s32.totalorder %s10, 1
    %p27 = por %p25, %p26
    %p28 = scmp.ne.s32.totalorder %s20, %s23
    %p29 = scmp.eq.s32.totalorder %s10, 0
    %p30 = por %p28, %p29
    %p31 = scmp.ne.s32.totalorder %s20, %s23
    %p32 = scmp.eq.s32.totalorder %s15, 1
    %p33 = por %p31, %p32
    %p34 = scmp.ne.s32.totalorder %s23, %s24
    %p35 = scmp.eq.s32.totalorder %s15, 0
    %p36 = por %p34, %p35
    %p37 = scmp.ne.s32.totalorder %s23, %s24
    %p38 = scmp.eq.s32.totalorder %s16, 1
    %p39 = por %p37, %p38
    %p41 = scmp.ne.s32.totalorder %s24, %s40
    %p42 = scmp.eq.s32.totalorder %s16, 0
    %p43 = por %p41, %p42
    %s45 = sadd.s32 %s44, 1
    %p48 = scmp.eq.s32.totalorder %s10, 1
    %p49 = scmp.ne.s32.totalorder %s44, %s46
    %p50 = scmp.eq.s32.totalorder %s10, 0
    %p51 = por %p49, %p50
    %p52 = scmp.ne.s32.totalorder %s44, %s46
    %p53 = scmp.eq.s32.totalorder %s15, 1
    %p54 = por %p52, %p53
    %p55 = scmp.ne.s32.totalorder %s46, %s47
    %p56 = scmp.eq.s32.totalorder %s15, 0
    %p57 = por %p55, %p56
    %p58 = scmp.ne.s32.totalorder %s46, %s47
    %p59 = scmp.eq.s32.totalorder %s16, 1
    %p60 = por %p58, %p59
    %p62 = scmp.ne.s32.totalorder %s47, %s61
    %p63 = scmp.eq.s32.totalorder %s16, 0
    %p64 = por %p62, %p63
    %s66 = sadd.s32 %s65, 1
    %p69 = scmp.eq.s32.totalorder %s10, 1
    %p70 = scmp.ne.s32.totalorder %s65, %s67
    %p71 = scmp.eq.s32.totalorder %s10, 0
    %p72 = por %p70, %p71
    %p73 = scmp.ne.s32.totalorder %s65, %s67
    %p74 = scmp.eq.s32.totalorder %s15, 1
    %p75 = por %p73, %p74
    %p76 = scmp.ne.s32.totalorder %s67, %s68
    %p77 = scmp.eq.s32.totalorder %s15, 0
    %p78 = por %p76, %p77
    %p79 = scmp.ne.s32.totalorder %s67, %s68
    %p80 = scmp.eq.s32.totalorder %s16, 1
    %p81 = por %p79, %p80
    %p83 = scmp.ne.s32.totalorder %s68, %s82
    %p84 = scmp.eq.s32.totalorder %s16, 0
    %p85 = por %p83, %p84
    %s87 = sadd.s32 %s86, 1
    %p90 = scmp.eq.s32.totalorder %s10, 1
    %p91 = scmp.ne.s32.totalorder %s86, %s88
    %p92 = scmp.eq.s32.totalorder %s10, 0
    %p93 = por %p91, %p92
    %p94 = scmp.ne.s32.totalorder %s86, %s88
    %p95 = scmp.eq.s32.totalorder %s15, 1
    %p96 = por %p94, %p95
    %p97 = scmp.ne.s32.totalorder %s88, %s89
    %p98 = scmp.eq.s32.totalorder %s15, 0
    %p99 = por %p97, %p98
    %p100 = scmp.ne.s32.totalorder %s88, %s89
    %p101 = scmp.eq.s32.totalorder %s16, 1
    %p102 = por %p100, %p101
    %p104 = scmp.ne.s32.totalorder %s89, %s103
    %p105 = scmp.eq.s32.totalorder %s16, 0
    %p106 = por %p104, %p105
    %s107 = ssub.s32 %s10, %s17
    %p108 = scmp.eq.s32.totalorder %s107, 0
    %s110 = sadd.s32 %s109, 1
    %s111 = scalar_select %p108, %s109, %s110
    %p114 = pneg %p108
    %p115 = scmp.eq.s32.totalorder %s10, 1
    %p116 = por %p114, %p115
    %p117 = scmp.ne.s32.totalorder %s109, %s112
    %p118 = scmp.eq.s32.totalorder %s10, 0
    %p119 = por %p117, %p118
    %p120 = scmp.ne.s32.totalorder %s109, %s112
    %p121 = scmp.eq.s32.totalorder %s15, 1
    %p122 = por %p120, %p121
    %p123 = scmp.ne.s32.totalorder %s112, %s113
    %p124 = scmp.eq.s32.totalorder %s15, 0
    %p125 = por %p123, %p124
    %p126 = scmp.ne.s32.totalorder %s112, %s113
    %p127 = scmp.eq.s32.totalorder %s16, 1
    %p128 = por %p126, %p127
    %p130 = scmp.ne.s32.totalorder %s113, %s129
    %p131 = scmp.eq.s32.totalorder %s16, 0
    %p132 = por %p130, %p131
    %p133 = scmp.le.s32.totalorder 1, %s10
    %p134 = scmp.lt.s32.totalorder %s10, 3
    %p135 = pnand %p133, %p134
    %p136 = pneg %p135
    // Predicated region
    $region9: #{conv_layers_forward.1} parent=5 // pred_check
      _
    $region10: #{conv_layers_forward.1} parent=5 // pred_check_branch
      %138 = sbr.rel (%p135) target = $region12
    $region11: #{conv_layers_forward.1} parent=5 // pred_region
      %s139 = ssub.s32 %s10, 1
      // Predicated region
      $region13: #{conv_layers_forward.1} parent=11 // pred_check
        %p140 = pneg %p57
      $region14: #{conv_layers_forward.1} parent=11 // pred_check_branch
        %142 = sbr.rel (%p140) target = $region16
      $region15: #{conv_layers_forward.1} parent=11 // pred_region
        _
      $region16: #{conv_layers_forward.1} parent=11 // pred_fallthru
        _
      // Predicated region
      $region17: #{conv_layers_forward.1} parent=11 // pred_check
        %p143 = pneg %p78
      $region18: #{conv_layers_forward.1} parent=11 // pred_check_branch
        %145 = sbr.rel (%p143) target = $region20
      $region19: #{conv_layers_forward.1} parent=11 // pred_region
        _
      $region20: #{conv_layers_forward.1} parent=11 // pred_fallthru
        _
      // Predicated region
      $region21: #{conv_layers_forward.1} parent=11 // pred_check
        %p146 = pneg %p99
      $region22: #{conv_layers_forward.1} parent=11 // pred_check_branch
        %148 = sbr.rel (%p146) target = $region24
      $region23: #{conv_layers_forward.1} parent=11 // pred_region
        _
      $region24: #{conv_layers_forward.1} parent=11 // pred_fallthru
        _
    $region12: #{conv_layers_forward.1} parent=5 // pred_fallthru
      _
    %p149 = scmp.lt.s32.totalorder %s10, 2
    // Predicated region
    $region25: #{conv_layers_forward.1} parent=5 // pred_check
      %p150 = pneg %p149
    $region26: #{conv_layers_forward.1} parent=5 // pred_check_branch
      %152 = sbr.rel (%p150) target = $region28
    $region27: #{conv_layers_forward.1} parent=5 // pred_region
      // Predicated region
      $region29: #{conv_layers_forward.1} parent=27 // pred_check
        %p153 = pneg %p30
      $region30: #{conv_layers_forward.1} parent=27 // pred_check_branch
        %155 = sbr.rel (%p153) target = $region32
      $region31: #{conv_layers_forward.1} parent=27 // pred_region
        %p156 = scmp.lt.s32.totalorder %s10, 1
        %s157 = scalar_select %p156, %s10, 1
        %s158 = smul.addr %s157, 208
        %s159 = smul.addr %s158, 4
        %s160 = scalar_lea.vmem %s0, %s159
      $region32: #{conv_layers_forward.1} parent=27 // pred_fallthru
        _
    $region28: #{conv_layers_forward.1} parent=5 // pred_fallthru
      _
    %p161 = scmp.le.s32.totalorder 1, %s10
    %p162 = scmp.lt.s32.totalorder %s10, 3
    %p163 = pnand %p161, %p162
    %p164 = pneg %p163
    // Predicated region
    $region33: #{conv_layers_forward.1} parent=5 // pred_check
      _
    $region34: #{conv_layers_forward.1} parent=5 // pred_check_branch
      %166 = sbr.rel (%p163) target = $region36
    $region35: #{conv_layers_forward.1} parent=5 // pred_region
      %s167 = ssub.s32 %s10, 1
      %p168 = scmp.lt.s32.totalorder %s15, 1
      %s169 = scalar_select %p168, %s15, 1
      %s170 = smul.addr %s169, 208
      %s171 = smul.addr %s170, 4
      %s172 = scalar_lea.vmem %s0, %s171
      %p173 = pneg %p36
      %p174 = pneg %p33
      %p175 = pneg %p57
      %p176 = pneg %p54
      %p177 = pneg %p78
      %p178 = pneg %p75
      %p179 = pneg %p99
      %p180 = pneg %p96
      %p181 = pneg %p125
      %p182 = pneg %p122
      %p183 = scmp.lt.s32.totalorder %s15, 1
      %s184 = scalar_select %p183, %s15, 1
      %s185 = smul.addr %s184, 100
      %s186 = smul.addr %s185, 4
      %s187 = scalar_lea.vmem %s4, %s186
      %p188 = scmp.lt.s32.totalorder %s15, 1
      %s189 = scalar_select %p188, %s15, 1
      %s190 = smul.addr %s189, 208
      %s191 = smul.addr %s190, 4
      %s192 = scalar_lea.vmem %s0, %s191
      %p193 = scmp.lt.s32.totalorder %s15, 1
      %s194 = scalar_select %p193, %s15, 1
      %s195 = smul.addr %s194, 100
      %s196 = smul.addr %s195, 4
      %s197 = scalar_lea.vmem %s4, %s196
      %v199 = vld [vmem:[%s192] sm:$0xf]
      %v200 = vld [vmem:[%s192 + $0x4] sm:$0xf]
      %v201 = vld [vmem:[%s192 + $0x8] sm:$0xf]
      %v202 = vld [vmem:[%s192 + $0xc] sm:$0xf]
      %v203 = vld [vmem:[%s192 + $0x10] sm:$0xf]
      %v204 = vld [vmem:[%s192 + $0x14] sm:$0xf]
      %v205 = vld [vmem:[%s192 + $0x18] sm:$0xf]
      %v206 = vld [vmem:[%s192 + $0x1c] sm:$0xf]
      %v207 = vld [vmem:[%s192 + $0x20] sm:$0xf]
      %v208 = vld [vmem:[%s192 + $0x24] sm:$0xf]
      %v209 = vld [vmem:[%s192 + $0x28] sm:$0xf]
      %v210 = vld [vmem:[%s192 + $0x2c] sm:$0xf]
      %v211 = vld [vmem:[%s192 + $0x30] sm:$0xf]
      %v212 = vld [vmem:[%s192 + $0x34] sm:$0xf]
      %v213 = vld [vmem:[%s192 + $0x38] sm:$0xf]
      %v214 = vld [vmem:[%s192 + $0x3c] sm:$0xf]
      %v215 = vld [vmem:[%s192 + $0x40] sm:$0xf]
      %v216 = vld [vmem:[%s192 + $0x44] sm:$0xf]
      %v217 = vld [vmem:[%s192 + $0x48] sm:$0xf]
      %v218 = vld [vmem:[%s192 + $0x4c] sm:$0xf]
      %v219 = vld [vmem:[%s192 + $0x50] sm:$0xf]
      %v220 = vld [vmem:[%s192 + $0x54] sm:$0xf]
      %v221 = vld [vmem:[%s192 + $0x58] sm:$0xf]
      %v222 = vld [vmem:[%s192 + $0x5c] sm:$0xf]
      %v223 = vld [vmem:[%s192 + $0x60] sm:$0xf]
      %v224 = vld [vmem:[%s192 + $0x64] sm:$0xf]
      %v225 = vld [vmem:[%s192 + $0x68] sm:$0xf]
      %v226 = vld [vmem:[%s192 + $0x6c] sm:$0xf]
      %v227 = vld [vmem:[%s192 + $0x70] sm:$0xf]
      %v228 = vld [vmem:[%s192 + $0x74] sm:$0xf]
      %v229 = vld [vmem:[%s192 + $0x78] sm:$0xf]
      %v230 = vld [vmem:[%s192 + $0x7c] sm:$0xf]
      %v231 = vld [vmem:[%s192 + $0x80] sm:$0xf]
      %v232 = vld [vmem:[%s192 + $0x84] sm:$0xf]
      %v233 = vld [vmem:[%s192 + $0x88] sm:$0xf]
      %v234 = vld [vmem:[%s192 + $0x8c] sm:$0xf]
      %v235 = vld [vmem:[%s192 + $0x90] sm:$0xf]
      %v236 = vld [vmem:[%s192 + $0x94] sm:$0xf]
      %v237 = vld [vmem:[%s192 + $0x98] sm:$0xf]
      %v238 = vld [vmem:[%s192 + $0x9c] sm:$0xf]
      %v239 = vld [vmem:[%s192 + $0xa0] sm:$0xf]
      %v240 = vld [vmem:[%s192 + $0xa4] sm:$0xf]
      %v241 = vld [vmem:[%s192 + $0xa8] sm:$0xf]
      %v242 = vld [vmem:[%s192 + $0xac] sm:$0xf]
      %v243 = vld [vmem:[%s192 + $0xb0] sm:$0xf]
      %v244 = vld [vmem:[%s192 + $0xb4] sm:$0xf]
      %v245 = vld [vmem:[%s192 + $0xb8] sm:$0xf]
      %v246 = vld [vmem:[%s192 + $0xbc] sm:$0xf]
      %v247 = vld [vmem:[%s192 + $0xc0] sm:$0xf]
      %v248 = vld [vmem:[%s192 + $0xc4] sm:$0xf]
      %v249 = vld [vmem:[%s192 + $0xc8] sm:$0xf]
      %v250 = vld [vmem:[%s192 + $0xcc] sm:$0xf]
      %v251 = vld [vmem:[%s192 + $0xd0] sm:$0xf]
      %v252 = vld [vmem:[%s192 + $0xd4] sm:$0xf]
      %v253 = vld [vmem:[%s192 + $0xd8] sm:$0xf]
      %v254 = vld [vmem:[%s192 + $0xdc] sm:$0xf]
      %v255 = vld [vmem:[%s192 + $0xe0] sm:$0xf]
      %v256 = vld [vmem:[%s192 + $0xe4] sm:$0xf]
      %v257 = vld [vmem:[%s192 + $0xe8] sm:$0xf]
      %v258 = vld [vmem:[%s192 + $0xec] sm:$0xf]
      %v259 = vld [vmem:[%s192 + $0xf0] sm:$0xf]
      %v260 = vld [vmem:[%s192 + $0xf4] sm:$0xf]
      %v261 = vld [vmem:[%s192 + $0xf8] sm:$0xf]
      %v262 = vld [vmem:[%s192 + $0xfc] sm:$0xf]
      %v263 = vld [vmem:[%s192 + $0x100] sm:$0xf]
      %v264 = vld [vmem:[%s192 + $0x104] sm:$0xf]
      %v265 = vld [vmem:[%s192 + $0x108] sm:$0xf]
      %v266 = vld [vmem:[%s192 + $0x10c] sm:$0xf]
      %v267 = vld [vmem:[%s192 + $0x110] sm:$0xf]
      %v268 = vld [vmem:[%s192 + $0x114] sm:$0xf]
      %v269 = vld [vmem:[%s192 + $0x118] sm:$0xf]
      %v270 = vld [vmem:[%s192 + $0x11c] sm:$0xf]
      %v271 = vld [vmem:[%s192 + $0x120] sm:$0xf]
      %v272 = vld [vmem:[%s192 + $0x124] sm:$0xf]
      %v273 = vld [vmem:[%s192 + $0x128] sm:$0xf]
      %v274 = vld [vmem:[%s192 + $0x12c] sm:$0xf]
      %v275 = vld [vmem:[%s192 + $0x130] sm:$0xf]
      %v276 = vld [vmem:[%s192 + $0x134] sm:$0xf]
      %v277 = vld [vmem:[%s192 + $0x138] sm:$0xf]
      %v278 = vld [vmem:[%s192 + $0x13c] sm:$0xf]
      %v279 = vld [vmem:[%s192 + $0x140] sm:$0xf]
      %v280 = vld [vmem:[%s192 + $0x144] sm:$0xf]
      %v281 = vld [vmem:[%s192 + $0x148] sm:$0xf]
      %v282 = vld [vmem:[%s192 + $0x14c] sm:$0xf]
      %v283 = vld [vmem:[%s192 + $0x150] sm:$0xf]
      %v284 = vld [vmem:[%s192 + $0x154] sm:$0xf]
      %v285 = vld [vmem:[%s192 + $0x158] sm:$0xf]
      %v286 = vld [vmem:[%s192 + $0x15c] sm:$0xf]
      %v287 = vld [vmem:[%s192 + $0x160] sm:$0xf]
      %v288 = vld [vmem:[%s192 + $0x164] sm:$0xf]
      %v289 = vld [vmem:[%s192 + $0x168] sm:$0xf]
      %v290 = vld [vmem:[%s192 + $0x16c] sm:$0xf]
      %v291 = vld [vmem:[%s192 + $0x170] sm:$0xf]
      %v292 = vld [vmem:[%s192 + $0x174] sm:$0xf]
      %v293 = vld [vmem:[%s192 + $0x178] sm:$0xf]
      %v294 = vld [vmem:[%s192 + $0x17c] sm:$0xf]
      %v295 = vld [vmem:[%s192 + $0x180] sm:$0xf]
      %v296 = vld [vmem:[%s192 + $0x184] sm:$0xf]
      %v297 = vld [vmem:[%s192 + $0x188] sm:$0xf]
      %v298 = vld [vmem:[%s192 + $0x18c] sm:$0xf]
      %v299 = vld [vmem:[%s192 + $0x190] sm:$0xf]
      %v300 = vld [vmem:[%s192 + $0x194] sm:$0xf]
      %v301 = vld [vmem:[%s192 + $0x198] sm:$0xf]
      %v302 = vld [vmem:[%s192 + $0x19c] sm:$0xf]
      %v303 = vld [vmem:[%s192 + $0x1a0] sm:$0xf]
      %v304 = vld [vmem:[%s192 + $0x1a4] sm:$0xf]
      %v305 = vld [vmem:[%s192 + $0x1a8] sm:$0xf]
      %v306 = vld [vmem:[%s192 + $0x1ac] sm:$0xf]
      %v307 = vld [vmem:[%s192 + $0x1b0] sm:$0xf]
      %v308 = vld [vmem:[%s192 + $0x1b4] sm:$0xf]
      %v309 = vld [vmem:[%s192 + $0x1b8] sm:$0xf]
      %v310 = vld [vmem:[%s192 + $0x1bc] sm:$0xf]
      %v311 = vld [vmem:[%s192 + $0x1c0] sm:$0xf]
      %v312 = vld [vmem:[%s192 + $0x1c4] sm:$0xf]
      %v313 = vld [vmem:[%s192 + $0x1c8] sm:$0xf]
      %v314 = vld [vmem:[%s192 + $0x1cc] sm:$0xf]
      %v315 = vld [vmem:[%s192 + $0x1d0] sm:$0xf]
      %v316 = vld [vmem:[%s192 + $0x1d4] sm:$0xf]
      %v317 = vld [vmem:[%s192 + $0x1d8] sm:$0xf]
      %v318 = vld [vmem:[%s192 + $0x1dc] sm:$0xf]
      %v319 = vld [vmem:[%s192 + $0x1e0] sm:$0xf]
      %v320 = vld [vmem:[%s192 + $0x1e4] sm:$0xf]
      %v321 = vld [vmem:[%s192 + $0x1e8] sm:$0xf]
      %v322 = vld [vmem:[%s192 + $0x1ec] sm:$0xf]
      %v323 = vld [vmem:[%s192 + $0x1f0] sm:$0xf]
      %v324 = vld [vmem:[%s192 + $0x1f4] sm:$0xf]
      %v325 = vld [vmem:[%s192 + $0x1f8] sm:$0xf]
      %v326 = vld [vmem:[%s192 + $0x1fc] sm:$0xf]
      %v327 = vld [vmem:[%s192 + $0x200] sm:$0xf]
      %v328 = vld [vmem:[%s192 + $0x204] sm:$0xf]
      %v329 = vld [vmem:[%s192 + $0x208] sm:$0xf]
      %v330 = vld [vmem:[%s192 + $0x20c] sm:$0xf]
      %v331 = vld [vmem:[%s192 + $0x210] sm:$0xf]
      %v332 = vld [vmem:[%s192 + $0x214] sm:$0xf]
      %v333 = vld [vmem:[%s192 + $0x218] sm:$0xf]
      %v334 = vld [vmem:[%s192 + $0x21c] sm:$0xf]
      %v335 = vld [vmem:[%s192 + $0x220] sm:$0xf]
      %v336 = vld [vmem:[%s192 + $0x224] sm:$0xf]
      %v337 = vld [vmem:[%s192 + $0x228] sm:$0xf]
      %v338 = vld [vmem:[%s192 + $0x22c] sm:$0xf]
      %v339 = vld [vmem:[%s192 + $0x230] sm:$0xf]
      %v340 = vld [vmem:[%s192 + $0x234] sm:$0xf]
      %v341 = vld [vmem:[%s192 + $0x238] sm:$0xf]
      %v342 = vld [vmem:[%s192 + $0x23c] sm:$0xf]
      %v343 = vld [vmem:[%s192 + $0x240] sm:$0xf]
      %v344 = vld [vmem:[%s192 + $0x244] sm:$0xf]
      %v345 = vld [vmem:[%s192 + $0x248] sm:$0xf]
      %v346 = vld [vmem:[%s192 + $0x24c] sm:$0xf]
      %v347 = vld [vmem:[%s192 + $0x250] sm:$0xf]
      %v348 = vld [vmem:[%s192 + $0x254] sm:$0xf]
      %v349 = vld [vmem:[%s192 + $0x258] sm:$0xf]
      %v350 = vld [vmem:[%s192 + $0x25c] sm:$0xf]
      %v351 = vld [vmem:[%s192 + $0x260] sm:$0xf]
      %v352 = vld [vmem:[%s192 + $0x264] sm:$0xf]
      %v353 = vld [vmem:[%s192 + $0x268] sm:$0xf]
      %v354 = vld [vmem:[%s192 + $0x26c] sm:$0xf]
      %v355 = vld [vmem:[%s192 + $0x270] sm:$0xf]
      %v356 = vld [vmem:[%s192 + $0x274] sm:$0xf]
      %v357 = vld [vmem:[%s192 + $0x278] sm:$0xf]
      %v358 = vld [vmem:[%s192 + $0x27c] sm:$0xf]
      %v359 = vld [vmem:[%s192 + $0x280] sm:$0xf]
      %v360 = vld [vmem:[%s192 + $0x284] sm:$0xf]
      %v361 = vld [vmem:[%s192 + $0x288] sm:$0xf]
      %v362 = vld [vmem:[%s192 + $0x28c] sm:$0xf]
      %v363 = vld [vmem:[%s192 + $0x290] sm:$0xf]
      %v364 = vld [vmem:[%s192 + $0x294] sm:$0xf]
      %v365 = vld [vmem:[%s192 + $0x298] sm:$0xf]
      %v366 = vld [vmem:[%s192 + $0x29c] sm:$0xf]
      %v367 = vld [vmem:[%s192 + $0x2a0] sm:$0xf]
      %v368 = vld [vmem:[%s192 + $0x2a4] sm:$0xf]
      %v369 = vld [vmem:[%s192 + $0x2a8] sm:$0xf]
      %v370 = vld [vmem:[%s192 + $0x2ac] sm:$0xf]
      %v371 = vld [vmem:[%s192 + $0x2b0] sm:$0xf]
      %v372 = vld [vmem:[%s192 + $0x2b4] sm:$0xf]
      %v373 = vld [vmem:[%s192 + $0x2b8] sm:$0xf]
      %v374 = vld [vmem:[%s192 + $0x2bc] sm:$0xf]
      %v375 = vld [vmem:[%s192 + $0x2c0] sm:$0xf]
      %v376 = vld [vmem:[%s192 + $0x2c4] sm:$0xf]
      %v377 = vld [vmem:[%s192 + $0x2c8] sm:$0xf]
      %v378 = vld [vmem:[%s192 + $0x2cc] sm:$0xf]
      %v379 = vld [vmem:[%s192 + $0x2d0] sm:$0xf]
      %v380 = vld [vmem:[%s192 + $0x2d4] sm:$0xf]
      %v381 = vld [vmem:[%s192 + $0x2d8] sm:$0xf]
      %v382 = vld [vmem:[%s192 + $0x2dc] sm:$0xf]
      %v383 = vld [vmem:[%s192 + $0x2e0] sm:$0xf]
      %v384 = vld [vmem:[%s192 + $0x2e4] sm:$0xf]
      %v385 = vld [vmem:[%s192 + $0x2e8] sm:$0xf]
      %v386 = vld [vmem:[%s192 + $0x2ec] sm:$0xf]
      %v387 = vld [vmem:[%s192 + $0x2f0] sm:$0xf]
      %v388 = vld [vmem:[%s192 + $0x2f4] sm:$0xf]
      %v389 = vld [vmem:[%s192 + $0x2f8] sm:$0xf]
      %v390 = vld [vmem:[%s192 + $0x2fc] sm:$0xf]
      %v391 = vld [vmem:[%s192 + $0x300] sm:$0xf]
      %v392 = vld [vmem:[%s192 + $0x304] sm:$0xf]
      %v393 = vld [vmem:[%s192 + $0x308] sm:$0xf]
      %v394 = vld [vmem:[%s192 + $0x30c] sm:$0xf]
      %v395 = vld [vmem:[%s192 + $0x310] sm:$0xf]
      %v396 = vld [vmem:[%s192 + $0x314] sm:$0xf]
      %v397 = vld [vmem:[%s192 + $0x318] sm:$0xf]
      %v398 = vld [vmem:[%s192 + $0x31c] sm:$0xf]
      %v399 = vld [vmem:[%s192 + $0x320] sm:$0xf]
      %v400 = vld [vmem:[%s192 + $0x324] sm:$0xf]
      %v401 = vld [vmem:[%s192 + $0x328] sm:$0xf]
      %v402 = vld [vmem:[%s192 + $0x32c] sm:$0xf]
      %v403 = vld [vmem:[%s192 + $0x330] sm:$0xf]
      %v404 = vld [vmem:[%s192 + $0x334] sm:$0xf]
      %v405 = vld [vmem:[%s192 + $0x338] sm:$0xf]
      %v406 = vld [vmem:[%s192 + $0x33c] sm:$0xf]
      %v407 = vld [vmem:[%s1] sm:$0xff]
      %v408 = vld [vmem:[%s1 + $0x8] sm:$0xff]
      %v409 = vld [vmem:[%s1 + $0x10] sm:$0xff]
      %v410 = vld [vmem:[%s1 + $0x18] sm:$0xff]
      %v411 = vld [vmem:[%s1 + $0x20] sm:$0xff]
      %v412 = vld [vmem:[%s1 + $0x28] sm:$0xff]
      %v413 = vld [vmem:[%s1 + $0x30] sm:$0xff]
      %v414 = vld [vmem:[%s1 + $0x38] sm:$0xff]
      %v415 = vld [vmem:[%s1 + $0x40] sm:$0xff]
      %v416 = vld [vmem:[%s1 + $0x48] sm:$0xff]
      %v417 = vld [vmem:[%s1 + $0x50] sm:$0xff]
      %v418 = vld [vmem:[%s1 + $0x58] sm:$0xff]
      %v419 = vld [vmem:[%s1 + $0x60] sm:$0xff]
      %v420 = vld [vmem:[%s1 + $0x68] sm:$0xff]
      %v421 = vld [vmem:[%s1 + $0x70] sm:$0xff]
      %v422 = vld [vmem:[%s1 + $0x78] sm:$0xff]
      %v631 = vunpack.c.l.b16 %v199
      %v632 = vunpack.c.l.b16 %v200
      %v633 = vunpack.c.l.b16 %v201
      %v634 = vunpack.c.l.b16 %v202
      %v635 = vunpack.c.l.b16 %v203
      %v636 = vunpack.c.l.b16 %v204
      %v637 = vunpack.c.l.b16 %v205
      %v638 = vunpack.c.l.b16 %v206
      %v639 = vunpack.c.l.b16 %v207
      %v640 = vunpack.c.l.b16 %v208
      %v641 = vunpack.c.l.b16 %v209
      %v642 = vunpack.c.l.b16 %v210
      %v643 = vunpack.c.l.b16 %v211
      %v644 = vunpack.c.l.b16 %v212
      %v645 = vunpack.c.l.b16 %v213
      %v646 = vunpack.c.l.b16 %v214
      %v647 = vunpack.c.l.b16 %v215
      %v648 = vunpack.c.l.b16 %v216
      %v649 = vunpack.c.l.b16 %v217
      %v650 = vunpack.c.l.b16 %v218
      %v651 = vunpack.c.l.b16 %v219
      %v652 = vunpack.c.l.b16 %v220
      %v653 = vunpack.c.l.b16 %v221
      %v654 = vunpack.c.l.b16 %v222
      %v655 = vunpack.c.l.b16 %v223
      %v656 = vunpack.c.l.b16 %v224
      %v657 = vunpack.c.l.b16 %v225
      %v658 = vunpack.c.l.b16 %v226
      %v659 = vunpack.c.l.b16 %v227
      %v660 = vunpack.c.l.b16 %v228
      %v661 = vunpack.c.l.b16 %v229
      %v662 = vunpack.c.l.b16 %v230
      %v663 = vunpack.c.l.b16 %v231
      %v664 = vunpack.c.l.b16 %v232
      %v665 = vunpack.c.l.b16 %v233
      %v666 = vunpack.c.l.b16 %v234
      %v667 = vunpack.c.l.b16 %v235
      %v668 = vunpack.c.l.b16 %v236
      %v669 = vunpack.c.l.b16 %v237
      %v670 = vunpack.c.l.b16 %v238
      %v671 = vunpack.c.l.b16 %v239
      %v672 = vunpack.c.l.b16 %v240
      %v673 = vunpack.c.l.b16 %v241
      %v674 = vunpack.c.l.b16 %v242
      %v675 = vunpack.c.l.b16 %v243
      %v676 = vunpack.c.l.b16 %v244
      %v677 = vunpack.c.l.b16 %v245
      %v678 = vunpack.c.l.b16 %v246
      %v679 = vunpack.c.l.b16 %v247
      %v680 = vunpack.c.l.b16 %v248
      %v681 = vunpack.c.l.b16 %v249
      %v682 = vunpack.c.l.b16 %v250
      %v683 = vunpack.c.l.b16 %v251
      %v684 = vunpack.c.l.b16 %v252
      %v685 = vunpack.c.l.b16 %v253
      %v686 = vunpack.c.l.b16 %v254
      %v687 = vunpack.c.l.b16 %v255
      %v688 = vunpack.c.l.b16 %v256
      %v689 = vunpack.c.l.b16 %v257
      %v690 = vunpack.c.l.b16 %v258
      %v691 = vunpack.c.l.b16 %v259
      %v692 = vunpack.c.l.b16 %v260
      %v693 = vunpack.c.l.b16 %v261
      %v694 = vunpack.c.l.b16 %v262
      %v695 = vunpack.c.l.b16 %v263
      %v696 = vunpack.c.l.b16 %v264
      %v697 = vunpack.c.l.b16 %v265
      %v698 = vunpack.c.l.b16 %v266
      %v699 = vunpack.c.l.b16 %v267
      %v700 = vunpack.c.l.b16 %v268
      %v701 = vunpack.c.l.b16 %v269
      %v702 = vunpack.c.l.b16 %v270
      %v703 = vunpack.c.l.b16 %v271
      %v704 = vunpack.c.l.b16 %v272
      %v705 = vunpack.c.l.b16 %v273
      %v706 = vunpack.c.l.b16 %v274
      %v707 = vunpack.c.l.b16 %v275
      %v708 = vunpack.c.l.b16 %v276
      %v709 = vunpack.c.l.b16 %v277
      %v710 = vunpack.c.l.b16 %v278
      %v711 = vunpack.c.l.b16 %v279
      %v712 = vunpack.c.l.b16 %v280
      %v713 = vunpack.c.l.b16 %v281
      %v714 = vunpack.c.l.b16 %v282
      %v715 = vunpack.c.l.b16 %v283
      %v716 = vunpack.c.l.b16 %v284
      %v717 = vunpack.c.l.b16 %v285
      %v718 = vunpack.c.l.b16 %v286
      %v719 = vunpack.c.l.b16 %v287
      %v720 = vunpack.c.l.b16 %v288
      %v721 = vunpack.c.l.b16 %v289
      %v722 = vunpack.c.l.b16 %v290
      %v723 = vunpack.c.l.b16 %v291
      %v724 = vunpack.c.l.b16 %v292
      %v725 = vunpack.c.l.b16 %v293
      %v726 = vunpack.c.l.b16 %v294
      %v727 = vunpack.c.l.b16 %v295
      %v728 = vunpack.c.l.b16 %v296
      %v729 = vunpack.c.l.b16 %v297
      %v730 = vunpack.c.l.b16 %v298
      %v731 = vunpack.c.l.b16 %v299
      %v732 = vunpack.c.l.b16 %v300
      %v733 = vunpack.c.l.b16 %v301
      %v734 = vunpack.c.l.b16 %v302
      %v735 = vunpack.c.l.b16 %v303
      %v736 = vunpack.c.l.b16 %v304
      %v737 = vunpack.c.l.b16 %v305
      %v738 = vunpack.c.l.b16 %v306
      %v739 = vunpack.c.l.b16 %v307
      %v740 = vunpack.c.l.b16 %v308
      %v741 = vunpack.c.l.b16 %v309
      %v742 = vunpack.c.l.b16 %v310
      %v743 = vunpack.c.l.b16 %v311
      %v744 = vunpack.c.l.b16 %v312
      %v745 = vunpack.c.l.b16 %v313
      %v746 = vunpack.c.l.b16 %v314
      %v747 = vunpack.c.l.b16 %v315
      %v748 = vunpack.c.l.b16 %v316
      %v749 = vunpack.c.l.b16 %v317
      %v750 = vunpack.c.l.b16 %v318
      %v751 = vunpack.c.l.b16 %v319
      %v752 = vunpack.c.l.b16 %v320
      %v753 = vunpack.c.l.b16 %v321
      %v754 = vunpack.c.l.b16 %v322
      %v755 = vunpack.c.l.b16 %v323
      %v756 = vunpack.c.l.b16 %v324
      %v757 = vunpack.c.l.b16 %v325
      %v758 = vunpack.c.l.b16 %v326
      %v759 = vunpack.c.l.b16 %v327
      %v760 = vunpack.c.l.b16 %v328
      %v761 = vunpack.c.l.b16 %v329
      %v762 = vunpack.c.l.b16 %v330
      %v763 = vunpack.c.l.b16 %v331
      %v764 = vunpack.c.l.b16 %v332
      %v765 = vunpack.c.l.b16 %v333
      %v766 = vunpack.c.l.b16 %v334
      %v767 = vunpack.c.l.b16 %v335
      %v768 = vunpack.c.l.b16 %v336
      %v769 = vunpack.c.l.b16 %v337
      %v770 = vunpack.c.l.b16 %v338
      %v771 = vunpack.c.l.b16 %v339
      %v772 = vunpack.c.l.b16 %v340
      %v773 = vunpack.c.l.b16 %v341
      %v774 = vunpack.c.l.b16 %v342
      %v775 = vunpack.c.l.b16 %v343
      %v776 = vunpack.c.l.b16 %v344
      %v777 = vunpack.c.l.b16 %v345
      %v778 = vunpack.c.l.b16 %v346
      %v779 = vunpack.c.l.b16 %v347
      %v780 = vunpack.c.l.b16 %v348
      %v781 = vunpack.c.l.b16 %v349
      %v782 = vunpack.c.l.b16 %v350
      %v783 = vunpack.c.l.b16 %v351
      %v784 = vunpack.c.l.b16 %v352
      %v785 = vunpack.c.l.b16 %v353
      %v786 = vunpack.c.l.b16 %v354
      %v787 = vunpack.c.l.b16 %v355
      %v788 = vunpack.c.l.b16 %v356
      %v789 = vunpack.c.l.b16 %v357
      %v790 = vunpack.c.l.b16 %v358
      %v791 = vunpack.c.l.b16 %v359
      %v792 = vunpack.c.l.b16 %v360
      %v793 = vunpack.c.l.b16 %v361
      %v794 = vunpack.c.l.b16 %v362
      %v795 = vunpack.c.l.b16 %v363
      %v796 = vunpack.c.l.b16 %v364
      %v797 = vunpack.c.l.b16 %v365
      %v798 = vunpack.c.l.b16 %v366
      %v799 = vunpack.c.l.b16 %v367
      %v800 = vunpack.c.l.b16 %v368
      %v801 = vunpack.c.l.b16 %v369
      %v802 = vunpack.c.l.b16 %v370
      %v803 = vunpack.c.l.b16 %v371
      %v804 = vunpack.c.l.b16 %v372
      %v805 = vunpack.c.l.b16 %v373
      %v806 = vunpack.c.l.b16 %v374
      %v807 = vunpack.c.l.b16 %v375
      %v808 = vunpack.c.l.b16 %v376
      %v809 = vunpack.c.l.b16 %v377
      %v810 = vunpack.c.l.b16 %v378
      %v811 = vunpack.c.l.b16 %v379
      %v812 = vunpack.c.l.b16 %v380
      %v813 = vunpack.c.l.b16 %v381
      %v814 = vunpack.c.l.b16 %v382
      %v815 = vunpack.c.l.b16 %v383
      %v816 = vunpack.c.l.b16 %v384
      %v817 = vunpack.c.l.b16 %v385
      %v818 = vunpack.c.l.b16 %v386
      %v819 = vunpack.c.l.b16 %v387
      %v820 = vunpack.c.l.b16 %v388
      %v821 = vunpack.c.l.b16 %v389
      %v822 = vunpack.c.l.b16 %v390
      %v823 = vunpack.c.l.b16 %v391
      %v824 = vunpack.c.l.b16 %v392
      %v825 = vunpack.c.l.b16 %v393
      %v826 = vunpack.c.l.b16 %v394
      %v827 = vunpack.c.l.b16 %v395
      %v828 = vunpack.c.l.b16 %v396
      %v829 = vunpack.c.l.b16 %v397
      %v830 = vunpack.c.l.b16 %v398
      %v831 = vunpack.c.l.b16 %v399
      %v832 = vunpack.c.l.b16 %v400
      %v833 = vunpack.c.l.b16 %v401
      %v834 = vunpack.c.l.b16 %v402
      %v835 = vunpack.c.l.b16 %v403
      %v836 = vunpack.c.l.b16 %v404
      %v837 = vunpack.c.l.b16 %v405
      %v838 = vunpack.c.l.b16 %v406
      %v839 = vpack.c.b16 %v632, %v631
      %v840 = vpack.c.b16 %v634, %v633
      %v841 = vpack.c.b16 %v636, %v635
      %v842 = vpack.c.b16 %v638, %v637
      %v843 = vpack.c.b16 %v640, %v639
      %v844 = vpack.c.b16 %v642, %v641
      %v845 = vpack.c.b16 %v644, %v643
      %v846 = vpack.c.b16 %v646, %v645
      %v847 = vpack.c.b16 %v648, %v647
      %v848 = vpack.c.b16 %v650, %v649
      %v849 = vpack.c.b16 %v652, %v651
      %v850 = vpack.c.b16 %v654, %v653
      %v851 = vpack.c.b16 %v656, %v655
      %v852 = vpack.c.b16 %v658, %v657
      %v853 = vpack.c.b16 %v660, %v659
      %v854 = vpack.c.b16 %v662, %v661
      %v855 = vpack.c.b16 %v664, %v663
      %v856 = vpack.c.b16 %v666, %v665
      %v857 = vpack.c.b16 %v668, %v667
      %v858 = vpack.c.b16 %v670, %v669
      %v859 = vpack.c.b16 %v672, %v671
      %v860 = vpack.c.b16 %v674, %v673
      %v861 = vpack.c.b16 %v676, %v675
      %v862 = vpack.c.b16 %v678, %v677
      %v863 = vpack.c.b16 %v680, %v679
      %v864 = vpack.c.b16 %v682, %v681
      %v865 = vpack.c.b16 %v684, %v683
      %v866 = vpack.c.b16 %v686, %v685
      %v867 = vpack.c.b16 %v688, %v687
      %v868 = vpack.c.b16 %v690, %v689
      %v869 = vpack.c.b16 %v692, %v691
      %v870 = vpack.c.b16 %v694, %v693
      %v871 = vpack.c.b16 %v696, %v695
      %v872 = vpack.c.b16 %v698, %v697
      %v873 = vpack.c.b16 %v700, %v699
      %v874 = vpack.c.b16 %v702, %v701
      %v875 = vpack.c.b16 %v704, %v703
      %v876 = vpack.c.b16 %v706, %v705
      %v877 = vpack.c.b16 %v708, %v707
      %v878 = vpack.c.b16 %v710, %v709
      %v879 = vpack.c.b16 %v712, %v711
      %v880 = vpack.c.b16 %v714, %v713
      %v881 = vpack.c.b16 %v716, %v715
      %v882 = vpack.c.b16 %v718, %v717
      %v883 = vpack.c.b16 %v720, %v719
      %v884 = vpack.c.b16 %v722, %v721
      %v885 = vpack.c.b16 %v724, %v723
      %v886 = vpack.c.b16 %v726, %v725
      %v887 = vpack.c.b16 %v728, %v727
      %v888 = vpack.c.b16 %v730, %v729
      %v889 = vpack.c.b16 %v732, %v731
      %v890 = vpack.c.b16 %v734, %v733
      %v891 = vpack.c.b16 %v736, %v735
      %v892 = vpack.c.b16 %v738, %v737
      %v893 = vpack.c.b16 %v740, %v739
      %v894 = vpack.c.b16 %v742, %v741
      %v895 = vpack.c.b16 %v744, %v743
      %v896 = vpack.c.b16 %v746, %v745
      %v897 = vpack.c.b16 %v748, %v747
      %v898 = vpack.c.b16 %v750, %v749
      %v899 = vpack.c.b16 %v752, %v751
      %v900 = vpack.c.b16 %v754, %v753
      %v901 = vpack.c.b16 %v756, %v755
      %v902 = vpack.c.b16 %v758, %v757
      %v903 = vpack.c.b16 %v760, %v759
      %v904 = vpack.c.b16 %v762, %v761
      %v905 = vpack.c.b16 %v764, %v763
      %v906 = vpack.c.b16 %v766, %v765
      %v907 = vpack.c.b16 %v768, %v767
      %v908 = vpack.c.b16 %v770, %v769
      %v909 = vpack.c.b16 %v772, %v771
      %v910 = vpack.c.b16 %v774, %v773
      %v911 = vpack.c.b16 %v776, %v775
      %v912 = vpack.c.b16 %v778, %v777
      %v913 = vpack.c.b16 %v780, %v779
      %v914 = vpack.c.b16 %v782, %v781
      %v915 = vpack.c.b16 %v784, %v783
      %v916 = vpack.c.b16 %v786, %v785
      %v917 = vpack.c.b16 %v788, %v787
      %v918 = vpack.c.b16 %v790, %v789
      %v919 = vpack.c.b16 %v792, %v791
      %v920 = vpack.c.b16 %v794, %v793
      %v921 = vpack.c.b16 %v796, %v795
      %v922 = vpack.c.b16 %v798, %v797
      %v923 = vpack.c.b16 %v800, %v799
      %v924 = vpack.c.b16 %v802, %v801
      %v925 = vpack.c.b16 %v804, %v803
      %v926 = vpack.c.b16 %v806, %v805
      %v927 = vpack.c.b16 %v808, %v807
      %v928 = vpack.c.b16 %v810, %v809
      %v929 = vpack.c.b16 %v812, %v811
      %v930 = vpack.c.b16 %v814, %v813
      %v931 = vpack.c.b16 %v816, %v815
      %v932 = vpack.c.b16 %v818, %v817
      %v933 = vpack.c.b16 %v820, %v819
      %v934 = vpack.c.b16 %v822, %v821
      %v935 = vpack.c.b16 %v824, %v823
      %v936 = vpack.c.b16 %v826, %v825
      %v937 = vpack.c.b16 %v828, %v827
      %v938 = vpack.c.b16 %v830, %v829
      %v939 = vpack.c.b16 %v832, %v831
      %v940 = vpack.c.b16 %v834, %v833
      %v941 = vpack.c.b16 %v836, %v835
      %v942 = vpack.c.b16 %v838, %v837
      %v1063 = vunpack.c.l.b16 %v407
      %v1064 = vunpack.c.h.b16 %v407
      %v1065 = vunpack.c.l.b16 %v408
      %v1066 = vunpack.c.h.b16 %v408
      %v1067 = vunpack.c.l.b16 %v409
      %v1068 = vunpack.c.h.b16 %v409
      %v1069 = vunpack.c.l.b16 %v410
      %v1070 = vunpack.c.h.b16 %v410
      %v1071 = vunpack.c.l.b16 %v411
      %v1072 = vunpack.c.h.b16 %v411
      %v1073 = vunpack.c.l.b16 %v412
      %v1074 = vunpack.c.h.b16 %v412
      %v1075 = vunpack.c.l.b16 %v413
      %v1076 = vunpack.c.h.b16 %v413
      %v1077 = vunpack.c.l.b16 %v414
      %v1078 = vunpack.c.h.b16 %v414
      %v1079 = vunpack.c.l.b16 %v415
      %v1080 = vunpack.c.h.b16 %v415
      %v1081 = vunpack.c.l.b16 %v416
      %v1082 = vunpack.c.h.b16 %v416
      %v1083 = vunpack.c.l.b16 %v417
      %v1084 = vunpack.c.h.b16 %v417
      %v1085 = vunpack.c.l.b16 %v418
      %v1086 = vunpack.c.h.b16 %v418
      %v1087 = vunpack.c.l.b16 %v419
      %v1088 = vunpack.c.h.b16 %v419
      %v1089 = vunpack.c.l.b16 %v420
      %v1090 = vunpack.c.h.b16 %v420
      %v1091 = vunpack.c.l.b16 %v421
      %v1092 = vunpack.c.h.b16 %v421
      %v1093 = vunpack.c.l.b16 %v422
      %v1094 = vunpack.c.h.b16 %v422
      %v1095 = vpack.c.b16 %v1065, %v1063
      %v1096 = vpack.c.b16 %v1066, %v1064
      %v1097 = vpack.c.b16 %v1069, %v1067
      %v1098 = vpack.c.b16 %v1070, %v1068
      %v1099 = vpack.c.b16 %v1073, %v1071
      %v1100 = vpack.c.b16 %v1074, %v1072
      %v1101 = vpack.c.b16 %v1077, %v1075
      %v1102 = vpack.c.b16 %v1078, %v1076
      %v1103 = vpack.c.b16 %v1081, %v1079
      %v1104 = vpack.c.b16 %v1082, %v1080
      %v1105 = vpack.c.b16 %v1085, %v1083
      %v1106 = vpack.c.b16 %v1086, %v1084
      %v1107 = vpack.c.b16 %v1089, %v1087
      %v1108 = vpack.c.b16 %v1090, %v1088
      %v1109 = vpack.c.b16 %v1093, %v1091
      %v1110 = vpack.c.b16 %v1094, %v1092
      %1127 = vmatprep.subr.bf16.mxu0 %v1096
      %1128 = vmatpush1.bf16.msra.mxu0 %v1095
      %1129 = vmatprep.subr.bf16.mxu0 %v1098
      %1130 = vmatpush1.bf16.msra.mxu0 %v1097
      %1131 = vmatprep.subr.bf16.mxu0 %v1100
      %1132 = vmatpush1.bf16.msra.mxu0 %v1099
      %1133 = vmatprep.subr.bf16.mxu0 %v1102
      %1134 = vmatpush1.bf16.msra.mxu0 %v1101
      %1135 = vmatprep.subr.bf16.mxu0 %v1104
      %1136 = vmatpush1.bf16.msra.mxu0 %v1103
      %1137 = vmatprep.subr.bf16.mxu0 %v1106
      %1138 = vmatpush1.bf16.msra.mxu0 %v1105
      %1139 = vmatprep.subr.bf16.mxu0 %v1108
      %1140 = vmatpush1.bf16.msra.mxu0 %v1107
      %1141 = vmatprep.subr.bf16.mxu0 %v1110
      %1142 = vmatpush1.bf16.msra.mxu0 %v1109
      %1143 = vmatprep.subr.bf16.mxu0 0
      %1144 = vmatpush1.bf16.msra.mxu0 0
      %1145 = vmatprep.subr.bf16.mxu0 0
      %1146 = vmatpush1.bf16.msra.mxu0 0
      %1147 = vmatprep.subr.bf16.mxu0 0
      %1148 = vmatpush1.bf16.msra.mxu0 0
      %1149 = vmatprep.subr.bf16.mxu0 0
      %1150 = vmatpush1.bf16.msra.mxu0 0
      %1151 = vmatprep.subr.bf16.mxu0 0
      %1152 = vmatpush1.bf16.msra.mxu0 0
      %1153 = vmatprep.subr.bf16.mxu0 0
      %1154 = vmatpush1.bf16.msra.mxu0 0
      %1155 = vmatprep.subr.bf16.mxu0 0
      %1156 = vmatpush1.bf16.msra.mxu0 0
      %1157 = vmatprep.subr.bf16.mxu0 0
      %1158 = vmatpush1.bf16.msra.mxu0 0
      %1159 = vmatprep.mubr.bf16.mxu0 0
      %1160 = vmatmul.mubr.bf16.gmra.mrb[0].mxu0 %v839
      %v1161 = vpop.f32.mrb[0].mxu0
      %v1162 = vadd.f32 0.0, %v1161
      %v1163 = vpop.f32.mrb[0].mxu0
      %v1164 = vadd.f32 0.0, %v1163
      %v1165 = vpop.f32.mrb[0].mxu0
      %v1166 = vadd.f32 0.0, %v1165
      %v1167 = vpop.f32.mrb[0].mxu0
      %v1168 = vadd.f32 0.0, %v1167
      %1169 = vmatprep.mubr.bf16.mxu0 0
      %1170 = vmatmul.mubr.bf16.gmra.mrb[0].mxu0 %v840
      %v1171 = vpop.f32.mrb[0].mxu0
      %v1172 = vadd.f32 0.0, %v1171
      %v1173 = vpop.f32.mrb[0].mxu0
      %v1174 = vadd.f32 0.0, %v1173
      %v1175 = vpop.f32.mrb[0].mxu0
      %v1176 = vadd.f32 0.0, %v1175
      %v1177 = vpop.f32.mrb[0].mxu0
      %v1178 = vadd.f32 0.0, %v1177
      %1179 = vmatprep.mubr.bf16.mxu0 0
      %1180 = vmatmul.mubr.bf16.gmra.mrb[0].mxu0 %v841
      %v1181 = vpop.f32.mrb[0].mxu0
      %v1182 = vadd.f32 0.0, %v1181
      %v1183 = vpop.f32.mrb[0].mxu0
      %v1184 = vadd.f32 0.0, %v1183
      %v1185 = vpop.f32.mrb[0].mxu0
      %v1186 = vadd.f32 0.0, %v1185
      %v1187 = vpop.f32.mrb[0].mxu0
      %v1188 = vadd.f32 0.0, %v1187
      %1189 = vmatprep.mubr.bf16.mxu0 0
      %1190 = vmatmul.mubr.bf16.gmra.mrb[0].mxu0 %v842
      %v1191 = vpop.f32.mrb[0].mxu0
      %v1192 = vadd.f32 0.0, %v1191
      %v1193 = vpop.f32.mrb[0].mxu0
      %v1194 = vadd.f32 0.0, %v1193
      %v1195 = vpop.f32.mrb[0].mxu0
      %v1196 = vadd.f32 0.0, %v1195
      %v1197 = vpop.f32.mrb[0].mxu0
      %v1198 = vadd.f32 0.0, %v1197
      %1199 = vmatprep.mubr.bf16.mxu0 0
      %1200 = vmatmul.mubr.bf16.gmra.mrb[0].mxu0 %v843
      %v1201 = vpop.f32.mrb[0].mxu0
      %v1202 = vadd.f32 0.0, %v1201
      %v1203 = vpop.f32.mrb[0].mxu0
      %v1204 = vadd.f32 0.0, %v1203
      %v1205 = vpop.f32.mrb[0].mxu0
      %v1206 = vadd.f32 0.0, %v1205
      %v1207 = vpop.f32.mrb[0].mxu0
      %v1208 = vadd.f32 0.0, %v1207
      %1209 = vmatprep.mubr.bf16.mxu0 0
      %1210 = vmatmul.mubr.bf16.gmra.mrb[0].mxu0 %v844
      %v1211 = vpop.f32.mrb[0].mxu0
      %v1212 = vadd.f32 0.0, %v1211
      %v1213 = vpop.f32.mrb[0].mxu0
      %v1214 = vadd.f32 0.0, %v1213
      %v1215 = vpop.f32.mrb[0].mxu0
      %v1216 = vadd.f32 0.0, %v1215
      %v1217 = vpop.f32.mrb[0].mxu0
      %v1218 = vadd.f32 0.0, %v1217
      %1219 = vmatprep.mubr.bf16.mxu0 0
      %1220 = vmatmul.mubr.bf16.gmra.mrb[0].mxu0 %v845
      %v1221 = vpop.f32.mrb[0].mxu0
      %v1222 = vadd.f32 0.0, %v1221
      %v1223 = vpop.f32.mrb[0].mxu0
      %v1224 = vadd.f32 0.0, %v1223
      %v1225 = vpop.f32.mrb[0].mxu0
      %v1226 = vadd.f32 0.0, %v1225
      %v1227 = vpop.f32.mrb[0].mxu0
      %v1228 = vadd.f32 0.0, %v1227
      %1229 = vmatprep.mubr.bf16.mxu0 0
      %1230 = vmatmul.mubr.bf16.gmra.mrb[0].mxu0 %v846
      %v1231 = vpop.f32.mrb[0].mxu0
      %v1232 = vadd.f32 0.0, %v1231
      %v1233 = vpop.f32.mrb[0].mxu0
      %v1234 = vadd.f32 0.0, %v1233
      %v1235 = vpop.f32.mrb[0].mxu0
      %v1236 = vadd.f32 0.0, %v1235
      %v1237 = vpop.f32.mrb[0].mxu0
      %v1238 = vadd.f32 0.0, %v1237
      %1239 = vmatprep.mubr.bf16.mxu0 0
      %1240 = vmatmul.mubr.bf16.gmra.mrb[0].mxu0 %v847
      %v1241 = vpop.f32.mrb[0].mxu0
      %v1242 = vadd.f32 0.0, %v1241
      %v1243 = vpop.f32.mrb[0].mxu0
      %v1244 = vadd.f32 0.0, %v1243
      %v1245 = vpop.f32.mrb[0].mxu0
      %v1246 = vadd.f32 0.0, %v1245
      %v1247 = vpop.f32.mrb[0].mxu0
      %v1248 = vadd.f32 0.0, %v1247
      %1249 = vmatprep.mubr.bf16.mxu0 0
      %1250 = vmatmul.mubr.bf16.gmra.mrb[0].mxu0 %v848
      %v1251 = vpop.f32.mrb[0].mxu0
      %v1252 = vadd.f32 0.0, %v1251
      %v1253 = vpop.f32.mrb[0].mxu0
      %v1254 = vadd.f32 0.0, %v1253
      %v1255 = vpop.f32.mrb[0].mxu0
      %v1256 = vadd.f32 0.0, %v1255
      %v1257 = vpop.f32.mrb[0].mxu0
      %v1258 = vadd.f32 0.0, %v1257
      %1259 = vmatprep.mubr.bf16.mxu0 0
      %1260 = vmatmul.mubr.bf16.gmra.mrb[0].mxu0 %v849
      %v1261 = vpop.f32.mrb[0].mxu0
      %v1262 = vadd.f32 0.0, %v1261
      %v1263 = vpop.f32.mrb[0].mxu0
      %v1264 = vadd.f32 0.0, %v1263
      %v1265 = vpop.f32.mrb[0].mxu0
      %v1266 = vadd.f32 0.0, %v1265
      %v1267 = vpop.f32.mrb[0].mxu0
      %v1268 = vadd.f32 0.0, %v1267
      %1269 = vmatprep.mubr.bf16.mxu0 0
      %1270 = vmatmul.mubr.bf16.gmra.mrb[0].mxu0 %v850
      %v1271 = vpop.f32.mrb[0].mxu0
      %v1272 = vadd.f32 0.0, %v1271
      %v1273 = vpop.f32.mrb[0].mxu0
      %v1274 = vadd.f32 0.0, %v1273
      %v1275 = vpop.f32.mrb[0].mxu0
      %v1276 = vadd.f32 0.0, %v1275
      %v1277 = vpop.f32.mrb[0].mxu0
      %v1278 = vadd.f32 0.0, %v1277
      %1279 = vmatprep.mubr.bf16.mxu0 0
      %1280 = vmatmul.mubr.bf16.gmra.mrb[0].mxu0 %v851
      %v1281 = vpop.f32.mrb[0].mxu0
      %v1282 = vadd.f32 0.0, %v1281
      %v1283 = vpop.f32.mrb[0].mxu0
      %v1284 = vadd.f32 0.0, %v1283
      %v1285 = vpop.f32.mrb[0].mxu0
      %v1286 = vadd.f32 0.0, %v1285
      %v1287 = vpop.f32.mrb[0].mxu0
      %v1288 = vadd.f32 0.0, %v1287
      %1289 = vmatprep.mubr.bf16.mxu0 0
      %1290 = vmatmul.mubr.bf16.gmra.mrb[0].mxu0 %v852
      %v1291 = vpop.f32.mrb[0].mxu0
      %v1292 = vadd.f32 0.0, %v1291
      %v1293 = vpop.f32.mrb[0].mxu0
      %v1294 = vadd.f32 0.0, %v1293
      %v1295 = vpop.f32.mrb[0].mxu0
      %v1296 = vadd.f32 0.0, %v1295
      %v1297 = vpop.f32.mrb[0].mxu0
      %v1298 = vadd.f32 0.0, %v1297
      %1299 = vmatprep.mubr.bf16.mxu0 0
      %1300 = vmatmul.mubr.bf16.gmra.mrb[0].mxu0 %v853
      %v1301 = vpop.f32.mrb[0].mxu0
      %v1302 = vadd.f32 0.0, %v1301
      %v1303 = vpop.f32.mrb[0].mxu0
      %v1304 = vadd.f32 0.0, %v1303
      %v1305 = vpop.f32.mrb[0].mxu0
      %v1306 = vadd.f32 0.0, %v1305
      %v1307 = vpop.f32.mrb[0].mxu0
      %v1308 = vadd.f32 0.0, %v1307
      %1309 = vmatprep.mubr.bf16.mxu0 0
      %1310 = vmatmul.mubr.bf16.gmra.mrb[0].mxu0 %v854
      %v1311 = vpop.f32.mrb[0].mxu0
      %v1312 = vadd.f32 0.0, %v1311
      %v1313 = vpop.f32.mrb[0].mxu0
      %v1314 = vadd.f32 0.0, %v1313
      %v1315 = vpop.f32.mrb[0].mxu0
      %v1316 = vadd.f32 0.0, %v1315
      %v1317 = vpop.f32.mrb[0].mxu0
      %v1318 = vadd.f32 0.0, %v1317
      %1319 = vmatprep.mubr.bf16.mxu0 0
      %1320 = vmatmul.mubr.bf16.gmra.mrb[0].mxu0 %v855
      %v1321 = vpop.f32.mrb[0].mxu0
      %v1322 = vadd.f32 0.0, %v1321
      %v1323 = vpop.f32.mrb[0].mxu0
      %v1324 = vadd.f32 0.0, %v1323
      %v1325 = vpop.f32.mrb[0].mxu0
      %v1326 = vadd.f32 0.0, %v1325
      %v1327 = vpop.f32.mrb[0].mxu0
      %v1328 = vadd.f32 0.0, %v1327
      %1329 = vmatprep.mubr.bf16.mxu0 0
      %1330 = vmatmul.mubr.bf16.gmra.mrb[0].mxu0 %v856
      %v1331 = vpop.f32.mrb[0].mxu0
      %v1332 = vadd.f32 0.0, %v1331
      %v1333 = vpop.f32.mrb[0].mxu0
      %v1334 = vadd.f32 0.0, %v1333
      %v1335 = vpop.f32.mrb[0].mxu0
      %v1336 = vadd.f32 0.0, %v1335
      %v1337 = vpop.f32.mrb[0].mxu0
      %v1338 = vadd.f32 0.0, %v1337
      %1339 = vmatprep.mubr.bf16.mxu0 0
      %1340 = vmatmul.mubr.bf16.gmra.mrb[0].mxu0 %v857
      %v1341 = vpop.f32.mrb[0].mxu0
      %v1342 = vadd.f32 0.0, %v1341
      %v1343 = vpop.f32.mrb[0].mxu0
      %v1344 = vadd.f32 0.0, %v1343
      %v1345 = vpop.f32.mrb[0].mxu0
      %v1346 = vadd.f32 0.0, %v1345
      %v1347 = vpop.f32.mrb[0].mxu0
      %v1348 = vadd.f32 0.0, %v1347
      %1349 = vmatprep.mubr.bf16.mxu0 0
      %1350 = vmatmul.mubr.bf16.gmra.mrb[0].mxu0 %v858
      %v1351 = vpop.f32.mrb[0].mxu0
      %v1352 = vadd.f32 0.0, %v1351
      %v1353 = vpop.f32.mrb[0].mxu0
      %v1354 = vadd.f32 0.0, %v1353
      %v1355 = vpop.f32.mrb[0].mxu0
      %v1356 = vadd.f32 0.0, %v1355
      %v1357 = vpop.f32.mrb[0].mxu0
      %v1358 = vadd.f32 0.0, %v1357
      %1359 = vmatprep.mubr.bf16.mxu0 0
      %1360 = vmatmul.mubr.bf16.gmra.mrb[0].mxu0 %v859
      %v1361 = vpop.f32.mrb[0].mxu0
      %v1362 = vadd.f32 0.0, %v1361
      %v1363 = vpop.f32.mrb[0].mxu0
      %v1364 = vadd.f32 0.0, %v1363
      %v1365 = vpop.f32.mrb[0].mxu0
      %v1366 = vadd.f32 0.0, %v1365
      %v1367 = vpop.f32.mrb[0].mxu0
      %v1368 = vadd.f32 0.0, %v1367
      %1369 = vmatprep.mubr.bf16.mxu0 0
      %1370 = vmatmul.mubr.bf16.gmra.mrb[0].mxu0 %v860
      %v1371 = vpop.f32.mrb[0].mxu0
      %v1372 = vadd.f32 0.0, %v1371
      %v1373 = vpop.f32.mrb[0].mxu0
      %v1374 = vadd.f32 0.0, %v1373
      %v1375 = vpop.f32.mrb[0].mxu0
      %v1376 = vadd.f32 0.0, %v1375
      %v1377 = vpop.f32.mrb[0].mxu0
      %v1378 = vadd.f32 0.0, %v1377
      %1379 = vmatprep.mubr.bf16.mxu0 0
      %1380 = vmatmul.mubr.bf16.gmra.mrb[0].mxu0 %v861
      %v1381 = vpop.f32.mrb[0].mxu0
      %v1382 = vadd.f32 0.0, %v1381
      %v1383 = vpop.f32.mrb[0].mxu0
      %v1384 = vadd.f32 0.0, %v1383
      %v1385 = vpop.f32.mrb[0].mxu0
      %v1386 = vadd.f32 0.0, %v1385
      %v1387 = vpop.f32.mrb[0].mxu0
      %v1388 = vadd.f32 0.0, %v1387
      %1389 = vmatprep.mubr.bf16.mxu0 0
      %1390 = vmatmul.mubr.bf16.gmra.mrb[0].mxu0 %v862
      %v1391 = vpop.f32.mrb[0].mxu0
      %v1392 = vadd.f32 0.0, %v1391
      %v1393 = vpop.f32.mrb[0].mxu0
      %v1394 = vadd.f32 0.0, %v1393
      %v1395 = vpop.f32.mrb[0].mxu0
      %v1396 = vadd.f32 0.0, %v1395
      %v1397 = vpop.f32.mrb[0].mxu0
      %v1398 = vadd.f32 0.0, %v1397
      %1399 = vmatprep.mubr.bf16.mxu0 0
      %1400 = vmatmul.mubr.bf16.gmra.mrb[0].mxu0 %v863
      %v1401 = vpop.f32.mrb[0].mxu0
      %v1402 = vadd.f32 0.0, %v1401
      %v1403 = vpop.f32.mrb[0].mxu0
      %v1404 = vadd.f32 0.0, %v1403
      %v1405 = vpop.f32.mrb[0].mxu0
      %v1406 = vadd.f32 0.0, %v1405
      %v1407 = vpop.f32.mrb[0].mxu0
      %v1408 = vadd.f32 0.0, %v1407
      %1409 = vmatprep.mubr.bf16.mxu0 0
      %1410 = vmatmul.mubr.bf16.gmra.mrb[0].mxu0 %v864
      %v1411 = vpop.f32.mrb[0].mxu0
      %v1412 = vadd.f32 0.0, %v1411
      %v1413 = vpop.f32.mrb[0].mxu0
      %v1414 = vadd.f32 0.0, %v1413
      %v1415 = vpop.f32.mrb[0].mxu0
      %v1416 = vadd.f32 0.0, %v1415
      %v1417 = vpop.f32.mrb[0].mxu0
      %v1418 = vadd.f32 0.0, %v1417
      %1419 = vmatprep.mubr.bf16.mxu0 0
      %1420 = vmatmul.mubr.bf16.gmra.mrb[0].mxu0 %v865
      %v1421 = vpop.f32.mrb[0].mxu0
      %v1422 = vadd.f32 0.0, %v1421
      %v1423 = vpop.f32.mrb[0].mxu0
      %v1424 = vadd.f32 0.0, %v1423
      %v1425 = vpop.f32.mrb[0].mxu0
      %v1426 = vadd.f32 0.0, %v1425
      %v1427 = vpop.f32.mrb[0].mxu0
      %v1428 = vadd.f32 0.0, %v1427
      %1429 = vmatprep.mubr.bf16.mxu0 0
      %1430 = vmatmul.mubr.bf16.gmra.mrb[0].mxu0 %v866
      %v1431 = vpop.f32.mrb[0].mxu0
      %v1432 = vadd.f32 0.0, %v1431
      %v1433 = vpop.f32.mrb[0].mxu0
      %v1434 = vadd.f32 0.0, %v1433
      %v1435 = vpop.f32.mrb[0].mxu0
      %v1436 = vadd.f32 0.0, %v1435
      %v1437 = vpop.f32.mrb[0].mxu0
      %v1438 = vadd.f32 0.0, %v1437
      %1439 = vmatprep.mubr.bf16.mxu0 0
      %1440 = vmatmul.mubr.bf16.gmra.mrb[0].mxu0 %v867
      %v1441 = vpop.f32.mrb[0].mxu0
      %v1442 = vadd.f32 0.0, %v1441
      %v1443 = vpop.f32.mrb[0].mxu0
      %v1444 = vadd.f32 0.0, %v1443
      %v1445 = vpop.f32.mrb[0].mxu0
      %v1446 = vadd.f32 0.0, %v1445
      %v1447 = vpop.f32.mrb[0].mxu0
      %v1448 = vadd.f32 0.0, %v1447
      %1449 = vmatprep.mubr.bf16.mxu0 0
      %1450 = vmatmul.mubr.bf16.gmra.mrb[0].mxu0 %v868
      %v1451 = vpop.f32.mrb[0].mxu0
      %v1452 = vadd.f32 0.0, %v1451
      %v1453 = vpop.f32.mrb[0].mxu0
      %v1454 = vadd.f32 0.0, %v1453
      %v1455 = vpop.f32.mrb[0].mxu0
      %v1456 = vadd.f32 0.0, %v1455
      %v1457 = vpop.f32.mrb[0].mxu0
      %v1458 = vadd.f32 0.0, %v1457
      %1459 = vmatprep.mubr.bf16.mxu0 0
      %1460 = vmatmul.mubr.bf16.gmra.mrb[0].mxu0 %v869
      %v1461 = vpop.f32.mrb[0].mxu0
      %v1462 = vadd.f32 0.0, %v1461
      %v1463 = vpop.f32.mrb[0].mxu0
      %v1464 = vadd.f32 0.0, %v1463
      %v1465 = vpop.f32.mrb[0].mxu0
      %v1466 = vadd.f32 0.0, %v1465
      %v1467 = vpop.f32.mrb[0].mxu0
      %v1468 = vadd.f32 0.0, %v1467
      %1469 = vmatprep.mubr.bf16.mxu0 0
      %1470 = vmatmul.mubr.bf16.gmra.mrb[0].mxu0 %v870
      %v1471 = vpop.f32.mrb[0].mxu0
      %v1472 = vadd.f32 0.0, %v1471
      %v1473 = vpop.f32.mrb[0].mxu0
      %v1474 = vadd.f32 0.0, %v1473
      %v1475 = vpop.f32.mrb[0].mxu0
      %v1476 = vadd.f32 0.0, %v1475
      %v1477 = vpop.f32.mrb[0].mxu0
      %v1478 = vadd.f32 0.0, %v1477
      %1479 = vmatprep.mubr.bf16.mxu0 0
      %1480 = vmatmul.mubr.bf16.gmra.mrb[0].mxu0 %v871
      %v1481 = vpop.f32.mrb[0].mxu0
      %v1482 = vadd.f32 0.0, %v1481
      %v1483 = vpop.f32.mrb[0].mxu0
      %v1484 = vadd.f32 0.0, %v1483
      %v1485 = vpop.f32.mrb[0].mxu0
      %v1486 = vadd.f32 0.0, %v1485
      %v1487 = vpop.f32.mrb[0].mxu0
      %v1488 = vadd.f32 0.0, %v1487
      %1489 = vmatprep.mubr.bf16.mxu0 0
      %1490 = vmatmul.mubr.bf16.gmra.mrb[0].mxu0 %v872
      %v1491 = vpop.f32.mrb[0].mxu0
      %v1492 = vadd.f32 0.0, %v1491
      %v1493 = vpop.f32.mrb[0].mxu0
      %v1494 = vadd.f32 0.0, %v1493
      %v1495 = vpop.f32.mrb[0].mxu0
      %v1496 = vadd.f32 0.0, %v1495
      %v1497 = vpop.f32.mrb[0].mxu0
      %v1498 = vadd.f32 0.0, %v1497
      %1499 = vmatprep.mubr.bf16.mxu0 0
      %1500 = vmatmul.mubr.bf16.gmra.mrb[0].mxu0 %v873
      %v1501 = vpop.f32.mrb[0].mxu0
      %v1502 = vadd.f32 0.0, %v1501
      %v1503 = vpop.f32.mrb[0].mxu0
      %v1504 = vadd.f32 0.0, %v1503
      %v1505 = vpop.f32.mrb[0].mxu0
      %v1506 = vadd.f32 0.0, %v1505
      %v1507 = vpop.f32.mrb[0].mxu0
      %v1508 = vadd.f32 0.0, %v1507
      %1509 = vmatprep.mubr.bf16.mxu0 0
      %1510 = vmatmul.mubr.bf16.gmra.mrb[0].mxu0 %v874
      %v1511 = vpop.f32.mrb[0].mxu0
      %v1512 = vadd.f32 0.0, %v1511
      %v1513 = vpop.f32.mrb[0].mxu0
      %v1514 = vadd.f32 0.0, %v1513
      %v1515 = vpop.f32.mrb[0].mxu0
      %v1516 = vadd.f32 0.0, %v1515
      %v1517 = vpop.f32.mrb[0].mxu0
      %v1518 = vadd.f32 0.0, %v1517
      %1519 = vmatprep.mubr.bf16.mxu0 0
      %1520 = vmatmul.mubr.bf16.gmra.mrb[0].mxu0 %v875
      %v1521 = vpop.f32.mrb[0].mxu0
      %v1522 = vadd.f32 0.0, %v1521
      %v1523 = vpop.f32.mrb[0].mxu0
      %v1524 = vadd.f32 0.0, %v1523
      %v1525 = vpop.f32.mrb[0].mxu0
      %v1526 = vadd.f32 0.0, %v1525
      %v1527 = vpop.f32.mrb[0].mxu0
      %v1528 = vadd.f32 0.0, %v1527
      %1529 = vmatprep.mubr.bf16.mxu0 0
      %1530 = vmatmul.mubr.bf16.gmra.mrb[0].mxu0 %v876
      %v1531 = vpop.f32.mrb[0].mxu0
      %v1532 = vadd.f32 0.0, %v1531
      %v1533 = vpop.f32.mrb[0].mxu0
      %v1534 = vadd.f32 0.0, %v1533
      %v1535 = vpop.f32.mrb[0].mxu0
      %v1536 = vadd.f32 0.0, %v1535
      %v1537 = vpop.f32.mrb[0].mxu0
      %v1538 = vadd.f32 0.0, %v1537
      %1539 = vmatprep.mubr.bf16.mxu0 0
      %1540 = vmatmul.mubr.bf16.gmra.mrb[0].mxu0 %v877
      %v1541 = vpop.f32.mrb[0].mxu0
      %v1542 = vadd.f32 0.0, %v1541
      %v1543 = vpop.f32.mrb[0].mxu0
      %v1544 = vadd.f32 0.0, %v1543
      %v1545 = vpop.f32.mrb[0].mxu0
      %v1546 = vadd.f32 0.0, %v1545
      %v1547 = vpop.f32.mrb[0].mxu0
      %v1548 = vadd.f32 0.0, %v1547
      %1549 = vmatprep.mubr.bf16.mxu0 0
      %1550 = vmatmul.mubr.bf16.gmra.mrb[0].mxu0 %v878
      %v1551 = vpop.f32.mrb[0].mxu0
      %v1552 = vadd.f32 0.0, %v1551
      %v1553 = vpop.f32.mrb[0].mxu0
      %v1554 = vadd.f32 0.0, %v1553
      %v1555 = vpop.f32.mrb[0].mxu0
      %v1556 = vadd.f32 0.0, %v1555
      %v1557 = vpop.f32.mrb[0].mxu0
      %v1558 = vadd.f32 0.0, %v1557
      %1559 = vmatprep.mubr.bf16.mxu0 0
      %1560 = vmatmul.mubr.bf16.gmra.mrb[0].mxu0 %v879
      %v1561 = vpop.f32.mrb[0].mxu0
      %v1562 = vadd.f32 0.0, %v1561
      %v1563 = vpop.f32.mrb[0].mxu0
      %v1564 = vadd.f32 0.0, %v1563
      %v1565 = vpop.f32.mrb[0].mxu0
      %v1566 = vadd.f32 0.0, %v1565
      %v1567 = vpop.f32.mrb[0].mxu0
      %v1568 = vadd.f32 0.0, %v1567
      %1569 = vmatprep.mubr.bf16.mxu0 0
      %1570 = vmatmul.mubr.bf16.gmra.mrb[0].mxu0 %v880
      %v1571 = vpop.f32.mrb[0].mxu0
      %v1572 = vadd.f32 0.0, %v1571
      %v1573 = vpop.f32.mrb[0].mxu0
      %v1574 = vadd.f32 0.0, %v1573
      %v1575 = vpop.f32.mrb[0].mxu0
      %v1576 = vadd.f32 0.0, %v1575
      %v1577 = vpop.f32.mrb[0].mxu0
      %v1578 = vadd.f32 0.0, %v1577
      %1579 = vmatprep.mubr.bf16.mxu0 0
      %1580 = vmatmul.mubr.bf16.gmra.mrb[0].mxu0 %v881
      %v1581 = vpop.f32.mrb[0].mxu0
      %v1582 = vadd.f32 0.0, %v1581
      %v1583 = vpop.f32.mrb[0].mxu0
      %v1584 = vadd.f32 0.0, %v1583
      %v1585 = vpop.f32.mrb[0].mxu0
      %v1586 = vadd.f32 0.0, %v1585
      %v1587 = vpop.f32.mrb[0].mxu0
      %v1588 = vadd.f32 0.0, %v1587
      %1589 = vmatprep.mubr.bf16.mxu0 0
      %1590 = vmatmul.mubr.bf16.gmra.mrb[0].mxu0 %v882
      %v1591 = vpop.f32.mrb[0].mxu0
      %v1592 = vadd.f32 0.0, %v1591
      %v1593 = vpop.f32.mrb[0].mxu0
      %v1594 = vadd.f32 0.0, %v1593
      %v1595 = vpop.f32.mrb[0].mxu0
      %v1596 = vadd.f32 0.0, %v1595
      %v1597 = vpop.f32.mrb[0].mxu0
      %v1598 = vadd.f32 0.0, %v1597
      %1599 = vmatprep.mubr.bf16.mxu0 0
      %1600 = vmatmul.mubr.bf16.gmra.mrb[0].mxu0 %v883
      %v1601 = vpop.f32.mrb[0].mxu0
      %v1602 = vadd.f32 0.0, %v1601
      %v1603 = vpop.f32.mrb[0].mxu0
      %v1604 = vadd.f32 0.0, %v1603
      %v1605 = vpop.f32.mrb[0].mxu0
      %v1606 = vadd.f32 0.0, %v1605
      %v1607 = vpop.f32.mrb[0].mxu0
      %v1608 = vadd.f32 0.0, %v1607
      %1609 = vmatprep.mubr.bf16.mxu0 0
      %1610 = vmatmul.mubr.bf16.gmra.mrb[0].mxu0 %v884
      %v1611 = vpop.f32.mrb[0].mxu0
      %v1612 = vadd.f32 0.0, %v1611
      %v1613 = vpop.f32.mrb[0].mxu0
      %v1614 = vadd.f32 0.0, %v1613
      %v1615 = vpop.f32.mrb[0].mxu0
      %v1616 = vadd.f32 0.0, %v1615
      %v1617 = vpop.f32.mrb[0].mxu0
      %v1618 = vadd.f32 0.0, %v1617
      %1619 = vmatprep.mubr.bf16.mxu0 0
      %1620 = vmatmul.mubr.bf16.gmra.mrb[0].mxu0 %v885
      %v1621 = vpop.f32.mrb[0].mxu0
      %v1622 = vadd.f32 0.0, %v1621
      %v1623 = vpop.f32.mrb[0].mxu0
      %v1624 = vadd.f32 0.0, %v1623
      %v1625 = vpop.f32.mrb[0].mxu0
      %v1626 = vadd.f32 0.0, %v1625
      %v1627 = vpop.f32.mrb[0].mxu0
      %v1628 = vadd.f32 0.0, %v1627
      %1629 = vmatprep.mubr.bf16.mxu0 0
      %1630 = vmatmul.mubr.bf16.gmra.mrb[0].mxu0 %v886
      %v1631 = vpop.f32.mrb[0].mxu0
      %v1632 = vadd.f32 0.0, %v1631
      %v1633 = vpop.f32.mrb[0].mxu0
      %v1634 = vadd.f32 0.0, %v1633
      %v1635 = vpop.f32.mrb[0].mxu0
      %v1636 = vadd.f32 0.0, %v1635
      %v1637 = vpop.f32.mrb[0].mxu0
      %v1638 = vadd.f32 0.0, %v1637
      %1639 = vmatprep.mubr.bf16.mxu0 0
      %1640 = vmatmul.mubr.bf16.gmra.mrb[0].mxu0 %v887
      %v1641 = vpop.f32.mrb[0].mxu0
      %v1642 = vadd.f32 0.0, %v1641
      %v1643 = vpop.f32.mrb[0].mxu0
      %v1644 = vadd.f32 0.0, %v1643
      %v1645 = vpop.f32.mrb[0].mxu0
      %v1646 = vadd.f32 0.0, %v1645
      %v1647 = vpop.f32.mrb[0].mxu0
      %v1648 = vadd.f32 0.0, %v1647
      %1649 = vmatprep.mubr.bf16.mxu0 0
      %1650 = vmatmul.mubr.bf16.gmra.mrb[0].mxu0 %v888
      %v1651 = vpop.f32.mrb[0].mxu0
      %v1652 = vadd.f32 0.0, %v1651
      %v1653 = vpop.f32.mrb[0].mxu0
      %v1654 = vadd.f32 0.0, %v1653
      %v1655 = vpop.f32.mrb[0].mxu0
      %v1656 = vadd.f32 0.0, %v1655
      %v1657 = vpop.f32.mrb[0].mxu0
      %v1658 = vadd.f32 0.0, %v1657
      %1659 = vmatprep.mubr.bf16.mxu0 0
      %1660 = vmatmul.mubr.bf16.gmra.mrb[0].mxu0 %v889
      %v1661 = vpop.f32.mrb[0].mxu0
      %v1662 = vadd.f32 0.0, %v1661
      %v1663 = vpop.f32.mrb[0].mxu0
      %v1664 = vadd.f32 0.0, %v1663
      %v1665 = vpop.f32.mrb[0].mxu0
      %v1666 = vadd.f32 0.0, %v1665
      %v1667 = vpop.f32.mrb[0].mxu0
      %v1668 = vadd.f32 0.0, %v1667
      %1669 = vmatprep.mubr.bf16.mxu0 0
      %1670 = vmatmul.mubr.bf16.gmra.mrb[0].mxu0 %v890
      %v1671 = vpop.f32.mrb[0].mxu0
      %v1672 = vadd.f32 0.0, %v1671
      %v1673 = vpop.f32.mrb[0].mxu0
      %v1674 = vadd.f32 0.0, %v1673
      %v1675 = vpop.f32.mrb[0].mxu0
      %v1676 = vadd.f32 0.0, %v1675
      %v1677 = vpop.f32.mrb[0].mxu0
      %v1678 = vadd.f32 0.0, %v1677
      %1679 = vmatprep.mubr.bf16.mxu0 0
      %1680 = vmatmul.mubr.bf16.gmra.mrb[0].mxu0 %v891
      %v1681 = vpop.f32.mrb[0].mxu0
      %v1682 = vadd.f32 0.0, %v1681
      %v1683 = vpop.f32.mrb[0].mxu0
      %v1684 = vadd.f32 0.0, %v1683
      %v1685 = vpop.f32.mrb[0].mxu0
      %v1686 = vadd.f32 0.0, %v1685
      %v1687 = vpop.f32.mrb[0].mxu0
      %v1688 = vadd.f32 0.0, %v1687
      %1689 = vmatprep.mubr.bf16.mxu0 0
      %1690 = vmatmul.mubr.bf16.gmra.mrb[0].mxu0 %v892
      %v1691 = vpop.f32.mrb[0].mxu0
      %v1692 = vadd.f32 0.0, %v1691
      %v1693 = vpop.f32.mrb[0].mxu0
      %v1694 = vadd.f32 0.0, %v1693
      %v1695 = vpop.f32.mrb[0].mxu0
      %v1696 = vadd.f32 0.0, %v1695
      %v1697 = vpop.f32.mrb[0].mxu0
      %v1698 = vadd.f32 0.0, %v1697
      %1699 = vmatprep.mubr.bf16.mxu0 0
      %1700 = vmatmul.mubr.bf16.gmra.mrb[0].mxu0 %v893
      %v1701 = vpop.f32.mrb[0].mxu0
      %v1702 = vadd.f32 0.0, %v1701
      %v1703 = vpop.f32.mrb[0].mxu0
      %v1704 = vadd.f32 0.0, %v1703
      %v1705 = vpop.f32.mrb[0].mxu0
      %v1706 = vadd.f32 0.0, %v1705
      %v1707 = vpop.f32.mrb[0].mxu0
      %v1708 = vadd.f32 0.0, %v1707
      %1709 = vmatprep.mubr.bf16.mxu0 0
      %1710 = vmatmul.mubr.bf16.gmra.mrb[0].mxu0 %v894
      %v1711 = vpop.f32.mrb[0].mxu0
      %v1712 = vadd.f32 0.0, %v1711
      %v1713 = vpop.f32.mrb[0].mxu0
      %v1714 = vadd.f32 0.0, %v1713
      %v1715 = vpop.f32.mrb[0].mxu0
      %v1716 = vadd.f32 0.0, %v1715
      %v1717 = vpop.f32.mrb[0].mxu0
      %v1718 = vadd.f32 0.0, %v1717
      %1719 = vmatprep.mubr.bf16.mxu0 0
      %1720 = vmatmul.mubr.bf16.gmra.mrb[0].mxu0 %v895
      %v1721 = vpop.f32.mrb[0].mxu0
      %v1722 = vadd.f32 0.0, %v1721
      %v1723 = vpop.f32.mrb[0].mxu0
      %v1724 = vadd.f32 0.0, %v1723
      %v1725 = vpop.f32.mrb[0].mxu0
      %v1726 = vadd.f32 0.0, %v1725
      %v1727 = vpop.f32.mrb[0].mxu0
      %v1728 = vadd.f32 0.0, %v1727
      %1729 = vmatprep.mubr.bf16.mxu0 0
      %1730 = vmatmul.mubr.bf16.gmra.mrb[0].mxu0 %v896
      %v1731 = vpop.f32.mrb[0].mxu0
      %v1732 = vadd.f32 0.0, %v1731
      %v1733 = vpop.f32.mrb[0].mxu0
      %v1734 = vadd.f32 0.0, %v1733
      %v1735 = vpop.f32.mrb[0].mxu0
      %v1736 = vadd.f32 0.0, %v1735
      %v1737 = vpop.f32.mrb[0].mxu0
      %v1738 = vadd.f32 0.0, %v1737
      %1739 = vmatprep.mubr.bf16.mxu0 0
      %1740 = vmatmul.mubr.bf16.gmra.mrb[0].mxu0 %v897
      %v1741 = vpop.f32.mrb[0].mxu0
      %v1742 = vadd.f32 0.0, %v1741
      %v1743 = vpop.f32.mrb[0].mxu0
      %v1744 = vadd.f32 0.0, %v1743
      %v1745 = vpop.f32.mrb[0].mxu0
      %v1746 = vadd.f32 0.0, %v1745
      %v1747 = vpop.f32.mrb[0].mxu0
      %v1748 = vadd.f32 0.0, %v1747
      %1749 = vmatprep.mubr.bf16.mxu0 0
      %1750 = vmatmul.mubr.bf16.gmra.mrb[0].mxu0 %v898
      %v1751 = vpop.f32.mrb[0].mxu0
      %v1752 = vadd.f32 0.0, %v1751
      %v1753 = vpop.f32.mrb[0].mxu0
      %v1754 = vadd.f32 0.0, %v1753
      %v1755 = vpop.f32.mrb[0].mxu0
      %v1756 = vadd.f32 0.0, %v1755
      %v1757 = vpop.f32.mrb[0].mxu0
      %v1758 = vadd.f32 0.0, %v1757
      %1759 = vmatprep.mubr.bf16.mxu0 0
      %1760 = vmatmul.mubr.bf16.gmra.mrb[0].mxu0 %v899
      %v1761 = vpop.f32.mrb[0].mxu0
      %v1762 = vadd.f32 0.0, %v1761
      %v1763 = vpop.f32.mrb[0].mxu0
      %v1764 = vadd.f32 0.0, %v1763
      %v1765 = vpop.f32.mrb[0].mxu0
      %v1766 = vadd.f32 0.0, %v1765
      %v1767 = vpop.f32.mrb[0].mxu0
      %v1768 = vadd.f32 0.0, %v1767
      %1769 = vmatprep.mubr.bf16.mxu0 0
      %1770 = vmatmul.mubr.bf16.gmra.mrb[0].mxu0 %v900
      %v1771 = vpop.f32.mrb[0].mxu0
      %v1772 = vadd.f32 0.0, %v1771
      %v1773 = vpop.f32.mrb[0].mxu0
      %v1774 = vadd.f32 0.0, %v1773
      %v1775 = vpop.f32.mrb[0].mxu0
      %v1776 = vadd.f32 0.0, %v1775
      %v1777 = vpop.f32.mrb[0].mxu0
      %v1778 = vadd.f32 0.0, %v1777
      %1779 = vmatprep.mubr.bf16.mxu0 0
      %1780 = vmatmul.mubr.bf16.gmra.mrb[0].mxu0 %v901
      %v1781 = vpop.f32.mrb[0].mxu0
      %v1782 = vadd.f32 0.0, %v1781
      %v1783 = vpop.f32.mrb[0].mxu0
      %v1784 = vadd.f32 0.0, %v1783
      %v1785 = vpop.f32.mrb[0].mxu0
      %v1786 = vadd.f32 0.0, %v1785
      %v1787 = vpop.f32.mrb[0].mxu0
      %v1788 = vadd.f32 0.0, %v1787
      %1789 = vmatprep.mubr.bf16.mxu0 0
      %1790 = vmatmul.mubr.bf16.gmra.mrb[0].mxu0 %v902
      %v1791 = vpop.f32.mrb[0].mxu0
      %v1792 = vadd.f32 0.0, %v1791
      %v1793 = vpop.f32.mrb[0].mxu0
      %v1794 = vadd.f32 0.0, %v1793
      %v1795 = vpop.f32.mrb[0].mxu0
      %v1796 = vadd.f32 0.0, %v1795
      %v1797 = vpop.f32.mrb[0].mxu0
      %v1798 = vadd.f32 0.0, %v1797
      %1799 = vmatprep.mubr.bf16.mxu0 0
      %1800 = vmatmul.mubr.bf16.gmra.mrb[0].mxu0 %v903
      %v1801 = vpop.f32.mrb[0].mxu0
      %v1802 = vadd.f32 0.0, %v1801
      %v1803 = vpop.f32.mrb[0].mxu0
      %v1804 = vadd.f32 0.0, %v1803
      %v1805 = vpop.f32.mrb[0].mxu0
      %v1806 = vadd.f32 0.0, %v1805
      %v1807 = vpop.f32.mrb[0].mxu0
      %v1808 = vadd.f32 0.0, %v1807
      %1809 = vmatprep.mubr.bf16.mxu0 0
      %1810 = vmatmul.mubr.bf16.gmra.mrb[0].mxu0 %v904
      %v1811 = vpop.f32.mrb[0].mxu0
      %v1812 = vadd.f32 0.0, %v1811
      %v1813 = vpop.f32.mrb[0].mxu0
      %v1814 = vadd.f32 0.0, %v1813
      %v1815 = vpop.f32.mrb[0].mxu0
      %v1816 = vadd.f32 0.0, %v1815
      %v1817 = vpop.f32.mrb[0].mxu0
      %v1818 = vadd.f32 0.0, %v1817
      %1819 = vmatprep.mubr.bf16.mxu0 0
      %1820 = vmatmul.mubr.bf16.gmra.mrb[0].mxu0 %v905
      %v1821 = vpop.f32.mrb[0].mxu0
      %v1822 = vadd.f32 0.0, %v1821
      %v1823 = vpop.f32.mrb[0].mxu0
      %v1824 = vadd.f32 0.0, %v1823
      %v1825 = vpop.f32.mrb[0].mxu0
      %v1826 = vadd.f32 0.0, %v1825
      %v1827 = vpop.f32.mrb[0].mxu0
      %v1828 = vadd.f32 0.0, %v1827
      %1829 = vmatprep.mubr.bf16.mxu0 0
      %1830 = vmatmul.mubr.bf16.gmra.mrb[0].mxu0 %v906
      %v1831 = vpop.f32.mrb[0].mxu0
      %v1832 = vadd.f32 0.0, %v1831
      %v1833 = vpop.f32.mrb[0].mxu0
      %v1834 = vadd.f32 0.0, %v1833
      %v1835 = vpop.f32.mrb[0].mxu0
      %v1836 = vadd.f32 0.0, %v1835
      %v1837 = vpop.f32.mrb[0].mxu0
      %v1838 = vadd.f32 0.0, %v1837
      %1839 = vmatprep.mubr.bf16.mxu0 0
      %1840 = vmatmul.mubr.bf16.gmra.mrb[0].mxu0 %v907
      %v1841 = vpop.f32.mrb[0].mxu0
      %v1842 = vadd.f32 0.0, %v1841
      %v1843 = vpop.f32.mrb[0].mxu0
      %v1844 = vadd.f32 0.0, %v1843
      %v1845 = vpop.f32.mrb[0].mxu0
      %v1846 = vadd.f32 0.0, %v1845
      %v1847 = vpop.f32.mrb[0].mxu0
      %v1848 = vadd.f32 0.0, %v1847
      %1849 = vmatprep.mubr.bf16.mxu0 0
      %1850 = vmatmul.mubr.bf16.gmra.mrb[0].mxu0 %v908
      %v1851 = vpop.f32.mrb[0].mxu0
      %v1852 = vadd.f32 0.0, %v1851
      %v1853 = vpop.f32.mrb[0].mxu0
      %v1854 = vadd.f32 0.0, %v1853
      %v1855 = vpop.f32.mrb[0].mxu0
      %v1856 = vadd.f32 0.0, %v1855
      %v1857 = vpop.f32.mrb[0].mxu0
      %v1858 = vadd.f32 0.0, %v1857
      %1859 = vmatprep.mubr.bf16.mxu0 0
      %1860 = vmatmul.mubr.bf16.gmra.mrb[0].mxu0 %v909
      %v1861 = vpop.f32.mrb[0].mxu0
      %v1862 = vadd.f32 0.0, %v1861
      %v1863 = vpop.f32.mrb[0].mxu0
      %v1864 = vadd.f32 0.0, %v1863
      %v1865 = vpop.f32.mrb[0].mxu0
      %v1866 = vadd.f32 0.0, %v1865
      %v1867 = vpop.f32.mrb[0].mxu0
      %v1868 = vadd.f32 0.0, %v1867
      %1869 = vmatprep.mubr.bf16.mxu0 0
      %1870 = vmatmul.mubr.bf16.gmra.mrb[0].mxu0 %v910
      %v1871 = vpop.f32.mrb[0].mxu0
      %v1872 = vadd.f32 0.0, %v1871
      %v1873 = vpop.f32.mrb[0].mxu0
      %v1874 = vadd.f32 0.0, %v1873
      %v1875 = vpop.f32.mrb[0].mxu0
      %v1876 = vadd.f32 0.0, %v1875
      %v1877 = vpop.f32.mrb[0].mxu0
      %v1878 = vadd.f32 0.0, %v1877
      %1879 = vmatprep.mubr.bf16.mxu0 0
      %1880 = vmatmul.mubr.bf16.gmra.mrb[0].mxu0 %v911
      %v1881 = vpop.f32.mrb[0].mxu0
      %v1882 = vadd.f32 0.0, %v1881
      %v1883 = vpop.f32.mrb[0].mxu0
      %v1884 = vadd.f32 0.0, %v1883
      %v1885 = vpop.f32.mrb[0].mxu0
      %v1886 = vadd.f32 0.0, %v1885
      %v1887 = vpop.f32.mrb[0].mxu0
      %v1888 = vadd.f32 0.0, %v1887
      %1889 = vmatprep.mubr.bf16.mxu0 0
      %1890 = vmatmul.mubr.bf16.gmra.mrb[0].mxu0 %v912
      %v1891 = vpop.f32.mrb[0].mxu0
      %v1892 = vadd.f32 0.0, %v1891
      %v1893 = vpop.f32.mrb[0].mxu0
      %v1894 = vadd.f32 0.0, %v1893
      %v1895 = vpop.f32.mrb[0].mxu0
      %v1896 = vadd.f32 0.0, %v1895
      %v1897 = vpop.f32.mrb[0].mxu0
      %v1898 = vadd.f32 0.0, %v1897
      %1899 = vmatprep.mubr.bf16.mxu0 0
      %1900 = vmatmul.mubr.bf16.gmra.mrb[0].mxu0 %v913
      %v1901 = vpop.f32.mrb[0].mxu0
      %v1902 = vadd.f32 0.0, %v1901
      %v1903 = vpop.f32.mrb[0].mxu0
      %v1904 = vadd.f32 0.0, %v1903
      %v1905 = vpop.f32.mrb[0].mxu0
      %v1906 = vadd.f32 0.0, %v1905
      %v1907 = vpop.f32.mrb[0].mxu0
      %v1908 = vadd.f32 0.0, %v1907
      %1909 = vmatprep.mubr.bf16.mxu0 0
      %1910 = vmatmul.mubr.bf16.gmra.mrb[0].mxu0 %v914
      %v1911 = vpop.f32.mrb[0].mxu0
      %v1912 = vadd.f32 0.0, %v1911
      %v1913 = vpop.f32.mrb[0].mxu0
      %v1914 = vadd.f32 0.0, %v1913
      %v1915 = vpop.f32.mrb[0].mxu0
      %v1916 = vadd.f32 0.0, %v1915
      %v1917 = vpop.f32.mrb[0].mxu0
      %v1918 = vadd.f32 0.0, %v1917
      %1919 = vmatprep.mubr.bf16.mxu0 0
      %1920 = vmatmul.mubr.bf16.gmra.mrb[0].mxu0 %v915
      %v1921 = vpop.f32.mrb[0].mxu0
      %v1922 = vadd.f32 0.0, %v1921
      %v1923 = vpop.f32.mrb[0].mxu0
      %v1924 = vadd.f32 0.0, %v1923
      %v1925 = vpop.f32.mrb[0].mxu0
      %v1926 = vadd.f32 0.0, %v1925
      %v1927 = vpop.f32.mrb[0].mxu0
      %v1928 = vadd.f32 0.0, %v1927
      %1929 = vmatprep.mubr.bf16.mxu0 0
      %1930 = vmatmul.mubr.bf16.gmra.mrb[0].mxu0 %v916
      %v1931 = vpop.f32.mrb[0].mxu0
      %v1932 = vadd.f32 0.0, %v1931
      %v1933 = vpop.f32.mrb[0].mxu0
      %v1934 = vadd.f32 0.0, %v1933
      %v1935 = vpop.f32.mrb[0].mxu0
      %v1936 = vadd.f32 0.0, %v1935
      %v1937 = vpop.f32.mrb[0].mxu0
      %v1938 = vadd.f32 0.0, %v1937
      %1939 = vmatprep.mubr.bf16.mxu0 0
      %1940 = vmatmul.mubr.bf16.gmra.mrb[0].mxu0 %v917
      %v1941 = vpop.f32.mrb[0].mxu0
      %v1942 = vadd.f32 0.0, %v1941
      %v1943 = vpop.f32.mrb[0].mxu0
      %v1944 = vadd.f32 0.0, %v1943
      %v1945 = vpop.f32.mrb[0].mxu0
      %v1946 = vadd.f32 0.0, %v1945
      %v1947 = vpop.f32.mrb[0].mxu0
      %v1948 = vadd.f32 0.0, %v1947
      %1949 = vmatprep.mubr.bf16.mxu0 0
      %1950 = vmatmul.mubr.bf16.gmra.mrb[0].mxu0 %v918
      %v1951 = vpop.f32.mrb[0].mxu0
      %v1952 = vadd.f32 0.0, %v1951
      %v1953 = vpop.f32.mrb[0].mxu0
      %v1954 = vadd.f32 0.0, %v1953
      %v1955 = vpop.f32.mrb[0].mxu0
      %v1956 = vadd.f32 0.0, %v1955
      %v1957 = vpop.f32.mrb[0].mxu0
      %v1958 = vadd.f32 0.0, %v1957
      %1959 = vmatprep.mubr.bf16.mxu0 0
      %1960 = vmatmul.mubr.bf16.gmra.mrb[0].mxu0 %v919
      %v1961 = vpop.f32.mrb[0].mxu0
      %v1962 = vadd.f32 0.0, %v1961
      %v1963 = vpop.f32.mrb[0].mxu0
      %v1964 = vadd.f32 0.0, %v1963
      %v1965 = vpop.f32.mrb[0].mxu0
      %v1966 = vadd.f32 0.0, %v1965
      %v1967 = vpop.f32.mrb[0].mxu0
      %v1968 = vadd.f32 0.0, %v1967
      %1969 = vmatprep.mubr.bf16.mxu0 0
      %1970 = vmatmul.mubr.bf16.gmra.mrb[0].mxu0 %v920
      %v1971 = vpop.f32.mrb[0].mxu0
      %v1972 = vadd.f32 0.0, %v1971
      %v1973 = vpop.f32.mrb[0].mxu0
      %v1974 = vadd.f32 0.0, %v1973
      %v1975 = vpop.f32.mrb[0].mxu0
      %v1976 = vadd.f32 0.0, %v1975
      %v1977 = vpop.f32.mrb[0].mxu0
      %v1978 = vadd.f32 0.0, %v1977
      %1979 = vmatprep.mubr.bf16.mxu0 0
      %1980 = vmatmul.mubr.bf16.gmra.mrb[0].mxu0 %v921
      %v1981 = vpop.f32.mrb[0].mxu0
      %v1982 = vadd.f32 0.0, %v1981
      %v1983 = vpop.f32.mrb[0].mxu0
      %v1984 = vadd.f32 0.0, %v1983
      %v1985 = vpop.f32.mrb[0].mxu0
      %v1986 = vadd.f32 0.0, %v1985
      %v1987 = vpop.f32.mrb[0].mxu0
      %v1988 = vadd.f32 0.0, %v1987
      %1989 = vmatprep.mubr.bf16.mxu0 0
      %1990 = vmatmul.mubr.bf16.gmra.mrb[0].mxu0 %v922
      %v1991 = vpop.f32.mrb[0].mxu0
      %v1992 = vadd.f32 0.0, %v1991
      %v1993 = vpop.f32.mrb[0].mxu0
      %v1994 = vadd.f32 0.0, %v1993
      %v1995 = vpop.f32.mrb[0].mxu0
      %v1996 = vadd.f32 0.0, %v1995
      %v1997 = vpop.f32.mrb[0].mxu0
      %v1998 = vadd.f32 0.0, %v1997
      %1999 = vmatprep.mubr.bf16.mxu0 0
      %2000 = vmatmul.mubr.bf16.gmra.mrb[0].mxu0 %v923
      %v2001 = vpop.f32.mrb[0].mxu0
      %v2002 = vadd.f32 0.0, %v2001
      %v2003 = vpop.f32.mrb[0].mxu0
      %v2004 = vadd.f32 0.0, %v2003
      %v2005 = vpop.f32.mrb[0].mxu0
      %v2006 = vadd.f32 0.0, %v2005
      %v2007 = vpop.f32.mrb[0].mxu0
      %v2008 = vadd.f32 0.0, %v2007
      %2009 = vmatprep.mubr.bf16.mxu0 0
      %2010 = vmatmul.mubr.bf16.gmra.mrb[0].mxu0 %v924
      %v2011 = vpop.f32.mrb[0].mxu0
      %v2012 = vadd.f32 0.0, %v2011
      %v2013 = vpop.f32.mrb[0].mxu0
      %v2014 = vadd.f32 0.0, %v2013
      %v2015 = vpop.f32.mrb[0].mxu0
      %v2016 = vadd.f32 0.0, %v2015
      %v2017 = vpop.f32.mrb[0].mxu0
      %v2018 = vadd.f32 0.0, %v2017
      %2019 = vmatprep.mubr.bf16.mxu0 0
      %2020 = vmatmul.mubr.bf16.gmra.mrb[0].mxu0 %v925
      %v2021 = vpop.f32.mrb[0].mxu0
      %v2022 = vadd.f32 0.0, %v2021
      %v2023 = vpop.f32.mrb[0].mxu0
      %v2024 = vadd.f32 0.0, %v2023
      %v2025 = vpop.f32.mrb[0].mxu0
      %v2026 = vadd.f32 0.0, %v2025
      %v2027 = vpop.f32.mrb[0].mxu0
      %v2028 = vadd.f32 0.0, %v2027
      %2029 = vmatprep.mubr.bf16.mxu0 0
      %2030 = vmatmul.mubr.bf16.gmra.mrb[0].mxu0 %v926
      %v2031 = vpop.f32.mrb[0].mxu0
      %v2032 = vadd.f32 0.0, %v2031
      %v2033 = vpop.f32.mrb[0].mxu0
      %v2034 = vadd.f32 0.0, %v2033
      %v2035 = vpop.f32.mrb[0].mxu0
      %v2036 = vadd.f32 0.0, %v2035
      %v2037 = vpop.f32.mrb[0].mxu0
      %v2038 = vadd.f32 0.0, %v2037
      %2039 = vmatprep.mubr.bf16.mxu0 0
      %2040 = vmatmul.mubr.bf16.gmra.mrb[0].mxu0 %v927
      %v2041 = vpop.f32.mrb[0].mxu0
      %v2042 = vadd.f32 0.0, %v2041
      %v2043 = vpop.f32.mrb[0].mxu0
      %v2044 = vadd.f32 0.0, %v2043
      %v2045 = vpop.f32.mrb[0].mxu0
      %v2046 = vadd.f32 0.0, %v2045
      %v2047 = vpop.f32.mrb[0].mxu0
      %v2048 = vadd.f32 0.0, %v2047
      %2049 = vmatprep.mubr.bf16.mxu0 0
      %2050 = vmatmul.mubr.bf16.gmra.mrb[0].mxu0 %v928
      %v2051 = vpop.f32.mrb[0].mxu0
      %v2052 = vadd.f32 0.0, %v2051
      %v2053 = vpop.f32.mrb[0].mxu0
      %v2054 = vadd.f32 0.0, %v2053
      %v2055 = vpop.f32.mrb[0].mxu0
      %v2056 = vadd.f32 0.0, %v2055
      %v2057 = vpop.f32.mrb[0].mxu0
      %v2058 = vadd.f32 0.0, %v2057
      %2059 = vmatprep.mubr.bf16.mxu0 0
      %2060 = vmatmul.mubr.bf16.gmra.mrb[0].mxu0 %v929
      %v2061 = vpop.f32.mrb[0].mxu0
      %v2062 = vadd.f32 0.0, %v2061
      %v2063 = vpop.f32.mrb[0].mxu0
      %v2064 = vadd.f32 0.0, %v2063
      %v2065 = vpop.f32.mrb[0].mxu0
      %v2066 = vadd.f32 0.0, %v2065
      %v2067 = vpop.f32.mrb[0].mxu0
      %v2068 = vadd.f32 0.0, %v2067
      %2069 = vmatprep.mubr.bf16.mxu0 0
      %2070 = vmatmul.mubr.bf16.gmra.mrb[0].mxu0 %v930
      %v2071 = vpop.f32.mrb[0].mxu0
      %v2072 = vadd.f32 0.0, %v2071
      %v2073 = vpop.f32.mrb[0].mxu0
      %v2074 = vadd.f32 0.0, %v2073
      %v2075 = vpop.f32.mrb[0].mxu0
      %v2076 = vadd.f32 0.0, %v2075
      %v2077 = vpop.f32.mrb[0].mxu0
      %v2078 = vadd.f32 0.0, %v2077
      %2079 = vmatprep.mubr.bf16.mxu0 0
      %2080 = vmatmul.mubr.bf16.gmra.mrb[0].mxu0 %v931
      %v2081 = vpop.f32.mrb[0].mxu0
      %v2082 = vadd.f32 0.0, %v2081
      %v2083 = vpop.f32.mrb[0].mxu0
      %v2084 = vadd.f32 0.0, %v2083
      %v2085 = vpop.f32.mrb[0].mxu0
      %v2086 = vadd.f32 0.0, %v2085
      %v2087 = vpop.f32.mrb[0].mxu0
      %v2088 = vadd.f32 0.0, %v2087
      %2089 = vmatprep.mubr.bf16.mxu0 0
      %2090 = vmatmul.mubr.bf16.gmra.mrb[0].mxu0 %v932
      %v2091 = vpop.f32.mrb[0].mxu0
      %v2092 = vadd.f32 0.0, %v2091
      %v2093 = vpop.f32.mrb[0].mxu0
      %v2094 = vadd.f32 0.0, %v2093
      %v2095 = vpop.f32.mrb[0].mxu0
      %v2096 = vadd.f32 0.0, %v2095
      %v2097 = vpop.f32.mrb[0].mxu0
      %v2098 = vadd.f32 0.0, %v2097
      %2099 = vmatprep.mubr.bf16.mxu0 0
      %2100 = vmatmul.mubr.bf16.gmra.mrb[0].mxu0 %v933
      %v2101 = vpop.f32.mrb[0].mxu0
      %v2102 = vadd.f32 0.0, %v2101
      %v2103 = vpop.f32.mrb[0].mxu0
      %v2104 = vadd.f32 0.0, %v2103
      %v2105 = vpop.f32.mrb[0].mxu0
      %v2106 = vadd.f32 0.0, %v2105
      %v2107 = vpop.f32.mrb[0].mxu0
      %v2108 = vadd.f32 0.0, %v2107
      %2109 = vmatprep.mubr.bf16.mxu0 0
      %2110 = vmatmul.mubr.bf16.gmra.mrb[0].mxu0 %v934
      %v2111 = vpop.f32.mrb[0].mxu0
      %v2112 = vadd.f32 0.0, %v2111
      %v2113 = vpop.f32.mrb[0].mxu0
      %v2114 = vadd.f32 0.0, %v2113
      %v2115 = vpop.f32.mrb[0].mxu0
      %v2116 = vadd.f32 0.0, %v2115
      %v2117 = vpop.f32.mrb[0].mxu0
      %v2118 = vadd.f32 0.0, %v2117
      %2119 = vmatprep.mubr.bf16.mxu0 0
      %2120 = vmatmul.mubr.bf16.gmra.mrb[0].mxu0 %v935
      %v2121 = vpop.f32.mrb[0].mxu0
      %v2122 = vadd.f32 0.0, %v2121
      %v2123 = vpop.f32.mrb[0].mxu0
      %v2124 = vadd.f32 0.0, %v2123
      %v2125 = vpop.f32.mrb[0].mxu0
      %v2126 = vadd.f32 0.0, %v2125
      %v2127 = vpop.f32.mrb[0].mxu0
      %v2128 = vadd.f32 0.0, %v2127
      %2129 = vmatprep.mubr.bf16.mxu0 0
      %2130 = vmatmul.mubr.bf16.gmra.mrb[0].mxu0 %v936
      %v2131 = vpop.f32.mrb[0].mxu0
      %v2132 = vadd.f32 0.0, %v2131
      %v2133 = vpop.f32.mrb[0].mxu0
      %v2134 = vadd.f32 0.0, %v2133
      %v2135 = vpop.f32.mrb[0].mxu0
      %v2136 = vadd.f32 0.0, %v2135
      %v2137 = vpop.f32.mrb[0].mxu0
      %v2138 = vadd.f32 0.0, %v2137
      %2139 = vmatprep.mubr.bf16.mxu0 0
      %2140 = vmatmul.mubr.bf16.gmra.mrb[0].mxu0 %v937
      %v2141 = vpop.f32.mrb[0].mxu0
      %v2142 = vadd.f32 0.0, %v2141
      %v2143 = vpop.f32.mrb[0].mxu0
      %v2144 = vadd.f32 0.0, %v2143
      %v2145 = vpop.f32.mrb[0].mxu0
      %v2146 = vadd.f32 0.0, %v2145
      %v2147 = vpop.f32.mrb[0].mxu0
      %v2148 = vadd.f32 0.0, %v2147
      %2149 = vmatprep.mubr.bf16.mxu0 0
      %2150 = vmatmul.mubr.bf16.gmra.mrb[0].mxu0 %v938
      %v2151 = vpop.f32.mrb[0].mxu0
      %v2152 = vadd.f32 0.0, %v2151
      %v2153 = vpop.f32.mrb[0].mxu0
      %v2154 = vadd.f32 0.0, %v2153
      %v2155 = vpop.f32.mrb[0].mxu0
      %v2156 = vadd.f32 0.0, %v2155
      %v2157 = vpop.f32.mrb[0].mxu0
      %v2158 = vadd.f32 0.0, %v2157
      %2159 = vmatprep.mubr.bf16.mxu0 0
      %2160 = vmatmul.mubr.bf16.gmra.mrb[0].mxu0 %v939
      %v2161 = vpop.f32.mrb[0].mxu0
      %v2162 = vadd.f32 0.0, %v2161
      %v2163 = vpop.f32.mrb[0].mxu0
      %v2164 = vadd.f32 0.0, %v2163
      %v2165 = vpop.f32.mrb[0].mxu0
      %v2166 = vadd.f32 0.0, %v2165
      %v2167 = vpop.f32.mrb[0].mxu0
      %v2168 = vadd.f32 0.0, %v2167
      %2169 = vmatprep.mubr.bf16.mxu0 0
      %2170 = vmatmul.mubr.bf16.gmra.mrb[0].mxu0 %v940
      %v2171 = vpop.f32.mrb[0].mxu0
      %v2172 = vadd.f32 0.0, %v2171
      %v2173 = vpop.f32.mrb[0].mxu0
      %v2174 = vadd.f32 0.0, %v2173
      %v2175 = vpop.f32.mrb[0].mxu0
      %v2176 = vadd.f32 0.0, %v2175
      %v2177 = vpop.f32.mrb[0].mxu0
      %v2178 = vadd.f32 0.0, %v2177
      %2179 = vmatprep.mubr.bf16.mxu0 0
      %2180 = vmatmul.mubr.bf16.gmra.mrb[0].mxu0 %v941
      %v2181 = vpop.f32.mrb[0].mxu0
      %v2182 = vadd.f32 0.0, %v2181
      %v2183 = vpop.f32.mrb[0].mxu0
      %v2184 = vadd.f32 0.0, %v2183
      %v2185 = vpop.f32.mrb[0].mxu0
      %v2186 = vadd.f32 0.0, %v2185
      %v2187 = vpop.f32.mrb[0].mxu0
      %v2188 = vadd.f32 0.0, %v2187
      %2189 = vmatprep.mubr.bf16.mxu0 0
      %2190 = vmatmul.mubr.bf16.gmra.mrb[0].mxu0 %v942
      %v2191 = vpop.f32.mrb[0].mxu0
      %v2192 = vadd.f32 0.0, %v2191
      %v2193 = vpop.f32.mrb[0].mxu0
      %v2194 = vadd.f32 0.0, %v2193
      %v2195 = vpop.f32.mrb[0].mxu0
      %v2196 = vadd.f32 0.0, %v2195
      %v2197 = vpop.f32.mrb[0].mxu0
      %v2198 = vadd.f32 0.0, %v2197
      %2199 = vdwg.mxu0
      %v2200 = vmax.f32 %v1162, 0.0
      %v2201 = vmax.f32 %v1164, 0.0
      %v2202 = vmax.f32 %v1166, 0.0
      %v2203 = vmax.f32 %v1168, 0.0
      %v2204 = vmax.f32 %v1172, 0.0
      %v2205 = vmax.f32 %v1174, 0.0
      %v2206 = vmax.f32 %v1176, 0.0
      %v2207 = vmax.f32 %v1178, 0.0
      %v2208 = vmax.f32 %v1182, 0.0
      %v2209 = vmax.f32 %v1184, 0.0
      %v2210 = vmax.f32 %v1186, 0.0
      %v2211 = vmax.f32 %v1188, 0.0
      %v2212 = vmax.f32 %v1192, 0.0
      %v2213 = vmax.f32 %v1194, 0.0
      %v2214 = vmax.f32 %v1196, 0.0
      %v2215 = vmax.f32 %v1198, 0.0
      %v2216 = vmax.f32 %v1202, 0.0
      %v2217 = vmax.f32 %v1204, 0.0
      %v2218 = vmax.f32 %v1206, 0.0
      %v2219 = vmax.f32 %v1208, 0.0
      %v2220 = vmax.f32 %v1212, 0.0
      %v2221 = vmax.f32 %v1214, 0.0
      %v2222 = vmax.f32 %v1216, 0.0
      %v2223 = vmax.f32 %v1218, 0.0
      %v2224 = vmax.f32 %v1222, 0.0
      %v2225 = vmax.f32 %v1224, 0.0
      %v2226 = vmax.f32 %v1226, 0.0
      %v2227 = vmax.f32 %v1228, 0.0
      %v2228 = vmax.f32 %v1232, 0.0
      %v2229 = vmax.f32 %v1234, 0.0
      %v2230 = vmax.f32 %v1236, 0.0
      %v2231 = vmax.f32 %v1238, 0.0
      %v2232 = vmax.f32 %v1242, 0.0
      %v2233 = vmax.f32 %v1244, 0.0
      %v2234 = vmax.f32 %v1246, 0.0
      %v2235 = vmax.f32 %v1248, 0.0
      %v2236 = vmax.f32 %v1252, 0.0
      %v2237 = vmax.f32 %v1254, 0.0
      %v2238 = vmax.f32 %v1256, 0.0
      %v2239 = vmax.f32 %v1258, 0.0
      %v2240 = vmax.f32 %v1262, 0.0
      %v2241 = vmax.f32 %v1264, 0.0
      %v2242 = vmax.f32 %v1266, 0.0
      %v2243 = vmax.f32 %v1268, 0.0
      %v2244 = vmax.f32 %v1272, 0.0
      %v2245 = vmax.f32 %v1274, 0.0
      %v2246 = vmax.f32 %v1276, 0.0
      %v2247 = vmax.f32 %v1278, 0.0
      %v2248 = vmax.f32 %v1282, 0.0
      %v2249 = vmax.f32 %v1284, 0.0
      %v2250 = vmax.f32 %v1286, 0.0
      %v2251 = vmax.f32 %v1288, 0.0
      %v2252 = vmax.f32 %v1292, 0.0
      %v2253 = vmax.f32 %v1294, 0.0
      %v2254 = vmax.f32 %v1296, 0.0
      %v2255 = vmax.f32 %v1298, 0.0
      %v2256 = vmax.f32 %v1302, 0.0
      %v2257 = vmax.f32 %v1304, 0.0
      %v2258 = vmax.f32 %v1306, 0.0
      %v2259 = vmax.f32 %v1308, 0.0
      %v2260 = vmax.f32 %v1312, 0.0
      %v2261 = vmax.f32 %v1314, 0.0
      %v2262 = vmax.f32 %v1316, 0.0
      %v2263 = vmax.f32 %v1318, 0.0
      %v2264 = vmax.f32 %v1322, 0.0
      %v2265 = vmax.f32 %v1324, 0.0
      %v2266 = vmax.f32 %v1326, 0.0
      %v2267 = vmax.f32 %v1328, 0.0
      %v2268 = vmax.f32 %v1332, 0.0
      %v2269 = vmax.f32 %v1334, 0.0
      %v2270 = vmax.f32 %v1336, 0.0
      %v2271 = vmax.f32 %v1338, 0.0
      %v2272 = vmax.f32 %v1342, 0.0
      %v2273 = vmax.f32 %v1344, 0.0
      %v2274 = vmax.f32 %v1346, 0.0
      %v2275 = vmax.f32 %v1348, 0.0
      %v2276 = vmax.f32 %v1352, 0.0
      %v2277 = vmax.f32 %v1354, 0.0
      %v2278 = vmax.f32 %v1356, 0.0
      %v2279 = vmax.f32 %v1358, 0.0
      %v2280 = vmax.f32 %v1362, 0.0
      %v2281 = vmax.f32 %v1364, 0.0
      %v2282 = vmax.f32 %v1366, 0.0
      %v2283 = vmax.f32 %v1368, 0.0
      %v2284 = vmax.f32 %v1372, 0.0
      %v2285 = vmax.f32 %v1374, 0.0
      %v2286 = vmax.f32 %v1376, 0.0
      %v2287 = vmax.f32 %v1378, 0.0
      %v2288 = vmax.f32 %v1382, 0.0
      %v2289 = vmax.f32 %v1384, 0.0
      %v2290 = vmax.f32 %v1386, 0.0
      %v2291 = vmax.f32 %v1388, 0.0
      %v2292 = vmax.f32 %v1392, 0.0
      %v2293 = vmax.f32 %v1394, 0.0
      %v2294 = vmax.f32 %v1396, 0.0
      %v2295 = vmax.f32 %v1398, 0.0
      %v2296 = vmax.f32 %v1402, 0.0
      %v2297 = vmax.f32 %v1404, 0.0
      %v2298 = vmax.f32 %v1406, 0.0
      %v2299 = vmax.f32 %v1408, 0.0
      %v2300 = vmax.f32 %v1412, 0.0
      %v2301 = vmax.f32 %v1414, 0.0
      %v2302 = vmax.f32 %v1416, 0.0
      %v2303 = vmax.f32 %v1418, 0.0
      %v2304 = vmax.f32 %v1422, 0.0
      %v2305 = vmax.f32 %v1424, 0.0
      %v2306 = vmax.f32 %v1426, 0.0
      %v2307 = vmax.f32 %v1428, 0.0
      %v2308 = vmax.f32 %v1432, 0.0
      %v2309 = vmax.f32 %v1434, 0.0
      %v2310 = vmax.f32 %v1436, 0.0
      %v2311 = vmax.f32 %v1438, 0.0
      %v2312 = vmax.f32 %v1442, 0.0
      %v2313 = vmax.f32 %v1444, 0.0
      %v2314 = vmax.f32 %v1446, 0.0
      %v2315 = vmax.f32 %v1448, 0.0
      %v2316 = vmax.f32 %v1452, 0.0
      %v2317 = vmax.f32 %v1454, 0.0
      %v2318 = vmax.f32 %v1456, 0.0
      %v2319 = vmax.f32 %v1458, 0.0
      %v2320 = vmax.f32 %v1462, 0.0
      %v2321 = vmax.f32 %v1464, 0.0
      %v2322 = vmax.f32 %v1466, 0.0
      %v2323 = vmax.f32 %v1468, 0.0
      %v2324 = vmax.f32 %v1472, 0.0
      %v2325 = vmax.f32 %v1474, 0.0
      %v2326 = vmax.f32 %v1476, 0.0
      %v2327 = vmax.f32 %v1478, 0.0
      %v2328 = vmax.f32 %v1482, 0.0
      %v2329 = vmax.f32 %v1484, 0.0
      %v2330 = vmax.f32 %v1486, 0.0
      %v2331 = vmax.f32 %v1488, 0.0
      %v2332 = vmax.f32 %v1492, 0.0
      %v2333 = vmax.f32 %v1494, 0.0
      %v2334 = vmax.f32 %v1496, 0.0
      %v2335 = vmax.f32 %v1498, 0.0
      %v2336 = vmax.f32 %v1502, 0.0
      %v2337 = vmax.f32 %v1504, 0.0
      %v2338 = vmax.f32 %v1506, 0.0
      %v2339 = vmax.f32 %v1508, 0.0
      %v2340 = vmax.f32 %v1512, 0.0
      %v2341 = vmax.f32 %v1514, 0.0
      %v2342 = vmax.f32 %v1516, 0.0
      %v2343 = vmax.f32 %v1518, 0.0
      %v2344 = vmax.f32 %v1522, 0.0
      %v2345 = vmax.f32 %v1524, 0.0
      %v2346 = vmax.f32 %v1526, 0.0
      %v2347 = vmax.f32 %v1528, 0.0
      %v2348 = vmax.f32 %v1532, 0.0
      %v2349 = vmax.f32 %v1534, 0.0
      %v2350 = vmax.f32 %v1536, 0.0
      %v2351 = vmax.f32 %v1538, 0.0
      %v2352 = vmax.f32 %v1542, 0.0
      %v2353 = vmax.f32 %v1544, 0.0
      %v2354 = vmax.f32 %v1546, 0.0
      %v2355 = vmax.f32 %v1548, 0.0
      %v2356 = vmax.f32 %v1552, 0.0
      %v2357 = vmax.f32 %v1554, 0.0
      %v2358 = vmax.f32 %v1556, 0.0
      %v2359 = vmax.f32 %v1558, 0.0
      %v2360 = vmax.f32 %v1562, 0.0
      %v2361 = vmax.f32 %v1564, 0.0
      %v2362 = vmax.f32 %v1566, 0.0
      %v2363 = vmax.f32 %v1568, 0.0
      %v2364 = vmax.f32 %v1572, 0.0
      %v2365 = vmax.f32 %v1574, 0.0
      %v2366 = vmax.f32 %v1576, 0.0
      %v2367 = vmax.f32 %v1578, 0.0
      %v2368 = vmax.f32 %v1582, 0.0
      %v2369 = vmax.f32 %v1584, 0.0
      %v2370 = vmax.f32 %v1586, 0.0
      %v2371 = vmax.f32 %v1588, 0.0
      %v2372 = vmax.f32 %v1592, 0.0
      %v2373 = vmax.f32 %v1594, 0.0
      %v2374 = vmax.f32 %v1596, 0.0
      %v2375 = vmax.f32 %v1598, 0.0
      %v2376 = vmax.f32 %v1602, 0.0
      %v2377 = vmax.f32 %v1604, 0.0
      %v2378 = vmax.f32 %v1606, 0.0
      %v2379 = vmax.f32 %v1608, 0.0
      %v2380 = vmax.f32 %v1612, 0.0
      %v2381 = vmax.f32 %v1614, 0.0
      %v2382 = vmax.f32 %v1616, 0.0
      %v2383 = vmax.f32 %v1618, 0.0
      %v2384 = vmax.f32 %v1622, 0.0
      %v2385 = vmax.f32 %v1624, 0.0
      %v2386 = vmax.f32 %v1626, 0.0
      %v2387 = vmax.f32 %v1628, 0.0
      %v2388 = vmax.f32 %v1632, 0.0
      %v2389 = vmax.f32 %v1634, 0.0
      %v2390 = vmax.f32 %v1636, 0.0
      %v2391 = vmax.f32 %v1638, 0.0
      %v2392 = vmax.f32 %v1642, 0.0
      %v2393 = vmax.f32 %v1644, 0.0
      %v2394 = vmax.f32 %v1646, 0.0
      %v2395 = vmax.f32 %v1648, 0.0
      %v2396 = vmax.f32 %v1652, 0.0
      %v2397 = vmax.f32 %v1654, 0.0
      %v2398 = vmax.f32 %v1656, 0.0
      %v2399 = vmax.f32 %v1658, 0.0
      %v2400 = vmax.f32 %v1662, 0.0
      %v2401 = vmax.f32 %v1664, 0.0
      %v2402 = vmax.f32 %v1666, 0.0
      %v2403 = vmax.f32 %v1668, 0.0
      %v2404 = vmax.f32 %v1672, 0.0
      %v2405 = vmax.f32 %v1674, 0.0
      %v2406 = vmax.f32 %v1676, 0.0
      %v2407 = vmax.f32 %v1678, 0.0
      %v2408 = vmax.f32 %v1682, 0.0
      %v2409 = vmax.f32 %v1684, 0.0
      %v2410 = vmax.f32 %v1686, 0.0
      %v2411 = vmax.f32 %v1688, 0.0
      %v2412 = vmax.f32 %v1692, 0.0
      %v2413 = vmax.f32 %v1694, 0.0
      %v2414 = vmax.f32 %v1696, 0.0
      %v2415 = vmax.f32 %v1698, 0.0
      %v2416 = vmax.f32 %v1702, 0.0
      %v2417 = vmax.f32 %v1704, 0.0
      %v2418 = vmax.f32 %v1706, 0.0
      %v2419 = vmax.f32 %v1708, 0.0
      %v2420 = vmax.f32 %v1712, 0.0
      %v2421 = vmax.f32 %v1714, 0.0
      %v2422 = vmax.f32 %v1716, 0.0
      %v2423 = vmax.f32 %v1718, 0.0
      %v2424 = vmax.f32 %v1722, 0.0
      %v2425 = vmax.f32 %v1724, 0.0
      %v2426 = vmax.f32 %v1726, 0.0
      %v2427 = vmax.f32 %v1728, 0.0
      %v2428 = vmax.f32 %v1732, 0.0
      %v2429 = vmax.f32 %v1734, 0.0
      %v2430 = vmax.f32 %v1736, 0.0
      %v2431 = vmax.f32 %v1738, 0.0
      %v2432 = vmax.f32 %v1742, 0.0
      %v2433 = vmax.f32 %v1744, 0.0
      %v2434 = vmax.f32 %v1746, 0.0
      %v2435 = vmax.f32 %v1748, 0.0
      %v2436 = vmax.f32 %v1752, 0.0
      %v2437 = vmax.f32 %v1754, 0.0
      %v2438 = vmax.f32 %v1756, 0.0
      %v2439 = vmax.f32 %v1758, 0.0
      %v2440 = vmax.f32 %v1762, 0.0
      %v2441 = vmax.f32 %v1764, 0.0
      %v2442 = vmax.f32 %v1766, 0.0
      %v2443 = vmax.f32 %v1768, 0.0
      %v2444 = vmax.f32 %v1772, 0.0
      %v2445 = vmax.f32 %v1774, 0.0
      %v2446 = vmax.f32 %v1776, 0.0
      %v2447 = vmax.f32 %v1778, 0.0
      %v2448 = vmax.f32 %v1782, 0.0
      %v2449 = vmax.f32 %v1784, 0.0
      %v2450 = vmax.f32 %v1786, 0.0
      %v2451 = vmax.f32 %v1788, 0.0
      %v2452 = vmax.f32 %v1792, 0.0
      %v2453 = vmax.f32 %v1794, 0.0
      %v2454 = vmax.f32 %v1796, 0.0
      %v2455 = vmax.f32 %v1798, 0.0
      %v2456 = vmax.f32 %v1802, 0.0
      %v2457 = vmax.f32 %v1804, 0.0
      %v2458 = vmax.f32 %v1806, 0.0
      %v2459 = vmax.f32 %v1808, 0.0
      %v2460 = vmax.f32 %v1812, 0.0
      %v2461 = vmax.f32 %v1814, 0.0
      %v2462 = vmax.f32 %v1816, 0.0
      %v2463 = vmax.f32 %v1818, 0.0
      %v2464 = vmax.f32 %v1822, 0.0
      %v2465 = vmax.f32 %v1824, 0.0
      %v2466 = vmax.f32 %v1826, 0.0
      %v2467 = vmax.f32 %v1828, 0.0
      %v2468 = vmax.f32 %v1832, 0.0
      %v2469 = vmax.f32 %v1834, 0.0
      %v2470 = vmax.f32 %v1836, 0.0
      %v2471 = vmax.f32 %v1838, 0.0
      %v2472 = vmax.f32 %v1842, 0.0
      %v2473 = vmax.f32 %v1844, 0.0
      %v2474 = vmax.f32 %v1846, 0.0
      %v2475 = vmax.f32 %v1848, 0.0
      %v2476 = vmax.f32 %v1852, 0.0
      %v2477 = vmax.f32 %v1854, 0.0
      %v2478 = vmax.f32 %v1856, 0.0
      %v2479 = vmax.f32 %v1858, 0.0
      %v2480 = vmax.f32 %v1862, 0.0
      %v2481 = vmax.f32 %v1864, 0.0
      %v2482 = vmax.f32 %v1866, 0.0
      %v2483 = vmax.f32 %v1868, 0.0
      %v2484 = vmax.f32 %v1872, 0.0
      %v2485 = vmax.f32 %v1874, 0.0
      %v2486 = vmax.f32 %v1876, 0.0
      %v2487 = vmax.f32 %v1878, 0.0
      %v2488 = vmax.f32 %v1882, 0.0
      %v2489 = vmax.f32 %v1884, 0.0
      %v2490 = vmax.f32 %v1886, 0.0
      %v2491 = vmax.f32 %v1888, 0.0
      %v2492 = vmax.f32 %v1892, 0.0
      %v2493 = vmax.f32 %v1894, 0.0
      %v2494 = vmax.f32 %v1896, 0.0
      %v2495 = vmax.f32 %v1898, 0.0
      %v2496 = vmax.f32 %v1902, 0.0
      %v2497 = vmax.f32 %v1904, 0.0
      %v2498 = vmax.f32 %v1906, 0.0
      %v2499 = vmax.f32 %v1908, 0.0
      %v2500 = vmax.f32 %v1912, 0.0
      %v2501 = vmax.f32 %v1914, 0.0
      %v2502 = vmax.f32 %v1916, 0.0
      %v2503 = vmax.f32 %v1918, 0.0
      %v2504 = vmax.f32 %v1922, 0.0
      %v2505 = vmax.f32 %v1924, 0.0
      %v2506 = vmax.f32 %v1926, 0.0
      %v2507 = vmax.f32 %v1928, 0.0
      %v2508 = vmax.f32 %v1932, 0.0
      %v2509 = vmax.f32 %v1934, 0.0
      %v2510 = vmax.f32 %v1936, 0.0
      %v2511 = vmax.f32 %v1938, 0.0
      %v2512 = vmax.f32 %v1942, 0.0
      %v2513 = vmax.f32 %v1944, 0.0
      %v2514 = vmax.f32 %v1946, 0.0
      %v2515 = vmax.f32 %v1948, 0.0
      %v2516 = vmax.f32 %v1952, 0.0
      %v2517 = vmax.f32 %v1954, 0.0
      %v2518 = vmax.f32 %v1956, 0.0
      %v2519 = vmax.f32 %v1958, 0.0
      %v2520 = vmax.f32 %v1962, 0.0
      %v2521 = vmax.f32 %v1964, 0.0
      %v2522 = vmax.f32 %v1966, 0.0
      %v2523 = vmax.f32 %v1968, 0.0
      %v2524 = vmax.f32 %v1972, 0.0
      %v2525 = vmax.f32 %v1974, 0.0
      %v2526 = vmax.f32 %v1976, 0.0
      %v2527 = vmax.f32 %v1978, 0.0
      %v2528 = vmax.f32 %v1982, 0.0
      %v2529 = vmax.f32 %v1984, 0.0
      %v2530 = vmax.f32 %v1986, 0.0
      %v2531 = vmax.f32 %v1988, 0.0
      %v2532 = vmax.f32 %v1992, 0.0
      %v2533 = vmax.f32 %v1994, 0.0
      %v2534 = vmax.f32 %v1996, 0.0
      %v2535 = vmax.f32 %v1998, 0.0
      %v2536 = vmax.f32 %v2002, 0.0
      %v2537 = vmax.f32 %v2004, 0.0
      %v2538 = vmax.f32 %v2006, 0.0
      %v2539 = vmax.f32 %v2008, 0.0
      %v2540 = vmax.f32 %v2012, 0.0
      %v2541 = vmax.f32 %v2014, 0.0
      %v2542 = vmax.f32 %v2016, 0.0
      %v2543 = vmax.f32 %v2018, 0.0
      %v2544 = vmax.f32 %v2022, 0.0
      %v2545 = vmax.f32 %v2024, 0.0
      %v2546 = vmax.f32 %v2026, 0.0
      %v2547 = vmax.f32 %v2028, 0.0
      %v2548 = vmax.f32 %v2032, 0.0
      %v2549 = vmax.f32 %v2034, 0.0
      %v2550 = vmax.f32 %v2036, 0.0
      %v2551 = vmax.f32 %v2038, 0.0
      %v2552 = vmax.f32 %v2042, 0.0
      %v2553 = vmax.f32 %v2044, 0.0
      %v2554 = vmax.f32 %v2046, 0.0
      %v2555 = vmax.f32 %v2048, 0.0
      %v2556 = vmax.f32 %v2052, 0.0
      %v2557 = vmax.f32 %v2054, 0.0
      %v2558 = vmax.f32 %v2056, 0.0
      %v2559 = vmax.f32 %v2058, 0.0
      %v2560 = vmax.f32 %v2062, 0.0
      %v2561 = vmax.f32 %v2064, 0.0
      %v2562 = vmax.f32 %v2066, 0.0
      %v2563 = vmax.f32 %v2068, 0.0
      %v2564 = vmax.f32 %v2072, 0.0
      %v2565 = vmax.f32 %v2074, 0.0
      %v2566 = vmax.f32 %v2076, 0.0
      %v2567 = vmax.f32 %v2078, 0.0
      %v2568 = vmax.f32 %v2082, 0.0
      %v2569 = vmax.f32 %v2084, 0.0
      %v2570 = vmax.f32 %v2086, 0.0
      %v2571 = vmax.f32 %v2088, 0.0
      %v2572 = vmax.f32 %v2092, 0.0
      %v2573 = vmax.f32 %v2094, 0.0
      %v2574 = vmax.f32 %v2096, 0.0
      %v2575 = vmax.f32 %v2098, 0.0
      %v2576 = vmax.f32 %v2102, 0.0
      %v2577 = vmax.f32 %v2104, 0.0
      %v2578 = vmax.f32 %v2106, 0.0
      %v2579 = vmax.f32 %v2108, 0.0
      %v2580 = vmax.f32 %v2112, 0.0
      %v2581 = vmax.f32 %v2114, 0.0
      %v2582 = vmax.f32 %v2116, 0.0
      %v2583 = vmax.f32 %v2118, 0.0
      %v2584 = vmax.f32 %v2122, 0.0
      %v2585 = vmax.f32 %v2124, 0.0
      %v2586 = vmax.f32 %v2126, 0.0
      %v2587 = vmax.f32 %v2128, 0.0
      %v2588 = vmax.f32 %v2132, 0.0
      %v2589 = vmax.f32 %v2134, 0.0
      %v2590 = vmax.f32 %v2136, 0.0
      %v2591 = vmax.f32 %v2138, 0.0
      %v2592 = vmax.f32 %v2142, 0.0
      %v2593 = vmax.f32 %v2144, 0.0
      %v2594 = vmax.f32 %v2146, 0.0
      %v2595 = vmax.f32 %v2148, 0.0
      %v2596 = vmax.f32 %v2152, 0.0
      %v2597 = vmax.f32 %v2154, 0.0
      %v2598 = vmax.f32 %v2156, 0.0
      %v2599 = vmax.f32 %v2158, 0.0
      %v2600 = vmax.f32 %v2162, 0.0
      %v2601 = vmax.f32 %v2164, 0.0
      %v2602 = vmax.f32 %v2166, 0.0
      %v2603 = vmax.f32 %v2168, 0.0
      %v2604 = vmax.f32 %v2172, 0.0
      %v2605 = vmax.f32 %v2174, 0.0
      %v2606 = vmax.f32 %v2176, 0.0
      %v2607 = vmax.f32 %v2178, 0.0
      %v2608 = vmax.f32 %v2182, 0.0
      %v2609 = vmax.f32 %v2184, 0.0
      %v2610 = vmax.f32 %v2186, 0.0
      %v2611 = vmax.f32 %v2188, 0.0
      %v2612 = vmax.f32 %v2192, 0.0
      %v2613 = vmax.f32 %v2194, 0.0
      %v2614 = vmax.f32 %v2196, 0.0
      %v2615 = vmax.f32 %v2198, 0.0
      %v2616 = vpack.c.bf16 %v2202, %v2200
      %v2617 = vpack.c.bf16 %v2203, %v2201
      %v2618 = vpack.c.bf16 %v2206, %v2204
      %v2619 = vpack.c.bf16 %v2207, %v2205
      %v2620 = vpack.c.bf16 %v2210, %v2208
      %v2621 = vpack.c.bf16 %v2211, %v2209
      %v2622 = vpack.c.bf16 %v2214, %v2212
      %v2623 = vpack.c.bf16 %v2215, %v2213
      %v2624 = vpack.c.bf16 %v2218, %v2216
      %v2625 = vpack.c.bf16 %v2219, %v2217
      %v2626 = vpack.c.bf16 %v2222, %v2220
      %v2627 = vpack.c.bf16 %v2223, %v2221
      %v2628 = vpack.c.bf16 %v2226, %v2224
      %v2629 = vpack.c.bf16 %v2227, %v2225
      %v2630 = vpack.c.bf16 %v2230, %v2228
      %v2631 = vpack.c.bf16 %v2231, %v2229
      %v2632 = vpack.c.bf16 %v2234, %v2232
      %v2633 = vpack.c.bf16 %v2235, %v2233
      %v2634 = vpack.c.bf16 %v2238, %v2236
      %v2635 = vpack.c.bf16 %v2239, %v2237
      %v2636 = vpack.c.bf16 %v2242, %v2240
      %v2637 = vpack.c.bf16 %v2243, %v2241
      %v2638 = vpack.c.bf16 %v2246, %v2244
      %v2639 = vpack.c.bf16 %v2247, %v2245
      %v2640 = vpack.c.bf16 %v2250, %v2248
      %v2641 = vpack.c.bf16 %v2251, %v2249
      %v2642 = vpack.c.bf16 %v2254, %v2252
      %v2643 = vpack.c.bf16 %v2255, %v2253
      %v2644 = vpack.c.bf16 %v2258, %v2256
      %v2645 = vpack.c.bf16 %v2259, %v2257
      %v2646 = vpack.c.bf16 %v2262, %v2260
      %v2647 = vpack.c.bf16 %v2263, %v2261
      %v2648 = vpack.c.bf16 %v2266, %v2264
      %v2649 = vpack.c.bf16 %v2267, %v2265
      %v2650 = vpack.c.bf16 %v2270, %v2268
      %v2651 = vpack.c.bf16 %v2271, %v2269
      %v2652 = vpack.c.bf16 %v2274, %v2272
      %v2653 = vpack.c.bf16 %v2275, %v2273
      %v2654 = vpack.c.bf16 %v2278, %v2276
      %v2655 = vpack.c.bf16 %v2279, %v2277
      %v2656 = vpack.c.bf16 %v2282, %v2280
      %v2657 = vpack.c.bf16 %v2283, %v2281
      %v2658 = vpack.c.bf16 %v2286, %v2284
      %v2659 = vpack.c.bf16 %v2287, %v2285
      %v2660 = vpack.c.bf16 %v2290, %v2288
      %v2661 = vpack.c.bf16 %v2291, %v2289
      %v2662 = vpack.c.bf16 %v2294, %v2292
      %v2663 = vpack.c.bf16 %v2295, %v2293
      %v2664 = vpack.c.bf16 %v2298, %v2296
      %v2665 = vpack.c.bf16 %v2299, %v2297
      %v2666 = vpack.c.bf16 %v2302, %v2300
      %v2667 = vpack.c.bf16 %v2303, %v2301
      %v2668 = vpack.c.bf16 %v2306, %v2304
      %v2669 = vpack.c.bf16 %v2307, %v2305
      %v2670 = vpack.c.bf16 %v2310, %v2308
      %v2671 = vpack.c.bf16 %v2311, %v2309
      %v2672 = vpack.c.bf16 %v2314, %v2312
      %v2673 = vpack.c.bf16 %v2315, %v2313
      %v2674 = vpack.c.bf16 %v2318, %v2316
      %v2675 = vpack.c.bf16 %v2319, %v2317
      %v2676 = vpack.c.bf16 %v2322, %v2320
      %v2677 = vpack.c.bf16 %v2323, %v2321
      %v2678 = vpack.c.bf16 %v2326, %v2324
      %v2679 = vpack.c.bf16 %v2327, %v2325
      %v2680 = vpack.c.bf16 %v2330, %v2328
      %v2681 = vpack.c.bf16 %v2331, %v2329
      %v2682 = vpack.c.bf16 %v2334, %v2332
      %v2683 = vpack.c.bf16 %v2335, %v2333
      %v2684 = vpack.c.bf16 %v2338, %v2336
      %v2685 = vpack.c.bf16 %v2339, %v2337
      %v2686 = vpack.c.bf16 %v2342, %v2340
      %v2687 = vpack.c.bf16 %v2343, %v2341
      %v2688 = vpack.c.bf16 %v2346, %v2344
      %v2689 = vpack.c.bf16 %v2347, %v2345
      %v2690 = vpack.c.bf16 %v2350, %v2348
      %v2691 = vpack.c.bf16 %v2351, %v2349
      %v2692 = vpack.c.bf16 %v2354, %v2352
      %v2693 = vpack.c.bf16 %v2355, %v2353
      %v2694 = vpack.c.bf16 %v2358, %v2356
      %v2695 = vpack.c.bf16 %v2359, %v2357
      %v2696 = vpack.c.bf16 %v2362, %v2360
      %v2697 = vpack.c.bf16 %v2363, %v2361
      %v2698 = vpack.c.bf16 %v2366, %v2364
      %v2699 = vpack.c.bf16 %v2367, %v2365
      %v2700 = vpack.c.bf16 %v2370, %v2368
      %v2701 = vpack.c.bf16 %v2371, %v2369
      %v2702 = vpack.c.bf16 %v2374, %v2372
      %v2703 = vpack.c.bf16 %v2375, %v2373
      %v2704 = vpack.c.bf16 %v2378, %v2376
      %v2705 = vpack.c.bf16 %v2379, %v2377
      %v2706 = vpack.c.bf16 %v2382, %v2380
      %v2707 = vpack.c.bf16 %v2383, %v2381
      %v2708 = vpack.c.bf16 %v2386, %v2384
      %v2709 = vpack.c.bf16 %v2387, %v2385
      %v2710 = vpack.c.bf16 %v2390, %v2388
      %v2711 = vpack.c.bf16 %v2391, %v2389
      %v2712 = vpack.c.bf16 %v2394, %v2392
      %v2713 = vpack.c.bf16 %v2395, %v2393
      %v2714 = vpack.c.bf16 %v2398, %v2396
      %v2715 = vpack.c.bf16 %v2399, %v2397
      %v2716 = vpack.c.bf16 %v2402, %v2400
      %v2717 = vpack.c.bf16 %v2403, %v2401
      %v2718 = vpack.c.bf16 %v2406, %v2404
      %v2719 = vpack.c.bf16 %v2407, %v2405
      %v2720 = vpack.c.bf16 %v2410, %v2408
      %v2721 = vpack.c.bf16 %v2411, %v2409
      %v2722 = vpack.c.bf16 %v2414, %v2412
      %v2723 = vpack.c.bf16 %v2415, %v2413
      %v2724 = vpack.c.bf16 %v2418, %v2416
      %v2725 = vpack.c.bf16 %v2419, %v2417
      %v2726 = vpack.c.bf16 %v2422, %v2420
      %v2727 = vpack.c.bf16 %v2423, %v2421
      %v2728 = vpack.c.bf16 %v2426, %v2424
      %v2729 = vpack.c.bf16 %v2427, %v2425
      %v2730 = vpack.c.bf16 %v2430, %v2428
      %v2731 = vpack.c.bf16 %v2431, %v2429
      %v2732 = vpack.c.bf16 %v2434, %v2432
      %v2733 = vpack.c.bf16 %v2435, %v2433
      %v2734 = vpack.c.bf16 %v2438, %v2436
      %v2735 = vpack.c.bf16 %v2439, %v2437
      %v2736 = vpack.c.bf16 %v2442, %v2440
      %v2737 = vpack.c.bf16 %v2443, %v2441
      %v2738 = vpack.c.bf16 %v2446, %v2444
      %v2739 = vpack.c.bf16 %v2447, %v2445
      %v2740 = vpack.c.bf16 %v2450, %v2448
      %v2741 = vpack.c.bf16 %v2451, %v2449
      %v2742 = vpack.c.bf16 %v2454, %v2452
      %v2743 = vpack.c.bf16 %v2455, %v2453
      %v2744 = vpack.c.bf16 %v2458, %v2456
      %v2745 = vpack.c.bf16 %v2459, %v2457
      %v2746 = vpack.c.bf16 %v2462, %v2460
      %v2747 = vpack.c.bf16 %v2463, %v2461
      %v2748 = vpack.c.bf16 %v2466, %v2464
      %v2749 = vpack.c.bf16 %v2467, %v2465
      %v2750 = vpack.c.bf16 %v2470, %v2468
      %v2751 = vpack.c.bf16 %v2471, %v2469
      %v2752 = vpack.c.bf16 %v2474, %v2472
      %v2753 = vpack.c.bf16 %v2475, %v2473
      %v2754 = vpack.c.bf16 %v2478, %v2476
      %v2755 = vpack.c.bf16 %v2479, %v2477
      %v2756 = vpack.c.bf16 %v2482, %v2480
      %v2757 = vpack.c.bf16 %v2483, %v2481
      %v2758 = vpack.c.bf16 %v2486, %v2484
      %v2759 = vpack.c.bf16 %v2487, %v2485
      %v2760 = vpack.c.bf16 %v2490, %v2488
      %v2761 = vpack.c.bf16 %v2491, %v2489
      %v2762 = vpack.c.bf16 %v2494, %v2492
      %v2763 = vpack.c.bf16 %v2495, %v2493
      %v2764 = vpack.c.bf16 %v2498, %v2496
      %v2765 = vpack.c.bf16 %v2499, %v2497
      %v2766 = vpack.c.bf16 %v2502, %v2500
      %v2767 = vpack.c.bf16 %v2503, %v2501
      %v2768 = vpack.c.bf16 %v2506, %v2504
      %v2769 = vpack.c.bf16 %v2507, %v2505
      %v2770 = vpack.c.bf16 %v2510, %v2508
      %v2771 = vpack.c.bf16 %v2511, %v2509
      %v2772 = vpack.c.bf16 %v2514, %v2512
      %v2773 = vpack.c.bf16 %v2515, %v2513
      %v2774 = vpack.c.bf16 %v2518, %v2516
      %v2775 = vpack.c.bf16 %v2519, %v2517
      %v2776 = vpack.c.bf16 %v2522, %v2520
      %v2777 = vpack.c.bf16 %v2523, %v2521
      %v2778 = vpack.c.bf16 %v2526, %v2524
      %v2779 = vpack.c.bf16 %v2527, %v2525
      %v2780 = vpack.c.bf16 %v2530, %v2528
      %v2781 = vpack.c.bf16 %v2531, %v2529
      %v2782 = vpack.c.bf16 %v2534, %v2532
      %v2783 = vpack.c.bf16 %v2535, %v2533
      %v2784 = vpack.c.bf16 %v2538, %v2536
      %v2785 = vpack.c.bf16 %v2539, %v2537
      %v2786 = vpack.c.bf16 %v2542, %v2540
      %v2787 = vpack.c.bf16 %v2543, %v2541
      %v2788 = vpack.c.bf16 %v2546, %v2544
      %v2789 = vpack.c.bf16 %v2547, %v2545
      %v2790 = vpack.c.bf16 %v2550, %v2548
      %v2791 = vpack.c.bf16 %v2551, %v2549
      %v2792 = vpack.c.bf16 %v2554, %v2552
      %v2793 = vpack.c.bf16 %v2555, %v2553
      %v2794 = vpack.c.bf16 %v2558, %v2556
      %v2795 = vpack.c.bf16 %v2559, %v2557
      %v2796 = vpack.c.bf16 %v2562, %v2560
      %v2797 = vpack.c.bf16 %v2563, %v2561
      %v2798 = vpack.c.bf16 %v2566, %v2564
      %v2799 = vpack.c.bf16 %v2567, %v2565
      %v2800 = vpack.c.bf16 %v2570, %v2568
      %v2801 = vpack.c.bf16 %v2571, %v2569
      %v2802 = vpack.c.bf16 %v2574, %v2572
      %v2803 = vpack.c.bf16 %v2575, %v2573
      %v2804 = vpack.c.bf16 %v2578, %v2576
      %v2805 = vpack.c.bf16 %v2579, %v2577
      %v2806 = vpack.c.bf16 %v2582, %v2580
      %v2807 = vpack.c.bf16 %v2583, %v2581
      %v2808 = vpack.c.bf16 %v2586, %v2584
      %v2809 = vpack.c.bf16 %v2587, %v2585
      %v2810 = vpack.c.bf16 %v2590, %v2588
      %v2811 = vpack.c.bf16 %v2591, %v2589
      %v2812 = vpack.c.bf16 %v2594, %v2592
      %v2813 = vpack.c.bf16 %v2595, %v2593
      %v2814 = vpack.c.bf16 %v2598, %v2596
      %v2815 = vpack.c.bf16 %v2599, %v2597
      %v2816 = vpack.c.bf16 %v2602, %v2600
      %v2817 = vpack.c.bf16 %v2603, %v2601
      %v2818 = vpack.c.bf16 %v2606, %v2604
      %v2819 = vpack.c.bf16 %v2607, %v2605
      %v2820 = vpack.c.bf16 %v2610, %v2608
      %v2821 = vpack.c.bf16 %v2611, %v2609
      %v2822 = vpack.c.bf16 %v2614, %v2612
      %v2823 = vpack.c.bf16 %v2615, %v2613
      %2824 = vst [vmem:[#allocation2] sm:$0xff] %v2616
      %2825 = vst [vmem:[#allocation2 + $0x8] sm:$0xff] %v2617
      %2826 = vst [vmem:[#allocation2 + $0x40] sm:$0xff] %v2618
      %2827 = vst [vmem:[#allocation2 + $0x48] sm:$0xff] %v2619
      %2828 = vst [vmem:[#allocation2 + $0x80] sm:$0xff] %v2620
      %2829 = vst [vmem:[#allocation2 + $0x88] sm:$0xff] %v2621
      %2830 = vst [vmem:[#allocation2 + $0xc0] sm:$0xff] %v2622
      %2831 = vst [vmem:[#allocation2 + $0xc8] sm:$0xff] %v2623
      %2832 = vst [vmem:[#allocation2 + $0x100] sm:$0xff] %v2624
      %2833 = vst [vmem:[#allocation2 + $0x108] sm:$0xff] %v2625
      %2834 = vst [vmem:[#allocation2 + $0x140] sm:$0xff] %v2626
      %2835 = vst [vmem:[#allocation2 + $0x148] sm:$0xff] %v2627
      %2836 = vst [vmem:[#allocation2 + $0x180] sm:$0xff] %v2628
      %2837 = vst [vmem:[#allocation2 + $0x188] sm:$0xff] %v2629
      %2838 = vst [vmem:[#allocation2 + $0x1c0] sm:$0xff] %v2630
      %2839 = vst [vmem:[#allocation2 + $0x1c8] sm:$0xff] %v2631
      %2840 = vst [vmem:[#allocation2 + $0x200] sm:$0xff] %v2632
      %2841 = vst [vmem:[#allocation2 + $0x208] sm:$0xff] %v2633
      %2842 = vst [vmem:[#allocation2 + $0x240] sm:$0xff] %v2634
      %2843 = vst [vmem:[#allocation2 + $0x248] sm:$0xff] %v2635
      %2844 = vst [vmem:[#allocation2 + $0x280] sm:$0xff] %v2636
      %2845 = vst [vmem:[#allocation2 + $0x288] sm:$0xff] %v2637
      %2846 = vst [vmem:[#allocation2 + $0x2c0] sm:$0xff] %v2638
      %2847 = vst [vmem:[#allocation2 + $0x2c8] sm:$0xff] %v2639
      %2848 = vst [vmem:[#allocation2 + $0x300] sm:$0xff] %v2640
      %2849 = vst [vmem:[#allocation2 + $0x308] sm:$0xff] %v2641
      %2850 = vst [vmem:[#allocation2 + $0x340] sm:$0xff] %v2642
      %2851 = vst [vmem:[#allocation2 + $0x348] sm:$0xff] %v2643
      %2852 = vst [vmem:[#allocation2 + $0x380] sm:$0xff] %v2644
      %2853 = vst [vmem:[#allocation2 + $0x388] sm:$0xff] %v2645
      %2854 = vst [vmem:[#allocation2 + $0x3c0] sm:$0xff] %v2646
      %2855 = vst [vmem:[#allocation2 + $0x3c8] sm:$0xff] %v2647
      %2856 = vst [vmem:[#allocation2 + $0x400] sm:$0xff] %v2648
      %2857 = vst [vmem:[#allocation2 + $0x408] sm:$0xff] %v2649
      %2858 = vst [vmem:[#allocation2 + $0x440] sm:$0xff] %v2650
      %2859 = vst [vmem:[#allocation2 + $0x448] sm:$0xff] %v2651
      %2860 = vst [vmem:[#allocation2 + $0x480] sm:$0xff] %v2652
      %2861 = vst [vmem:[#allocation2 + $0x488] sm:$0xff] %v2653
      %2862 = vst [vmem:[#allocation2 + $0x4c0] sm:$0xff] %v2654
      %2863 = vst [vmem:[#allocation2 + $0x4c8] sm:$0xff] %v2655
      %2864 = vst [vmem:[#allocation2 + $0x500] sm:$0xff] %v2656
      %2865 = vst [vmem:[#allocation2 + $0x508] sm:$0xff] %v2657
      %2866 = vst [vmem:[#allocation2 + $0x540] sm:$0xff] %v2658
      %2867 = vst [vmem:[#allocation2 + $0x548] sm:$0xff] %v2659
      %2868 = vst [vmem:[#allocation2 + $0x580] sm:$0xff] %v2660
      %2869 = vst [vmem:[#allocation2 + $0x588] sm:$0xff] %v2661
      %2870 = vst [vmem:[#allocation2 + $0x5c0] sm:$0xff] %v2662
      %2871 = vst [vmem:[#allocation2 + $0x5c8] sm:$0xff] %v2663
      %2872 = vst [vmem:[#allocation2 + $0x600] sm:$0xff] %v2664
      %2873 = vst [vmem:[#allocation2 + $0x608] sm:$0xff] %v2665
      %2874 = vst [vmem:[#allocation2 + $0x640] sm:$0xff] %v2666
      %2875 = vst [vmem:[#allocation2 + $0x648] sm:$0xff] %v2667
      %2876 = vst [vmem:[#allocation2 + $0x680] sm:$0xff] %v2668
      %2877 = vst [vmem:[#allocation2 + $0x688] sm:$0xff] %v2669
      %2878 = vst [vmem:[#allocation2 + $0x6c0] sm:$0xff] %v2670
      %2879 = vst [vmem:[#allocation2 + $0x6c8] sm:$0xff] %v2671
      %2880 = vst [vmem:[#allocation2 + $0x700] sm:$0xff] %v2672
      %2881 = vst [vmem:[#allocation2 + $0x708] sm:$0xff] %v2673
      %2882 = vst [vmem:[#allocation2 + $0x740] sm:$0xff] %v2674
      %2883 = vst [vmem:[#allocation2 + $0x748] sm:$0xff] %v2675
      %2884 = vst [vmem:[#allocation2 + $0x780] sm:$0xff] %v2676
      %2885 = vst [vmem:[#allocation2 + $0x788] sm:$0xff] %v2677
      %2886 = vst [vmem:[#allocation2 + $0x7c0] sm:$0xff] %v2678
      %2887 = vst [vmem:[#allocation2 + $0x7c8] sm:$0xff] %v2679
      %2888 = vst [vmem:[#allocation2 + $0x800] sm:$0xff] %v2680
      %2889 = vst [vmem:[#allocation2 + $0x808] sm:$0xff] %v2681
      %2890 = vst [vmem:[#allocation2 + $0x840] sm:$0xff] %v2682
      %2891 = vst [vmem:[#allocation2 + $0x848] sm:$0xff] %v2683
      %2892 = vst [vmem:[#allocation2 + $0x880] sm:$0xff] %v2684
      %2893 = vst [vmem:[#allocation2 + $0x888] sm:$0xff] %v2685
      %2894 = vst [vmem:[#allocation2 + $0x8c0] sm:$0xff] %v2686
      %2895 = vst [vmem:[#allocation2 + $0x8c8] sm:$0xff] %v2687
      %2896 = vst [vmem:[#allocation2 + $0x900] sm:$0xff] %v2688
      %2897 = vst [vmem:[#allocation2 + $0x908] sm:$0xff] %v2689
      %2898 = vst [vmem:[#allocation2 + $0x940] sm:$0xff] %v2690
      %2899 = vst [vmem:[#allocation2 + $0x948] sm:$0xff] %v2691
      %2900 = vst [vmem:[#allocation2 + $0x980] sm:$0xff] %v2692
      %2901 = vst [vmem:[#allocation2 + $0x988] sm:$0xff] %v2693
      %2902 = vst [vmem:[#allocation2 + $0x9c0] sm:$0xff] %v2694
      %2903 = vst [vmem:[#allocation2 + $0x9c8] sm:$0xff] %v2695
      %2904 = vst [vmem:[#allocation2 + $0xa00] sm:$0xff] %v2696
      %2905 = vst [vmem:[#allocation2 + $0xa08] sm:$0xff] %v2697
      %2906 = vst [vmem:[#allocation2 + $0xa40] sm:$0xff] %v2698
      %2907 = vst [vmem:[#allocation2 + $0xa48] sm:$0xff] %v2699
      %2908 = vst [vmem:[#allocation2 + $0xa80] sm:$0xff] %v2700
      %2909 = vst [vmem:[#allocation2 + $0xa88] sm:$0xff] %v2701
      %2910 = vst [vmem:[#allocation2 + $0xac0] sm:$0xff] %v2702
      %2911 = vst [vmem:[#allocation2 + $0xac8] sm:$0xff] %v2703
      %2912 = vst [vmem:[#allocation2 + $0xb00] sm:$0xff] %v2704
      %2913 = vst [vmem:[#allocation2 + $0xb08] sm:$0xff] %v2705
      %2914 = vst [vmem:[#allocation2 + $0xb40] sm:$0xff] %v2706
      %2915 = vst [vmem:[#allocation2 + $0xb48] sm:$0xff] %v2707
      %2916 = vst [vmem:[#allocation2 + $0xb80] sm:$0xff] %v2708
      %2917 = vst [vmem:[#allocation2 + $0xb88] sm:$0xff] %v2709
      %2918 = vst [vmem:[#allocation2 + $0xbc0] sm:$0xff] %v2710
      %2919 = vst [vmem:[#allocation2 + $0xbc8] sm:$0xff] %v2711
      %2920 = vst [vmem:[#allocation2 + $0xc00] sm:$0xff] %v2712
      %2921 = vst [vmem:[#allocation2 + $0xc08] sm:$0xff] %v2713
      %2922 = vst [vmem:[#allocation2 + $0xc40] sm:$0xff] %v2714
      %2923 = vst [vmem:[#allocation2 + $0xc48] sm:$0xff] %v2715
      %2924 = vst [vmem:[#allocation2 + $0x10] sm:$0xff] %v2720
      %2925 = vst [vmem:[#allocation2 + $0x18] sm:$0xff] %v2721
      %2926 = vst [vmem:[#allocation2 + $0x50] sm:$0xff] %v2722
      %2927 = vst [vmem:[#allocation2 + $0x58] sm:$0xff] %v2723
      %2928 = vst [vmem:[#allocation2 + $0x90] sm:$0xff] %v2724
      %2929 = vst [vmem:[#allocation2 + $0x98] sm:$0xff] %v2725
      %2930 = vst [vmem:[#allocation2 + $0xd0] sm:$0xff] %v2726
      %2931 = vst [vmem:[#allocation2 + $0xd8] sm:$0xff] %v2727
      %2932 = vst [vmem:[#allocation2 + $0x110] sm:$0xff] %v2728
      %2933 = vst [vmem:[#allocation2 + $0x118] sm:$0xff] %v2729
      %2934 = vst [vmem:[#allocation2 + $0x150] sm:$0xff] %v2730
      %2935 = vst [vmem:[#allocation2 + $0x158] sm:$0xff] %v2731
      %2936 = vst [vmem:[#allocation2 + $0x190] sm:$0xff] %v2732
      %2937 = vst [vmem:[#allocation2 + $0x198] sm:$0xff] %v2733
      %2938 = vst [vmem:[#allocation2 + $0x1d0] sm:$0xff] %v2734
      %2939 = vst [vmem:[#allocation2 + $0x1d8] sm:$0xff] %v2735
      %2940 = vst [vmem:[#allocation2 + $0x210] sm:$0xff] %v2736
      %2941 = vst [vmem:[#allocation2 + $0x218] sm:$0xff] %v2737
      %2942 = vst [vmem:[#allocation2 + $0x250] sm:$0xff] %v2738
      %2943 = vst [vmem:[#allocation2 + $0x258] sm:$0xff] %v2739
      %2944 = vst [vmem:[#allocation2 + $0x290] sm:$0xff] %v2740
      %2945 = vst [vmem:[#allocation2 + $0x298] sm:$0xff] %v2741
      %2946 = vst [vmem:[#allocation2 + $0x2d0] sm:$0xff] %v2742
      %2947 = vst [vmem:[#allocation2 + $0x2d8] sm:$0xff] %v2743
      %2948 = vst [vmem:[#allocation2 + $0x310] sm:$0xff] %v2744
      %2949 = vst [vmem:[#allocation2 + $0x318] sm:$0xff] %v2745
      %2950 = vst [vmem:[#allocation2 + $0x350] sm:$0xff] %v2746
      %2951 = vst [vmem:[#allocation2 + $0x358] sm:$0xff] %v2747
      %2952 = vst [vmem:[#allocation2 + $0x390] sm:$0xff] %v2748
      %2953 = vst [vmem:[#allocation2 + $0x398] sm:$0xff] %v2749
      %2954 = vst [vmem:[#allocation2 + $0x3d0] sm:$0xff] %v2750
      %2955 = vst [vmem:[#allocation2 + $0x3d8] sm:$0xff] %v2751
      %2956 = vst [vmem:[#allocation2 + $0x410] sm:$0xff] %v2752
      %2957 = vst [vmem:[#allocation2 + $0x418] sm:$0xff] %v2753
      %2958 = vst [vmem:[#allocation2 + $0x450] sm:$0xff] %v2754
      %2959 = vst [vmem:[#allocation2 + $0x458] sm:$0xff] %v2755
      %2960 = vst [vmem:[#allocation2 + $0x490] sm:$0xff] %v2756
      %2961 = vst [vmem:[#allocation2 + $0x498] sm:$0xff] %v2757
      %2962 = vst [vmem:[#allocation2 + $0x4d0] sm:$0xff] %v2758
      %2963 = vst [vmem:[#allocation2 + $0x4d8] sm:$0xff] %v2759
      %2964 = vst [vmem:[#allocation2 + $0x510] sm:$0xff] %v2760
      %2965 = vst [vmem:[#allocation2 + $0x518] sm:$0xff] %v2761
      %2966 = vst [vmem:[#allocation2 + $0x550] sm:$0xff] %v2762
      %2967 = vst [vmem:[#allocation2 + $0x558] sm:$0xff] %v2763
      %2968 = vst [vmem:[#allocation2 + $0x590] sm:$0xff] %v2764
      %2969 = vst [vmem:[#allocation2 + $0x598] sm:$0xff] %v2765
      %2970 = vst [vmem:[#allocation2 + $0x5d0] sm:$0xff] %v2766
      %2971 = vst [vmem:[#allocation2 + $0x5d8] sm:$0xff] %v2767
      %2972 = vst [vmem:[#allocation2 + $0x610] sm:$0xff] %v2768
      %2973 = vst [vmem:[#allocation2 + $0x618] sm:$0xff] %v2769
      %2974 = vst [vmem:[#allocation2 + $0x650] sm:$0xff] %v2770
      %2975 = vst [vmem:[#allocation2 + $0x658] sm:$0xff] %v2771
      %2976 = vst [vmem:[#allocation2 + $0x690] sm:$0xff] %v2772
      %2977 = vst [vmem:[#allocation2 + $0x698] sm:$0xff] %v2773
      %2978 = vst [vmem:[#allocation2 + $0x6d0] sm:$0xff] %v2774
      %2979 = vst [vmem:[#allocation2 + $0x6d8] sm:$0xff] %v2775
      %2980 = vst [vmem:[#allocation2 + $0x710] sm:$0xff] %v2776
      %2981 = vst [vmem:[#allocation2 + $0x718] sm:$0xff] %v2777
      %2982 = vst [vmem:[#allocation2 + $0x750] sm:$0xff] %v2778
      %2983 = vst [vmem:[#allocation2 + $0x758] sm:$0xff] %v2779
      %2984 = vst [vmem:[#allocation2 + $0x790] sm:$0xff] %v2780
      %2985 = vst [vmem:[#allocation2 + $0x798] sm:$0xff] %v2781
      %2986 = vst [vmem:[#allocation2 + $0x7d0] sm:$0xff] %v2782
      %2987 = vst [vmem:[#allocation2 + $0x7d8] sm:$0xff] %v2783
      %2988 = vst [vmem:[#allocation2 + $0x810] sm:$0xff] %v2784
      %2989 = vst [vmem:[#allocation2 + $0x818] sm:$0xff] %v2785
      %2990 = vst [vmem:[#allocation2 + $0x850] sm:$0xff] %v2786
      %2991 = vst [vmem:[#allocation2 + $0x858] sm:$0xff] %v2787
      %2992 = vst [vmem:[#allocation2 + $0x890] sm:$0xff] %v2788
      %2993 = vst [vmem:[#allocation2 + $0x898] sm:$0xff] %v2789
      %2994 = vst [vmem:[#allocation2 + $0x8d0] sm:$0xff] %v2790
      %2995 = vst [vmem:[#allocation2 + $0x8d8] sm:$0xff] %v2791
      %2996 = vst [vmem:[#allocation2 + $0x910] sm:$0xff] %v2792
      %2997 = vst [vmem:[#allocation2 + $0x918] sm:$0xff] %v2793
      %2998 = vst [vmem:[#allocation2 + $0x950] sm:$0xff] %v2794
      %2999 = vst [vmem:[#allocation2 + $0x958] sm:$0xff] %v2795
      %3000 = vst [vmem:[#allocation2 + $0x990] sm:$0xff] %v2796
      %3001 = vst [vmem:[#allocation2 + $0x998] sm:$0xff] %v2797
      %3002 = vst [vmem:[#allocation2 + $0x9d0] sm:$0xff] %v2798
      %3003 = vst [vmem:[#allocation2 + $0x9d8] sm:$0xff] %v2799
      %3004 = vst [vmem:[#allocation2 + $0xa10] sm:$0xff] %v2800
      %3005 = vst [vmem:[#allocation2 + $0xa18] sm:$0xff] %v2801
      %3006 = vst [vmem:[#allocation2 + $0xa50] sm:$0xff] %v2802
      %3007 = vst [vmem:[#allocation2 + $0xa58] sm:$0xff] %v2803
      %3008 = vst [vmem:[#allocation2 + $0xa90] sm:$0xff] %v2804
      %3009 = vst [vmem:[#allocation2 + $0xa98] sm:$0xff] %v2805
      %3010 = vst [vmem:[#allocation2 + $0xad0] sm:$0xff] %v2806
      %3011 = vst [vmem:[#allocation2 + $0xad8] sm:$0xff] %v2807
      %3012 = vst [vmem:[#allocation2 + $0xb10] sm:$0xff] %v2808
      %3013 = vst [vmem:[#allocation2 + $0xb18] sm:$0xff] %v2809
      %3014 = vst [vmem:[#allocation2 + $0xb50] sm:$0xff] %v2810
      %3015 = vst [vmem:[#allocation2 + $0xb58] sm:$0xff] %v2811
      %3016 = vst [vmem:[#allocation2 + $0xb90] sm:$0xff] %v2812
      %3017 = vst [vmem:[#allocation2 + $0xb98] sm:$0xff] %v2813
      %3018 = vst [vmem:[#allocation2 + $0xbd0] sm:$0xff] %v2814
      %3019 = vst [vmem:[#allocation2 + $0xbd8] sm:$0xff] %v2815
      %3020 = vst [vmem:[#allocation2 + $0xc10] sm:$0xff] %v2816
      %3021 = vst [vmem:[#allocation2 + $0xc18] sm:$0xff] %v2817
      %3022 = vst [vmem:[#allocation2 + $0xc50] sm:$0xff] %v2818
      %3023 = vst [vmem:[#allocation2 + $0xc58] sm:$0xff] %v2819
      %3024 = vst [vmem:[#allocation2 + $0x20] sm:$0xff] %v2620
      %3025 = vst [vmem:[#allocation2 + $0x28] sm:$0xff] %v2621
      %3026 = vst [vmem:[#allocation2 + $0x60] sm:$0xff] %v2622
      %3027 = vst [vmem:[#allocation2 + $0x68] sm:$0xff] %v2623
      %3028 = vst [vmem:[#allocation2 + $0xa0] sm:$0xff] %v2624
      %3029 = vst [vmem:[#allocation2 + $0xa8] sm:$0xff] %v2625
      %3030 = vst [vmem:[#allocation2 + $0xe0] sm:$0xff] %v2626
      %3031 = vst [vmem:[#allocation2 + $0xe8] sm:$0xff] %v2627
      %3032 = vst [vmem:[#allocation2 + $0x120] sm:$0xff] %v2628
      %3033 = vst [vmem:[#allocation2 + $0x128] sm:$0xff] %v2629
      %3034 = vst [vmem:[#allocation2 + $0x160] sm:$0xff] %v2630
      %3035 = vst [vmem:[#allocation2 + $0x168] sm:$0xff] %v2631
      %3036 = vst [vmem:[#allocation2 + $0x1a0] sm:$0xff] %v2632
      %3037 = vst [vmem:[#allocation2 + $0x1a8] sm:$0xff] %v2633
      %3038 = vst [vmem:[#allocation2 + $0x1e0] sm:$0xff] %v2634
      %3039 = vst [vmem:[#allocation2 + $0x1e8] sm:$0xff] %v2635
      %3040 = vst [vmem:[#allocation2 + $0x220] sm:$0xff] %v2636
      %3041 = vst [vmem:[#allocation2 + $0x228] sm:$0xff] %v2637
      %3042 = vst [vmem:[#allocation2 + $0x260] sm:$0xff] %v2638
      %3043 = vst [vmem:[#allocation2 + $0x268] sm:$0xff] %v2639
      %3044 = vst [vmem:[#allocation2 + $0x2a0] sm:$0xff] %v2640
      %3045 = vst [vmem:[#allocation2 + $0x2a8] sm:$0xff] %v2641
      %3046 = vst [vmem:[#allocation2 + $0x2e0] sm:$0xff] %v2642
      %3047 = vst [vmem:[#allocation2 + $0x2e8] sm:$0xff] %v2643
      %3048 = vst [vmem:[#allocation2 + $0x320] sm:$0xff] %v2644
      %3049 = vst [vmem:[#allocation2 + $0x328] sm:$0xff] %v2645
      %3050 = vst [vmem:[#allocation2 + $0x360] sm:$0xff] %v2646
      %3051 = vst [vmem:[#allocation2 + $0x368] sm:$0xff] %v2647
      %3052 = vst [vmem:[#allocation2 + $0x3a0] sm:$0xff] %v2648
      %3053 = vst [vmem:[#allocation2 + $0x3a8] sm:$0xff] %v2649
      %3054 = vst [vmem:[#allocation2 + $0x3e0] sm:$0xff] %v2650
      %3055 = vst [vmem:[#allocation2 + $0x3e8] sm:$0xff] %v2651
      %3056 = vst [vmem:[#allocation2 + $0x420] sm:$0xff] %v2652
      %3057 = vst [vmem:[#allocation2 + $0x428] sm:$0xff] %v2653
      %3058 = vst [vmem:[#allocation2 + $0x460] sm:$0xff] %v2654
      %3059 = vst [vmem:[#allocation2 + $0x468] sm:$0xff] %v2655
      %3060 = vst [vmem:[#allocation2 + $0x4a0] sm:$0xff] %v2656
      %3061 = vst [vmem:[#allocation2 + $0x4a8] sm:$0xff] %v2657
      %3062 = vst [vmem:[#allocation2 + $0x4e0] sm:$0xff] %v2658
      %3063 = vst [vmem:[#allocation2 + $0x4e8] sm:$0xff] %v2659
      %3064 = vst [vmem:[#allocation2 + $0x520] sm:$0xff] %v2660
      %3065 = vst [vmem:[#allocation2 + $0x528] sm:$0xff] %v2661
      %3066 = vst [vmem:[#allocation2 + $0x560] sm:$0xff] %v2662
      %3067 = vst [vmem:[#allocation2 + $0x568] sm:$0xff] %v2663
      %3068 = vst [vmem:[#allocation2 + $0x5a0] sm:$0xff] %v2664
      %3069 = vst [vmem:[#allocation2 + $0x5a8] sm:$0xff] %v2665
      %3070 = vst [vmem:[#allocation2 + $0x5e0] sm:$0xff] %v2666
      %3071 = vst [vmem:[#allocation2 + $0x5e8] sm:$0xff] %v2667
      %3072 = vst [vmem:[#allocation2 + $0x620] sm:$0xff] %v2668
      %3073 = vst [vmem:[#allocation2 + $0x628] sm:$0xff] %v2669
      %3074 = vst [vmem:[#allocation2 + $0x660] sm:$0xff] %v2670
      %3075 = vst [vmem:[#allocation2 + $0x668] sm:$0xff] %v2671
      %3076 = vst [vmem:[#allocation2 + $0x6a0] sm:$0xff] %v2672
      %3077 = vst [vmem:[#allocation2 + $0x6a8] sm:$0xff] %v2673
      %3078 = vst [vmem:[#allocation2 + $0x6e0] sm:$0xff] %v2674
      %3079 = vst [vmem:[#allocation2 + $0x6e8] sm:$0xff] %v2675
      %3080 = vst [vmem:[#allocation2 + $0x720] sm:$0xff] %v2676
      %3081 = vst [vmem:[#allocation2 + $0x728] sm:$0xff] %v2677
      %3082 = vst [vmem:[#allocation2 + $0x760] sm:$0xff] %v2678
      %3083 = vst [vmem:[#allocation2 + $0x768] sm:$0xff] %v2679
      %3084 = vst [vmem:[#allocation2 + $0x7a0] sm:$0xff] %v2680
      %3085 = vst [vmem:[#allocation2 + $0x7a8] sm:$0xff] %v2681
      %3086 = vst [vmem:[#allocation2 + $0x7e0] sm:$0xff] %v2682
      %3087 = vst [vmem:[#allocation2 + $0x7e8] sm:$0xff] %v2683
      %3088 = vst [vmem:[#allocation2 + $0x820] sm:$0xff] %v2684
      %3089 = vst [vmem:[#allocation2 + $0x828] sm:$0xff] %v2685
      %3090 = vst [vmem:[#allocation2 + $0x860] sm:$0xff] %v2686
      %3091 = vst [vmem:[#allocation2 + $0x868] sm:$0xff] %v2687
      %3092 = vst [vmem:[#allocation2 + $0x8a0] sm:$0xff] %v2688
      %3093 = vst [vmem:[#allocation2 + $0x8a8] sm:$0xff] %v2689
      %3094 = vst [vmem:[#allocation2 + $0x8e0] sm:$0xff] %v2690
      %3095 = vst [vmem:[#allocation2 + $0x8e8] sm:$0xff] %v2691
      %3096 = vst [vmem:[#allocation2 + $0x920] sm:$0xff] %v2692
      %3097 = vst [vmem:[#allocation2 + $0x928] sm:$0xff] %v2693
      %3098 = vst [vmem:[#allocation2 + $0x960] sm:$0xff] %v2694
      %3099 = vst [vmem:[#allocation2 + $0x968] sm:$0xff] %v2695
      %3100 = vst [vmem:[#allocation2 + $0x9a0] sm:$0xff] %v2696
      %3101 = vst [vmem:[#allocation2 + $0x9a8] sm:$0xff] %v2697
      %3102 = vst [vmem:[#allocation2 + $0x9e0] sm:$0xff] %v2698
      %3103 = vst [vmem:[#allocation2 + $0x9e8] sm:$0xff] %v2699
      %3104 = vst [vmem:[#allocation2 + $0xa20] sm:$0xff] %v2700
      %3105 = vst [vmem:[#allocation2 + $0xa28] sm:$0xff] %v2701
      %3106 = vst [vmem:[#allocation2 + $0xa60] sm:$0xff] %v2702
      %3107 = vst [vmem:[#allocation2 + $0xa68] sm:$0xff] %v2703
      %3108 = vst [vmem:[#allocation2 + $0xaa0] sm:$0xff] %v2704
      %3109 = vst [vmem:[#allocation2 + $0xaa8] sm:$0xff] %v2705
      %3110 = vst [vmem:[#allocation2 + $0xae0] sm:$0xff] %v2706
      %3111 = vst [vmem:[#allocation2 + $0xae8] sm:$0xff] %v2707
      %3112 = vst [vmem:[#allocation2 + $0xb20] sm:$0xff] %v2708
      %3113 = vst [vmem:[#allocation2 + $0xb28] sm:$0xff] %v2709
      %3114 = vst [vmem:[#allocation2 + $0xb60] sm:$0xff] %v2710
      %3115 = vst [vmem:[#allocation2 + $0xb68] sm:$0xff] %v2711
      %3116 = vst [vmem:[#allocation2 + $0xba0] sm:$0xff] %v2712
      %3117 = vst [vmem:[#allocation2 + $0xba8] sm:$0xff] %v2713
      %3118 = vst [vmem:[#allocation2 + $0xbe0] sm:$0xff] %v2714
      %3119 = vst [vmem:[#allocation2 + $0xbe8] sm:$0xff] %v2715
      %3120 = vst [vmem:[#allocation2 + $0xc20] sm:$0xff] %v2716
      %3121 = vst [vmem:[#allocation2 + $0xc28] sm:$0xff] %v2717
      %3122 = vst [vmem:[#allocation2 + $0xc60] sm:$0xff] %v2718
      %3123 = vst [vmem:[#allocation2 + $0xc68] sm:$0xff] %v2719
      %3124 = vst [vmem:[#allocation2 + $0x30] sm:$0xff] %v2724
      %3125 = vst [vmem:[#allocation2 + $0x38] sm:$0xff] %v2725
      %3126 = vst [vmem:[#allocation2 + $0x70] sm:$0xff] %v2726
      %3127 = vst [vmem:[#allocation2 + $0x78] sm:$0xff] %v2727
      %3128 = vst [vmem:[#allocation2 + $0xb0] sm:$0xff] %v2728
      %3129 = vst [vmem:[#allocation2 + $0xb8] sm:$0xff] %v2729
      %3130 = vst [vmem:[#allocation2 + $0xf0] sm:$0xff] %v2730
      %3131 = vst [vmem:[#allocation2 + $0xf8] sm:$0xff] %v2731
      %3132 = vst [vmem:[#allocation2 + $0x130] sm:$0xff] %v2732
      %3133 = vst [vmem:[#allocation2 + $0x138] sm:$0xff] %v2733
      %3134 = vst [vmem:[#allocation2 + $0x170] sm:$0xff] %v2734
      %3135 = vst [vmem:[#allocation2 + $0x178] sm:$0xff] %v2735
      %3136 = vst [vmem:[#allocation2 + $0x1b0] sm:$0xff] %v2736
      %3137 = vst [vmem:[#allocation2 + $0x1b8] sm:$0xff] %v2737
      %3138 = vst [vmem:[#allocation2 + $0x1f0] sm:$0xff] %v2738
      %3139 = vst [vmem:[#allocation2 + $0x1f8] sm:$0xff] %v2739
      %3140 = vst [vmem:[#allocation2 + $0x230] sm:$0xff] %v2740
      %3141 = vst [vmem:[#allocation2 + $0x238] sm:$0xff] %v2741
      %3142 = vst [vmem:[#allocation2 + $0x270] sm:$0xff] %v2742
      %3143 = vst [vmem:[#allocation2 + $0x278] sm:$0xff] %v2743
      %3144 = vst [vmem:[#allocation2 + $0x2b0] sm:$0xff] %v2744
      %3145 = vst [vmem:[#allocation2 + $0x2b8] sm:$0xff] %v2745
      %3146 = vst [vmem:[#allocation2 + $0x2f0] sm:$0xff] %v2746
      %3147 = vst [vmem:[#allocation2 + $0x2f8] sm:$0xff] %v2747
      %3148 = vst [vmem:[#allocation2 + $0x330] sm:$0xff] %v2748
      %3149 = vst [vmem:[#allocation2 + $0x338] sm:$0xff] %v2749
      %3150 = vst [vmem:[#allocation2 + $0x370] sm:$0xff] %v2750
      %3151 = vst [vmem:[#allocation2 + $0x378] sm:$0xff] %v2751
      %3152 = vst [vmem:[#allocation2 + $0x3b0] sm:$0xff] %v2752
      %3153 = vst [vmem:[#allocation2 + $0x3b8] sm:$0xff] %v2753
      %3154 = vst [vmem:[#allocation2 + $0x3f0] sm:$0xff] %v2754
      %3155 = vst [vmem:[#allocation2 + $0x3f8] sm:$0xff] %v2755
      %3156 = vst [vmem:[#allocation2 + $0x430] sm:$0xff] %v2756
      %3157 = vst [vmem:[#allocation2 + $0x438] sm:$0xff] %v2757
      %3158 = vst [vmem:[#allocation2 + $0x470] sm:$0xff] %v2758
      %3159 = vst [vmem:[#allocation2 + $0x478] sm:$0xff] %v2759
      %3160 = vst [vmem:[#allocation2 + $0x4b0] sm:$0xff] %v2760
      %3161 = vst [vmem:[#allocation2 + $0x4b8] sm:$0xff] %v2761
      %3162 = vst [vmem:[#allocation2 + $0x4f0] sm:$0xff] %v2762
      %3163 = vst [vmem:[#allocation2 + $0x4f8] sm:$0xff] %v2763
      %3164 = vst [vmem:[#allocation2 + $0x530] sm:$0xff] %v2764
      %3165 = vst [vmem:[#allocation2 + $0x538] sm:$0xff] %v2765
      %3166 = vst [vmem:[#allocation2 + $0x570] sm:$0xff] %v2766
      %3167 = vst [vmem:[#allocation2 + $0x578] sm:$0xff] %v2767
      %3168 = vst [vmem:[#allocation2 + $0x5b0] sm:$0xff] %v2768
      %3169 = vst [vmem:[#allocation2 + $0x5b8] sm:$0xff] %v2769
      %3170 = vst [vmem:[#allocation2 + $0x5f0] sm:$0xff] %v2770
      %3171 = vst [vmem:[#allocation2 + $0x5f8] sm:$0xff] %v2771
      %3172 = vst [vmem:[#allocation2 + $0x630] sm:$0xff] %v2772
      %3173 = vst [vmem:[#allocation2 + $0x638] sm:$0xff] %v2773
      %3174 = vst [vmem:[#allocation2 + $0x670] sm:$0xff] %v2774
      %3175 = vst [vmem:[#allocation2 + $0x678] sm:$0xff] %v2775
      %3176 = vst [vmem:[#allocation2 + $0x6b0] sm:$0xff] %v2776
      %3177 = vst [vmem:[#allocation2 + $0x6b8] sm:$0xff] %v2777
      %3178 = vst [vmem:[#allocation2 + $0x6f0] sm:$0xff] %v2778
      %3179 = vst [vmem:[#allocation2 + $0x6f8] sm:$0xff] %v2779
      %3180 = vst [vmem:[#allocation2 + $0x730] sm:$0xff] %v2780
      %3181 = vst [vmem:[#allocation2 + $0x738] sm:$0xff] %v2781
      %3182 = vst [vmem:[#allocation2 + $0x770] sm:$0xff] %v2782
      %3183 = vst [vmem:[#allocation2 + $0x778] sm:$0xff] %v2783
      %3184 = vst [vmem:[#allocation2 + $0x7b0] sm:$0xff] %v2784
      %3185 = vst [vmem:[#allocation2 + $0x7b8] sm:$0xff] %v2785
      %3186 = vst [vmem:[#allocation2 + $0x7f0] sm:$0xff] %v2786
      %3187 = vst [vmem:[#allocation2 + $0x7f8] sm:$0xff] %v2787
      %3188 = vst [vmem:[#allocation2 + $0x830] sm:$0xff] %v2788
      %3189 = vst [vmem:[#allocation2 + $0x838] sm:$0xff] %v2789
      %3190 = vst [vmem:[#allocation2 + $0x870] sm:$0xff] %v2790
      %3191 = vst [vmem:[#allocation2 + $0x878] sm:$0xff] %v2791
      %3192 = vst [vmem:[#allocation2 + $0x8b0] sm:$0xff] %v2792
      %3193 = vst [vmem:[#allocation2 + $0x8b8] sm:$0xff] %v2793
      %3194 = vst [vmem:[#allocation2 + $0x8f0] sm:$0xff] %v2794
      %3195 = vst [vmem:[#allocation2 + $0x8f8] sm:$0xff] %v2795
      %3196 = vst [vmem:[#allocation2 + $0x930] sm:$0xff] %v2796
      %3197 = vst [vmem:[#allocation2 + $0x938] sm:$0xff] %v2797
      %3198 = vst [vmem:[#allocation2 + $0x970] sm:$0xff] %v2798
      %3199 = vst [vmem:[#allocation2 + $0x978] sm:$0xff] %v2799
      %3200 = vst [vmem:[#allocation2 + $0x9b0] sm:$0xff] %v2800
      %3201 = vst [vmem:[#allocation2 + $0x9b8] sm:$0xff] %v2801
      %3202 = vst [vmem:[#allocation2 + $0x9f0] sm:$0xff] %v2802
      %3203 = vst [vmem:[#allocation2 + $0x9f8] sm:$0xff] %v2803
      %3204 = vst [vmem:[#allocation2 + $0xa30] sm:$0xff] %v2804
      %3205 = vst [vmem:[#allocation2 + $0xa38] sm:$0xff] %v2805
      %3206 = vst [vmem:[#allocation2 + $0xa70] sm:$0xff] %v2806
      %3207 = vst [vmem:[#allocation2 + $0xa78] sm:$0xff] %v2807
      %3208 = vst [vmem:[#allocation2 + $0xab0] sm:$0xff] %v2808
      %3209 = vst [vmem:[#allocation2 + $0xab8] sm:$0xff] %v2809
      %3210 = vst [vmem:[#allocation2 + $0xaf0] sm:$0xff] %v2810
      %3211 = vst [vmem:[#allocation2 + $0xaf8] sm:$0xff] %v2811
      %3212 = vst [vmem:[#allocation2 + $0xb30] sm:$0xff] %v2812
      %3213 = vst [vmem:[#allocation2 + $0xb38] sm:$0xff] %v2813
      %3214 = vst [vmem:[#allocation2 + $0xb70] sm:$0xff] %v2814
      %3215 = vst [vmem:[#allocation2 + $0xb78] sm:$0xff] %v2815
      %3216 = vst [vmem:[#allocation2 + $0xbb0] sm:$0xff] %v2816
      %3217 = vst [vmem:[#allocation2 + $0xbb8] sm:$0xff] %v2817
      %3218 = vst [vmem:[#allocation2 + $0xbf0] sm:$0xff] %v2818
      %3219 = vst [vmem:[#allocation2 + $0xbf8] sm:$0xff] %v2819
      %3220 = vst [vmem:[#allocation2 + $0xc30] sm:$0xff] %v2820
      %3221 = vst [vmem:[#allocation2 + $0xc38] sm:$0xff] %v2821
      %3222 = vst [vmem:[#allocation2 + $0xc70] sm:$0xff] %v2822
      %3223 = vst [vmem:[#allocation2 + $0xc78] sm:$0xff] %v2823
      %v3224 = vld [vmem:[#allocation2] sm:$0xff]
      %v3225 = vld [vmem:[#allocation2 + $0x8] sm:$0xff]
      %v3226 = vld [vmem:[#allocation2 + $0x10] sm:$0xff]
      %v3227 = vld [vmem:[#allocation2 + $0x18] sm:$0xff]
      %v3228 = vld [vmem:[#allocation2 + $0x20] sm:$0xff]
      %v3229 = vld [vmem:[#allocation2 + $0x28] sm:$0xff]
      %v3230 = vld [vmem:[#allocation2 + $0x30] sm:$0xff]
      %v3231 = vld [vmem:[#allocation2 + $0x38] sm:$0xff]
      %v3232 = vld [vmem:[#allocation2 + $0x40] sm:$0xff]
      %v3233 = vld [vmem:[#allocation2 + $0x48] sm:$0xff]
      %v3234 = vld [vmem:[#allocation2 + $0x50] sm:$0xff]
      %v3235 = vld [vmem:[#allocation2 + $0x58] sm:$0xff]
      %v3236 = vld [vmem:[#allocation2 + $0x60] sm:$0xff]
      %v3237 = vld [vmem:[#allocation2 + $0x68] sm:$0xff]
      %v3238 = vld [vmem:[#allocation2 + $0x70] sm:$0xff]
      %v3239 = vld [vmem:[#allocation2 + $0x78] sm:$0xff]
      %v3240 = vld [vmem:[#allocation2 + $0x80] sm:$0xff]
      %v3241 = vld [vmem:[#allocation2 + $0x88] sm:$0xff]
      %v3242 = vld [vmem:[#allocation2 + $0x90] sm:$0xff]
      %v3243 = vld [vmem:[#allocation2 + $0x98] sm:$0xff]
      %v3244 = vld [vmem:[#allocation2 + $0xa0] sm:$0xff]
      %v3245 = vld [vmem:[#allocation2 + $0xa8] sm:$0xff]
      %v3246 = vld [vmem:[#allocation2 + $0xb0] sm:$0xff]
      %v3247 = vld [vmem:[#allocation2 + $0xb8] sm:$0xff]
      %v3248 = vld [vmem:[#allocation2 + $0xc0] sm:$0xff]
      %v3249 = vld [vmem:[#allocation2 + $0xc8] sm:$0xff]
      %v3250 = vld [vmem:[#allocation2 + $0xd0] sm:$0xff]
      %v3251 = vld [vmem:[#allocation2 + $0xd8] sm:$0xff]
      %v3252 = vld [vmem:[#allocation2 + $0xe0] sm:$0xff]
      %v3253 = vld [vmem:[#allocation2 + $0xe8] sm:$0xff]
      %v3254 = vld [vmem:[#allocation2 + $0xf0] sm:$0xff]
      %v3255 = vld [vmem:[#allocation2 + $0xf8] sm:$0xff]
      %v3256 = vld [vmem:[#allocation2 + $0x100] sm:$0xff]
      %v3257 = vld [vmem:[#allocation2 + $0x108] sm:$0xff]
      %v3258 = vld [vmem:[#allocation2 + $0x110] sm:$0xff]
      %v3259 = vld [vmem:[#allocation2 + $0x118] sm:$0xff]
      %v3260 = vld [vmem:[#allocation2 + $0x120] sm:$0xff]
      %v3261 = vld [vmem:[#allocation2 + $0x128] sm:$0xff]
      %v3262 = vld [vmem:[#allocation2 + $0x130] sm:$0xff]
      %v3263 = vld [vmem:[#allocation2 + $0x138] sm:$0xff]
      %v3264 = vld [vmem:[#allocation2 + $0x140] sm:$0xff]
      %v3265 = vld [vmem:[#allocation2 + $0x148] sm:$0xff]
      %v3266 = vld [vmem:[#allocation2 + $0x150] sm:$0xff]
      %v3267 = vld [vmem:[#allocation2 + $0x158] sm:$0xff]
      %v3268 = vld [vmem:[#allocation2 + $0x160] sm:$0xff]
      %v3269 = vld [vmem:[#allocation2 + $0x168] sm:$0xff]
      %v3270 = vld [vmem:[#allocation2 + $0x170] sm:$0xff]
      %v3271 = vld [vmem:[#allocation2 + $0x178] sm:$0xff]
      %v3272 = vld [vmem:[#allocation2 + $0x180] sm:$0xff]
      %v3273 = vld [vmem:[#allocation2 + $0x188] sm:$0xff]
      %v3274 = vld [vmem:[#allocation2 + $0x190] sm:$0xff]
      %v3275 = vld [vmem:[#allocation2 + $0x198] sm:$0xff]
      %v3276 = vld [vmem:[#allocation2 + $0x1a0] sm:$0xff]
      %v3277 = vld [vmem:[#allocation2 + $0x1a8] sm:$0xff]
      %v3278 = vld [vmem:[#allocation2 + $0x1b0] sm:$0xff]
      %v3279 = vld [vmem:[#allocation2 + $0x1b8] sm:$0xff]
      %v3280 = vld [vmem:[#allocation2 + $0x1c0] sm:$0xff]
      %v3281 = vld [vmem:[#allocation2 + $0x1c8] sm:$0xff]
      %v3282 = vld [vmem:[#allocation2 + $0x1d0] sm:$0xff]
      %v3283 = vld [vmem:[#allocation2 + $0x1d8] sm:$0xff]
      %v3284 = vld [vmem:[#allocation2 + $0x1e0] sm:$0xff]
      %v3285 = vld [vmem:[#allocation2 + $0x1e8] sm:$0xff]
      %v3286 = vld [vmem:[#allocation2 + $0x1f0] sm:$0xff]
      %v3287 = vld [vmem:[#allocation2 + $0x1f8] sm:$0xff]
      %v3288 = vld [vmem:[#allocation2 + $0x200] sm:$0xff]
      %v3289 = vld [vmem:[#allocation2 + $0x208] sm:$0xff]
      %v3290 = vld [vmem:[#allocation2 + $0x210] sm:$0xff]
      %v3291 = vld [vmem:[#allocation2 + $0x218] sm:$0xff]
      %v3292 = vld [vmem:[#allocation2 + $0x220] sm:$0xff]
      %v3293 = vld [vmem:[#allocation2 + $0x228] sm:$0xff]
      %v3294 = vld [vmem:[#allocation2 + $0x230] sm:$0xff]
      %v3295 = vld [vmem:[#allocation2 + $0x238] sm:$0xff]
      %v3296 = vld [vmem:[#allocation2 + $0x240] sm:$0xff]
      %v3297 = vld [vmem:[#allocation2 + $0x248] sm:$0xff]
      %v3298 = vld [vmem:[#allocation2 + $0x250] sm:$0xff]
      %v3299 = vld [vmem:[#allocation2 + $0x258] sm:$0xff]
      %v3300 = vld [vmem:[#allocation2 + $0x260] sm:$0xff]
      %v3301 = vld [vmem:[#allocation2 + $0x268] sm:$0xff]
      %v3302 = vld [vmem:[#allocation2 + $0x270] sm:$0xff]
      %v3303 = vld [vmem:[#allocation2 + $0x278] sm:$0xff]
      %v3304 = vld [vmem:[#allocation2 + $0x280] sm:$0xff]
      %v3305 = vld [vmem:[#allocation2 + $0x288] sm:$0xff]
      %v3306 = vld [vmem:[#allocation2 + $0x290] sm:$0xff]
      %v3307 = vld [vmem:[#allocation2 + $0x298] sm:$0xff]
      %v3308 = vld [vmem:[#allocation2 + $0x2a0] sm:$0xff]
      %v3309 = vld [vmem:[#allocation2 + $0x2a8] sm:$0xff]
      %v3310 = vld [vmem:[#allocation2 + $0x2b0] sm:$0xff]
      %v3311 = vld [vmem:[#allocation2 + $0x2b8] sm:$0xff]
      %v3312 = vld [vmem:[#allocation2 + $0x2c0] sm:$0xff]
      %v3313 = vld [vmem:[#allocation2 + $0x2c8] sm:$0xff]
      %v3314 = vld [vmem:[#allocation2 + $0x2d0] sm:$0xff]
      %v3315 = vld [vmem:[#allocation2 + $0x2d8] sm:$0xff]
      %v3316 = vld [vmem:[#allocation2 + $0x2e0] sm:$0xff]
      %v3317 = vld [vmem:[#allocation2 + $0x2e8] sm:$0xff]
      %v3318 = vld [vmem:[#allocation2 + $0x2f0] sm:$0xff]
      %v3319 = vld [vmem:[#allocation2 + $0x2f8] sm:$0xff]
      %v3320 = vld [vmem:[#allocation2 + $0x300] sm:$0xff]
      %v3321 = vld [vmem:[#allocation2 + $0x308] sm:$0xff]
      %v3322 = vld [vmem:[#allocation2 + $0x310] sm:$0xff]
      %v3323 = vld [vmem:[#allocation2 + $0x318] sm:$0xff]
      %v3324 = vld [vmem:[#allocation2 + $0x320] sm:$0xff]
      %v3325 = vld [vmem:[#allocation2 + $0x328] sm:$0xff]
      %v3326 = vld [vmem:[#allocation2 + $0x330] sm:$0xff]
      %v3327 = vld [vmem:[#allocation2 + $0x338] sm:$0xff]
      %v3328 = vld [vmem:[#allocation2 + $0x340] sm:$0xff]
      %v3329 = vld [vmem:[#allocation2 + $0x348] sm:$0xff]
      %v3330 = vld [vmem:[#allocation2 + $0x350] sm:$0xff]
      %v3331 = vld [vmem:[#allocation2 + $0x358] sm:$0xff]
      %v3332 = vld [vmem:[#allocation2 + $0x360] sm:$0xff]
      %v3333 = vld [vmem:[#allocation2 + $0x368] sm:$0xff]
      %v3334 = vld [vmem:[#allocation2 + $0x370] sm:$0xff]
      %v3335 = vld [vmem:[#allocation2 + $0x378] sm:$0xff]
      %v3336 = vld [vmem:[#allocation2 + $0x380] sm:$0xff]
      %v3337 = vld [vmem:[#allocation2 + $0x388] sm:$0xff]
      %v3338 = vld [vmem:[#allocation2 + $0x390] sm:$0xff]
      %v3339 = vld [vmem:[#allocation2 + $0x398] sm:$0xff]
      %v3340 = vld [vmem:[#allocation2 + $0x3a0] sm:$0xff]
      %v3341 = vld [vmem:[#allocation2 + $0x3a8] sm:$0xff]
      %v3342 = vld [vmem:[#allocation2 + $0x3b0] sm:$0xff]
      %v3343 = vld [vmem:[#allocation2 + $0x3b8] sm:$0xff]
      %v3344 = vld [vmem:[#allocation2 + $0x3c0] sm:$0xff]
      %v3345 = vld [vmem:[#allocation2 + $0x3c8] sm:$0xff]
      %v3346 = vld [vmem:[#allocation2 + $0x3d0] sm:$0xff]
      %v3347 = vld [vmem:[#allocation2 + $0x3d8] sm:$0xff]
      %v3348 = vld [vmem:[#allocation2 + $0x3e0] sm:$0xff]
      %v3349 = vld [vmem:[#allocation2 + $0x3e8] sm:$0xff]
      %v3350 = vld [vmem:[#allocation2 + $0x3f0] sm:$0xff]
      %v3351 = vld [vmem:[#allocation2 + $0x3f8] sm:$0xff]
      %v3352 = vld [vmem:[#allocation2 + $0x400] sm:$0xff]
      %v3353 = vld [vmem:[#allocation2 + $0x408] sm:$0xff]
      %v3354 = vld [vmem:[#allocation2 + $0x410] sm:$0xff]
      %v3355 = vld [vmem:[#allocation2 + $0x418] sm:$0xff]
      %v3356 = vld [vmem:[#allocation2 + $0x420] sm:$0xff]
      %v3357 = vld [vmem:[#allocation2 + $0x428] sm:$0xff]
      %v3358 = vld [vmem:[#allocation2 + $0x430] sm:$0xff]
      %v3359 = vld [vmem:[#allocation2 + $0x438] sm:$0xff]
      %v3360 = vld [vmem:[#allocation2 + $0x440] sm:$0xff]
      %v3361 = vld [vmem:[#allocation2 + $0x448] sm:$0xff]
      %v3362 = vld [vmem:[#allocation2 + $0x450] sm:$0xff]
      %v3363 = vld [vmem:[#allocation2 + $0x458] sm:$0xff]
      %v3364 = vld [vmem:[#allocation2 + $0x460] sm:$0xff]
      %v3365 = vld [vmem:[#allocation2 + $0x468] sm:$0xff]
      %v3366 = vld [vmem:[#allocation2 + $0x470] sm:$0xff]
      %v3367 = vld [vmem:[#allocation2 + $0x478] sm:$0xff]
      %v3368 = vld [vmem:[#allocation2 + $0x480] sm:$0xff]
      %v3369 = vld [vmem:[#allocation2 + $0x488] sm:$0xff]
      %v3370 = vld [vmem:[#allocation2 + $0x490] sm:$0xff]
      %v3371 = vld [vmem:[#allocation2 + $0x498] sm:$0xff]
      %v3372 = vld [vmem:[#allocation2 + $0x4a0] sm:$0xff]
      %v3373 = vld [vmem:[#allocation2 + $0x4a8] sm:$0xff]
      %v3374 = vld [vmem:[#allocation2 + $0x4b0] sm:$0xff]
      %v3375 = vld [vmem:[#allocation2 + $0x4b8] sm:$0xff]
      %v3376 = vld [vmem:[#allocation2 + $0x4c0] sm:$0xff]
      %v3377 = vld [vmem:[#allocation2 + $0x4c8] sm:$0xff]
      %v3378 = vld [vmem:[#allocation2 + $0x4d0] sm:$0xff]
      %v3379 = vld [vmem:[#allocation2 + $0x4d8] sm:$0xff]
      %v3380 = vld [vmem:[#allocation2 + $0x4e0] sm:$0xff]
      %v3381 = vld [vmem:[#allocation2 + $0x4e8] sm:$0xff]
      %v3382 = vld [vmem:[#allocation2 + $0x4f0] sm:$0xff]
      %v3383 = vld [vmem:[#allocation2 + $0x4f8] sm:$0xff]
      %v3384 = vld [vmem:[#allocation2 + $0x500] sm:$0xff]
      %v3385 = vld [vmem:[#allocation2 + $0x508] sm:$0xff]
      %v3386 = vld [vmem:[#allocation2 + $0x510] sm:$0xff]
      %v3387 = vld [vmem:[#allocation2 + $0x518] sm:$0xff]
      %v3388 = vld [vmem:[#allocation2 + $0x520] sm:$0xff]
      %v3389 = vld [vmem:[#allocation2 + $0x528] sm:$0xff]
      %v3390 = vld [vmem:[#allocation2 + $0x530] sm:$0xff]
      %v3391 = vld [vmem:[#allocation2 + $0x538] sm:$0xff]
      %v3392 = vld [vmem:[#allocation2 + $0x540] sm:$0xff]
      %v3393 = vld [vmem:[#allocation2 + $0x548] sm:$0xff]
      %v3394 = vld [vmem:[#allocation2 + $0x550] sm:$0xff]
      %v3395 = vld [vmem:[#allocation2 + $0x558] sm:$0xff]
      %v3396 = vld [vmem:[#allocation2 + $0x560] sm:$0xff]
      %v3397 = vld [vmem:[#allocation2 + $0x568] sm:$0xff]
      %v3398 = vld [vmem:[#allocation2 + $0x570] sm:$0xff]
      %v3399 = vld [vmem:[#allocation2 + $0x578] sm:$0xff]
      %v3400 = vld [vmem:[#allocation2 + $0x580] sm:$0xff]
      %v3401 = vld [vmem:[#allocation2 + $0x588] sm:$0xff]
      %v3402 = vld [vmem:[#allocation2 + $0x590] sm:$0xff]
      %v3403 = vld [vmem:[#allocation2 + $0x598] sm:$0xff]
      %v3404 = vld [vmem:[#allocation2 + $0x5a0] sm:$0xff]
      %v3405 = vld [vmem:[#allocation2 + $0x5a8] sm:$0xff]
      %v3406 = vld [vmem:[#allocation2 + $0x5b0] sm:$0xff]
      %v3407 = vld [vmem:[#allocation2 + $0x5b8] sm:$0xff]
      %v3408 = vld [vmem:[#allocation2 + $0x5c0] sm:$0xff]
      %v3409 = vld [vmem:[#allocation2 + $0x5c8] sm:$0xff]
      %v3410 = vld [vmem:[#allocation2 + $0x5d0] sm:$0xff]
      %v3411 = vld [vmem:[#allocation2 + $0x5d8] sm:$0xff]
      %v3412 = vld [vmem:[#allocation2 + $0x5e0] sm:$0xff]
      %v3413 = vld [vmem:[#allocation2 + $0x5e8] sm:$0xff]
      %v3414 = vld [vmem:[#allocation2 + $0x5f0] sm:$0xff]
      %v3415 = vld [vmem:[#allocation2 + $0x5f8] sm:$0xff]
      %v3416 = vld [vmem:[#allocation2 + $0x600] sm:$0xff]
      %v3417 = vld [vmem:[#allocation2 + $0x608] sm:$0xff]
      %v3418 = vld [vmem:[#allocation2 + $0x610] sm:$0xff]
      %v3419 = vld [vmem:[#allocation2 + $0x618] sm:$0xff]
      %v3420 = vld [vmem:[#allocation2 + $0x620] sm:$0xff]
      %v3421 = vld [vmem:[#allocation2 + $0x628] sm:$0xff]
      %v3422 = vld [vmem:[#allocation2 + $0x630] sm:$0xff]
      %v3423 = vld [vmem:[#allocation2 + $0x638] sm:$0xff]
      %v3424 = vld [vmem:[#allocation2 + $0x640] sm:$0xff]
      %v3425 = vld [vmem:[#allocation2 + $0x648] sm:$0xff]
      %v3426 = vld [vmem:[#allocation2 + $0x650] sm:$0xff]
      %v3427 = vld [vmem:[#allocation2 + $0x658] sm:$0xff]
      %v3428 = vld [vmem:[#allocation2 + $0x660] sm:$0xff]
      %v3429 = vld [vmem:[#allocation2 + $0x668] sm:$0xff]
      %v3430 = vld [vmem:[#allocation2 + $0x670] sm:$0xff]
      %v3431 = vld [vmem:[#allocation2 + $0x678] sm:$0xff]
      %v3432 = vld [vmem:[#allocation2 + $0x680] sm:$0xff]
      %v3433 = vld [vmem:[#allocation2 + $0x688] sm:$0xff]
      %v3434 = vld [vmem:[#allocation2 + $0x690] sm:$0xff]
      %v3435 = vld [vmem:[#allocation2 + $0x698] sm:$0xff]
      %v3436 = vld [vmem:[#allocation2 + $0x6a0] sm:$0xff]
      %v3437 = vld [vmem:[#allocation2 + $0x6a8] sm:$0xff]
      %v3438 = vld [vmem:[#allocation2 + $0x6b0] sm:$0xff]
      %v3439 = vld [vmem:[#allocation2 + $0x6b8] sm:$0xff]
      %v3440 = vld [vmem:[#allocation2 + $0x6c0] sm:$0xff]
      %v3441 = vld [vmem:[#allocation2 + $0x6c8] sm:$0xff]
      %v3442 = vld [vmem:[#allocation2 + $0x6d0] sm:$0xff]
      %v3443 = vld [vmem:[#allocation2 + $0x6d8] sm:$0xff]
      %v3444 = vld [vmem:[#allocation2 + $0x6e0] sm:$0xff]
      %v3445 = vld [vmem:[#allocation2 + $0x6e8] sm:$0xff]
      %v3446 = vld [vmem:[#allocation2 + $0x6f0] sm:$0xff]
      %v3447 = vld [vmem:[#allocation2 + $0x6f8] sm:$0xff]
      %v3448 = vld [vmem:[#allocation2 + $0x700] sm:$0xff]
      %v3449 = vld [vmem:[#allocation2 + $0x708] sm:$0xff]
      %v3450 = vld [vmem:[#allocation2 + $0x710] sm:$0xff]
      %v3451 = vld [vmem:[#allocation2 + $0x718] sm:$0xff]
      %v3452 = vld [vmem:[#allocation2 + $0x720] sm:$0xff]
      %v3453 = vld [vmem:[#allocation2 + $0x728] sm:$0xff]
      %v3454 = vld [vmem:[#allocation2 + $0x730] sm:$0xff]
      %v3455 = vld [vmem:[#allocation2 + $0x738] sm:$0xff]
      %v3456 = vld [vmem:[#allocation2 + $0x740] sm:$0xff]
      %v3457 = vld [vmem:[#allocation2 + $0x748] sm:$0xff]
      %v3458 = vld [vmem:[#allocation2 + $0x750] sm:$0xff]
      %v3459 = vld [vmem:[#allocation2 + $0x758] sm:$0xff]
      %v3460 = vld [vmem:[#allocation2 + $0x760] sm:$0xff]
      %v3461 = vld [vmem:[#allocation2 + $0x768] sm:$0xff]
      %v3462 = vld [vmem:[#allocation2 + $0x770] sm:$0xff]
      %v3463 = vld [vmem:[#allocation2 + $0x778] sm:$0xff]
      %v3464 = vld [vmem:[#allocation2 + $0x780] sm:$0xff]
      %v3465 = vld [vmem:[#allocation2 + $0x788] sm:$0xff]
      %v3466 = vld [vmem:[#allocation2 + $0x790] sm:$0xff]
      %v3467 = vld [vmem:[#allocation2 + $0x798] sm:$0xff]
      %v3468 = vld [vmem:[#allocation2 + $0x7a0] sm:$0xff]
      %v3469 = vld [vmem:[#allocation2 + $0x7a8] sm:$0xff]
      %v3470 = vld [vmem:[#allocation2 + $0x7b0] sm:$0xff]
      %v3471 = vld [vmem:[#allocation2 + $0x7b8] sm:$0xff]
      %v3472 = vld [vmem:[#allocation2 + $0x7c0] sm:$0xff]
      %v3473 = vld [vmem:[#allocation2 + $0x7c8] sm:$0xff]
      %v3474 = vld [vmem:[#allocation2 + $0x7d0] sm:$0xff]
      %v3475 = vld [vmem:[#allocation2 + $0x7d8] sm:$0xff]
      %v3476 = vld [vmem:[#allocation2 + $0x7e0] sm:$0xff]
      %v3477 = vld [vmem:[#allocation2 + $0x7e8] sm:$0xff]
      %v3478 = vld [vmem:[#allocation2 + $0x7f0] sm:$0xff]
      %v3479 = vld [vmem:[#allocation2 + $0x7f8] sm:$0xff]
      %v3480 = vld [vmem:[#allocation2 + $0x800] sm:$0xff]
      %v3481 = vld [vmem:[#allocation2 + $0x808] sm:$0xff]
      %v3482 = vld [vmem:[#allocation2 + $0x810] sm:$0xff]
      %v3483 = vld [vmem:[#allocation2 + $0x818] sm:$0xff]
      %v3484 = vld [vmem:[#allocation2 + $0x820] sm:$0xff]
      %v3485 = vld [vmem:[#allocation2 + $0x828] sm:$0xff]
      %v3486 = vld [vmem:[#allocation2 + $0x830] sm:$0xff]
      %v3487 = vld [vmem:[#allocation2 + $0x838] sm:$0xff]
      %v3488 = vld [vmem:[#allocation2 + $0x840] sm:$0xff]
      %v3489 = vld [vmem:[#allocation2 + $0x848] sm:$0xff]
      %v3490 = vld [vmem:[#allocation2 + $0x850] sm:$0xff]
      %v3491 = vld [vmem:[#allocation2 + $0x858] sm:$0xff]
      %v3492 = vld [vmem:[#allocation2 + $0x860] sm:$0xff]
      %v3493 = vld [vmem:[#allocation2 + $0x868] sm:$0xff]
      %v3494 = vld [vmem:[#allocation2 + $0x870] sm:$0xff]
      %v3495 = vld [vmem:[#allocation2 + $0x878] sm:$0xff]
      %v3496 = vld [vmem:[#allocation2 + $0x880] sm:$0xff]
      %v3497 = vld [vmem:[#allocation2 + $0x888] sm:$0xff]
      %v3498 = vld [vmem:[#allocation2 + $0x890] sm:$0xff]
      %v3499 = vld [vmem:[#allocation2 + $0x898] sm:$0xff]
      %v3500 = vld [vmem:[#allocation2 + $0x8a0] sm:$0xff]
      %v3501 = vld [vmem:[#allocation2 + $0x8a8] sm:$0xff]
      %v3502 = vld [vmem:[#allocation2 + $0x8b0] sm:$0xff]
      %v3503 = vld [vmem:[#allocation2 + $0x8b8] sm:$0xff]
      %v3504 = vld [vmem:[#allocation2 + $0x8c0] sm:$0xff]
      %v3505 = vld [vmem:[#allocation2 + $0x8c8] sm:$0xff]
      %v3506 = vld [vmem:[#allocation2 + $0x8d0] sm:$0xff]
      %v3507 = vld [vmem:[#allocation2 + $0x8d8] sm:$0xff]
      %v3508 = vld [vmem:[#allocation2 + $0x8e0] sm:$0xff]
      %v3509 = vld [vmem:[#allocation2 + $0x8e8] sm:$0xff]
      %v3510 = vld [vmem:[#allocation2 + $0x8f0] sm:$0xff]
      %v3511 = vld [vmem:[#allocation2 + $0x8f8] sm:$0xff]
      %v3512 = vld [vmem:[#allocation2 + $0x900] sm:$0xff]
      %v3513 = vld [vmem:[#allocation2 + $0x908] sm:$0xff]
      %v3514 = vld [vmem:[#allocation2 + $0x910] sm:$0xff]
      %v3515 = vld [vmem:[#allocation2 + $0x918] sm:$0xff]
      %v3516 = vld [vmem:[#allocation2 + $0x920] sm:$0xff]
      %v3517 = vld [vmem:[#allocation2 + $0x928] sm:$0xff]
      %v3518 = vld [vmem:[#allocation2 + $0x930] sm:$0xff]
      %v3519 = vld [vmem:[#allocation2 + $0x938] sm:$0xff]
      %v3520 = vld [vmem:[#allocation2 + $0x940] sm:$0xff]
      %v3521 = vld [vmem:[#allocation2 + $0x948] sm:$0xff]
      %v3522 = vld [vmem:[#allocation2 + $0x950] sm:$0xff]
      %v3523 = vld [vmem:[#allocation2 + $0x958] sm:$0xff]
      %v3524 = vld [vmem:[#allocation2 + $0x960] sm:$0xff]
      %v3525 = vld [vmem:[#allocation2 + $0x968] sm:$0xff]
      %v3526 = vld [vmem:[#allocation2 + $0x970] sm:$0xff]
      %v3527 = vld [vmem:[#allocation2 + $0x978] sm:$0xff]
      %v3528 = vld [vmem:[#allocation2 + $0x980] sm:$0xff]
      %v3529 = vld [vmem:[#allocation2 + $0x988] sm:$0xff]
      %v3530 = vld [vmem:[#allocation2 + $0x990] sm:$0xff]
      %v3531 = vld [vmem:[#allocation2 + $0x998] sm:$0xff]
      %v3532 = vld [vmem:[#allocation2 + $0x9a0] sm:$0xff]
      %v3533 = vld [vmem:[#allocation2 + $0x9a8] sm:$0xff]
      %v3534 = vld [vmem:[#allocation2 + $0x9b0] sm:$0xff]
      %v3535 = vld [vmem:[#allocation2 + $0x9b8] sm:$0xff]
      %v3536 = vld [vmem:[#allocation2 + $0x9c0] sm:$0xff]
      %v3537 = vld [vmem:[#allocation2 + $0x9c8] sm:$0xff]
      %v3538 = vld [vmem:[#allocation2 + $0x9d0] sm:$0xff]
      %v3539 = vld [vmem:[#allocation2 + $0x9d8] sm:$0xff]
      %v3540 = vld [vmem:[#allocation2 + $0x9e0] sm:$0xff]
      %v3541 = vld [vmem:[#allocation2 + $0x9e8] sm:$0xff]
      %v3542 = vld [vmem:[#allocation2 + $0x9f0] sm:$0xff]
      %v3543 = vld [vmem:[#allocation2 + $0x9f8] sm:$0xff]
      %v3544 = vld [vmem:[#allocation2 + $0xa00] sm:$0xff]
      %v3545 = vld [vmem:[#allocation2 + $0xa08] sm:$0xff]
      %v3546 = vld [vmem:[#allocation2 + $0xa10] sm:$0xff]
      %v3547 = vld [vmem:[#allocation2 + $0xa18] sm:$0xff]
      %v3548 = vld [vmem:[#allocation2 + $0xa20] sm:$0xff]
      %v3549 = vld [vmem:[#allocation2 + $0xa28] sm:$0xff]
      %v3550 = vld [vmem:[#allocation2 + $0xa30] sm:$0xff]
      %v3551 = vld [vmem:[#allocation2 + $0xa38] sm:$0xff]
      %v3552 = vld [vmem:[#allocation2 + $0xa40] sm:$0xff]
      %v3553 = vld [vmem:[#allocation2 + $0xa48] sm:$0xff]
      %v3554 = vld [vmem:[#allocation2 + $0xa50] sm:$0xff]
      %v3555 = vld [vmem:[#allocation2 + $0xa58] sm:$0xff]
      %v3556 = vld [vmem:[#allocation2 + $0xa60] sm:$0xff]
      %v3557 = vld [vmem:[#allocation2 + $0xa68] sm:$0xff]
      %v3558 = vld [vmem:[#allocation2 + $0xa70] sm:$0xff]
      %v3559 = vld [vmem:[#allocation2 + $0xa78] sm:$0xff]
      %v3560 = vld [vmem:[#allocation2 + $0xa80] sm:$0xff]
      %v3561 = vld [vmem:[#allocation2 + $0xa88] sm:$0xff]
      %v3562 = vld [vmem:[#allocation2 + $0xa90] sm:$0xff]
      %v3563 = vld [vmem:[#allocation2 + $0xa98] sm:$0xff]
      %v3564 = vld [vmem:[#allocation2 + $0xaa0] sm:$0xff]
      %v3565 = vld [vmem:[#allocation2 + $0xaa8] sm:$0xff]
      %v3566 = vld [vmem:[#allocation2 + $0xab0] sm:$0xff]
      %v3567 = vld [vmem:[#allocation2 + $0xab8] sm:$0xff]
      %v3568 = vld [vmem:[#allocation2 + $0xac0] sm:$0xff]
      %v3569 = vld [vmem:[#allocation2 + $0xac8] sm:$0xff]
      %v3570 = vld [vmem:[#allocation2 + $0xad0] sm:$0xff]
      %v3571 = vld [vmem:[#allocation2 + $0xad8] sm:$0xff]
      %v3572 = vld [vmem:[#allocation2 + $0xae0] sm:$0xff]
      %v3573 = vld [vmem:[#allocation2 + $0xae8] sm:$0xff]
      %v3574 = vld [vmem:[#allocation2 + $0xaf0] sm:$0xff]
      %v3575 = vld [vmem:[#allocation2 + $0xaf8] sm:$0xff]
      %v3576 = vld [vmem:[#allocation2 + $0xb00] sm:$0xff]
      %v3577 = vld [vmem:[#allocation2 + $0xb08] sm:$0xff]
      %v3578 = vld [vmem:[#allocation2 + $0xb10] sm:$0xff]
      %v3579 = vld [vmem:[#allocation2 + $0xb18] sm:$0xff]
      %v3580 = vld [vmem:[#allocation2 + $0xb20] sm:$0xff]
      %v3581 = vld [vmem:[#allocation2 + $0xb28] sm:$0xff]
      %v3582 = vld [vmem:[#allocation2 + $0xb30] sm:$0xff]
      %v3583 = vld [vmem:[#allocation2 + $0xb38] sm:$0xff]
      %v3584 = vld [vmem:[#allocation2 + $0xb40] sm:$0xff]
      %v3585 = vld [vmem:[#allocation2 + $0xb48] sm:$0xff]
      %v3586 = vld [vmem:[#allocation2 + $0xb50] sm:$0xff]
      %v3587 = vld [vmem:[#allocation2 + $0xb58] sm:$0xff]
      %v3588 = vld [vmem:[#allocation2 + $0xb60] sm:$0xff]
      %v3589 = vld [vmem:[#allocation2 + $0xb68] sm:$0xff]
      %v3590 = vld [vmem:[#allocation2 + $0xb70] sm:$0xff]
      %v3591 = vld [vmem:[#allocation2 + $0xb78] sm:$0xff]
      %v3592 = vld [vmem:[#allocation2 + $0xb80] sm:$0xff]
      %v3593 = vld [vmem:[#allocation2 + $0xb88] sm:$0xff]
      %v3594 = vld [vmem:[#allocation2 + $0xb90] sm:$0xff]
      %v3595 = vld [vmem:[#allocation2 + $0xb98] sm:$0xff]
      %v3596 = vld [vmem:[#allocation2 + $0xba0] sm:$0xff]
      %v3597 = vld [vmem:[#allocation2 + $0xba8] sm:$0xff]
      %v3598 = vld [vmem:[#allocation2 + $0xbb0] sm:$0xff]
      %v3599 = vld [vmem:[#allocation2 + $0xbb8] sm:$0xff]
      %v3600 = vld [vmem:[#allocation2 + $0xbc0] sm:$0xff]
      %v3601 = vld [vmem:[#allocation2 + $0xbc8] sm:$0xff]
      %v3602 = vld [vmem:[#allocation2 + $0xbd0] sm:$0xff]
      %v3603 = vld [vmem:[#allocation2 + $0xbd8] sm:$0xff]
      %v3604 = vld [vmem:[#allocation2 + $0xbe0] sm:$0xff]
      %v3605 = vld [vmem:[#allocation2 + $0xbe8] sm:$0xff]
      %v3606 = vld [vmem:[#allocation2 + $0xbf0] sm:$0xff]
      %v3607 = vld [vmem:[#allocation2 + $0xbf8] sm:$0xff]
      %v3608 = vld [vmem:[#allocation2 + $0xc00] sm:$0xff]
      %v3609 = vld [vmem:[#allocation2 + $0xc08] sm:$0xff]
      %v3610 = vld [vmem:[#allocation2 + $0xc10] sm:$0xff]
      %v3611 = vld [vmem:[#allocation2 + $0xc18] sm:$0xff]
      %v3612 = vld [vmem:[#allocation2 + $0xc20] sm:$0xff]
      %v3613 = vld [vmem:[#allocation2 + $0xc28] sm:$0xff]
      %v3614 = vld [vmem:[#allocation2 + $0xc30] sm:$0xff]
      %v3615 = vld [vmem:[#allocation2 + $0xc38] sm:$0xff]
      %v3616 = vld [vmem:[#allocation2 + $0xc40] sm:$0xff]
      %v3617 = vld [vmem:[#allocation2 + $0xc48] sm:$0xff]
      %v3618 = vld [vmem:[#allocation2 + $0xc50] sm:$0xff]
      %v3619 = vld [vmem:[#allocation2 + $0xc58] sm:$0xff]
      %v3620 = vld [vmem:[#allocation2 + $0xc60] sm:$0xff]
      %v3621 = vld [vmem:[#allocation2 + $0xc68] sm:$0xff]
      %v3622 = vld [vmem:[#allocation2 + $0xc70] sm:$0xff]
      %v3623 = vld [vmem:[#allocation2 + $0xc78] sm:$0xff]
      %v3624 = vld [vmem:[%s2] sm:$0xf]
      %v3625 = vld [vmem:[%s2 + $0x4] sm:$0xf]
      %v3626 = vld [vmem:[%s2 + $0x8] sm:$0xf]
      %v3627 = vld [vmem:[%s2 + $0xc] sm:$0xf]
      %v3628 = vld [vmem:[%s2 + $0x10] sm:$0xf]
      %v3629 = vld [vmem:[%s2 + $0x14] sm:$0xf]
      %v3630 = vld [vmem:[%s2 + $0x18] sm:$0xf]
      %v3631 = vld [vmem:[%s2 + $0x1c] sm:$0xf]
      %v3632 = vld [vmem:[%s2 + $0x20] sm:$0xf]
      %v3633 = vld [vmem:[%s2 + $0x24] sm:$0xf]
      %v3634 = vld [vmem:[%s2 + $0x28] sm:$0xf]
      %v3635 = vld [vmem:[%s2 + $0x2c] sm:$0xf]
      %v3636 = vld [vmem:[%s2 + $0x30] sm:$0xf]
      %v3637 = vld [vmem:[%s2 + $0x34] sm:$0xf]
      %v3638 = vld [vmem:[%s2 + $0x38] sm:$0xf]
      %v3639 = vld [vmem:[%s2 + $0x3c] sm:$0xf]
      %v3640 = vld [vmem:[%s2 + $0x40] sm:$0xf]
      %v3641 = vld [vmem:[%s2 + $0x44] sm:$0xf]
      %v3642 = vld [vmem:[%s2 + $0x48] sm:$0xf]
      %v3643 = vld [vmem:[%s2 + $0x4c] sm:$0xf]
      %v3644 = vld [vmem:[%s2 + $0x50] sm:$0xf]
      %v3645 = vld [vmem:[%s2 + $0x54] sm:$0xf]
      %v3646 = vld [vmem:[%s2 + $0x58] sm:$0xf]
      %v3647 = vld [vmem:[%s2 + $0x5c] sm:$0xf]
      %v3648 = vld [vmem:[%s2 + $0x60] sm:$0xf]
      %v3649 = vld [vmem:[%s2 + $0x64] sm:$0xf]
      %v3650 = vld [vmem:[%s2 + $0x68] sm:$0xf]
      %v3651 = vld [vmem:[%s2 + $0x6c] sm:$0xf]
      %v3652 = vld [vmem:[%s2 + $0x70] sm:$0xf]
      %v3653 = vld [vmem:[%s2 + $0x74] sm:$0xf]
      %v3654 = vld [vmem:[%s2 + $0x78] sm:$0xf]
      %v3655 = vld [vmem:[%s2 + $0x7c] sm:$0xf]
      %v3656 = vld [vmem:[%s2 + $0x80] sm:$0xf]
      %v3657 = vld [vmem:[%s2 + $0x84] sm:$0xf]
      %v3658 = vld [vmem:[%s2 + $0x88] sm:$0xf]
      %v3659 = vld [vmem:[%s2 + $0x8c] sm:$0xf]
      %v3660 = vld [vmem:[%s2 + $0x90] sm:$0xf]
      %v3661 = vld [vmem:[%s2 + $0x94] sm:$0xf]
      %v3662 = vld [vmem:[%s2 + $0x98] sm:$0xf]
      %v3663 = vld [vmem:[%s2 + $0x9c] sm:$0xf]
      %v3664 = vld [vmem:[%s2 + $0xa0] sm:$0xf]
      %v3665 = vld [vmem:[%s2 + $0xa4] sm:$0xf]
      %v3666 = vld [vmem:[%s2 + $0xa8] sm:$0xf]
      %v3667 = vld [vmem:[%s2 + $0xac] sm:$0xf]
      %v3668 = vld [vmem:[%s2 + $0xb0] sm:$0xf]
      %v3669 = vld [vmem:[%s2 + $0xb4] sm:$0xf]
      %v3670 = vld [vmem:[%s2 + $0xb8] sm:$0xf]
      %v3671 = vld [vmem:[%s2 + $0xbc] sm:$0xf]
      %v3672 = vld [vmem:[%s2 + $0xc0] sm:$0xf]
      %v3673 = vld [vmem:[%s2 + $0xc4] sm:$0xf]
      %v3674 = vld [vmem:[%s2 + $0xc8] sm:$0xf]
      %v3675 = vld [vmem:[%s2 + $0xcc] sm:$0xf]
      %v3676 = vld [vmem:[%s2 + $0xd0] sm:$0xf]
      %v3677 = vld [vmem:[%s2 + $0xd4] sm:$0xf]
      %v3678 = vld [vmem:[%s2 + $0xd8] sm:$0xf]
      %v3679 = vld [vmem:[%s2 + $0xdc] sm:$0xf]
      %v3680 = vld [vmem:[%s2 + $0xe0] sm:$0xf]
      %v3681 = vld [vmem:[%s2 + $0xe4] sm:$0xf]
      %v3682 = vld [vmem:[%s2 + $0xe8] sm:$0xf]
      %v3683 = vld [vmem:[%s2 + $0xec] sm:$0xf]
      %v3684 = vld [vmem:[%s2 + $0xf0] sm:$0xf]
      %v3685 = vld [vmem:[%s2 + $0xf4] sm:$0xf]
      %v3686 = vld [vmem:[%s2 + $0xf8] sm:$0xf]
      %v3687 = vld [vmem:[%s2 + $0xfc] sm:$0xf]
      %v3688 = vld [vmem:[%s2 + $0x100] sm:$0xf]
      %v3689 = vld [vmem:[%s2 + $0x104] sm:$0xf]
      %v3690 = vld [vmem:[%s2 + $0x108] sm:$0xf]
      %v3691 = vld [vmem:[%s2 + $0x10c] sm:$0xf]
      %v3692 = vld [vmem:[%s2 + $0x110] sm:$0xf]
      %v3693 = vld [vmem:[%s2 + $0x114] sm:$0xf]
      %v3694 = vld [vmem:[%s2 + $0x118] sm:$0xf]
      %v3695 = vld [vmem:[%s2 + $0x11c] sm:$0xf]
      %v3696 = vld [vmem:[%s2 + $0x120] sm:$0xf]
      %v3697 = vld [vmem:[%s2 + $0x124] sm:$0xf]
      %v3698 = vld [vmem:[%s2 + $0x128] sm:$0xf]
      %v3699 = vld [vmem:[%s2 + $0x12c] sm:$0xf]
      %v3700 = vld [vmem:[%s2 + $0x130] sm:$0xf]
      %v3701 = vld [vmem:[%s2 + $0x134] sm:$0xf]
      %v3702 = vld [vmem:[%s2 + $0x138] sm:$0xf]
      %v3703 = vld [vmem:[%s2 + $0x13c] sm:$0xf]
      %v3704 = vld [vmem:[%s2 + $0x140] sm:$0xf]
      %v3705 = vld [vmem:[%s2 + $0x144] sm:$0xf]
      %v3706 = vld [vmem:[%s2 + $0x148] sm:$0xf]
      %v3707 = vld [vmem:[%s2 + $0x14c] sm:$0xf]
      %v3708 = vld [vmem:[%s2 + $0x150] sm:$0xf]
      %v3709 = vld [vmem:[%s2 + $0x154] sm:$0xf]
      %v3710 = vld [vmem:[%s2 + $0x158] sm:$0xf]
      %v3711 = vld [vmem:[%s2 + $0x15c] sm:$0xf]
      %v3712 = vld [vmem:[%s2 + $0x160] sm:$0xf]
      %v3713 = vld [vmem:[%s2 + $0x164] sm:$0xf]
      %v3714 = vld [vmem:[%s2 + $0x168] sm:$0xf]
      %v3715 = vld [vmem:[%s2 + $0x16c] sm:$0xf]
      %v3716 = vld [vmem:[%s2 + $0x170] sm:$0xf]
      %v3717 = vld [vmem:[%s2 + $0x174] sm:$0xf]
      %v3718 = vld [vmem:[%s2 + $0x178] sm:$0xf]
      %v3719 = vld [vmem:[%s2 + $0x17c] sm:$0xf]
      %v3720 = vld [vmem:[%s2 + $0x180] sm:$0xf]
      %v3721 = vld [vmem:[%s2 + $0x184] sm:$0xf]
      %v3722 = vld [vmem:[%s2 + $0x188] sm:$0xf]
      %v3723 = vld [vmem:[%s2 + $0x18c] sm:$0xf]
      %v3724 = vld [vmem:[%s2 + $0x190] sm:$0xf]
      %v3725 = vld [vmem:[%s2 + $0x194] sm:$0xf]
      %v3726 = vld [vmem:[%s2 + $0x198] sm:$0xf]
      %v3727 = vld [vmem:[%s2 + $0x19c] sm:$0xf]
      %v3728 = vld [vmem:[%s2 + $0x1a0] sm:$0xf]
      %v3729 = vld [vmem:[%s2 + $0x1a4] sm:$0xf]
      %v3730 = vld [vmem:[%s2 + $0x1a8] sm:$0xf]
      %v3731 = vld [vmem:[%s2 + $0x1ac] sm:$0xf]
      %v3732 = vld [vmem:[%s2 + $0x1b0] sm:$0xf]
      %v3733 = vld [vmem:[%s2 + $0x1b4] sm:$0xf]
      %v3734 = vld [vmem:[%s2 + $0x1b8] sm:$0xf]
      %v3735 = vld [vmem:[%s2 + $0x1bc] sm:$0xf]
      %v3736 = vld [vmem:[%s2 + $0x1c0] sm:$0xf]
      %v3737 = vld [vmem:[%s2 + $0x1c4] sm:$0xf]
      %v3738 = vld [vmem:[%s2 + $0x1c8] sm:$0xf]
      %v3739 = vld [vmem:[%s2 + $0x1cc] sm:$0xf]
      %v3740 = vld [vmem:[%s2 + $0x1d0] sm:$0xf]
      %v3741 = vld [vmem:[%s2 + $0x1d4] sm:$0xf]
      %v3742 = vld [vmem:[%s2 + $0x1d8] sm:$0xf]
      %v3743 = vld [vmem:[%s2 + $0x1dc] sm:$0xf]
      %v3744 = vld [vmem:[%s2 + $0x1e0] sm:$0xf]
      %v3745 = vld [vmem:[%s2 + $0x1e4] sm:$0xf]
      %v3746 = vld [vmem:[%s2 + $0x1e8] sm:$0xf]
      %v3747 = vld [vmem:[%s2 + $0x1ec] sm:$0xf]
      %v3748 = vld [vmem:[%s2 + $0x1f0] sm:$0xf]
      %v3749 = vld [vmem:[%s2 + $0x1f4] sm:$0xf]
      %v3750 = vld [vmem:[%s2 + $0x1f8] sm:$0xf]
      %v3751 = vld [vmem:[%s2 + $0x1fc] sm:$0xf]
      %v3752 = vld [vmem:[%s3] sm:$0x1]
      %v3754 = vlaneseq
      %v3755 = vshrl.u32 %v3754, 7
      %v3756 = vsub.s32 0, %v3755
      %v3757 = vrot.slane %v3752, %v3756
      %v3887 = vunpack.c.l.b16 %v3624
      %v3888 = vunpack.c.l.b16 %v3625
      %v3889 = vunpack.c.l.b16 %v3626
      %v3890 = vunpack.c.l.b16 %v3627
      %v3891 = vunpack.c.l.b16 %v3628
      %v3892 = vunpack.c.l.b16 %v3629
      %v3893 = vunpack.c.l.b16 %v3630
      %v3894 = vunpack.c.l.b16 %v3631
      %v3895 = vunpack.c.l.b16 %v3632
      %v3896 = vunpack.c.l.b16 %v3633
      %v3897 = vunpack.c.l.b16 %v3634
      %v3898 = vunpack.c.l.b16 %v3635
      %v3899 = vunpack.c.l.b16 %v3636
      %v3900 = vunpack.c.l.b16 %v3637
      %v3901 = vunpack.c.l.b16 %v3638
      %v3902 = vunpack.c.l.b16 %v3639
      %v3903 = vunpack.c.l.b16 %v3640
      %v3904 = vunpack.c.l.b16 %v3641
      %v3905 = vunpack.c.l.b16 %v3642
      %v3906 = vunpack.c.l.b16 %v3643
      %v3907 = vunpack.c.l.b16 %v3644
      %v3908 = vunpack.c.l.b16 %v3645
      %v3909 = vunpack.c.l.b16 %v3646
      %v3910 = vunpack.c.l.b16 %v3647
      %v3911 = vunpack.c.l.b16 %v3648
      %v3912 = vunpack.c.l.b16 %v3649
      %v3913 = vunpack.c.l.b16 %v3650
      %v3914 = vunpack.c.l.b16 %v3651
      %v3915 = vunpack.c.l.b16 %v3652
      %v3916 = vunpack.c.l.b16 %v3653
      %v3917 = vunpack.c.l.b16 %v3654
      %v3918 = vunpack.c.l.b16 %v3655
      %v3919 = vunpack.c.l.b16 %v3656
      %v3920 = vunpack.c.l.b16 %v3657
      %v3921 = vunpack.c.l.b16 %v3658
      %v3922 = vunpack.c.l.b16 %v3659
      %v3923 = vunpack.c.l.b16 %v3660
      %v3924 = vunpack.c.l.b16 %v3661
      %v3925 = vunpack.c.l.b16 %v3662
      %v3926 = vunpack.c.l.b16 %v3663
      %v3927 = vunpack.c.l.b16 %v3664
      %v3928 = vunpack.c.l.b16 %v3665
      %v3929 = vunpack.c.l.b16 %v3666
      %v3930 = vunpack.c.l.b16 %v3667
      %v3931 = vunpack.c.l.b16 %v3668
      %v3932 = vunpack.c.l.b16 %v3669
      %v3933 = vunpack.c.l.b16 %v3670
      %v3934 = vunpack.c.l.b16 %v3671
      %v3935 = vunpack.c.l.b16 %v3672
      %v3936 = vunpack.c.l.b16 %v3673
      %v3937 = vunpack.c.l.b16 %v3674
      %v3938 = vunpack.c.l.b16 %v3675
      %v3939 = vunpack.c.l.b16 %v3676
      %v3940 = vunpack.c.l.b16 %v3677
      %v3941 = vunpack.c.l.b16 %v3678
      %v3942 = vunpack.c.l.b16 %v3679
      %v3943 = vunpack.c.l.b16 %v3680
      %v3944 = vunpack.c.l.b16 %v3681
      %v3945 = vunpack.c.l.b16 %v3682
      %v3946 = vunpack.c.l.b16 %v3683
      %v3947 = vunpack.c.l.b16 %v3684
      %v3948 = vunpack.c.l.b16 %v3685
      %v3949 = vunpack.c.l.b16 %v3686
      %v3950 = vunpack.c.l.b16 %v3687
      %v3951 = vunpack.c.l.b16 %v3688
      %v3952 = vunpack.c.l.b16 %v3689
      %v3953 = vunpack.c.l.b16 %v3690
      %v3954 = vunpack.c.l.b16 %v3691
      %v3955 = vunpack.c.l.b16 %v3692
      %v3956 = vunpack.c.l.b16 %v3693
      %v3957 = vunpack.c.l.b16 %v3694
      %v3958 = vunpack.c.l.b16 %v3695
      %v3959 = vunpack.c.l.b16 %v3696
      %v3960 = vunpack.c.l.b16 %v3697
      %v3961 = vunpack.c.l.b16 %v3698
      %v3962 = vunpack.c.l.b16 %v3699
      %v3963 = vunpack.c.l.b16 %v3700
      %v3964 = vunpack.c.l.b16 %v3701
      %v3965 = vunpack.c.l.b16 %v3702
      %v3966 = vunpack.c.l.b16 %v3703
      %v3967 = vunpack.c.l.b16 %v3704
      %v3968 = vunpack.c.l.b16 %v3705
      %v3969 = vunpack.c.l.b16 %v3706
      %v3970 = vunpack.c.l.b16 %v3707
      %v3971 = vunpack.c.l.b16 %v3708
      %v3972 = vunpack.c.l.b16 %v3709
      %v3973 = vunpack.c.l.b16 %v3710
      %v3974 = vunpack.c.l.b16 %v3711
      %v3975 = vunpack.c.l.b16 %v3712
      %v3976 = vunpack.c.l.b16 %v3713
      %v3977 = vunpack.c.l.b16 %v3714
      %v3978 = vunpack.c.l.b16 %v3715
      %v3979 = vunpack.c.l.b16 %v3716
      %v3980 = vunpack.c.l.b16 %v3717
      %v3981 = vunpack.c.l.b16 %v3718
      %v3982 = vunpack.c.l.b16 %v3719
      %v3983 = vunpack.c.l.b16 %v3720
      %v3984 = vunpack.c.l.b16 %v3721
      %v3985 = vunpack.c.l.b16 %v3722
      %v3986 = vunpack.c.l.b16 %v3723
      %v3987 = vunpack.c.l.b16 %v3724
      %v3988 = vunpack.c.l.b16 %v3725
      %v3989 = vunpack.c.l.b16 %v3726
      %v3990 = vunpack.c.l.b16 %v3727
      %v3991 = vunpack.c.l.b16 %v3728
      %v3992 = vunpack.c.l.b16 %v3729
      %v3993 = vunpack.c.l.b16 %v3730
      %v3994 = vunpack.c.l.b16 %v3731
      %v3995 = vunpack.c.l.b16 %v3732
      %v3996 = vunpack.c.l.b16 %v3733
      %v3997 = vunpack.c.l.b16 %v3734
      %v3998 = vunpack.c.l.b16 %v3735
      %v3999 = vunpack.c.l.b16 %v3736
      %v4000 = vunpack.c.l.b16 %v3737
      %v4001 = vunpack.c.l.b16 %v3738
      %v4002 = vunpack.c.l.b16 %v3739
      %v4003 = vunpack.c.l.b16 %v3740
      %v4004 = vunpack.c.l.b16 %v3741
      %v4005 = vunpack.c.l.b16 %v3742
      %v4006 = vunpack.c.l.b16 %v3743
      %v4007 = vunpack.c.l.b16 %v3744
      %v4008 = vunpack.c.l.b16 %v3745
      %v4009 = vunpack.c.l.b16 %v3746
      %v4010 = vunpack.c.l.b16 %v3747
      %v4011 = vunpack.c.l.b16 %v3748
      %v4012 = vunpack.c.l.b16 %v3749
      %v4013 = vunpack.c.l.b16 %v3750
      %v4014 = vunpack.c.l.b16 %v3751
      %v4015 = vpack.c.b16 %v3888, %v3887
      %v4016 = vpack.c.b16 %v3890, %v3889
      %v4017 = vpack.c.b16 %v3892, %v3891
      %v4018 = vpack.c.b16 %v3894, %v3893
      %v4019 = vpack.c.b16 %v3896, %v3895
      %v4020 = vpack.c.b16 %v3898, %v3897
      %v4021 = vpack.c.b16 %v3900, %v3899
      %v4022 = vpack.c.b16 %v3902, %v3901
      %v4023 = vpack.c.b16 %v3904, %v3903
      %v4024 = vpack.c.b16 %v3906, %v3905
      %v4025 = vpack.c.b16 %v3908, %v3907
      %v4026 = vpack.c.b16 %v3910, %v3909
      %v4027 = vpack.c.b16 %v3912, %v3911
      %v4028 = vpack.c.b16 %v3914, %v3913
      %v4029 = vpack.c.b16 %v3916, %v3915
      %v4030 = vpack.c.b16 %v3918, %v3917
      %v4031 = vpack.c.b16 %v3920, %v3919
      %v4032 = vpack.c.b16 %v3922, %v3921
      %v4033 = vpack.c.b16 %v3924, %v3923
      %v4034 = vpack.c.b16 %v3926, %v3925
      %v4035 = vpack.c.b16 %v3928, %v3927
      %v4036 = vpack.c.b16 %v3930, %v3929
      %v4037 = vpack.c.b16 %v3932, %v3931
      %v4038 = vpack.c.b16 %v3934, %v3933
      %v4039 = vpack.c.b16 %v3936, %v3935
      %v4040 = vpack.c.b16 %v3938, %v3937
      %v4041 = vpack.c.b16 %v3940, %v3939
      %v4042 = vpack.c.b16 %v3942, %v3941
      %v4043 = vpack.c.b16 %v3944, %v3943
      %v4044 = vpack.c.b16 %v3946, %v3945
      %v4045 = vpack.c.b16 %v3948, %v3947
      %v4046 = vpack.c.b16 %v3950, %v3949
      %v4047 = vpack.c.b16 %v3952, %v3951
      %v4048 = vpack.c.b16 %v3954, %v3953
      %v4049 = vpack.c.b16 %v3956, %v3955
      %v4050 = vpack.c.b16 %v3958, %v3957
      %v4051 = vpack.c.b16 %v3960, %v3959
      %v4052 = vpack.c.b16 %v3962, %v3961
      %v4053 = vpack.c.b16 %v3964, %v3963
      %v4054 = vpack.c.b16 %v3966, %v3965
      %v4055 = vpack.c.b16 %v3968, %v3967
      %v4056 = vpack.c.b16 %v3970, %v3969
      %v4057 = vpack.c.b16 %v3972, %v3971
      %v4058 = vpack.c.b16 %v3974, %v3973
      %v4059 = vpack.c.b16 %v3976, %v3975
      %v4060 = vpack.c.b16 %v3978, %v3977
      %v4061 = vpack.c.b16 %v3980, %v3979
      %v4062 = vpack.c.b16 %v3982, %v3981
      %v4063 = vpack.c.b16 %v3984, %v3983
      %v4064 = vpack.c.b16 %v3986, %v3985
      %v4065 = vpack.c.b16 %v3988, %v3987
      %v4066 = vpack.c.b16 %v3990, %v3989
      %v4067 = vpack.c.b16 %v3992, %v3991
      %v4068 = vpack.c.b16 %v3994, %v3993
      %v4069 = vpack.c.b16 %v3996, %v3995
      %v4070 = vpack.c.b16 %v3998, %v3997
      %v4071 = vpack.c.b16 %v4000, %v3999
      %v4072 = vpack.c.b16 %v4002, %v4001
      %v4073 = vpack.c.b16 %v4004, %v4003
      %v4074 = vpack.c.b16 %v4006, %v4005
      %v4075 = vpack.c.b16 %v4008, %v4007
      %v4076 = vpack.c.b16 %v4010, %v4009
      %v4077 = vpack.c.b16 %v4012, %v4011
      %v4078 = vpack.c.b16 %v4014, %v4013
      %4143 = vmatprep.subr.bf16.mxu0 0
      %4144 = vmatpush1.bf16.msra.mxu0 %v4015
      %4145 = vmatprep.subr.bf16.mxu0 0
      %4146 = vmatpush1.bf16.msra.mxu0 %v4016
      %4147 = vmatprep.subr.bf16.mxu0 0
      %4148 = vmatpush1.bf16.msra.mxu0 %v4017
      %4149 = vmatprep.subr.bf16.mxu0 0
      %4150 = vmatpush1.bf16.msra.mxu0 %v4018
      %4151 = vmatprep.subr.bf16.mxu0 0
      %4152 = vmatpush1.bf16.msra.mxu0 %v4019
      %4153 = vmatprep.subr.bf16.mxu0 0
      %4154 = vmatpush1.bf16.msra.mxu0 %v4020
      %4155 = vmatprep.subr.bf16.mxu0 0
      %4156 = vmatpush1.bf16.msra.mxu0 %v4021
      %4157 = vmatprep.subr.bf16.mxu0 0
      %4158 = vmatpush1.bf16.msra.mxu0 %v4022
      %4159 = vmatprep.subr.bf16.mxu0 0
      %4160 = vmatpush1.bf16.msra.mxu0 %v4023
      %4161 = vmatprep.subr.bf16.mxu0 0
      %4162 = vmatpush1.bf16.msra.mxu0 %v4024
      %4163 = vmatprep.subr.bf16.mxu0 0
      %4164 = vmatpush1.bf16.msra.mxu0 %v4025
      %4165 = vmatprep.subr.bf16.mxu0 0
      %4166 = vmatpush1.bf16.msra.mxu0 %v4026
      %4167 = vmatprep.subr.bf16.mxu0 0
      %4168 = vmatpush1.bf16.msra.mxu0 %v4027
      %4169 = vmatprep.subr.bf16.mxu0 0
      %4170 = vmatpush1.bf16.msra.mxu0 %v4028
      %4171 = vmatprep.subr.bf16.mxu0 0
      %4172 = vmatpush1.bf16.msra.mxu0 %v4029
      %4173 = vmatprep.subr.bf16.mxu0 0
      %4174 = vmatpush1.bf16.msra.mxu0 %v4030
      %4175 = vmatprep.mubr.bf16.mxu0 %v3225
      %4176 = vmatmul.mubr.bf16.gmra.mrb[0].mxu0 %v3224
      %v4177 = vpop.f32.mrb[0].mxu0
      %v4178 = vadd.f32 %v3757, %v4177
      %v4179 = vpop.f32.mrb[0].mxu0
      %v4180 = vpop.f32.mrb[0].mxu0
      %v4181 = vadd.f32 %v3757, %v4180
      %v4182 = vpop.f32.mrb[0].mxu0
      %4183 = vmatprep.mubr.bf16.mxu0 %v3233
      %4184 = vmatmul.mubr.bf16.gmra.mrb[0].mxu0 %v3232
      %v4185 = vpop.f32.mrb[0].mxu0
      %v4186 = vadd.f32 %v3757, %v4185
      %v4187 = vpop.f32.mrb[0].mxu0
      %v4188 = vpop.f32.mrb[0].mxu0
      %v4189 = vadd.f32 %v3757, %v4188
      %v4190 = vpop.f32.mrb[0].mxu0
      %4191 = vmatprep.mubr.bf16.mxu0 %v3241
      %4192 = vmatmul.mubr.bf16.gmra.mrb[0].mxu0 %v3240
      %v4193 = vpop.f32.mrb[0].mxu0
      %v4194 = vadd.f32 %v3757, %v4193
      %v4195 = vpop.f32.mrb[0].mxu0
      %v4196 = vpop.f32.mrb[0].mxu0
      %v4197 = vadd.f32 %v3757, %v4196
      %v4198 = vpop.f32.mrb[0].mxu0
      %4199 = vmatprep.mubr.bf16.mxu0 %v3249
      %4200 = vmatmul.mubr.bf16.gmra.mrb[0].mxu0 %v3248
      %v4201 = vpop.f32.mrb[0].mxu0
      %v4202 = vadd.f32 %v3757, %v4201
      %v4203 = vpop.f32.mrb[0].mxu0
      %v4204 = vpop.f32.mrb[0].mxu0
      %v4205 = vadd.f32 %v3757, %v4204
      %v4206 = vpop.f32.mrb[0].mxu0
      %4207 = vmatprep.mubr.bf16.mxu0 %v3257
      %4208 = vmatmul.mubr.bf16.gmra.mrb[0].mxu0 %v3256
      %v4209 = vpop.f32.mrb[0].mxu0
      %v4210 = vadd.f32 %v3757, %v4209
      %v4211 = vpop.f32.mrb[0].mxu0
      %v4212 = vpop.f32.mrb[0].mxu0
      %v4213 = vadd.f32 %v3757, %v4212
      %v4214 = vpop.f32.mrb[0].mxu0
      %4215 = vmatprep.mubr.bf16.mxu0 %v3265
      %4216 = vmatmul.mubr.bf16.gmra.mrb[0].mxu0 %v3264
      %v4217 = vpop.f32.mrb[0].mxu0
      %v4218 = vadd.f32 %v3757, %v4217
      %v4219 = vpop.f32.mrb[0].mxu0
      %v4220 = vpop.f32.mrb[0].mxu0
      %v4221 = vadd.f32 %v3757, %v4220
      %v4222 = vpop.f32.mrb[0].mxu0
      %4223 = vmatprep.mubr.bf16.mxu0 %v3273
      %4224 = vmatmul.mubr.bf16.gmra.mrb[0].mxu0 %v3272
      %v4225 = vpop.f32.mrb[0].mxu0
      %v4226 = vadd.f32 %v3757, %v4225
      %v4227 = vpop.f32.mrb[0].mxu0
      %v4228 = vpop.f32.mrb[0].mxu0
      %v4229 = vadd.f32 %v3757, %v4228
      %v4230 = vpop.f32.mrb[0].mxu0
      %4231 = vmatprep.mubr.bf16.mxu0 %v3281
      %4232 = vmatmul.mubr.bf16.gmra.mrb[0].mxu0 %v3280
      %v4233 = vpop.f32.mrb[0].mxu0
      %v4234 = vadd.f32 %v3757, %v4233
      %v4235 = vpop.f32.mrb[0].mxu0
      %v4236 = vpop.f32.mrb[0].mxu0
      %v4237 = vadd.f32 %v3757, %v4236
      %v4238 = vpop.f32.mrb[0].mxu0
      %4239 = vmatprep.mubr.bf16.mxu0 %v3289
      %4240 = vmatmul.mubr.bf16.gmra.mrb[0].mxu0 %v3288
      %v4241 = vpop.f32.mrb[0].mxu0
      %v4242 = vadd.f32 %v3757, %v4241
      %v4243 = vpop.f32.mrb[0].mxu0
      %v4244 = vpop.f32.mrb[0].mxu0
      %v4245 = vadd.f32 %v3757, %v4244
      %v4246 = vpop.f32.mrb[0].mxu0
      %4247 = vmatprep.mubr.bf16.mxu0 %v3297
      %4248 = vmatmul.mubr.bf16.gmra.mrb[0].mxu0 %v3296
      %v4249 = vpop.f32.mrb[0].mxu0
      %v4250 = vadd.f32 %v3757, %v4249
      %v4251 = vpop.f32.mrb[0].mxu0
      %v4252 = vpop.f32.mrb[0].mxu0
      %v4253 = vadd.f32 %v3757, %v4252
      %v4254 = vpop.f32.mrb[0].mxu0
      %4255 = vmatprep.mubr.bf16.mxu0 %v3305
      %4256 = vmatmul.mubr.bf16.gmra.mrb[0].mxu0 %v3304
      %v4257 = vpop.f32.mrb[0].mxu0
      %v4258 = vadd.f32 %v3757, %v4257
      %v4259 = vpop.f32.mrb[0].mxu0
      %v4260 = vpop.f32.mrb[0].mxu0
      %v4261 = vadd.f32 %v3757, %v4260
      %v4262 = vpop.f32.mrb[0].mxu0
      %4263 = vmatprep.mubr.bf16.mxu0 %v3313
      %4264 = vmatmul.mubr.bf16.gmra.mrb[0].mxu0 %v3312
      %v4265 = vpop.f32.mrb[0].mxu0
      %v4266 = vadd.f32 %v3757, %v4265
      %v4267 = vpop.f32.mrb[0].mxu0
      %v4268 = vpop.f32.mrb[0].mxu0
      %v4269 = vadd.f32 %v3757, %v4268
      %v4270 = vpop.f32.mrb[0].mxu0
      %4271 = vmatprep.mubr.bf16.mxu0 %v3321
      %4272 = vmatmul.mubr.bf16.gmra.mrb[0].mxu0 %v3320
      %v4273 = vpop.f32.mrb[0].mxu0
      %v4274 = vadd.f32 %v3757, %v4273
      %v4275 = vpop.f32.mrb[0].mxu0
      %v4276 = vpop.f32.mrb[0].mxu0
      %v4277 = vadd.f32 %v3757, %v4276
      %v4278 = vpop.f32.mrb[0].mxu0
      %4279 = vmatprep.mubr.bf16.mxu0 %v3329
      %4280 = vmatmul.mubr.bf16.gmra.mrb[0].mxu0 %v3328
      %v4281 = vpop.f32.mrb[0].mxu0
      %v4282 = vadd.f32 %v3757, %v4281
      %v4283 = vpop.f32.mrb[0].mxu0
      %v4284 = vpop.f32.mrb[0].mxu0
      %v4285 = vadd.f32 %v3757, %v4284
      %v4286 = vpop.f32.mrb[0].mxu0
      %4287 = vmatprep.mubr.bf16.mxu0 %v3337
      %4288 = vmatmul.mubr.bf16.gmra.mrb[0].mxu0 %v3336
      %v4289 = vpop.f32.mrb[0].mxu0
      %v4290 = vadd.f32 %v3757, %v4289
      %v4291 = vpop.f32.mrb[0].mxu0
      %v4292 = vpop.f32.mrb[0].mxu0
      %v4293 = vadd.f32 %v3757, %v4292
      %v4294 = vpop.f32.mrb[0].mxu0
      %4295 = vmatprep.mubr.bf16.mxu0 %v3345
      %4296 = vmatmul.mubr.bf16.gmra.mrb[0].mxu0 %v3344
      %v4297 = vpop.f32.mrb[0].mxu0
      %v4298 = vadd.f32 %v3757, %v4297
      %v4299 = vpop.f32.mrb[0].mxu0
      %v4300 = vpop.f32.mrb[0].mxu0
      %v4301 = vadd.f32 %v3757, %v4300
      %v4302 = vpop.f32.mrb[0].mxu0
      %4303 = vmatprep.mubr.bf16.mxu0 %v3353
      %4304 = vmatmul.mubr.bf16.gmra.mrb[0].mxu0 %v3352
      %v4305 = vpop.f32.mrb[0].mxu0
      %v4306 = vadd.f32 %v3757, %v4305
      %v4307 = vpop.f32.mrb[0].mxu0
      %v4308 = vpop.f32.mrb[0].mxu0
      %v4309 = vadd.f32 %v3757, %v4308
      %v4310 = vpop.f32.mrb[0].mxu0
      %4311 = vmatprep.mubr.bf16.mxu0 %v3361
      %4312 = vmatmul.mubr.bf16.gmra.mrb[0].mxu0 %v3360
      %v4313 = vpop.f32.mrb[0].mxu0
      %v4314 = vadd.f32 %v3757, %v4313
      %v4315 = vpop.f32.mrb[0].mxu0
      %v4316 = vpop.f32.mrb[0].mxu0
      %v4317 = vadd.f32 %v3757, %v4316
      %v4318 = vpop.f32.mrb[0].mxu0
      %4319 = vmatprep.mubr.bf16.mxu0 %v3369
      %4320 = vmatmul.mubr.bf16.gmra.mrb[0].mxu0 %v3368
      %v4321 = vpop.f32.mrb[0].mxu0
      %v4322 = vadd.f32 %v3757, %v4321
      %v4323 = vpop.f32.mrb[0].mxu0
      %v4324 = vpop.f32.mrb[0].mxu0
      %v4325 = vadd.f32 %v3757, %v4324
      %v4326 = vpop.f32.mrb[0].mxu0
      %4327 = vmatprep.mubr.bf16.mxu0 %v3377
      %4328 = vmatmul.mubr.bf16.gmra.mrb[0].mxu0 %v3376
      %v4329 = vpop.f32.mrb[0].mxu0
      %v4330 = vadd.f32 %v3757, %v4329
      %v4331 = vpop.f32.mrb[0].mxu0
      %v4332 = vpop.f32.mrb[0].mxu0
      %v4333 = vadd.f32 %v3757, %v4332
      %v4334 = vpop.f32.mrb[0].mxu0
      %4335 = vmatprep.mubr.bf16.mxu0 %v3385
      %4336 = vmatmul.mubr.bf16.gmra.mrb[0].mxu0 %v3384
      %v4337 = vpop.f32.mrb[0].mxu0
      %v4338 = vadd.f32 %v3757, %v4337
      %v4339 = vpop.f32.mrb[0].mxu0
      %v4340 = vpop.f32.mrb[0].mxu0
      %v4341 = vadd.f32 %v3757, %v4340
      %v4342 = vpop.f32.mrb[0].mxu0
      %4343 = vmatprep.mubr.bf16.mxu0 %v3393
      %4344 = vmatmul.mubr.bf16.gmra.mrb[0].mxu0 %v3392
      %v4345 = vpop.f32.mrb[0].mxu0
      %v4346 = vadd.f32 %v3757, %v4345
      %v4347 = vpop.f32.mrb[0].mxu0
      %v4348 = vpop.f32.mrb[0].mxu0
      %v4349 = vadd.f32 %v3757, %v4348
      %v4350 = vpop.f32.mrb[0].mxu0
      %4351 = vmatprep.mubr.bf16.mxu0 %v3401
      %4352 = vmatmul.mubr.bf16.gmra.mrb[0].mxu0 %v3400
      %v4353 = vpop.f32.mrb[0].mxu0
      %v4354 = vadd.f32 %v3757, %v4353
      %v4355 = vpop.f32.mrb[0].mxu0
      %v4356 = vpop.f32.mrb[0].mxu0
      %v4357 = vadd.f32 %v3757, %v4356
      %v4358 = vpop.f32.mrb[0].mxu0
      %4359 = vmatprep.mubr.bf16.mxu0 %v3409
      %4360 = vmatmul.mubr.bf16.gmra.mrb[0].mxu0 %v3408
      %v4361 = vpop.f32.mrb[0].mxu0
      %v4362 = vadd.f32 %v3757, %v4361
      %v4363 = vpop.f32.mrb[0].mxu0
      %v4364 = vpop.f32.mrb[0].mxu0
      %v4365 = vadd.f32 %v3757, %v4364
      %v4366 = vpop.f32.mrb[0].mxu0
      %4367 = vmatprep.mubr.bf16.mxu0 %v3417
      %4368 = vmatmul.mubr.bf16.gmra.mrb[0].mxu0 %v3416
      %v4369 = vpop.f32.mrb[0].mxu0
      %v4370 = vadd.f32 %v3757, %v4369
      %v4371 = vpop.f32.mrb[0].mxu0
      %v4372 = vpop.f32.mrb[0].mxu0
      %v4373 = vadd.f32 %v3757, %v4372
      %v4374 = vpop.f32.mrb[0].mxu0
      %4375 = vmatprep.mubr.bf16.mxu0 %v3425
      %4376 = vmatmul.mubr.bf16.gmra.mrb[0].mxu0 %v3424
      %v4377 = vpop.f32.mrb[0].mxu0
      %v4378 = vadd.f32 %v3757, %v4377
      %v4379 = vpop.f32.mrb[0].mxu0
      %v4380 = vpop.f32.mrb[0].mxu0
      %v4381 = vadd.f32 %v3757, %v4380
      %v4382 = vpop.f32.mrb[0].mxu0
      %4383 = vmatprep.mubr.bf16.mxu0 %v3433
      %4384 = vmatmul.mubr.bf16.gmra.mrb[0].mxu0 %v3432
      %v4385 = vpop.f32.mrb[0].mxu0
      %v4386 = vadd.f32 %v3757, %v4385
      %v4387 = vpop.f32.mrb[0].mxu0
      %v4388 = vpop.f32.mrb[0].mxu0
      %v4389 = vadd.f32 %v3757, %v4388
      %v4390 = vpop.f32.mrb[0].mxu0
      %4391 = vmatprep.mubr.bf16.mxu0 %v3441
      %4392 = vmatmul.mubr.bf16.gmra.mrb[0].mxu0 %v3440
      %v4393 = vpop.f32.mrb[0].mxu0
      %v4394 = vadd.f32 %v3757, %v4393
      %v4395 = vpop.f32.mrb[0].mxu0
      %v4396 = vpop.f32.mrb[0].mxu0
      %v4397 = vadd.f32 %v3757, %v4396
      %v4398 = vpop.f32.mrb[0].mxu0
      %4399 = vmatprep.mubr.bf16.mxu0 %v3449
      %4400 = vmatmul.mubr.bf16.gmra.mrb[0].mxu0 %v3448
      %v4401 = vpop.f32.mrb[0].mxu0
      %v4402 = vadd.f32 %v3757, %v4401
      %v4403 = vpop.f32.mrb[0].mxu0
      %v4404 = vpop.f32.mrb[0].mxu0
      %v4405 = vadd.f32 %v3757, %v4404
      %v4406 = vpop.f32.mrb[0].mxu0
      %4407 = vmatprep.mubr.bf16.mxu0 %v3457
      %4408 = vmatmul.mubr.bf16.gmra.mrb[0].mxu0 %v3456
      %v4409 = vpop.f32.mrb[0].mxu0
      %v4410 = vadd.f32 %v3757, %v4409
      %v4411 = vpop.f32.mrb[0].mxu0
      %v4412 = vpop.f32.mrb[0].mxu0
      %v4413 = vadd.f32 %v3757, %v4412
      %v4414 = vpop.f32.mrb[0].mxu0
      %4415 = vmatprep.mubr.bf16.mxu0 %v3465
      %4416 = vmatmul.mubr.bf16.gmra.mrb[0].mxu0 %v3464
      %v4417 = vpop.f32.mrb[0].mxu0
      %v4418 = vadd.f32 %v3757, %v4417
      %v4419 = vpop.f32.mrb[0].mxu0
      %v4420 = vpop.f32.mrb[0].mxu0
      %v4421 = vadd.f32 %v3757, %v4420
      %v4422 = vpop.f32.mrb[0].mxu0
      %4423 = vmatprep.mubr.bf16.mxu0 %v3473
      %4424 = vmatmul.mubr.bf16.gmra.mrb[0].mxu0 %v3472
      %v4425 = vpop.f32.mrb[0].mxu0
      %v4426 = vadd.f32 %v3757, %v4425
      %v4427 = vpop.f32.mrb[0].mxu0
      %v4428 = vpop.f32.mrb[0].mxu0
      %v4429 = vadd.f32 %v3757, %v4428
      %v4430 = vpop.f32.mrb[0].mxu0
      %4431 = vmatprep.mubr.bf16.mxu0 %v3481
      %4432 = vmatmul.mubr.bf16.gmra.mrb[0].mxu0 %v3480
      %v4433 = vpop.f32.mrb[0].mxu0
      %v4434 = vadd.f32 %v3757, %v4433
      %v4435 = vpop.f32.mrb[0].mxu0
      %v4436 = vpop.f32.mrb[0].mxu0
      %v4437 = vadd.f32 %v3757, %v4436
      %v4438 = vpop.f32.mrb[0].mxu0
      %4439 = vmatprep.mubr.bf16.mxu0 %v3489
      %4440 = vmatmul.mubr.bf16.gmra.mrb[0].mxu0 %v3488
      %v4441 = vpop.f32.mrb[0].mxu0
      %v4442 = vadd.f32 %v3757, %v4441
      %v4443 = vpop.f32.mrb[0].mxu0
      %v4444 = vpop.f32.mrb[0].mxu0
      %v4445 = vadd.f32 %v3757, %v4444
      %v4446 = vpop.f32.mrb[0].mxu0
      %4447 = vmatprep.mubr.bf16.mxu0 %v3497
      %4448 = vmatmul.mubr.bf16.gmra.mrb[0].mxu0 %v3496
      %v4449 = vpop.f32.mrb[0].mxu0
      %v4450 = vadd.f32 %v3757, %v4449
      %v4451 = vpop.f32.mrb[0].mxu0
      %v4452 = vpop.f32.mrb[0].mxu0
      %v4453 = vadd.f32 %v3757, %v4452
      %v4454 = vpop.f32.mrb[0].mxu0
      %4455 = vmatprep.mubr.bf16.mxu0 %v3505
      %4456 = vmatmul.mubr.bf16.gmra.mrb[0].mxu0 %v3504
      %v4457 = vpop.f32.mrb[0].mxu0
      %v4458 = vadd.f32 %v3757, %v4457
      %v4459 = vpop.f32.mrb[0].mxu0
      %v4460 = vpop.f32.mrb[0].mxu0
      %v4461 = vadd.f32 %v3757, %v4460
      %v4462 = vpop.f32.mrb[0].mxu0
      %4463 = vmatprep.mubr.bf16.mxu0 %v3513
      %4464 = vmatmul.mubr.bf16.gmra.mrb[0].mxu0 %v3512
      %v4465 = vpop.f32.mrb[0].mxu0
      %v4466 = vadd.f32 %v3757, %v4465
      %v4467 = vpop.f32.mrb[0].mxu0
      %v4468 = vpop.f32.mrb[0].mxu0
      %v4469 = vadd.f32 %v3757, %v4468
      %v4470 = vpop.f32.mrb[0].mxu0
      %4471 = vmatprep.mubr.bf16.mxu0 %v3521
      %4472 = vmatmul.mubr.bf16.gmra.mrb[0].mxu0 %v3520
      %v4473 = vpop.f32.mrb[0].mxu0
      %v4474 = vadd.f32 %v3757, %v4473
      %v4475 = vpop.f32.mrb[0].mxu0
      %v4476 = vpop.f32.mrb[0].mxu0
      %v4477 = vadd.f32 %v3757, %v4476
      %v4478 = vpop.f32.mrb[0].mxu0
      %4479 = vmatprep.mubr.bf16.mxu0 %v3529
      %4480 = vmatmul.mubr.bf16.gmra.mrb[0].mxu0 %v3528
      %v4481 = vpop.f32.mrb[0].mxu0
      %v4482 = vadd.f32 %v3757, %v4481
      %v4483 = vpop.f32.mrb[0].mxu0
      %v4484 = vpop.f32.mrb[0].mxu0
      %v4485 = vadd.f32 %v3757, %v4484
      %v4486 = vpop.f32.mrb[0].mxu0
      %4487 = vmatprep.mubr.bf16.mxu0 %v3537
      %4488 = vmatmul.mubr.bf16.gmra.mrb[0].mxu0 %v3536
      %v4489 = vpop.f32.mrb[0].mxu0
      %v4490 = vadd.f32 %v3757, %v4489
      %v4491 = vpop.f32.mrb[0].mxu0
      %v4492 = vpop.f32.mrb[0].mxu0
      %v4493 = vadd.f32 %v3757, %v4492
      %v4494 = vpop.f32.mrb[0].mxu0
      %4495 = vmatprep.mubr.bf16.mxu0 %v3545
      %4496 = vmatmul.mubr.bf16.gmra.mrb[0].mxu0 %v3544
      %v4497 = vpop.f32.mrb[0].mxu0
      %v4498 = vadd.f32 %v3757, %v4497
      %v4499 = vpop.f32.mrb[0].mxu0
      %v4500 = vpop.f32.mrb[0].mxu0
      %v4501 = vadd.f32 %v3757, %v4500
      %v4502 = vpop.f32.mrb[0].mxu0
      %4503 = vmatprep.mubr.bf16.mxu0 %v3553
      %4504 = vmatmul.mubr.bf16.gmra.mrb[0].mxu0 %v3552
      %v4505 = vpop.f32.mrb[0].mxu0
      %v4506 = vadd.f32 %v3757, %v4505
      %v4507 = vpop.f32.mrb[0].mxu0
      %v4508 = vpop.f32.mrb[0].mxu0
      %v4509 = vadd.f32 %v3757, %v4508
      %v4510 = vpop.f32.mrb[0].mxu0
      %4511 = vmatprep.mubr.bf16.mxu0 %v3561
      %4512 = vmatmul.mubr.bf16.gmra.mrb[0].mxu0 %v3560
      %v4513 = vpop.f32.mrb[0].mxu0
      %v4514 = vadd.f32 %v3757, %v4513
      %v4515 = vpop.f32.mrb[0].mxu0
      %v4516 = vpop.f32.mrb[0].mxu0
      %v4517 = vadd.f32 %v3757, %v4516
      %v4518 = vpop.f32.mrb[0].mxu0
      %4519 = vmatprep.mubr.bf16.mxu0 %v3569
      %4520 = vmatmul.mubr.bf16.gmra.mrb[0].mxu0 %v3568
      %v4521 = vpop.f32.mrb[0].mxu0
      %v4522 = vadd.f32 %v3757, %v4521
      %v4523 = vpop.f32.mrb[0].mxu0
      %v4524 = vpop.f32.mrb[0].mxu0
      %v4525 = vadd.f32 %v3757, %v4524
      %v4526 = vpop.f32.mrb[0].mxu0
      %4527 = vmatprep.mubr.bf16.mxu0 %v3577
      %4528 = vmatmul.mubr.bf16.gmra.mrb[0].mxu0 %v3576
      %v4529 = vpop.f32.mrb[0].mxu0
      %v4530 = vadd.f32 %v3757, %v4529
      %v4531 = vpop.f32.mrb[0].mxu0
      %v4532 = vpop.f32.mrb[0].mxu0
      %v4533 = vadd.f32 %v3757, %v4532
      %v4534 = vpop.f32.mrb[0].mxu0
      %4535 = vmatprep.mubr.bf16.mxu0 %v3585
      %4536 = vmatmul.mubr.bf16.gmra.mrb[0].mxu0 %v3584
      %v4537 = vpop.f32.mrb[0].mxu0
      %v4538 = vadd.f32 %v3757, %v4537
      %v4539 = vpop.f32.mrb[0].mxu0
      %v4540 = vpop.f32.mrb[0].mxu0
      %v4541 = vadd.f32 %v3757, %v4540
      %v4542 = vpop.f32.mrb[0].mxu0
      %4543 = vmatprep.mubr.bf16.mxu0 %v3593
      %4544 = vmatmul.mubr.bf16.gmra.mrb[0].mxu0 %v3592
      %v4545 = vpop.f32.mrb[0].mxu0
      %v4546 = vadd.f32 %v3757, %v4545
      %v4547 = vpop.f32.mrb[0].mxu0
      %v4548 = vpop.f32.mrb[0].mxu0
      %v4549 = vadd.f32 %v3757, %v4548
      %v4550 = vpop.f32.mrb[0].mxu0
      %4551 = vmatprep.mubr.bf16.mxu0 %v3601
      %4552 = vmatmul.mubr.bf16.gmra.mrb[0].mxu0 %v3600
      %v4553 = vpop.f32.mrb[0].mxu0
      %v4554 = vadd.f32 %v3757, %v4553
      %v4555 = vpop.f32.mrb[0].mxu0
      %v4556 = vpop.f32.mrb[0].mxu0
      %v4557 = vadd.f32 %v3757, %v4556
      %v4558 = vpop.f32.mrb[0].mxu0
      %4559 = vmatprep.mubr.bf16.mxu0 %v3609
      %4560 = vmatmul.mubr.bf16.gmra.mrb[0].mxu0 %v3608
      %v4561 = vpop.f32.mrb[0].mxu0
      %v4562 = vadd.f32 %v3757, %v4561
      %v4563 = vpop.f32.mrb[0].mxu0
      %v4564 = vpop.f32.mrb[0].mxu0
      %v4565 = vadd.f32 %v3757, %v4564
      %v4566 = vpop.f32.mrb[0].mxu0
      %4567 = vmatprep.mubr.bf16.mxu0 %v3617
      %4568 = vmatmul.mubr.bf16.gmra.mrb[0].mxu0 %v3616
      %v4569 = vpop.f32.mrb[0].mxu0
      %v4570 = vadd.f32 %v3757, %v4569
      %v4571 = vpop.f32.mrb[0].mxu0
      %v4572 = vpop.f32.mrb[0].mxu0
      %v4573 = vadd.f32 %v3757, %v4572
      %v4574 = vpop.f32.mrb[0].mxu0
      %4575 = vdwg.mxu0
      %4576 = vmatprep.subr.bf16.mxu0 0
      %4577 = vmatpush1.bf16.msra.mxu0 %v4031
      %4578 = vmatprep.subr.bf16.mxu0 0
      %4579 = vmatpush1.bf16.msra.mxu0 %v4032
      %4580 = vmatprep.subr.bf16.mxu0 0
      %4581 = vmatpush1.bf16.msra.mxu0 %v4033
      %4582 = vmatprep.subr.bf16.mxu0 0
      %4583 = vmatpush1.bf16.msra.mxu0 %v4034
      %4584 = vmatprep.subr.bf16.mxu0 0
      %4585 = vmatpush1.bf16.msra.mxu0 %v4035
      %4586 = vmatprep.subr.bf16.mxu0 0
      %4587 = vmatpush1.bf16.msra.mxu0 %v4036
      %4588 = vmatprep.subr.bf16.mxu0 0
      %4589 = vmatpush1.bf16.msra.mxu0 %v4037
      %4590 = vmatprep.subr.bf16.mxu0 0
      %4591 = vmatpush1.bf16.msra.mxu0 %v4038
      %4592 = vmatprep.subr.bf16.mxu0 0
      %4593 = vmatpush1.bf16.msra.mxu0 %v4039
      %4594 = vmatprep.subr.bf16.mxu0 0
      %4595 = vmatpush1.bf16.msra.mxu0 %v4040
      %4596 = vmatprep.subr.bf16.mxu0 0
      %4597 = vmatpush1.bf16.msra.mxu0 %v4041
      %4598 = vmatprep.subr.bf16.mxu0 0
      %4599 = vmatpush1.bf16.msra.mxu0 %v4042
      %4600 = vmatprep.subr.bf16.mxu0 0
      %4601 = vmatpush1.bf16.msra.mxu0 %v4043
      %4602 = vmatprep.subr.bf16.mxu0 0
      %4603 = vmatpush1.bf16.msra.mxu0 %v4044
      %4604 = vmatprep.subr.bf16.mxu0 0
      %4605 = vmatpush1.bf16.msra.mxu0 %v4045
      %4606 = vmatprep.subr.bf16.mxu0 0
      %4607 = vmatpush1.bf16.msra.mxu0 %v4046
      %4608 = vmatprep.mubr.bf16.mxu0 %v3227
      %4609 = vmatmul.mubr.bf16.gmra.mrb[0].mxu0 %v3226
      %v4610 = vpop.f32.mrb[0].mxu0
      %v4611 = vadd.f32 %v4178, %v4610
      %v4612 = vpop.f32.mrb[0].mxu0
      %v4613 = vpop.f32.mrb[0].mxu0
      %v4614 = vadd.f32 %v4181, %v4613
      %v4615 = vpop.f32.mrb[0].mxu0
      %4616 = vmatprep.mubr.bf16.mxu0 %v3235
      %4617 = vmatmul.mubr.bf16.gmra.mrb[0].mxu0 %v3234
      %v4618 = vpop.f32.mrb[0].mxu0
      %v4619 = vadd.f32 %v4186, %v4618
      %v4620 = vpop.f32.mrb[0].mxu0
      %v4621 = vpop.f32.mrb[0].mxu0
      %v4622 = vadd.f32 %v4189, %v4621
      %v4623 = vpop.f32.mrb[0].mxu0
      %4624 = vmatprep.mubr.bf16.mxu0 %v3243
      %4625 = vmatmul.mubr.bf16.gmra.mrb[0].mxu0 %v3242
      %v4626 = vpop.f32.mrb[0].mxu0
      %v4627 = vadd.f32 %v4194, %v4626
      %v4628 = vpop.f32.mrb[0].mxu0
      %v4629 = vpop.f32.mrb[0].mxu0
      %v4630 = vadd.f32 %v4197, %v4629
      %v4631 = vpop.f32.mrb[0].mxu0
      %4632 = vmatprep.mubr.bf16.mxu0 %v3251
      %4633 = vmatmul.mubr.bf16.gmra.mrb[0].mxu0 %v3250
      %v4634 = vpop.f32.mrb[0].mxu0
      %v4635 = vadd.f32 %v4202, %v4634
      %v4636 = vpop.f32.mrb[0].mxu0
      %v4637 = vpop.f32.mrb[0].mxu0
      %v4638 = vadd.f32 %v4205, %v4637
      %v4639 = vpop.f32.mrb[0].mxu0
      %4640 = vmatprep.mubr.bf16.mxu0 %v3259
      %4641 = vmatmul.mubr.bf16.gmra.mrb[0].mxu0 %v3258
      %v4642 = vpop.f32.mrb[0].mxu0
      %v4643 = vadd.f32 %v4210, %v4642
      %v4644 = vpop.f32.mrb[0].mxu0
      %v4645 = vpop.f32.mrb[0].mxu0
      %v4646 = vadd.f32 %v4213, %v4645
      %v4647 = vpop.f32.mrb[0].mxu0
      %4648 = vmatprep.mubr.bf16.mxu0 %v3267
      %4649 = vmatmul.mubr.bf16.gmra.mrb[0].mxu0 %v3266
      %v4650 = vpop.f32.mrb[0].mxu0
      %v4651 = vadd.f32 %v4218, %v4650
      %v4652 = vpop.f32.mrb[0].mxu0
      %v4653 = vpop.f32.mrb[0].mxu0
      %v4654 = vadd.f32 %v4221, %v4653
      %v4655 = vpop.f32.mrb[0].mxu0
      %4656 = vmatprep.mubr.bf16.mxu0 %v3275
      %4657 = vmatmul.mubr.bf16.gmra.mrb[0].mxu0 %v3274
      %v4658 = vpop.f32.mrb[0].mxu0
      %v4659 = vadd.f32 %v4226, %v4658
      %v4660 = vpop.f32.mrb[0].mxu0
      %v4661 = vpop.f32.mrb[0].mxu0
      %v4662 = vadd.f32 %v4229, %v4661
      %v4663 = vpop.f32.mrb[0].mxu0
      %4664 = vmatprep.mubr.bf16.mxu0 %v3283
      %4665 = vmatmul.mubr.bf16.gmra.mrb[0].mxu0 %v3282
      %v4666 = vpop.f32.mrb[0].mxu0
      %v4667 = vadd.f32 %v4234, %v4666
      %v4668 = vpop.f32.mrb[0].mxu0
      %v4669 = vpop.f32.mrb[0].mxu0
      %v4670 = vadd.f32 %v4237, %v4669
      %v4671 = vpop.f32.mrb[0].mxu0
      %4672 = vmatprep.mubr.bf16.mxu0 %v3291
      %4673 = vmatmul.mubr.bf16.gmra.mrb[0].mxu0 %v3290
      %v4674 = vpop.f32.mrb[0].mxu0
      %v4675 = vadd.f32 %v4242, %v4674
      %v4676 = vpop.f32.mrb[0].mxu0
      %v4677 = vpop.f32.mrb[0].mxu0
      %v4678 = vadd.f32 %v4245, %v4677
      %v4679 = vpop.f32.mrb[0].mxu0
      %4680 = vmatprep.mubr.bf16.mxu0 %v3299
      %4681 = vmatmul.mubr.bf16.gmra.mrb[0].mxu0 %v3298
      %v4682 = vpop.f32.mrb[0].mxu0
      %v4683 = vadd.f32 %v4250, %v4682
      %v4684 = vpop.f32.mrb[0].mxu0
      %v4685 = vpop.f32.mrb[0].mxu0
      %v4686 = vadd.f32 %v4253, %v4685
      %v4687 = vpop.f32.mrb[0].mxu0
      %4688 = vmatprep.mubr.bf16.mxu0 %v3307
      %4689 = vmatmul.mubr.bf16.gmra.mrb[0].mxu0 %v3306
      %v4690 = vpop.f32.mrb[0].mxu0
      %v4691 = vadd.f32 %v4258, %v4690
      %v4692 = vpop.f32.mrb[0].mxu0
      %v4693 = vpop.f32.mrb[0].mxu0
      %v4694 = vadd.f32 %v4261, %v4693
      %v4695 = vpop.f32.mrb[0].mxu0
      %4696 = vmatprep.mubr.bf16.mxu0 %v3315
      %4697 = vmatmul.mubr.bf16.gmra.mrb[0].mxu0 %v3314
      %v4698 = vpop.f32.mrb[0].mxu0
      %v4699 = vadd.f32 %v4266, %v4698
      %v4700 = vpop.f32.mrb[0].mxu0
      %v4701 = vpop.f32.mrb[0].mxu0
      %v4702 = vadd.f32 %v4269, %v4701
      %v4703 = vpop.f32.mrb[0].mxu0
      %4704 = vmatprep.mubr.bf16.mxu0 %v3323
      %4705 = vmatmul.mubr.bf16.gmra.mrb[0].mxu0 %v3322
      %v4706 = vpop.f32.mrb[0].mxu0
      %v4707 = vadd.f32 %v4274, %v4706
      %v4708 = vpop.f32.mrb[0].mxu0
      %v4709 = vpop.f32.mrb[0].mxu0
      %v4710 = vadd.f32 %v4277, %v4709
      %v4711 = vpop.f32.mrb[0].mxu0
      %4712 = vmatprep.mubr.bf16.mxu0 %v3331
      %4713 = vmatmul.mubr.bf16.gmra.mrb[0].mxu0 %v3330
      %v4714 = vpop.f32.mrb[0].mxu0
      %v4715 = vadd.f32 %v4282, %v4714
      %v4716 = vpop.f32.mrb[0].mxu0
      %v4717 = vpop.f32.mrb[0].mxu0
      %v4718 = vadd.f32 %v4285, %v4717
      %v4719 = vpop.f32.mrb[0].mxu0
      %4720 = vmatprep.mubr.bf16.mxu0 %v3339
      %4721 = vmatmul.mubr.bf16.gmra.mrb[0].mxu0 %v3338
      %v4722 = vpop.f32.mrb[0].mxu0
      %v4723 = vadd.f32 %v4290, %v4722
      %v4724 = vpop.f32.mrb[0].mxu0
      %v4725 = vpop.f32.mrb[0].mxu0
      %v4726 = vadd.f32 %v4293, %v4725
      %v4727 = vpop.f32.mrb[0].mxu0
      %4728 = vmatprep.mubr.bf16.mxu0 %v3347
      %4729 = vmatmul.mubr.bf16.gmra.mrb[0].mxu0 %v3346
      %v4730 = vpop.f32.mrb[0].mxu0
      %v4731 = vadd.f32 %v4298, %v4730
      %v4732 = vpop.f32.mrb[0].mxu0
      %v4733 = vpop.f32.mrb[0].mxu0
      %v4734 = vadd.f32 %v4301, %v4733
      %v4735 = vpop.f32.mrb[0].mxu0
      %4736 = vmatprep.mubr.bf16.mxu0 %v3355
      %4737 = vmatmul.mubr.bf16.gmra.mrb[0].mxu0 %v3354
      %v4738 = vpop.f32.mrb[0].mxu0
      %v4739 = vadd.f32 %v4306, %v4738
      %v4740 = vpop.f32.mrb[0].mxu0
      %v4741 = vpop.f32.mrb[0].mxu0
      %v4742 = vadd.f32 %v4309, %v4741
      %v4743 = vpop.f32.mrb[0].mxu0
      %4744 = vmatprep.mubr.bf16.mxu0 %v3363
      %4745 = vmatmul.mubr.bf16.gmra.mrb[0].mxu0 %v3362
      %v4746 = vpop.f32.mrb[0].mxu0
      %v4747 = vadd.f32 %v4314, %v4746
      %v4748 = vpop.f32.mrb[0].mxu0
      %v4749 = vpop.f32.mrb[0].mxu0
      %v4750 = vadd.f32 %v4317, %v4749
      %v4751 = vpop.f32.mrb[0].mxu0
      %4752 = vmatprep.mubr.bf16.mxu0 %v3371
      %4753 = vmatmul.mubr.bf16.gmra.mrb[0].mxu0 %v3370
      %v4754 = vpop.f32.mrb[0].mxu0
      %v4755 = vadd.f32 %v4322, %v4754
      %v4756 = vpop.f32.mrb[0].mxu0
      %v4757 = vpop.f32.mrb[0].mxu0
      %v4758 = vadd.f32 %v4325, %v4757
      %v4759 = vpop.f32.mrb[0].mxu0
      %4760 = vmatprep.mubr.bf16.mxu0 %v3379
      %4761 = vmatmul.mubr.bf16.gmra.mrb[0].mxu0 %v3378
      %v4762 = vpop.f32.mrb[0].mxu0
      %v4763 = vadd.f32 %v4330, %v4762
      %v4764 = vpop.f32.mrb[0].mxu0
      %v4765 = vpop.f32.mrb[0].mxu0
      %v4766 = vadd.f32 %v4333, %v4765
      %v4767 = vpop.f32.mrb[0].mxu0
      %4768 = vmatprep.mubr.bf16.mxu0 %v3387
      %4769 = vmatmul.mubr.bf16.gmra.mrb[0].mxu0 %v3386
      %v4770 = vpop.f32.mrb[0].mxu0
      %v4771 = vadd.f32 %v4338, %v4770
      %v4772 = vpop.f32.mrb[0].mxu0
      %v4773 = vpop.f32.mrb[0].mxu0
      %v4774 = vadd.f32 %v4341, %v4773
      %v4775 = vpop.f32.mrb[0].mxu0
      %4776 = vmatprep.mubr.bf16.mxu0 %v3395
      %4777 = vmatmul.mubr.bf16.gmra.mrb[0].mxu0 %v3394
      %v4778 = vpop.f32.mrb[0].mxu0
      %v4779 = vadd.f32 %v4346, %v4778
      %v4780 = vpop.f32.mrb[0].mxu0
      %v4781 = vpop.f32.mrb[0].mxu0
      %v4782 = vadd.f32 %v4349, %v4781
      %v4783 = vpop.f32.mrb[0].mxu0
      %4784 = vmatprep.mubr.bf16.mxu0 %v3403
      %4785 = vmatmul.mubr.bf16.gmra.mrb[0].mxu0 %v3402
      %v4786 = vpop.f32.mrb[0].mxu0
      %v4787 = vadd.f32 %v4354, %v4786
      %v4788 = vpop.f32.mrb[0].mxu0
      %v4789 = vpop.f32.mrb[0].mxu0
      %v4790 = vadd.f32 %v4357, %v4789
      %v4791 = vpop.f32.mrb[0].mxu0
      %4792 = vmatprep.mubr.bf16.mxu0 %v3411
      %4793 = vmatmul.mubr.bf16.gmra.mrb[0].mxu0 %v3410
      %v4794 = vpop.f32.mrb[0].mxu0
      %v4795 = vadd.f32 %v4362, %v4794
      %v4796 = vpop.f32.mrb[0].mxu0
      %v4797 = vpop.f32.mrb[0].mxu0
      %v4798 = vadd.f32 %v4365, %v4797
      %v4799 = vpop.f32.mrb[0].mxu0
      %4800 = vmatprep.mubr.bf16.mxu0 %v3419
      %4801 = vmatmul.mubr.bf16.gmra.mrb[0].mxu0 %v3418
      %v4802 = vpop.f32.mrb[0].mxu0
      %v4803 = vadd.f32 %v4370, %v4802
      %v4804 = vpop.f32.mrb[0].mxu0
      %v4805 = vpop.f32.mrb[0].mxu0
      %v4806 = vadd.f32 %v4373, %v4805
      %v4807 = vpop.f32.mrb[0].mxu0
      %4808 = vmatprep.mubr.bf16.mxu0 %v3427
      %4809 = vmatmul.mubr.bf16.gmra.mrb[0].mxu0 %v3426
      %v4810 = vpop.f32.mrb[0].mxu0
      %v4811 = vadd.f32 %v4378, %v4810
      %v4812 = vpop.f32.mrb[0].mxu0
      %v4813 = vpop.f32.mrb[0].mxu0
      %v4814 = vadd.f32 %v4381, %v4813
      %v4815 = vpop.f32.mrb[0].mxu0
      %4816 = vmatprep.mubr.bf16.mxu0 %v3435
      %4817 = vmatmul.mubr.bf16.gmra.mrb[0].mxu0 %v3434
      %v4818 = vpop.f32.mrb[0].mxu0
      %v4819 = vadd.f32 %v4386, %v4818
      %v4820 = vpop.f32.mrb[0].mxu0
      %v4821 = vpop.f32.mrb[0].mxu0
      %v4822 = vadd.f32 %v4389, %v4821
      %v4823 = vpop.f32.mrb[0].mxu0
      %4824 = vmatprep.mubr.bf16.mxu0 %v3443
      %4825 = vmatmul.mubr.bf16.gmra.mrb[0].mxu0 %v3442
      %v4826 = vpop.f32.mrb[0].mxu0
      %v4827 = vadd.f32 %v4394, %v4826
      %v4828 = vpop.f32.mrb[0].mxu0
      %v4829 = vpop.f32.mrb[0].mxu0
      %v4830 = vadd.f32 %v4397, %v4829
      %v4831 = vpop.f32.mrb[0].mxu0
      %4832 = vmatprep.mubr.bf16.mxu0 %v3451
      %4833 = vmatmul.mubr.bf16.gmra.mrb[0].mxu0 %v3450
      %v4834 = vpop.f32.mrb[0].mxu0
      %v4835 = vadd.f32 %v4402, %v4834
      %v4836 = vpop.f32.mrb[0].mxu0
      %v4837 = vpop.f32.mrb[0].mxu0
      %v4838 = vadd.f32 %v4405, %v4837
      %v4839 = vpop.f32.mrb[0].mxu0
      %4840 = vmatprep.mubr.bf16.mxu0 %v3459
      %4841 = vmatmul.mubr.bf16.gmra.mrb[0].mxu0 %v3458
      %v4842 = vpop.f32.mrb[0].mxu0
      %v4843 = vadd.f32 %v4410, %v4842
      %v4844 = vpop.f32.mrb[0].mxu0
      %v4845 = vpop.f32.mrb[0].mxu0
      %v4846 = vadd.f32 %v4413, %v4845
      %v4847 = vpop.f32.mrb[0].mxu0
      %4848 = vmatprep.mubr.bf16.mxu0 %v3467
      %4849 = vmatmul.mubr.bf16.gmra.mrb[0].mxu0 %v3466
      %v4850 = vpop.f32.mrb[0].mxu0
      %v4851 = vadd.f32 %v4418, %v4850
      %v4852 = vpop.f32.mrb[0].mxu0
      %v4853 = vpop.f32.mrb[0].mxu0
      %v4854 = vadd.f32 %v4421, %v4853
      %v4855 = vpop.f32.mrb[0].mxu0
      %4856 = vmatprep.mubr.bf16.mxu0 %v3475
      %4857 = vmatmul.mubr.bf16.gmra.mrb[0].mxu0 %v3474
      %v4858 = vpop.f32.mrb[0].mxu0
      %v4859 = vadd.f32 %v4426, %v4858
      %v4860 = vpop.f32.mrb[0].mxu0
      %v4861 = vpop.f32.mrb[0].mxu0
      %v4862 = vadd.f32 %v4429, %v4861
      %v4863 = vpop.f32.mrb[0].mxu0
      %4864 = vmatprep.mubr.bf16.mxu0 %v3483
      %4865 = vmatmul.mubr.bf16.gmra.mrb[0].mxu0 %v3482
      %v4866 = vpop.f32.mrb[0].mxu0
      %v4867 = vadd.f32 %v4434, %v4866
      %v4868 = vpop.f32.mrb[0].mxu0
      %v4869 = vpop.f32.mrb[0].mxu0
      %v4870 = vadd.f32 %v4437, %v4869
      %v4871 = vpop.f32.mrb[0].mxu0
      %4872 = vmatprep.mubr.bf16.mxu0 %v3491
      %4873 = vmatmul.mubr.bf16.gmra.mrb[0].mxu0 %v3490
      %v4874 = vpop.f32.mrb[0].mxu0
      %v4875 = vadd.f32 %v4442, %v4874
      %v4876 = vpop.f32.mrb[0].mxu0
      %v4877 = vpop.f32.mrb[0].mxu0
      %v4878 = vadd.f32 %v4445, %v4877
      %v4879 = vpop.f32.mrb[0].mxu0
      %4880 = vmatprep.mubr.bf16.mxu0 %v3499
      %4881 = vmatmul.mubr.bf16.gmra.mrb[0].mxu0 %v3498
      %v4882 = vpop.f32.mrb[0].mxu0
      %v4883 = vadd.f32 %v4450, %v4882
      %v4884 = vpop.f32.mrb[0].mxu0
      %v4885 = vpop.f32.mrb[0].mxu0
      %v4886 = vadd.f32 %v4453, %v4885
      %v4887 = vpop.f32.mrb[0].mxu0
      %4888 = vmatprep.mubr.bf16.mxu0 %v3507
      %4889 = vmatmul.mubr.bf16.gmra.mrb[0].mxu0 %v3506
      %v4890 = vpop.f32.mrb[0].mxu0
      %v4891 = vadd.f32 %v4458, %v4890
      %v4892 = vpop.f32.mrb[0].mxu0
      %v4893 = vpop.f32.mrb[0].mxu0
      %v4894 = vadd.f32 %v4461, %v4893
      %v4895 = vpop.f32.mrb[0].mxu0
      %4896 = vmatprep.mubr.bf16.mxu0 %v3515
      %4897 = vmatmul.mubr.bf16.gmra.mrb[0].mxu0 %v3514
      %v4898 = vpop.f32.mrb[0].mxu0
      %v4899 = vadd.f32 %v4466, %v4898
      %v4900 = vpop.f32.mrb[0].mxu0
      %v4901 = vpop.f32.mrb[0].mxu0
      %v4902 = vadd.f32 %v4469, %v4901
      %v4903 = vpop.f32.mrb[0].mxu0
      %4904 = vmatprep.mubr.bf16.mxu0 %v3523
      %4905 = vmatmul.mubr.bf16.gmra.mrb[0].mxu0 %v3522
      %v4906 = vpop.f32.mrb[0].mxu0
      %v4907 = vadd.f32 %v4474, %v4906
      %v4908 = vpop.f32.mrb[0].mxu0
      %v4909 = vpop.f32.mrb[0].mxu0
      %v4910 = vadd.f32 %v4477, %v4909
      %v4911 = vpop.f32.mrb[0].mxu0
      %4912 = vmatprep.mubr.bf16.mxu0 %v3531
      %4913 = vmatmul.mubr.bf16.gmra.mrb[0].mxu0 %v3530
      %v4914 = vpop.f32.mrb[0].mxu0
      %v4915 = vadd.f32 %v4482, %v4914
      %v4916 = vpop.f32.mrb[0].mxu0
      %v4917 = vpop.f32.mrb[0].mxu0
      %v4918 = vadd.f32 %v4485, %v4917
      %v4919 = vpop.f32.mrb[0].mxu0
      %4920 = vmatprep.mubr.bf16.mxu0 %v3539
      %4921 = vmatmul.mubr.bf16.gmra.mrb[0].mxu0 %v3538
      %v4922 = vpop.f32.mrb[0].mxu0
      %v4923 = vadd.f32 %v4490, %v4922
      %v4924 = vpop.f32.mrb[0].mxu0
      %v4925 = vpop.f32.mrb[0].mxu0
      %v4926 = vadd.f32 %v4493, %v4925
      %v4927 = vpop.f32.mrb[0].mxu0
      %4928 = vmatprep.mubr.bf16.mxu0 %v3547
      %4929 = vmatmul.mubr.bf16.gmra.mrb[0].mxu0 %v3546
      %v4930 = vpop.f32.mrb[0].mxu0
      %v4931 = vadd.f32 %v4498, %v4930
      %v4932 = vpop.f32.mrb[0].mxu0
      %v4933 = vpop.f32.mrb[0].mxu0
      %v4934 = vadd.f32 %v4501, %v4933
      %v4935 = vpop.f32.mrb[0].mxu0
      %4936 = vmatprep.mubr.bf16.mxu0 %v3555
      %4937 = vmatmul.mubr.bf16.gmra.mrb[0].mxu0 %v3554
      %v4938 = vpop.f32.mrb[0].mxu0
      %v4939 = vadd.f32 %v4506, %v4938
      %v4940 = vpop.f32.mrb[0].mxu0
      %v4941 = vpop.f32.mrb[0].mxu0
      %v4942 = vadd.f32 %v4509, %v4941
      %v4943 = vpop.f32.mrb[0].mxu0
      %4944 = vmatprep.mubr.bf16.mxu0 %v3563
      %4945 = vmatmul.mubr.bf16.gmra.mrb[0].mxu0 %v3562
      %v4946 = vpop.f32.mrb[0].mxu0
      %v4947 = vadd.f32 %v4514, %v4946
      %v4948 = vpop.f32.mrb[0].mxu0
      %v4949 = vpop.f32.mrb[0].mxu0
      %v4950 = vadd.f32 %v4517, %v4949
      %v4951 = vpop.f32.mrb[0].mxu0
      %4952 = vmatprep.mubr.bf16.mxu0 %v3571
      %4953 = vmatmul.mubr.bf16.gmra.mrb[0].mxu0 %v3570
      %v4954 = vpop.f32.mrb[0].mxu0
      %v4955 = vadd.f32 %v4522, %v4954
      %v4956 = vpop.f32.mrb[0].mxu0
      %v4957 = vpop.f32.mrb[0].mxu0
      %v4958 = vadd.f32 %v4525, %v4957
      %v4959 = vpop.f32.mrb[0].mxu0
      %4960 = vmatprep.mubr.bf16.mxu0 %v3579
      %4961 = vmatmul.mubr.bf16.gmra.mrb[0].mxu0 %v3578
      %v4962 = vpop.f32.mrb[0].mxu0
      %v4963 = vadd.f32 %v4530, %v4962
      %v4964 = vpop.f32.mrb[0].mxu0
      %v4965 = vpop.f32.mrb[0].mxu0
      %v4966 = vadd.f32 %v4533, %v4965
      %v4967 = vpop.f32.mrb[0].mxu0
      %4968 = vmatprep.mubr.bf16.mxu0 %v3587
      %4969 = vmatmul.mubr.bf16.gmra.mrb[0].mxu0 %v3586
      %v4970 = vpop.f32.mrb[0].mxu0
      %v4971 = vadd.f32 %v4538, %v4970
      %v4972 = vpop.f32.mrb[0].mxu0
      %v4973 = vpop.f32.mrb[0].mxu0
      %v4974 = vadd.f32 %v4541, %v4973
      %v4975 = vpop.f32.mrb[0].mxu0
      %4976 = vmatprep.mubr.bf16.mxu0 %v3595
      %4977 = vmatmul.mubr.bf16.gmra.mrb[0].mxu0 %v3594
      %v4978 = vpop.f32.mrb[0].mxu0
      %v4979 = vadd.f32 %v4546, %v4978
      %v4980 = vpop.f32.mrb[0].mxu0
      %v4981 = vpop.f32.mrb[0].mxu0
      %v4982 = vadd.f32 %v4549, %v4981
      %v4983 = vpop.f32.mrb[0].mxu0
      %4984 = vmatprep.mubr.bf16.mxu0 %v3603
      %4985 = vmatmul.mubr.bf16.gmra.mrb[0].mxu0 %v3602
      %v4986 = vpop.f32.mrb[0].mxu0
      %v4987 = vadd.f32 %v4554, %v4986
      %v4988 = vpop.f32.mrb[0].mxu0
      %v4989 = vpop.f32.mrb[0].mxu0
      %v4990 = vadd.f32 %v4557, %v4989
      %v4991 = vpop.f32.mrb[0].mxu0
      %4992 = vmatprep.mubr.bf16.mxu0 %v3611
      %4993 = vmatmul.mubr.bf16.gmra.mrb[0].mxu0 %v3610
      %v4994 = vpop.f32.mrb[0].mxu0
      %v4995 = vadd.f32 %v4562, %v4994
      %v4996 = vpop.f32.mrb[0].mxu0
      %v4997 = vpop.f32.mrb[0].mxu0
      %v4998 = vadd.f32 %v4565, %v4997
      %v4999 = vpop.f32.mrb[0].mxu0
      %5000 = vmatprep.mubr.bf16.mxu0 %v3619
      %5001 = vmatmul.mubr.bf16.gmra.mrb[0].mxu0 %v3618
      %v5002 = vpop.f32.mrb[0].mxu0
      %v5003 = vadd.f32 %v4570, %v5002
      %v5004 = vpop.f32.mrb[0].mxu0
      %v5005 = vpop.f32.mrb[0].mxu0
      %v5006 = vadd.f32 %v4573, %v5005
      %v5007 = vpop.f32.mrb[0].mxu0
      %5008 = vdwg.mxu0
      %5009 = vmatprep.subr.bf16.mxu0 0
      %5010 = vmatpush1.bf16.msra.mxu0 %v4047
      %5011 = vmatprep.subr.bf16.mxu0 0
      %5012 = vmatpush1.bf16.msra.mxu0 %v4048
      %5013 = vmatprep.subr.bf16.mxu0 0
      %5014 = vmatpush1.bf16.msra.mxu0 %v4049
      %5015 = vmatprep.subr.bf16.mxu0 0
      %5016 = vmatpush1.bf16.msra.mxu0 %v4050
      %5017 = vmatprep.subr.bf16.mxu0 0
      %5018 = vmatpush1.bf16.msra.mxu0 %v4051
      %5019 = vmatprep.subr.bf16.mxu0 0
      %5020 = vmatpush1.bf16.msra.mxu0 %v4052
      %5021 = vmatprep.subr.bf16.mxu0 0
      %5022 = vmatpush1.bf16.msra.mxu0 %v4053
      %5023 = vmatprep.subr.bf16.mxu0 0
      %5024 = vmatpush1.bf16.msra.mxu0 %v4054
      %5025 = vmatprep.subr.bf16.mxu0 0
      %5026 = vmatpush1.bf16.msra.mxu0 %v4055
      %5027 = vmatprep.subr.bf16.mxu0 0
      %5028 = vmatpush1.bf16.msra.mxu0 %v4056
      %5029 = vmatprep.subr.bf16.mxu0 0
      %5030 = vmatpush1.bf16.msra.mxu0 %v4057
      %5031 = vmatprep.subr.bf16.mxu0 0
      %5032 = vmatpush1.bf16.msra.mxu0 %v4058
      %5033 = vmatprep.subr.bf16.mxu0 0
      %5034 = vmatpush1.bf16.msra.mxu0 %v4059
      %5035 = vmatprep.subr.bf16.mxu0 0
      %5036 = vmatpush1.bf16.msra.mxu0 %v4060
      %5037 = vmatprep.subr.bf16.mxu0 0
      %5038 = vmatpush1.bf16.msra.mxu0 %v4061
      %5039 = vmatprep.subr.bf16.mxu0 0
      %5040 = vmatpush1.bf16.msra.mxu0 %v4062
      %5041 = vmatprep.mubr.bf16.mxu0 %v3229
      %5042 = vmatmul.mubr.bf16.gmra.mrb[0].mxu0 %v3228
      %v5043 = vpop.f32.mrb[0].mxu0
      %v5044 = vadd.f32 %v4611, %v5043
      %v5045 = vpop.f32.mrb[0].mxu0
      %v5046 = vpop.f32.mrb[0].mxu0
      %v5047 = vadd.f32 %v4614, %v5046
      %v5048 = vpop.f32.mrb[0].mxu0
      %5049 = vmatprep.mubr.bf16.mxu0 %v3237
      %5050 = vmatmul.mubr.bf16.gmra.mrb[0].mxu0 %v3236
      %v5051 = vpop.f32.mrb[0].mxu0
      %v5052 = vadd.f32 %v4619, %v5051
      %v5053 = vpop.f32.mrb[0].mxu0
      %v5054 = vpop.f32.mrb[0].mxu0
      %v5055 = vadd.f32 %v4622, %v5054
      %v5056 = vpop.f32.mrb[0].mxu0
      %5057 = vmatprep.mubr.bf16.mxu0 %v3245
      %5058 = vmatmul.mubr.bf16.gmra.mrb[0].mxu0 %v3244
      %v5059 = vpop.f32.mrb[0].mxu0
      %v5060 = vadd.f32 %v4627, %v5059
      %v5061 = vpop.f32.mrb[0].mxu0
      %v5062 = vpop.f32.mrb[0].mxu0
      %v5063 = vadd.f32 %v4630, %v5062
      %v5064 = vpop.f32.mrb[0].mxu0
      %5065 = vmatprep.mubr.bf16.mxu0 %v3253
      %5066 = vmatmul.mubr.bf16.gmra.mrb[0].mxu0 %v3252
      %v5067 = vpop.f32.mrb[0].mxu0
      %v5068 = vadd.f32 %v4635, %v5067
      %v5069 = vpop.f32.mrb[0].mxu0
      %v5070 = vpop.f32.mrb[0].mxu0
      %v5071 = vadd.f32 %v4638, %v5070
      %v5072 = vpop.f32.mrb[0].mxu0
      %5073 = vmatprep.mubr.bf16.mxu0 %v3261
      %5074 = vmatmul.mubr.bf16.gmra.mrb[0].mxu0 %v3260
      %v5075 = vpop.f32.mrb[0].mxu0
      %v5076 = vadd.f32 %v4643, %v5075
      %v5077 = vpop.f32.mrb[0].mxu0
      %v5078 = vpop.f32.mrb[0].mxu0
      %v5079 = vadd.f32 %v4646, %v5078
      %v5080 = vpop.f32.mrb[0].mxu0
      %5081 = vmatprep.mubr.bf16.mxu0 %v3269
      %5082 = vmatmul.mubr.bf16.gmra.mrb[0].mxu0 %v3268
      %v5083 = vpop.f32.mrb[0].mxu0
      %v5084 = vadd.f32 %v4651, %v5083
      %v5085 = vpop.f32.mrb[0].mxu0
      %v5086 = vpop.f32.mrb[0].mxu0
      %v5087 = vadd.f32 %v4654, %v5086
      %v5088 = vpop.f32.mrb[0].mxu0
      %5089 = vmatprep.mubr.bf16.mxu0 %v3277
      %5090 = vmatmul.mubr.bf16.gmra.mrb[0].mxu0 %v3276
      %v5091 = vpop.f32.mrb[0].mxu0
      %v5092 = vadd.f32 %v4659, %v5091
      %v5093 = vpop.f32.mrb[0].mxu0
      %v5094 = vpop.f32.mrb[0].mxu0
      %v5095 = vadd.f32 %v4662, %v5094
      %v5096 = vpop.f32.mrb[0].mxu0
      %5097 = vmatprep.mubr.bf16.mxu0 %v3285
      %5098 = vmatmul.mubr.bf16.gmra.mrb[0].mxu0 %v3284
      %v5099 = vpop.f32.mrb[0].mxu0
      %v5100 = vadd.f32 %v4667, %v5099
      %v5101 = vpop.f32.mrb[0].mxu0
      %v5102 = vpop.f32.mrb[0].mxu0
      %v5103 = vadd.f32 %v4670, %v5102
      %v5104 = vpop.f32.mrb[0].mxu0
      %5105 = vmatprep.mubr.bf16.mxu0 %v3293
      %5106 = vmatmul.mubr.bf16.gmra.mrb[0].mxu0 %v3292
      %v5107 = vpop.f32.mrb[0].mxu0
      %v5108 = vadd.f32 %v4675, %v5107
      %v5109 = vpop.f32.mrb[0].mxu0
      %v5110 = vpop.f32.mrb[0].mxu0
      %v5111 = vadd.f32 %v4678, %v5110
      %v5112 = vpop.f32.mrb[0].mxu0
      %5113 = vmatprep.mubr.bf16.mxu0 %v3301
      %5114 = vmatmul.mubr.bf16.gmra.mrb[0].mxu0 %v3300
      %v5115 = vpop.f32.mrb[0].mxu0
      %v5116 = vadd.f32 %v4683, %v5115
      %v5117 = vpop.f32.mrb[0].mxu0
      %v5118 = vpop.f32.mrb[0].mxu0
      %v5119 = vadd.f32 %v4686, %v5118
      %v5120 = vpop.f32.mrb[0].mxu0
      %5121 = vmatprep.mubr.bf16.mxu0 %v3309
      %5122 = vmatmul.mubr.bf16.gmra.mrb[0].mxu0 %v3308
      %v5123 = vpop.f32.mrb[0].mxu0
      %v5124 = vadd.f32 %v4691, %v5123
      %v5125 = vpop.f32.mrb[0].mxu0
      %v5126 = vpop.f32.mrb[0].mxu0
      %v5127 = vadd.f32 %v4694, %v5126
      %v5128 = vpop.f32.mrb[0].mxu0
      %5129 = vmatprep.mubr.bf16.mxu0 %v3317
      %5130 = vmatmul.mubr.bf16.gmra.mrb[0].mxu0 %v3316
      %v5131 = vpop.f32.mrb[0].mxu0
      %v5132 = vadd.f32 %v4699, %v5131
      %v5133 = vpop.f32.mrb[0].mxu0
      %v5134 = vpop.f32.mrb[0].mxu0
      %v5135 = vadd.f32 %v4702, %v5134
      %v5136 = vpop.f32.mrb[0].mxu0
      %5137 = vmatprep.mubr.bf16.mxu0 %v3325
      %5138 = vmatmul.mubr.bf16.gmra.mrb[0].mxu0 %v3324
      %v5139 = vpop.f32.mrb[0].mxu0
      %v5140 = vadd.f32 %v4707, %v5139
      %v5141 = vpop.f32.mrb[0].mxu0
      %v5142 = vpop.f32.mrb[0].mxu0
      %v5143 = vadd.f32 %v4710, %v5142
      %v5144 = vpop.f32.mrb[0].mxu0
      %5145 = vmatprep.mubr.bf16.mxu0 %v3333
      %5146 = vmatmul.mubr.bf16.gmra.mrb[0].mxu0 %v3332
      %v5147 = vpop.f32.mrb[0].mxu0
      %v5148 = vadd.f32 %v4715, %v5147
      %v5149 = vpop.f32.mrb[0].mxu0
      %v5150 = vpop.f32.mrb[0].mxu0
      %v5151 = vadd.f32 %v4718, %v5150
      %v5152 = vpop.f32.mrb[0].mxu0
      %5153 = vmatprep.mubr.bf16.mxu0 %v3341
      %5154 = vmatmul.mubr.bf16.gmra.mrb[0].mxu0 %v3340
      %v5155 = vpop.f32.mrb[0].mxu0
      %v5156 = vadd.f32 %v4723, %v5155
      %v5157 = vpop.f32.mrb[0].mxu0
      %v5158 = vpop.f32.mrb[0].mxu0
      %v5159 = vadd.f32 %v4726, %v5158
      %v5160 = vpop.f32.mrb[0].mxu0
      %5161 = vmatprep.mubr.bf16.mxu0 %v3349
      %5162 = vmatmul.mubr.bf16.gmra.mrb[0].mxu0 %v3348
      %v5163 = vpop.f32.mrb[0].mxu0
      %v5164 = vadd.f32 %v4731, %v5163
      %v5165 = vpop.f32.mrb[0].mxu0
      %v5166 = vpop.f32.mrb[0].mxu0
      %v5167 = vadd.f32 %v4734, %v5166
      %v5168 = vpop.f32.mrb[0].mxu0
      %5169 = vmatprep.mubr.bf16.mxu0 %v3357
      %5170 = vmatmul.mubr.bf16.gmra.mrb[0].mxu0 %v3356
      %v5171 = vpop.f32.mrb[0].mxu0
      %v5172 = vadd.f32 %v4739, %v5171
      %v5173 = vpop.f32.mrb[0].mxu0
      %v5174 = vpop.f32.mrb[0].mxu0
      %v5175 = vadd.f32 %v4742, %v5174
      %v5176 = vpop.f32.mrb[0].mxu0
      %5177 = vmatprep.mubr.bf16.mxu0 %v3365
      %5178 = vmatmul.mubr.bf16.gmra.mrb[0].mxu0 %v3364
      %v5179 = vpop.f32.mrb[0].mxu0
      %v5180 = vadd.f32 %v4747, %v5179
      %v5181 = vpop.f32.mrb[0].mxu0
      %v5182 = vpop.f32.mrb[0].mxu0
      %v5183 = vadd.f32 %v4750, %v5182
      %v5184 = vpop.f32.mrb[0].mxu0
      %5185 = vmatprep.mubr.bf16.mxu0 %v3373
      %5186 = vmatmul.mubr.bf16.gmra.mrb[0].mxu0 %v3372
      %v5187 = vpop.f32.mrb[0].mxu0
      %v5188 = vadd.f32 %v4755, %v5187
      %v5189 = vpop.f32.mrb[0].mxu0
      %v5190 = vpop.f32.mrb[0].mxu0
      %v5191 = vadd.f32 %v4758, %v5190
      %v5192 = vpop.f32.mrb[0].mxu0
      %5193 = vmatprep.mubr.bf16.mxu0 %v3381
      %5194 = vmatmul.mubr.bf16.gmra.mrb[0].mxu0 %v3380
      %v5195 = vpop.f32.mrb[0].mxu0
      %v5196 = vadd.f32 %v4763, %v5195
      %v5197 = vpop.f32.mrb[0].mxu0
      %v5198 = vpop.f32.mrb[0].mxu0
      %v5199 = vadd.f32 %v4766, %v5198
      %v5200 = vpop.f32.mrb[0].mxu0
      %5201 = vmatprep.mubr.bf16.mxu0 %v3389
      %5202 = vmatmul.mubr.bf16.gmra.mrb[0].mxu0 %v3388
      %v5203 = vpop.f32.mrb[0].mxu0
      %v5204 = vadd.f32 %v4771, %v5203
      %v5205 = vpop.f32.mrb[0].mxu0
      %v5206 = vpop.f32.mrb[0].mxu0
      %v5207 = vadd.f32 %v4774, %v5206
      %v5208 = vpop.f32.mrb[0].mxu0
      %5209 = vmatprep.mubr.bf16.mxu0 %v3397
      %5210 = vmatmul.mubr.bf16.gmra.mrb[0].mxu0 %v3396
      %v5211 = vpop.f32.mrb[0].mxu0
      %v5212 = vadd.f32 %v4779, %v5211
      %v5213 = vpop.f32.mrb[0].mxu0
      %v5214 = vpop.f32.mrb[0].mxu0
      %v5215 = vadd.f32 %v4782, %v5214
      %v5216 = vpop.f32.mrb[0].mxu0
      %5217 = vmatprep.mubr.bf16.mxu0 %v3405
      %5218 = vmatmul.mubr.bf16.gmra.mrb[0].mxu0 %v3404
      %v5219 = vpop.f32.mrb[0].mxu0
      %v5220 = vadd.f32 %v4787, %v5219
      %v5221 = vpop.f32.mrb[0].mxu0
      %v5222 = vpop.f32.mrb[0].mxu0
      %v5223 = vadd.f32 %v4790, %v5222
      %v5224 = vpop.f32.mrb[0].mxu0
      %5225 = vmatprep.mubr.bf16.mxu0 %v3413
      %5226 = vmatmul.mubr.bf16.gmra.mrb[0].mxu0 %v3412
      %v5227 = vpop.f32.mrb[0].mxu0
      %v5228 = vadd.f32 %v4795, %v5227
      %v5229 = vpop.f32.mrb[0].mxu0
      %v5230 = vpop.f32.mrb[0].mxu0
      %v5231 = vadd.f32 %v4798, %v5230
      %v5232 = vpop.f32.mrb[0].mxu0
      %5233 = vmatprep.mubr.bf16.mxu0 %v3421
      %5234 = vmatmul.mubr.bf16.gmra.mrb[0].mxu0 %v3420
      %v5235 = vpop.f32.mrb[0].mxu0
      %v5236 = vadd.f32 %v4803, %v5235
      %v5237 = vpop.f32.mrb[0].mxu0
      %v5238 = vpop.f32.mrb[0].mxu0
      %v5239 = vadd.f32 %v4806, %v5238
      %v5240 = vpop.f32.mrb[0].mxu0
      %5241 = vmatprep.mubr.bf16.mxu0 %v3429
      %5242 = vmatmul.mubr.bf16.gmra.mrb[0].mxu0 %v3428
      %v5243 = vpop.f32.mrb[0].mxu0
      %v5244 = vadd.f32 %v4811, %v5243
      %v5245 = vpop.f32.mrb[0].mxu0
      %v5246 = vpop.f32.mrb[0].mxu0
      %v5247 = vadd.f32 %v4814, %v5246
      %v5248 = vpop.f32.mrb[0].mxu0
      %5249 = vmatprep.mubr.bf16.mxu0 %v3437
      %5250 = vmatmul.mubr.bf16.gmra.mrb[0].mxu0 %v3436
      %v5251 = vpop.f32.mrb[0].mxu0
      %v5252 = vadd.f32 %v4819, %v5251
      %v5253 = vpop.f32.mrb[0].mxu0
      %v5254 = vpop.f32.mrb[0].mxu0
      %v5255 = vadd.f32 %v4822, %v5254
      %v5256 = vpop.f32.mrb[0].mxu0
      %5257 = vmatprep.mubr.bf16.mxu0 %v3445
      %5258 = vmatmul.mubr.bf16.gmra.mrb[0].mxu0 %v3444
      %v5259 = vpop.f32.mrb[0].mxu0
      %v5260 = vadd.f32 %v4827, %v5259
      %v5261 = vpop.f32.mrb[0].mxu0
      %v5262 = vpop.f32.mrb[0].mxu0
      %v5263 = vadd.f32 %v4830, %v5262
      %v5264 = vpop.f32.mrb[0].mxu0
      %5265 = vmatprep.mubr.bf16.mxu0 %v3453
      %5266 = vmatmul.mubr.bf16.gmra.mrb[0].mxu0 %v3452
      %v5267 = vpop.f32.mrb[0].mxu0
      %v5268 = vadd.f32 %v4835, %v5267
      %v5269 = vpop.f32.mrb[0].mxu0
      %v5270 = vpop.f32.mrb[0].mxu0
      %v5271 = vadd.f32 %v4838, %v5270
      %v5272 = vpop.f32.mrb[0].mxu0
      %5273 = vmatprep.mubr.bf16.mxu0 %v3461
      %5274 = vmatmul.mubr.bf16.gmra.mrb[0].mxu0 %v3460
      %v5275 = vpop.f32.mrb[0].mxu0
      %v5276 = vadd.f32 %v4843, %v5275
      %v5277 = vpop.f32.mrb[0].mxu0
      %v5278 = vpop.f32.mrb[0].mxu0
      %v5279 = vadd.f32 %v4846, %v5278
      %v5280 = vpop.f32.mrb[0].mxu0
      %5281 = vmatprep.mubr.bf16.mxu0 %v3469
      %5282 = vmatmul.mubr.bf16.gmra.mrb[0].mxu0 %v3468
      %v5283 = vpop.f32.mrb[0].mxu0
      %v5284 = vadd.f32 %v4851, %v5283
      %v5285 = vpop.f32.mrb[0].mxu0
      %v5286 = vpop.f32.mrb[0].mxu0
      %v5287 = vadd.f32 %v4854, %v5286
      %v5288 = vpop.f32.mrb[0].mxu0
      %5289 = vmatprep.mubr.bf16.mxu0 %v3477
      %5290 = vmatmul.mubr.bf16.gmra.mrb[0].mxu0 %v3476
      %v5291 = vpop.f32.mrb[0].mxu0
      %v5292 = vadd.f32 %v4859, %v5291
      %v5293 = vpop.f32.mrb[0].mxu0
      %v5294 = vpop.f32.mrb[0].mxu0
      %v5295 = vadd.f32 %v4862, %v5294
      %v5296 = vpop.f32.mrb[0].mxu0
      %5297 = vmatprep.mubr.bf16.mxu0 %v3485
      %5298 = vmatmul.mubr.bf16.gmra.mrb[0].mxu0 %v3484
      %v5299 = vpop.f32.mrb[0].mxu0
      %v5300 = vadd.f32 %v4867, %v5299
      %v5301 = vpop.f32.mrb[0].mxu0
      %v5302 = vpop.f32.mrb[0].mxu0
      %v5303 = vadd.f32 %v4870, %v5302
      %v5304 = vpop.f32.mrb[0].mxu0
      %5305 = vmatprep.mubr.bf16.mxu0 %v3493
      %5306 = vmatmul.mubr.bf16.gmra.mrb[0].mxu0 %v3492
      %v5307 = vpop.f32.mrb[0].mxu0
      %v5308 = vadd.f32 %v4875, %v5307
      %v5309 = vpop.f32.mrb[0].mxu0
      %v5310 = vpop.f32.mrb[0].mxu0
      %v5311 = vadd.f32 %v4878, %v5310
      %v5312 = vpop.f32.mrb[0].mxu0
      %5313 = vmatprep.mubr.bf16.mxu0 %v3501
      %5314 = vmatmul.mubr.bf16.gmra.mrb[0].mxu0 %v3500
      %v5315 = vpop.f32.mrb[0].mxu0
      %v5316 = vadd.f32 %v4883, %v5315
      %v5317 = vpop.f32.mrb[0].mxu0
      %v5318 = vpop.f32.mrb[0].mxu0
      %v5319 = vadd.f32 %v4886, %v5318
      %v5320 = vpop.f32.mrb[0].mxu0
      %5321 = vmatprep.mubr.bf16.mxu0 %v3509
      %5322 = vmatmul.mubr.bf16.gmra.mrb[0].mxu0 %v3508
      %v5323 = vpop.f32.mrb[0].mxu0
      %v5324 = vadd.f32 %v4891, %v5323
      %v5325 = vpop.f32.mrb[0].mxu0
      %v5326 = vpop.f32.mrb[0].mxu0
      %v5327 = vadd.f32 %v4894, %v5326
      %v5328 = vpop.f32.mrb[0].mxu0
      %5329 = vmatprep.mubr.bf16.mxu0 %v3517
      %5330 = vmatmul.mubr.bf16.gmra.mrb[0].mxu0 %v3516
      %v5331 = vpop.f32.mrb[0].mxu0
      %v5332 = vadd.f32 %v4899, %v5331
      %v5333 = vpop.f32.mrb[0].mxu0
      %v5334 = vpop.f32.mrb[0].mxu0
      %v5335 = vadd.f32 %v4902, %v5334
      %v5336 = vpop.f32.mrb[0].mxu0
      %5337 = vmatprep.mubr.bf16.mxu0 %v3525
      %5338 = vmatmul.mubr.bf16.gmra.mrb[0].mxu0 %v3524
      %v5339 = vpop.f32.mrb[0].mxu0
      %v5340 = vadd.f32 %v4907, %v5339
      %v5341 = vpop.f32.mrb[0].mxu0
      %v5342 = vpop.f32.mrb[0].mxu0
      %v5343 = vadd.f32 %v4910, %v5342
      %v5344 = vpop.f32.mrb[0].mxu0
      %5345 = vmatprep.mubr.bf16.mxu0 %v3533
      %5346 = vmatmul.mubr.bf16.gmra.mrb[0].mxu0 %v3532
      %v5347 = vpop.f32.mrb[0].mxu0
      %v5348 = vadd.f32 %v4915, %v5347
      %v5349 = vpop.f32.mrb[0].mxu0
      %v5350 = vpop.f32.mrb[0].mxu0
      %v5351 = vadd.f32 %v4918, %v5350
      %v5352 = vpop.f32.mrb[0].mxu0
      %5353 = vmatprep.mubr.bf16.mxu0 %v3541
      %5354 = vmatmul.mubr.bf16.gmra.mrb[0].mxu0 %v3540
      %v5355 = vpop.f32.mrb[0].mxu0
      %v5356 = vadd.f32 %v4923, %v5355
      %v5357 = vpop.f32.mrb[0].mxu0
      %v5358 = vpop.f32.mrb[0].mxu0
      %v5359 = vadd.f32 %v4926, %v5358
      %v5360 = vpop.f32.mrb[0].mxu0
      %5361 = vmatprep.mubr.bf16.mxu0 %v3549
      %5362 = vmatmul.mubr.bf16.gmra.mrb[0].mxu0 %v3548
      %v5363 = vpop.f32.mrb[0].mxu0
      %v5364 = vadd.f32 %v4931, %v5363
      %v5365 = vpop.f32.mrb[0].mxu0
      %v5366 = vpop.f32.mrb[0].mxu0
      %v5367 = vadd.f32 %v4934, %v5366
      %v5368 = vpop.f32.mrb[0].mxu0
      %5369 = vmatprep.mubr.bf16.mxu0 %v3557
      %5370 = vmatmul.mubr.bf16.gmra.mrb[0].mxu0 %v3556
      %v5371 = vpop.f32.mrb[0].mxu0
      %v5372 = vadd.f32 %v4939, %v5371
      %v5373 = vpop.f32.mrb[0].mxu0
      %v5374 = vpop.f32.mrb[0].mxu0
      %v5375 = vadd.f32 %v4942, %v5374
      %v5376 = vpop.f32.mrb[0].mxu0
      %5377 = vmatprep.mubr.bf16.mxu0 %v3565
      %5378 = vmatmul.mubr.bf16.gmra.mrb[0].mxu0 %v3564
      %v5379 = vpop.f32.mrb[0].mxu0
      %v5380 = vadd.f32 %v4947, %v5379
      %v5381 = vpop.f32.mrb[0].mxu0
      %v5382 = vpop.f32.mrb[0].mxu0
      %v5383 = vadd.f32 %v4950, %v5382
      %v5384 = vpop.f32.mrb[0].mxu0
      %5385 = vmatprep.mubr.bf16.mxu0 %v3573
      %5386 = vmatmul.mubr.bf16.gmra.mrb[0].mxu0 %v3572
      %v5387 = vpop.f32.mrb[0].mxu0
      %v5388 = vadd.f32 %v4955, %v5387
      %v5389 = vpop.f32.mrb[0].mxu0
      %v5390 = vpop.f32.mrb[0].mxu0
      %v5391 = vadd.f32 %v4958, %v5390
      %v5392 = vpop.f32.mrb[0].mxu0
      %5393 = vmatprep.mubr.bf16.mxu0 %v3581
      %5394 = vmatmul.mubr.bf16.gmra.mrb[0].mxu0 %v3580
      %v5395 = vpop.f32.mrb[0].mxu0
      %v5396 = vadd.f32 %v4963, %v5395
      %v5397 = vpop.f32.mrb[0].mxu0
      %v5398 = vpop.f32.mrb[0].mxu0
      %v5399 = vadd.f32 %v4966, %v5398
      %v5400 = vpop.f32.mrb[0].mxu0
      %5401 = vmatprep.mubr.bf16.mxu0 %v3589
      %5402 = vmatmul.mubr.bf16.gmra.mrb[0].mxu0 %v3588
      %v5403 = vpop.f32.mrb[0].mxu0
      %v5404 = vadd.f32 %v4971, %v5403
      %v5405 = vpop.f32.mrb[0].mxu0
      %v5406 = vpop.f32.mrb[0].mxu0
      %v5407 = vadd.f32 %v4974, %v5406
      %v5408 = vpop.f32.mrb[0].mxu0
      %5409 = vmatprep.mubr.bf16.mxu0 %v3597
      %5410 = vmatmul.mubr.bf16.gmra.mrb[0].mxu0 %v3596
      %v5411 = vpop.f32.mrb[0].mxu0
      %v5412 = vadd.f32 %v4979, %v5411
      %v5413 = vpop.f32.mrb[0].mxu0
      %v5414 = vpop.f32.mrb[0].mxu0
      %v5415 = vadd.f32 %v4982, %v5414
      %v5416 = vpop.f32.mrb[0].mxu0
      %5417 = vmatprep.mubr.bf16.mxu0 %v3605
      %5418 = vmatmul.mubr.bf16.gmra.mrb[0].mxu0 %v3604
      %v5419 = vpop.f32.mrb[0].mxu0
      %v5420 = vadd.f32 %v4987, %v5419
      %v5421 = vpop.f32.mrb[0].mxu0
      %v5422 = vpop.f32.mrb[0].mxu0
      %v5423 = vadd.f32 %v4990, %v5422
      %v5424 = vpop.f32.mrb[0].mxu0
      %5425 = vmatprep.mubr.bf16.mxu0 %v3613
      %5426 = vmatmul.mubr.bf16.gmra.mrb[0].mxu0 %v3612
      %v5427 = vpop.f32.mrb[0].mxu0
      %v5428 = vadd.f32 %v4995, %v5427
      %v5429 = vpop.f32.mrb[0].mxu0
      %v5430 = vpop.f32.mrb[0].mxu0
      %v5431 = vadd.f32 %v4998, %v5430
      %v5432 = vpop.f32.mrb[0].mxu0
      %5433 = vmatprep.mubr.bf16.mxu0 %v3621
      %5434 = vmatmul.mubr.bf16.gmra.mrb[0].mxu0 %v3620
      %v5435 = vpop.f32.mrb[0].mxu0
      %v5436 = vadd.f32 %v5003, %v5435
      %v5437 = vpop.f32.mrb[0].mxu0
      %v5438 = vpop.f32.mrb[0].mxu0
      %v5439 = vadd.f32 %v5006, %v5438
      %v5440 = vpop.f32.mrb[0].mxu0
      %5441 = vdwg.mxu0
      %5442 = vmatprep.subr.bf16.mxu0 0
      %5443 = vmatpush1.bf16.msra.mxu0 %v4063
      %5444 = vmatprep.subr.bf16.mxu0 0
      %5445 = vmatpush1.bf16.msra.mxu0 %v4064
      %5446 = vmatprep.subr.bf16.mxu0 0
      %5447 = vmatpush1.bf16.msra.mxu0 %v4065
      %5448 = vmatprep.subr.bf16.mxu0 0
      %5449 = vmatpush1.bf16.msra.mxu0 %v4066
      %5450 = vmatprep.subr.bf16.mxu0 0
      %5451 = vmatpush1.bf16.msra.mxu0 %v4067
      %5452 = vmatprep.subr.bf16.mxu0 0
      %5453 = vmatpush1.bf16.msra.mxu0 %v4068
      %5454 = vmatprep.subr.bf16.mxu0 0
      %5455 = vmatpush1.bf16.msra.mxu0 %v4069
      %5456 = vmatprep.subr.bf16.mxu0 0
      %5457 = vmatpush1.bf16.msra.mxu0 %v4070
      %5458 = vmatprep.subr.bf16.mxu0 0
      %5459 = vmatpush1.bf16.msra.mxu0 %v4071
      %5460 = vmatprep.subr.bf16.mxu0 0
      %5461 = vmatpush1.bf16.msra.mxu0 %v4072
      %5462 = vmatprep.subr.bf16.mxu0 0
      %5463 = vmatpush1.bf16.msra.mxu0 %v4073
      %5464 = vmatprep.subr.bf16.mxu0 0
      %5465 = vmatpush1.bf16.msra.mxu0 %v4074
      %5466 = vmatprep.subr.bf16.mxu0 0
      %5467 = vmatpush1.bf16.msra.mxu0 %v4075
      %5468 = vmatprep.subr.bf16.mxu0 0
      %5469 = vmatpush1.bf16.msra.mxu0 %v4076
      %5470 = vmatprep.subr.bf16.mxu0 0
      %5471 = vmatpush1.bf16.msra.mxu0 %v4077
      %5472 = vmatprep.subr.bf16.mxu0 0
      %5473 = vmatpush1.bf16.msra.mxu0 %v4078
      %5474 = vmatprep.mubr.bf16.mxu0 %v3231
      %5475 = vmatmul.mubr.bf16.gmra.mrb[0].mxu0 %v3230
      %v5476 = vpop.f32.mrb[0].mxu0
      %v5477 = vadd.f32 %v5044, %v5476
      %v5478 = vpop.f32.mrb[0].mxu0
      %v5479 = vpop.f32.mrb[0].mxu0
      %v5480 = vadd.f32 %v5047, %v5479
      %v5481 = vpop.f32.mrb[0].mxu0
      %5482 = vmatprep.mubr.bf16.mxu0 %v3239
      %5483 = vmatmul.mubr.bf16.gmra.mrb[0].mxu0 %v3238
      %v5484 = vpop.f32.mrb[0].mxu0
      %v5485 = vadd.f32 %v5052, %v5484
      %v5486 = vpop.f32.mrb[0].mxu0
      %v5487 = vpop.f32.mrb[0].mxu0
      %v5488 = vadd.f32 %v5055, %v5487
      %v5489 = vpop.f32.mrb[0].mxu0
      %5490 = vmatprep.mubr.bf16.mxu0 %v3247
      %5491 = vmatmul.mubr.bf16.gmra.mrb[0].mxu0 %v3246
      %v5492 = vpop.f32.mrb[0].mxu0
      %v5493 = vadd.f32 %v5060, %v5492
      %v5494 = vpop.f32.mrb[0].mxu0
      %v5495 = vpop.f32.mrb[0].mxu0
      %v5496 = vadd.f32 %v5063, %v5495
      %v5497 = vpop.f32.mrb[0].mxu0
      %5498 = vmatprep.mubr.bf16.mxu0 %v3255
      %5499 = vmatmul.mubr.bf16.gmra.mrb[0].mxu0 %v3254
      %v5500 = vpop.f32.mrb[0].mxu0
      %v5501 = vadd.f32 %v5068, %v5500
      %v5502 = vpop.f32.mrb[0].mxu0
      %v5503 = vpop.f32.mrb[0].mxu0
      %v5504 = vadd.f32 %v5071, %v5503
      %v5505 = vpop.f32.mrb[0].mxu0
      %5506 = vmatprep.mubr.bf16.mxu0 %v3263
      %5507 = vmatmul.mubr.bf16.gmra.mrb[0].mxu0 %v3262
      %v5508 = vpop.f32.mrb[0].mxu0
      %v5509 = vadd.f32 %v5076, %v5508
      %v5510 = vpop.f32.mrb[0].mxu0
      %v5511 = vpop.f32.mrb[0].mxu0
      %v5512 = vadd.f32 %v5079, %v5511
      %v5513 = vpop.f32.mrb[0].mxu0
      %5514 = vmatprep.mubr.bf16.mxu0 %v3271
      %5515 = vmatmul.mubr.bf16.gmra.mrb[0].mxu0 %v3270
      %v5516 = vpop.f32.mrb[0].mxu0
      %v5517 = vadd.f32 %v5084, %v5516
      %v5518 = vpop.f32.mrb[0].mxu0
      %v5519 = vpop.f32.mrb[0].mxu0
      %v5520 = vadd.f32 %v5087, %v5519
      %v5521 = vpop.f32.mrb[0].mxu0
      %5522 = vmatprep.mubr.bf16.mxu0 %v3279
      %5523 = vmatmul.mubr.bf16.gmra.mrb[0].mxu0 %v3278
      %v5524 = vpop.f32.mrb[0].mxu0
      %v5525 = vadd.f32 %v5092, %v5524
      %v5526 = vpop.f32.mrb[0].mxu0
      %v5527 = vpop.f32.mrb[0].mxu0
      %v5528 = vadd.f32 %v5095, %v5527
      %v5529 = vpop.f32.mrb[0].mxu0
      %5530 = vmatprep.mubr.bf16.mxu0 %v3287
      %5531 = vmatmul.mubr.bf16.gmra.mrb[0].mxu0 %v3286
      %v5532 = vpop.f32.mrb[0].mxu0
      %v5533 = vadd.f32 %v5100, %v5532
      %v5534 = vpop.f32.mrb[0].mxu0
      %v5535 = vpop.f32.mrb[0].mxu0
      %v5536 = vadd.f32 %v5103, %v5535
      %v5537 = vpop.f32.mrb[0].mxu0
      %5538 = vmatprep.mubr.bf16.mxu0 %v3295
      %5539 = vmatmul.mubr.bf16.gmra.mrb[0].mxu0 %v3294
      %v5540 = vpop.f32.mrb[0].mxu0
      %v5541 = vadd.f32 %v5108, %v5540
      %v5542 = vpop.f32.mrb[0].mxu0
      %v5543 = vpop.f32.mrb[0].mxu0
      %v5544 = vadd.f32 %v5111, %v5543
      %v5545 = vpop.f32.mrb[0].mxu0
      %5546 = vmatprep.mubr.bf16.mxu0 %v3303
      %5547 = vmatmul.mubr.bf16.gmra.mrb[0].mxu0 %v3302
      %v5548 = vpop.f32.mrb[0].mxu0
      %v5549 = vadd.f32 %v5116, %v5548
      %v5550 = vpop.f32.mrb[0].mxu0
      %v5551 = vpop.f32.mrb[0].mxu0
      %v5552 = vadd.f32 %v5119, %v5551
      %v5553 = vpop.f32.mrb[0].mxu0
      %5554 = vmatprep.mubr.bf16.mxu0 %v3311
      %5555 = vmatmul.mubr.bf16.gmra.mrb[0].mxu0 %v3310
      %v5556 = vpop.f32.mrb[0].mxu0
      %v5557 = vadd.f32 %v5124, %v5556
      %v5558 = vpop.f32.mrb[0].mxu0
      %v5559 = vpop.f32.mrb[0].mxu0
      %v5560 = vadd.f32 %v5127, %v5559
      %v5561 = vpop.f32.mrb[0].mxu0
      %5562 = vmatprep.mubr.bf16.mxu0 %v3319
      %5563 = vmatmul.mubr.bf16.gmra.mrb[0].mxu0 %v3318
      %v5564 = vpop.f32.mrb[0].mxu0
      %v5565 = vadd.f32 %v5132, %v5564
      %v5566 = vpop.f32.mrb[0].mxu0
      %v5567 = vpop.f32.mrb[0].mxu0
      %v5568 = vadd.f32 %v5135, %v5567
      %v5569 = vpop.f32.mrb[0].mxu0
      %5570 = vmatprep.mubr.bf16.mxu0 %v3327
      %5571 = vmatmul.mubr.bf16.gmra.mrb[0].mxu0 %v3326
      %v5572 = vpop.f32.mrb[0].mxu0
      %v5573 = vadd.f32 %v5140, %v5572
      %v5574 = vpop.f32.mrb[0].mxu0
      %v5575 = vpop.f32.mrb[0].mxu0
      %v5576 = vadd.f32 %v5143, %v5575
      %v5577 = vpop.f32.mrb[0].mxu0
      %5578 = vmatprep.mubr.bf16.mxu0 %v3335
      %5579 = vmatmul.mubr.bf16.gmra.mrb[0].mxu0 %v3334
      %v5580 = vpop.f32.mrb[0].mxu0
      %v5581 = vadd.f32 %v5148, %v5580
      %v5582 = vpop.f32.mrb[0].mxu0
      %v5583 = vpop.f32.mrb[0].mxu0
      %v5584 = vadd.f32 %v5151, %v5583
      %v5585 = vpop.f32.mrb[0].mxu0
      %5586 = vmatprep.mubr.bf16.mxu0 %v3343
      %5587 = vmatmul.mubr.bf16.gmra.mrb[0].mxu0 %v3342
      %v5588 = vpop.f32.mrb[0].mxu0
      %v5589 = vadd.f32 %v5156, %v5588
      %v5590 = vpop.f32.mrb[0].mxu0
      %v5591 = vpop.f32.mrb[0].mxu0
      %v5592 = vadd.f32 %v5159, %v5591
      %v5593 = vpop.f32.mrb[0].mxu0
      %5594 = vmatprep.mubr.bf16.mxu0 %v3351
      %5595 = vmatmul.mubr.bf16.gmra.mrb[0].mxu0 %v3350
      %v5596 = vpop.f32.mrb[0].mxu0
      %v5597 = vadd.f32 %v5164, %v5596
      %v5598 = vpop.f32.mrb[0].mxu0
      %v5599 = vpop.f32.mrb[0].mxu0
      %v5600 = vadd.f32 %v5167, %v5599
      %v5601 = vpop.f32.mrb[0].mxu0
      %5602 = vmatprep.mubr.bf16.mxu0 %v3359
      %5603 = vmatmul.mubr.bf16.gmra.mrb[0].mxu0 %v3358
      %v5604 = vpop.f32.mrb[0].mxu0
      %v5605 = vadd.f32 %v5172, %v5604
      %v5606 = vpop.f32.mrb[0].mxu0
      %v5607 = vpop.f32.mrb[0].mxu0
      %v5608 = vadd.f32 %v5175, %v5607
      %v5609 = vpop.f32.mrb[0].mxu0
      %5610 = vmatprep.mubr.bf16.mxu0 %v3367
      %5611 = vmatmul.mubr.bf16.gmra.mrb[0].mxu0 %v3366
      %v5612 = vpop.f32.mrb[0].mxu0
      %v5613 = vadd.f32 %v5180, %v5612
      %v5614 = vpop.f32.mrb[0].mxu0
      %v5615 = vpop.f32.mrb[0].mxu0
      %v5616 = vadd.f32 %v5183, %v5615
      %v5617 = vpop.f32.mrb[0].mxu0
      %5618 = vmatprep.mubr.bf16.mxu0 %v3375
      %5619 = vmatmul.mubr.bf16.gmra.mrb[0].mxu0 %v3374
      %v5620 = vpop.f32.mrb[0].mxu0
      %v5621 = vadd.f32 %v5188, %v5620
      %v5622 = vpop.f32.mrb[0].mxu0
      %v5623 = vpop.f32.mrb[0].mxu0
      %v5624 = vadd.f32 %v5191, %v5623
      %v5625 = vpop.f32.mrb[0].mxu0
      %5626 = vmatprep.mubr.bf16.mxu0 %v3383
      %5627 = vmatmul.mubr.bf16.gmra.mrb[0].mxu0 %v3382
      %v5628 = vpop.f32.mrb[0].mxu0
      %v5629 = vadd.f32 %v5196, %v5628
      %v5630 = vpop.f32.mrb[0].mxu0
      %v5631 = vpop.f32.mrb[0].mxu0
      %v5632 = vadd.f32 %v5199, %v5631
      %v5633 = vpop.f32.mrb[0].mxu0
      %5634 = vmatprep.mubr.bf16.mxu0 %v3391
      %5635 = vmatmul.mubr.bf16.gmra.mrb[0].mxu0 %v3390
      %v5636 = vpop.f32.mrb[0].mxu0
      %v5637 = vadd.f32 %v5204, %v5636
      %v5638 = vpop.f32.mrb[0].mxu0
      %v5639 = vpop.f32.mrb[0].mxu0
      %v5640 = vadd.f32 %v5207, %v5639
      %v5641 = vpop.f32.mrb[0].mxu0
      %5642 = vmatprep.mubr.bf16.mxu0 %v3399
      %5643 = vmatmul.mubr.bf16.gmra.mrb[0].mxu0 %v3398
      %v5644 = vpop.f32.mrb[0].mxu0
      %v5645 = vadd.f32 %v5212, %v5644
      %v5646 = vpop.f32.mrb[0].mxu0
      %v5647 = vpop.f32.mrb[0].mxu0
      %v5648 = vadd.f32 %v5215, %v5647
      %v5649 = vpop.f32.mrb[0].mxu0
      %5650 = vmatprep.mubr.bf16.mxu0 %v3407
      %5651 = vmatmul.mubr.bf16.gmra.mrb[0].mxu0 %v3406
      %v5652 = vpop.f32.mrb[0].mxu0
      %v5653 = vadd.f32 %v5220, %v5652
      %v5654 = vpop.f32.mrb[0].mxu0
      %v5655 = vpop.f32.mrb[0].mxu0
      %v5656 = vadd.f32 %v5223, %v5655
      %v5657 = vpop.f32.mrb[0].mxu0
      %5658 = vmatprep.mubr.bf16.mxu0 %v3415
      %5659 = vmatmul.mubr.bf16.gmra.mrb[0].mxu0 %v3414
      %v5660 = vpop.f32.mrb[0].mxu0
      %v5661 = vadd.f32 %v5228, %v5660
      %v5662 = vpop.f32.mrb[0].mxu0
      %v5663 = vpop.f32.mrb[0].mxu0
      %v5664 = vadd.f32 %v5231, %v5663
      %v5665 = vpop.f32.mrb[0].mxu0
      %5666 = vmatprep.mubr.bf16.mxu0 %v3423
      %5667 = vmatmul.mubr.bf16.gmra.mrb[0].mxu0 %v3422
      %v5668 = vpop.f32.mrb[0].mxu0
      %v5669 = vadd.f32 %v5236, %v5668
      %v5670 = vpop.f32.mrb[0].mxu0
      %v5671 = vpop.f32.mrb[0].mxu0
      %v5672 = vadd.f32 %v5239, %v5671
      %v5673 = vpop.f32.mrb[0].mxu0
      %5674 = vmatprep.mubr.bf16.mxu0 %v3431
      %5675 = vmatmul.mubr.bf16.gmra.mrb[0].mxu0 %v3430
      %v5676 = vpop.f32.mrb[0].mxu0
      %v5677 = vadd.f32 %v5244, %v5676
      %v5678 = vpop.f32.mrb[0].mxu0
      %v5679 = vpop.f32.mrb[0].mxu0
      %v5680 = vadd.f32 %v5247, %v5679
      %v5681 = vpop.f32.mrb[0].mxu0
      %5682 = vmatprep.mubr.bf16.mxu0 %v3439
      %5683 = vmatmul.mubr.bf16.gmra.mrb[0].mxu0 %v3438
      %v5684 = vpop.f32.mrb[0].mxu0
      %v5685 = vadd.f32 %v5252, %v5684
      %v5686 = vpop.f32.mrb[0].mxu0
      %v5687 = vpop.f32.mrb[0].mxu0
      %v5688 = vadd.f32 %v5255, %v5687
      %v5689 = vpop.f32.mrb[0].mxu0
      %5690 = vmatprep.mubr.bf16.mxu0 %v3447
      %5691 = vmatmul.mubr.bf16.gmra.mrb[0].mxu0 %v3446
      %v5692 = vpop.f32.mrb[0].mxu0
      %v5693 = vadd.f32 %v5260, %v5692
      %v5694 = vpop.f32.mrb[0].mxu0
      %v5695 = vpop.f32.mrb[0].mxu0
      %v5696 = vadd.f32 %v5263, %v5695
      %v5697 = vpop.f32.mrb[0].mxu0
      %5698 = vmatprep.mubr.bf16.mxu0 %v3455
      %5699 = vmatmul.mubr.bf16.gmra.mrb[0].mxu0 %v3454
      %v5700 = vpop.f32.mrb[0].mxu0
      %v5701 = vadd.f32 %v5268, %v5700
      %v5702 = vpop.f32.mrb[0].mxu0
      %v5703 = vpop.f32.mrb[0].mxu0
      %v5704 = vadd.f32 %v5271, %v5703
      %v5705 = vpop.f32.mrb[0].mxu0
      %5706 = vmatprep.mubr.bf16.mxu0 %v3463
      %5707 = vmatmul.mubr.bf16.gmra.mrb[0].mxu0 %v3462
      %v5708 = vpop.f32.mrb[0].mxu0
      %v5709 = vadd.f32 %v5276, %v5708
      %v5710 = vpop.f32.mrb[0].mxu0
      %v5711 = vpop.f32.mrb[0].mxu0
      %v5712 = vadd.f32 %v5279, %v5711
      %v5713 = vpop.f32.mrb[0].mxu0
      %5714 = vmatprep.mubr.bf16.mxu0 %v3471
      %5715 = vmatmul.mubr.bf16.gmra.mrb[0].mxu0 %v3470
      %v5716 = vpop.f32.mrb[0].mxu0
      %v5717 = vadd.f32 %v5284, %v5716
      %v5718 = vpop.f32.mrb[0].mxu0
      %v5719 = vpop.f32.mrb[0].mxu0
      %v5720 = vadd.f32 %v5287, %v5719
      %v5721 = vpop.f32.mrb[0].mxu0
      %5722 = vmatprep.mubr.bf16.mxu0 %v3479
      %5723 = vmatmul.mubr.bf16.gmra.mrb[0].mxu0 %v3478
      %v5724 = vpop.f32.mrb[0].mxu0
      %v5725 = vadd.f32 %v5292, %v5724
      %v5726 = vpop.f32.mrb[0].mxu0
      %v5727 = vpop.f32.mrb[0].mxu0
      %v5728 = vadd.f32 %v5295, %v5727
      %v5729 = vpop.f32.mrb[0].mxu0
      %5730 = vmatprep.mubr.bf16.mxu0 %v3487
      %5731 = vmatmul.mubr.bf16.gmra.mrb[0].mxu0 %v3486
      %v5732 = vpop.f32.mrb[0].mxu0
      %v5733 = vadd.f32 %v5300, %v5732
      %v5734 = vpop.f32.mrb[0].mxu0
      %v5735 = vpop.f32.mrb[0].mxu0
      %v5736 = vadd.f32 %v5303, %v5735
      %v5737 = vpop.f32.mrb[0].mxu0
      %5738 = vmatprep.mubr.bf16.mxu0 %v3495
      %5739 = vmatmul.mubr.bf16.gmra.mrb[0].mxu0 %v3494
      %v5740 = vpop.f32.mrb[0].mxu0
      %v5741 = vadd.f32 %v5308, %v5740
      %v5742 = vpop.f32.mrb[0].mxu0
      %v5743 = vpop.f32.mrb[0].mxu0
      %v5744 = vadd.f32 %v5311, %v5743
      %v5745 = vpop.f32.mrb[0].mxu0
      %5746 = vmatprep.mubr.bf16.mxu0 %v3503
      %5747 = vmatmul.mubr.bf16.gmra.mrb[0].mxu0 %v3502
      %v5748 = vpop.f32.mrb[0].mxu0
      %v5749 = vadd.f32 %v5316, %v5748
      %v5750 = vpop.f32.mrb[0].mxu0
      %v5751 = vpop.f32.mrb[0].mxu0
      %v5752 = vadd.f32 %v5319, %v5751
      %v5753 = vpop.f32.mrb[0].mxu0
      %5754 = vmatprep.mubr.bf16.mxu0 %v3511
      %5755 = vmatmul.mubr.bf16.gmra.mrb[0].mxu0 %v3510
      %v5756 = vpop.f32.mrb[0].mxu0
      %v5757 = vadd.f32 %v5324, %v5756
      %v5758 = vpop.f32.mrb[0].mxu0
      %v5759 = vpop.f32.mrb[0].mxu0
      %v5760 = vadd.f32 %v5327, %v5759
      %v5761 = vpop.f32.mrb[0].mxu0
      %5762 = vmatprep.mubr.bf16.mxu0 %v3519
      %5763 = vmatmul.mubr.bf16.gmra.mrb[0].mxu0 %v3518
      %v5764 = vpop.f32.mrb[0].mxu0
      %v5765 = vadd.f32 %v5332, %v5764
      %v5766 = vpop.f32.mrb[0].mxu0
      %v5767 = vpop.f32.mrb[0].mxu0
      %v5768 = vadd.f32 %v5335, %v5767
      %v5769 = vpop.f32.mrb[0].mxu0
      %5770 = vmatprep.mubr.bf16.mxu0 %v3527
      %5771 = vmatmul.mubr.bf16.gmra.mrb[0].mxu0 %v3526
      %v5772 = vpop.f32.mrb[0].mxu0
      %v5773 = vadd.f32 %v5340, %v5772
      %v5774 = vpop.f32.mrb[0].mxu0
      %v5775 = vpop.f32.mrb[0].mxu0
      %v5776 = vadd.f32 %v5343, %v5775
      %v5777 = vpop.f32.mrb[0].mxu0
      %5778 = vmatprep.mubr.bf16.mxu0 %v3535
      %5779 = vmatmul.mubr.bf16.gmra.mrb[0].mxu0 %v3534
      %v5780 = vpop.f32.mrb[0].mxu0
      %v5781 = vadd.f32 %v5348, %v5780
      %v5782 = vpop.f32.mrb[0].mxu0
      %v5783 = vpop.f32.mrb[0].mxu0
      %v5784 = vadd.f32 %v5351, %v5783
      %v5785 = vpop.f32.mrb[0].mxu0
      %5786 = vmatprep.mubr.bf16.mxu0 %v3543
      %5787 = vmatmul.mubr.bf16.gmra.mrb[0].mxu0 %v3542
      %v5788 = vpop.f32.mrb[0].mxu0
      %v5789 = vadd.f32 %v5356, %v5788
      %v5790 = vpop.f32.mrb[0].mxu0
      %v5791 = vpop.f32.mrb[0].mxu0
      %v5792 = vadd.f32 %v5359, %v5791
      %v5793 = vpop.f32.mrb[0].mxu0
      %5794 = vmatprep.mubr.bf16.mxu0 %v3551
      %5795 = vmatmul.mubr.bf16.gmra.mrb[0].mxu0 %v3550
      %v5796 = vpop.f32.mrb[0].mxu0
      %v5797 = vadd.f32 %v5364, %v5796
      %v5798 = vpop.f32.mrb[0].mxu0
      %v5799 = vpop.f32.mrb[0].mxu0
      %v5800 = vadd.f32 %v5367, %v5799
      %v5801 = vpop.f32.mrb[0].mxu0
      %5802 = vmatprep.mubr.bf16.mxu0 %v3559
      %5803 = vmatmul.mubr.bf16.gmra.mrb[0].mxu0 %v3558
      %v5804 = vpop.f32.mrb[0].mxu0
      %v5805 = vadd.f32 %v5372, %v5804
      %v5806 = vpop.f32.mrb[0].mxu0
      %v5807 = vpop.f32.mrb[0].mxu0
      %v5808 = vadd.f32 %v5375, %v5807
      %v5809 = vpop.f32.mrb[0].mxu0
      %5810 = vmatprep.mubr.bf16.mxu0 %v3567
      %5811 = vmatmul.mubr.bf16.gmra.mrb[0].mxu0 %v3566
      %v5812 = vpop.f32.mrb[0].mxu0
      %v5813 = vadd.f32 %v5380, %v5812
      %v5814 = vpop.f32.mrb[0].mxu0
      %v5815 = vpop.f32.mrb[0].mxu0
      %v5816 = vadd.f32 %v5383, %v5815
      %v5817 = vpop.f32.mrb[0].mxu0
      %5818 = vmatprep.mubr.bf16.mxu0 %v3575
      %5819 = vmatmul.mubr.bf16.gmra.mrb[0].mxu0 %v3574
      %v5820 = vpop.f32.mrb[0].mxu0
      %v5821 = vadd.f32 %v5388, %v5820
      %v5822 = vpop.f32.mrb[0].mxu0
      %v5823 = vpop.f32.mrb[0].mxu0
      %v5824 = vadd.f32 %v5391, %v5823
      %v5825 = vpop.f32.mrb[0].mxu0
      %5826 = vmatprep.mubr.bf16.mxu0 %v3583
      %5827 = vmatmul.mubr.bf16.gmra.mrb[0].mxu0 %v3582
      %v5828 = vpop.f32.mrb[0].mxu0
      %v5829 = vadd.f32 %v5396, %v5828
      %v5830 = vpop.f32.mrb[0].mxu0
      %v5831 = vpop.f32.mrb[0].mxu0
      %v5832 = vadd.f32 %v5399, %v5831
      %v5833 = vpop.f32.mrb[0].mxu0
      %5834 = vmatprep.mubr.bf16.mxu0 %v3591
      %5835 = vmatmul.mubr.bf16.gmra.mrb[0].mxu0 %v3590
      %v5836 = vpop.f32.mrb[0].mxu0
      %v5837 = vadd.f32 %v5404, %v5836
      %v5838 = vpop.f32.mrb[0].mxu0
      %v5839 = vpop.f32.mrb[0].mxu0
      %v5840 = vadd.f32 %v5407, %v5839
      %v5841 = vpop.f32.mrb[0].mxu0
      %5842 = vmatprep.mubr.bf16.mxu0 %v3599
      %5843 = vmatmul.mubr.bf16.gmra.mrb[0].mxu0 %v3598
      %v5844 = vpop.f32.mrb[0].mxu0
      %v5845 = vadd.f32 %v5412, %v5844
      %v5846 = vpop.f32.mrb[0].mxu0
      %v5847 = vpop.f32.mrb[0].mxu0
      %v5848 = vadd.f32 %v5415, %v5847
      %v5849 = vpop.f32.mrb[0].mxu0
      %5850 = vmatprep.mubr.bf16.mxu0 %v3607
      %5851 = vmatmul.mubr.bf16.gmra.mrb[0].mxu0 %v3606
      %v5852 = vpop.f32.mrb[0].mxu0
      %v5853 = vadd.f32 %v5420, %v5852
      %v5854 = vpop.f32.mrb[0].mxu0
      %v5855 = vpop.f32.mrb[0].mxu0
      %v5856 = vadd.f32 %v5423, %v5855
      %v5857 = vpop.f32.mrb[0].mxu0
      %5858 = vmatprep.mubr.bf16.mxu0 %v3615
      %5859 = vmatmul.mubr.bf16.gmra.mrb[0].mxu0 %v3614
      %v5860 = vpop.f32.mrb[0].mxu0
      %v5861 = vadd.f32 %v5428, %v5860
      %v5862 = vpop.f32.mrb[0].mxu0
      %v5863 = vpop.f32.mrb[0].mxu0
      %v5864 = vadd.f32 %v5431, %v5863
      %v5865 = vpop.f32.mrb[0].mxu0
      %5866 = vmatprep.mubr.bf16.mxu0 %v3623
      %5867 = vmatmul.mubr.bf16.gmra.mrb[0].mxu0 %v3622
      %v5868 = vpop.f32.mrb[0].mxu0
      %v5869 = vadd.f32 %v5436, %v5868
      %v5870 = vpop.f32.mrb[0].mxu0
      %v5871 = vpop.f32.mrb[0].mxu0
      %v5872 = vadd.f32 %v5439, %v5871
      %v5873 = vpop.f32.mrb[0].mxu0
      %5874 = vdwg.mxu0
      %v5875 = vmax.f32 %v5477, 0.0
      %v5876 = vmax.f32 %v5480, 0.0
      %v5877 = vmax.f32 %v5485, 0.0
      %v5878 = vmax.f32 %v5488, 0.0
      %v5879 = vmax.f32 %v5493, 0.0
      %v5880 = vmax.f32 %v5496, 0.0
      %v5881 = vmax.f32 %v5501, 0.0
      %v5882 = vmax.f32 %v5504, 0.0
      %v5883 = vmax.f32 %v5509, 0.0
      %v5884 = vmax.f32 %v5512, 0.0
      %v5885 = vmax.f32 %v5517, 0.0
      %v5886 = vmax.f32 %v5520, 0.0
      %v5887 = vmax.f32 %v5525, 0.0
      %v5888 = vmax.f32 %v5528, 0.0
      %v5889 = vmax.f32 %v5533, 0.0
      %v5890 = vmax.f32 %v5536, 0.0
      %v5891 = vmax.f32 %v5541, 0.0
      %v5892 = vmax.f32 %v5544, 0.0
      %v5893 = vmax.f32 %v5549, 0.0
      %v5894 = vmax.f32 %v5552, 0.0
      %v5895 = vmax.f32 %v5557, 0.0
      %v5896 = vmax.f32 %v5560, 0.0
      %v5897 = vmax.f32 %v5565, 0.0
      %v5898 = vmax.f32 %v5568, 0.0
      %v5899 = vmax.f32 %v5573, 0.0
      %v5900 = vmax.f32 %v5576, 0.0
      %v5901 = vmax.f32 %v5581, 0.0
      %v5902 = vmax.f32 %v5584, 0.0
      %v5903 = vmax.f32 %v5589, 0.0
      %v5904 = vmax.f32 %v5592, 0.0
      %v5905 = vmax.f32 %v5597, 0.0
      %v5906 = vmax.f32 %v5600, 0.0
      %v5907 = vmax.f32 %v5605, 0.0
      %v5908 = vmax.f32 %v5608, 0.0
      %v5909 = vmax.f32 %v5613, 0.0
      %v5910 = vmax.f32 %v5616, 0.0
      %v5911 = vmax.f32 %v5621, 0.0
      %v5912 = vmax.f32 %v5624, 0.0
      %v5913 = vmax.f32 %v5629, 0.0
      %v5914 = vmax.f32 %v5632, 0.0
      %v5915 = vmax.f32 %v5637, 0.0
      %v5916 = vmax.f32 %v5640, 0.0
      %v5917 = vmax.f32 %v5645, 0.0
      %v5918 = vmax.f32 %v5648, 0.0
      %v5919 = vmax.f32 %v5653, 0.0
      %v5920 = vmax.f32 %v5656, 0.0
      %v5921 = vmax.f32 %v5661, 0.0
      %v5922 = vmax.f32 %v5664, 0.0
      %v5923 = vmax.f32 %v5669, 0.0
      %v5924 = vmax.f32 %v5672, 0.0
      %v5925 = vmax.f32 %v5677, 0.0
      %v5926 = vmax.f32 %v5680, 0.0
      %v5927 = vmax.f32 %v5685, 0.0
      %v5928 = vmax.f32 %v5688, 0.0
      %v5929 = vmax.f32 %v5693, 0.0
      %v5930 = vmax.f32 %v5696, 0.0
      %v5931 = vmax.f32 %v5701, 0.0
      %v5932 = vmax.f32 %v5704, 0.0
      %v5933 = vmax.f32 %v5709, 0.0
      %v5934 = vmax.f32 %v5712, 0.0
      %v5935 = vmax.f32 %v5717, 0.0
      %v5936 = vmax.f32 %v5720, 0.0
      %v5937 = vmax.f32 %v5725, 0.0
      %v5938 = vmax.f32 %v5728, 0.0
      %v5939 = vmax.f32 %v5733, 0.0
      %v5940 = vmax.f32 %v5736, 0.0
      %v5941 = vmax.f32 %v5741, 0.0
      %v5942 = vmax.f32 %v5744, 0.0
      %v5943 = vmax.f32 %v5749, 0.0
      %v5944 = vmax.f32 %v5752, 0.0
      %v5945 = vmax.f32 %v5757, 0.0
      %v5946 = vmax.f32 %v5760, 0.0
      %v5947 = vmax.f32 %v5765, 0.0
      %v5948 = vmax.f32 %v5768, 0.0
      %v5949 = vmax.f32 %v5773, 0.0
      %v5950 = vmax.f32 %v5776, 0.0
      %v5951 = vmax.f32 %v5781, 0.0
      %v5952 = vmax.f32 %v5784, 0.0
      %v5953 = vmax.f32 %v5789, 0.0
      %v5954 = vmax.f32 %v5792, 0.0
      %v5955 = vmax.f32 %v5797, 0.0
      %v5956 = vmax.f32 %v5800, 0.0
      %v5957 = vmax.f32 %v5805, 0.0
      %v5958 = vmax.f32 %v5808, 0.0
      %v5959 = vmax.f32 %v5813, 0.0
      %v5960 = vmax.f32 %v5816, 0.0
      %v5961 = vmax.f32 %v5821, 0.0
      %v5962 = vmax.f32 %v5824, 0.0
      %v5963 = vmax.f32 %v5829, 0.0
      %v5964 = vmax.f32 %v5832, 0.0
      %v5965 = vmax.f32 %v5837, 0.0
      %v5966 = vmax.f32 %v5840, 0.0
      %v5967 = vmax.f32 %v5845, 0.0
      %v5968 = vmax.f32 %v5848, 0.0
      %v5969 = vmax.f32 %v5853, 0.0
      %v5970 = vmax.f32 %v5856, 0.0
      %v5971 = vmax.f32 %v5861, 0.0
      %v5972 = vmax.f32 %v5864, 0.0
      %v5973 = vmax.f32 %v5869, 0.0
      %v5974 = vmax.f32 %v5872, 0.0
      %v5975 = vpack.c.bf16 %v5876, %v5875
      %v5976 = vpack.c.bf16 %v5878, %v5877
      %v5977 = vpack.c.bf16 %v5880, %v5879
      %v5978 = vpack.c.bf16 %v5882, %v5881
      %v5979 = vpack.c.bf16 %v5884, %v5883
      %v5980 = vpack.c.bf16 %v5886, %v5885
      %v5981 = vpack.c.bf16 %v5888, %v5887
      %v5982 = vpack.c.bf16 %v5890, %v5889
      %v5983 = vpack.c.bf16 %v5892, %v5891
      %v5984 = vpack.c.bf16 %v5894, %v5893
      %v5985 = vpack.c.bf16 %v5896, %v5895
      %v5986 = vpack.c.bf16 %v5898, %v5897
      %v5987 = vpack.c.bf16 %v5900, %v5899
      %v5988 = vpack.c.bf16 %v5902, %v5901
      %v5989 = vpack.c.bf16 %v5904, %v5903
      %v5990 = vpack.c.bf16 %v5906, %v5905
      %v5991 = vpack.c.bf16 %v5908, %v5907
      %v5992 = vpack.c.bf16 %v5910, %v5909
      %v5993 = vpack.c.bf16 %v5912, %v5911
      %v5994 = vpack.c.bf16 %v5914, %v5913
      %v5995 = vpack.c.bf16 %v5916, %v5915
      %v5996 = vpack.c.bf16 %v5918, %v5917
      %v5997 = vpack.c.bf16 %v5920, %v5919
      %v5998 = vpack.c.bf16 %v5922, %v5921
      %v5999 = vpack.c.bf16 %v5924, %v5923
      %v6000 = vpack.c.bf16 %v5926, %v5925
      %v6001 = vpack.c.bf16 %v5928, %v5927
      %v6002 = vpack.c.bf16 %v5930, %v5929
      %v6003 = vpack.c.bf16 %v5932, %v5931
      %v6004 = vpack.c.bf16 %v5934, %v5933
      %v6005 = vpack.c.bf16 %v5936, %v5935
      %v6006 = vpack.c.bf16 %v5938, %v5937
      %v6007 = vpack.c.bf16 %v5940, %v5939
      %v6008 = vpack.c.bf16 %v5942, %v5941
      %v6009 = vpack.c.bf16 %v5944, %v5943
      %v6010 = vpack.c.bf16 %v5946, %v5945
      %v6011 = vpack.c.bf16 %v5948, %v5947
      %v6012 = vpack.c.bf16 %v5950, %v5949
      %v6013 = vpack.c.bf16 %v5952, %v5951
      %v6014 = vpack.c.bf16 %v5954, %v5953
      %v6015 = vpack.c.bf16 %v5956, %v5955
      %v6016 = vpack.c.bf16 %v5958, %v5957
      %v6017 = vpack.c.bf16 %v5960, %v5959
      %v6018 = vpack.c.bf16 %v5962, %v5961
      %v6019 = vpack.c.bf16 %v5964, %v5963
      %v6020 = vpack.c.bf16 %v5966, %v5965
      %v6021 = vpack.c.bf16 %v5968, %v5967
      %v6022 = vpack.c.bf16 %v5970, %v5969
      %v6023 = vpack.c.bf16 %v5972, %v5971
      %v6024 = vpack.c.bf16 %v5974, %v5973
      %v6075 = vunpack.c.l.b16 %v5975
      %v6076 = vunpack.c.h.b16 %v5975
      %v6077 = vunpack.c.l.b16 %v5976
      %v6078 = vunpack.c.h.b16 %v5976
      %v6079 = vunpack.c.l.b16 %v5977
      %v6080 = vunpack.c.h.b16 %v5977
      %v6081 = vunpack.c.l.b16 %v5978
      %v6082 = vunpack.c.h.b16 %v5978
      %v6083 = vunpack.c.l.b16 %v5979
      %v6084 = vunpack.c.h.b16 %v5979
      %v6085 = vunpack.c.l.b16 %v5980
      %v6086 = vunpack.c.h.b16 %v5980
      %v6087 = vunpack.c.l.b16 %v5981
      %v6088 = vunpack.c.h.b16 %v5981
      %v6089 = vunpack.c.l.b16 %v5982
      %v6090 = vunpack.c.h.b16 %v5982
      %v6091 = vunpack.c.l.b16 %v5983
      %v6092 = vunpack.c.h.b16 %v5983
      %v6093 = vunpack.c.l.b16 %v5984
      %v6094 = vunpack.c.h.b16 %v5984
      %v6095 = vunpack.c.l.b16 %v5985
      %v6096 = vunpack.c.h.b16 %v5985
      %v6097 = vunpack.c.l.b16 %v5986
      %v6098 = vunpack.c.h.b16 %v5986
      %v6099 = vunpack.c.l.b16 %v5987
      %v6100 = vunpack.c.h.b16 %v5987
      %v6101 = vunpack.c.l.b16 %v5988
      %v6102 = vunpack.c.h.b16 %v5988
      %v6103 = vunpack.c.l.b16 %v5989
      %v6104 = vunpack.c.h.b16 %v5989
      %v6105 = vunpack.c.l.b16 %v5990
      %v6106 = vunpack.c.h.b16 %v5990
      %v6107 = vunpack.c.l.b16 %v5991
      %v6108 = vunpack.c.h.b16 %v5991
      %v6109 = vunpack.c.l.b16 %v5992
      %v6110 = vunpack.c.h.b16 %v5992
      %v6111 = vunpack.c.l.b16 %v5993
      %v6112 = vunpack.c.h.b16 %v5993
      %v6113 = vunpack.c.l.b16 %v5994
      %v6114 = vunpack.c.h.b16 %v5994
      %v6115 = vunpack.c.l.b16 %v5995
      %v6116 = vunpack.c.h.b16 %v5995
      %v6117 = vunpack.c.l.b16 %v5996
      %v6118 = vunpack.c.h.b16 %v5996
      %v6119 = vunpack.c.l.b16 %v5997
      %v6120 = vunpack.c.h.b16 %v5997
      %v6121 = vunpack.c.l.b16 %v5998
      %v6122 = vunpack.c.h.b16 %v5998
      %v6123 = vunpack.c.l.b16 %v5999
      %v6124 = vunpack.c.h.b16 %v5999
      %v6125 = vunpack.c.l.b16 %v6000
      %v6126 = vunpack.c.h.b16 %v6000
      %v6127 = vunpack.c.l.b16 %v6001
      %v6128 = vunpack.c.h.b16 %v6001
      %v6129 = vunpack.c.l.b16 %v6002
      %v6130 = vunpack.c.h.b16 %v6002
      %v6131 = vunpack.c.l.b16 %v6003
      %v6132 = vunpack.c.h.b16 %v6003
      %v6133 = vunpack.c.l.b16 %v6004
      %v6134 = vunpack.c.h.b16 %v6004
      %v6135 = vunpack.c.l.b16 %v6005
      %v6136 = vunpack.c.h.b16 %v6005
      %v6137 = vunpack.c.l.b16 %v6006
      %v6138 = vunpack.c.h.b16 %v6006
      %v6139 = vunpack.c.l.b16 %v6007
      %v6140 = vunpack.c.h.b16 %v6007
      %v6141 = vunpack.c.l.b16 %v6008
      %v6142 = vunpack.c.h.b16 %v6008
      %v6143 = vunpack.c.l.b16 %v6009
      %v6144 = vunpack.c.h.b16 %v6009
      %v6145 = vunpack.c.l.b16 %v6010
      %v6146 = vunpack.c.h.b16 %v6010
      %v6147 = vunpack.c.l.b16 %v6011
      %v6148 = vunpack.c.h.b16 %v6011
      %v6149 = vunpack.c.l.b16 %v6012
      %v6150 = vunpack.c.h.b16 %v6012
      %v6151 = vunpack.c.l.b16 %v6013
      %v6152 = vunpack.c.h.b16 %v6013
      %v6153 = vunpack.c.l.b16 %v6014
      %v6154 = vunpack.c.h.b16 %v6014
      %v6155 = vunpack.c.l.b16 %v6015
      %v6156 = vunpack.c.h.b16 %v6015
      %v6157 = vunpack.c.l.b16 %v6016
      %v6158 = vunpack.c.h.b16 %v6016
      %v6159 = vunpack.c.l.b16 %v6017
      %v6160 = vunpack.c.h.b16 %v6017
      %v6161 = vunpack.c.l.b16 %v6018
      %v6162 = vunpack.c.h.b16 %v6018
      %v6163 = vunpack.c.l.b16 %v6019
      %v6164 = vunpack.c.h.b16 %v6019
      %v6165 = vunpack.c.l.b16 %v6020
      %v6166 = vunpack.c.h.b16 %v6020
      %v6167 = vunpack.c.l.b16 %v6021
      %v6168 = vunpack.c.h.b16 %v6021
      %v6169 = vunpack.c.l.b16 %v6022
      %v6170 = vunpack.c.h.b16 %v6022
      %v6171 = vunpack.c.l.b16 %v6023
      %v6172 = vunpack.c.h.b16 %v6023
      %v6173 = vunpack.c.l.b16 %v6024
      %v6174 = vunpack.c.h.b16 %v6024
      %v6175 = vpack.c.b16 %v6075, %v6075
      %v6176 = vpack.c.b16 %v6076, %v6076
      %v6177 = vpack.c.b16 %v6077, %v6077
      %v6178 = vpack.c.b16 %v6078, %v6078
      %v6179 = vpack.c.b16 %v6079, %v6079
      %v6180 = vpack.c.b16 %v6080, %v6080
      %v6181 = vpack.c.b16 %v6081, %v6081
      %v6182 = vpack.c.b16 %v6082, %v6082
      %v6183 = vpack.c.b16 %v6083, %v6083
      %v6184 = vpack.c.b16 %v6084, %v6084
      %v6185 = vpack.c.b16 %v6085, %v6085
      %v6186 = vpack.c.b16 %v6086, %v6086
      %v6187 = vpack.c.b16 %v6087, %v6087
      %v6188 = vpack.c.b16 %v6088, %v6088
      %v6189 = vpack.c.b16 %v6089, %v6089
      %v6190 = vpack.c.b16 %v6090, %v6090
      %v6191 = vpack.c.b16 %v6091, %v6091
      %v6192 = vpack.c.b16 %v6092, %v6092
      %v6193 = vpack.c.b16 %v6093, %v6093
      %v6194 = vpack.c.b16 %v6094, %v6094
      %v6195 = vpack.c.b16 %v6095, %v6095
      %v6196 = vpack.c.b16 %v6096, %v6096
      %v6197 = vpack.c.b16 %v6097, %v6097
      %v6198 = vpack.c.b16 %v6098, %v6098
      %v6199 = vpack.c.b16 %v6099, %v6099
      %v6200 = vpack.c.b16 %v6100, %v6100
      %v6201 = vpack.c.b16 %v6101, %v6101
      %v6202 = vpack.c.b16 %v6102, %v6102
      %v6203 = vpack.c.b16 %v6103, %v6103
      %v6204 = vpack.c.b16 %v6104, %v6104
      %v6205 = vpack.c.b16 %v6105, %v6105
      %v6206 = vpack.c.b16 %v6106, %v6106
      %v6207 = vpack.c.b16 %v6107, %v6107
      %v6208 = vpack.c.b16 %v6108, %v6108
      %v6209 = vpack.c.b16 %v6109, %v6109
      %v6210 = vpack.c.b16 %v6110, %v6110
      %v6211 = vpack.c.b16 %v6111, %v6111
      %v6212 = vpack.c.b16 %v6112, %v6112
      %v6213 = vpack.c.b16 %v6113, %v6113
      %v6214 = vpack.c.b16 %v6114, %v6114
      %v6215 = vpack.c.b16 %v6115, %v6115
      %v6216 = vpack.c.b16 %v6116, %v6116
      %v6217 = vpack.c.b16 %v6117, %v6117
      %v6218 = vpack.c.b16 %v6118, %v6118
      %v6219 = vpack.c.b16 %v6119, %v6119
      %v6220 = vpack.c.b16 %v6120, %v6120
      %v6221 = vpack.c.b16 %v6121, %v6121
      %v6222 = vpack.c.b16 %v6122, %v6122
      %v6223 = vpack.c.b16 %v6123, %v6123
      %v6224 = vpack.c.b16 %v6124, %v6124
      %v6225 = vpack.c.b16 %v6125, %v6125
      %v6226 = vpack.c.b16 %v6126, %v6126
      %v6227 = vpack.c.b16 %v6127, %v6127
      %v6228 = vpack.c.b16 %v6128, %v6128
      %v6229 = vpack.c.b16 %v6129, %v6129
      %v6230 = vpack.c.b16 %v6130, %v6130
      %v6231 = vpack.c.b16 %v6131, %v6131
      %v6232 = vpack.c.b16 %v6132, %v6132
      %v6233 = vpack.c.b16 %v6133, %v6133
      %v6234 = vpack.c.b16 %v6134, %v6134
      %v6235 = vpack.c.b16 %v6135, %v6135
      %v6236 = vpack.c.b16 %v6136, %v6136
      %v6237 = vpack.c.b16 %v6137, %v6137
      %v6238 = vpack.c.b16 %v6138, %v6138
      %v6239 = vpack.c.b16 %v6139, %v6139
      %v6240 = vpack.c.b16 %v6140, %v6140
      %v6241 = vpack.c.b16 %v6141, %v6141
      %v6242 = vpack.c.b16 %v6142, %v6142
      %v6243 = vpack.c.b16 %v6143, %v6143
      %v6244 = vpack.c.b16 %v6144, %v6144
      %v6245 = vpack.c.b16 %v6145, %v6145
      %v6246 = vpack.c.b16 %v6146, %v6146
      %v6247 = vpack.c.b16 %v6147, %v6147
      %v6248 = vpack.c.b16 %v6148, %v6148
      %v6249 = vpack.c.b16 %v6149, %v6149
      %v6250 = vpack.c.b16 %v6150, %v6150
      %v6251 = vpack.c.b16 %v6151, %v6151
      %v6252 = vpack.c.b16 %v6152, %v6152
      %v6253 = vpack.c.b16 %v6153, %v6153
      %v6254 = vpack.c.b16 %v6154, %v6154
      %v6255 = vpack.c.b16 %v6155, %v6155
      %v6256 = vpack.c.b16 %v6156, %v6156
      %v6257 = vpack.c.b16 %v6157, %v6157
      %v6258 = vpack.c.b16 %v6158, %v6158
      %v6259 = vpack.c.b16 %v6159, %v6159
      %v6260 = vpack.c.b16 %v6160, %v6160
      %v6261 = vpack.c.b16 %v6161, %v6161
      %v6262 = vpack.c.b16 %v6162, %v6162
      %v6263 = vpack.c.b16 %v6163, %v6163
      %v6264 = vpack.c.b16 %v6164, %v6164
      %v6265 = vpack.c.b16 %v6165, %v6165
      %v6266 = vpack.c.b16 %v6166, %v6166
      %v6267 = vpack.c.b16 %v6167, %v6167
      %v6268 = vpack.c.b16 %v6168, %v6168
      %v6269 = vpack.c.b16 %v6169, %v6169
      %v6270 = vpack.c.b16 %v6170, %v6170
      %v6271 = vpack.c.b16 %v6171, %v6171
      %v6272 = vpack.c.b16 %v6172, %v6172
      %v6273 = vpack.c.b16 %v6173, %v6173
      %v6274 = vpack.c.b16 %v6174, %v6174
      %6375 = vst [vmem:[%s197] sm:$0xf] %v6175
      %6376 = vst [vmem:[%s197 + $0x4] sm:$0xf] %v6176
      %6377 = vst [vmem:[%s197 + $0x8] sm:$0xf] %v6177
      %6378 = vst [vmem:[%s197 + $0xc] sm:$0xf] %v6178
      %6379 = vst [vmem:[%s197 + $0x10] sm:$0xf] %v6179
      %6380 = vst [vmem:[%s197 + $0x14] sm:$0xf] %v6180
      %6381 = vst [vmem:[%s197 + $0x18] sm:$0xf] %v6181
      %6382 = vst [vmem:[%s197 + $0x1c] sm:$0xf] %v6182
      %6383 = vst [vmem:[%s197 + $0x20] sm:$0xf] %v6183
      %6384 = vst [vmem:[%s197 + $0x24] sm:$0xf] %v6184
      %6385 = vst [vmem:[%s197 + $0x28] sm:$0xf] %v6185
      %6386 = vst [vmem:[%s197 + $0x2c] sm:$0xf] %v6186
      %6387 = vst [vmem:[%s197 + $0x30] sm:$0xf] %v6187
      %6388 = vst [vmem:[%s197 + $0x34] sm:$0xf] %v6188
      %6389 = vst [vmem:[%s197 + $0x38] sm:$0xf] %v6189
      %6390 = vst [vmem:[%s197 + $0x3c] sm:$0xf] %v6190
      %6391 = vst [vmem:[%s197 + $0x40] sm:$0xf] %v6191
      %6392 = vst [vmem:[%s197 + $0x44] sm:$0xf] %v6192
      %6393 = vst [vmem:[%s197 + $0x48] sm:$0xf] %v6193
      %6394 = vst [vmem:[%s197 + $0x4c] sm:$0xf] %v6194
      %6395 = vst [vmem:[%s197 + $0x50] sm:$0xf] %v6195
      %6396 = vst [vmem:[%s197 + $0x54] sm:$0xf] %v6196
      %6397 = vst [vmem:[%s197 + $0x58] sm:$0xf] %v6197
      %6398 = vst [vmem:[%s197 + $0x5c] sm:$0xf] %v6198
      %6399 = vst [vmem:[%s197 + $0x60] sm:$0xf] %v6199
      %6400 = vst [vmem:[%s197 + $0x64] sm:$0xf] %v6200
      %6401 = vst [vmem:[%s197 + $0x68] sm:$0xf] %v6201
      %6402 = vst [vmem:[%s197 + $0x6c] sm:$0xf] %v6202
      %6403 = vst [vmem:[%s197 + $0x70] sm:$0xf] %v6203
      %6404 = vst [vmem:[%s197 + $0x74] sm:$0xf] %v6204
      %6405 = vst [vmem:[%s197 + $0x78] sm:$0xf] %v6205
      %6406 = vst [vmem:[%s197 + $0x7c] sm:$0xf] %v6206
      %6407 = vst [vmem:[%s197 + $0x80] sm:$0xf] %v6207
      %6408 = vst [vmem:[%s197 + $0x84] sm:$0xf] %v6208
      %6409 = vst [vmem:[%s197 + $0x88] sm:$0xf] %v6209
      %6410 = vst [vmem:[%s197 + $0x8c] sm:$0xf] %v6210
      %6411 = vst [vmem:[%s197 + $0x90] sm:$0xf] %v6211
      %6412 = vst [vmem:[%s197 + $0x94] sm:$0xf] %v6212
      %6413 = vst [vmem:[%s197 + $0x98] sm:$0xf] %v6213
      %6414 = vst [vmem:[%s197 + $0x9c] sm:$0xf] %v6214
      %6415 = vst [vmem:[%s197 + $0xa0] sm:$0xf] %v6215
      %6416 = vst [vmem:[%s197 + $0xa4] sm:$0xf] %v6216
      %6417 = vst [vmem:[%s197 + $0xa8] sm:$0xf] %v6217
      %6418 = vst [vmem:[%s197 + $0xac] sm:$0xf] %v6218
      %6419 = vst [vmem:[%s197 + $0xb0] sm:$0xf] %v6219
      %6420 = vst [vmem:[%s197 + $0xb4] sm:$0xf] %v6220
      %6421 = vst [vmem:[%s197 + $0xb8] sm:$0xf] %v6221
      %6422 = vst [vmem:[%s197 + $0xbc] sm:$0xf] %v6222
      %6423 = vst [vmem:[%s197 + $0xc0] sm:$0xf] %v6223
      %6424 = vst [vmem:[%s197 + $0xc4] sm:$0xf] %v6224
      %6425 = vst [vmem:[%s197 + $0xc8] sm:$0xf] %v6225
      %6426 = vst [vmem:[%s197 + $0xcc] sm:$0xf] %v6226
      %6427 = vst [vmem:[%s197 + $0xd0] sm:$0xf] %v6227
      %6428 = vst [vmem:[%s197 + $0xd4] sm:$0xf] %v6228
      %6429 = vst [vmem:[%s197 + $0xd8] sm:$0xf] %v6229
      %6430 = vst [vmem:[%s197 + $0xdc] sm:$0xf] %v6230
      %6431 = vst [vmem:[%s197 + $0xe0] sm:$0xf] %v6231
      %6432 = vst [vmem:[%s197 + $0xe4] sm:$0xf] %v6232
      %6433 = vst [vmem:[%s197 + $0xe8] sm:$0xf] %v6233
      %6434 = vst [vmem:[%s197 + $0xec] sm:$0xf] %v6234
      %6435 = vst [vmem:[%s197 + $0xf0] sm:$0xf] %v6235
      %6436 = vst [vmem:[%s197 + $0xf4] sm:$0xf] %v6236
      %6437 = vst [vmem:[%s197 + $0xf8] sm:$0xf] %v6237
      %6438 = vst [vmem:[%s197 + $0xfc] sm:$0xf] %v6238
      %6439 = vst [vmem:[%s197 + $0x100] sm:$0xf] %v6239
      %6440 = vst [vmem:[%s197 + $0x104] sm:$0xf] %v6240
      %6441 = vst [vmem:[%s197 + $0x108] sm:$0xf] %v6241
      %6442 = vst [vmem:[%s197 + $0x10c] sm:$0xf] %v6242
      %6443 = vst [vmem:[%s197 + $0x110] sm:$0xf] %v6243
      %6444 = vst [vmem:[%s197 + $0x114] sm:$0xf] %v6244
      %6445 = vst [vmem:[%s197 + $0x118] sm:$0xf] %v6245
      %6446 = vst [vmem:[%s197 + $0x11c] sm:$0xf] %v6246
      %6447 = vst [vmem:[%s197 + $0x120] sm:$0xf] %v6247
      %6448 = vst [vmem:[%s197 + $0x124] sm:$0xf] %v6248
      %6449 = vst [vmem:[%s197 + $0x128] sm:$0xf] %v6249
      %6450 = vst [vmem:[%s197 + $0x12c] sm:$0xf] %v6250
      %6451 = vst [vmem:[%s197 + $0x130] sm:$0xf] %v6251
      %6452 = vst [vmem:[%s197 + $0x134] sm:$0xf] %v6252
      %6453 = vst [vmem:[%s197 + $0x138] sm:$0xf] %v6253
      %6454 = vst [vmem:[%s197 + $0x13c] sm:$0xf] %v6254
      %6455 = vst [vmem:[%s197 + $0x140] sm:$0xf] %v6255
      %6456 = vst [vmem:[%s197 + $0x144] sm:$0xf] %v6256
      %6457 = vst [vmem:[%s197 + $0x148] sm:$0xf] %v6257
      %6458 = vst [vmem:[%s197 + $0x14c] sm:$0xf] %v6258
      %6459 = vst [vmem:[%s197 + $0x150] sm:$0xf] %v6259
      %6460 = vst [vmem:[%s197 + $0x154] sm:$0xf] %v6260
      %6461 = vst [vmem:[%s197 + $0x158] sm:$0xf] %v6261
      %6462 = vst [vmem:[%s197 + $0x15c] sm:$0xf] %v6262
      %6463 = vst [vmem:[%s197 + $0x160] sm:$0xf] %v6263
      %6464 = vst [vmem:[%s197 + $0x164] sm:$0xf] %v6264
      %6465 = vst [vmem:[%s197 + $0x168] sm:$0xf] %v6265
      %6466 = vst [vmem:[%s197 + $0x16c] sm:$0xf] %v6266
      %6467 = vst [vmem:[%s197 + $0x170] sm:$0xf] %v6267
      %6468 = vst [vmem:[%s197 + $0x174] sm:$0xf] %v6268
      %6469 = vst [vmem:[%s197 + $0x178] sm:$0xf] %v6269
      %6470 = vst [vmem:[%s197 + $0x17c] sm:$0xf] %v6270
      %6471 = vst [vmem:[%s197 + $0x180] sm:$0xf] %v6271
      %6472 = vst [vmem:[%s197 + $0x184] sm:$0xf] %v6272
      %6473 = vst [vmem:[%s197 + $0x188] sm:$0xf] %v6273
      %6474 = vst [vmem:[%s197 + $0x18c] sm:$0xf] %v6274
      %p6475 = scmp.lt.s32.totalorder %s15, 1
      %s6476 = scalar_select %p6475, %s15, 1
      %s6477 = smul.addr %s6476, 100
      %s6478 = smul.addr %s6477, 4
      %s6479 = scalar_lea.vmem %s4, %s6478
      // Predicated region
      $region37: #{conv_layers_forward.1} parent=35 // pred_check
        %p6480 = pneg %p122
      $region38: #{conv_layers_forward.1} parent=35 // pred_check_branch
        %6482 = sbr.rel (%p6480) target = $region40
      $region39: #{conv_layers_forward.1} parent=35 // pred_region
        _
      $region40: #{conv_layers_forward.1} parent=35 // pred_fallthru
        _
    $region36: #{conv_layers_forward.1} parent=5 // pred_fallthru
      _
    %p6483 = scmp.le.s32.totalorder 2, %s10
    // Predicated region
    $region41: #{conv_layers_forward.1} parent=5 // pred_check
      %p6484 = pneg %p6483
    $region42: #{conv_layers_forward.1} parent=5 // pred_check_branch
      %6486 = sbr.rel (%p6484) target = $region44
    $region43: #{conv_layers_forward.1} parent=5 // pred_region
      %s6487 = ssub.s32 %s10, 2
      // Predicated region
      $region45: #{conv_layers_forward.1} parent=43 // pred_check
        %p6488 = pneg %p128
      $region46: #{conv_layers_forward.1} parent=43 // pred_check_branch
        %6490 = sbr.rel (%p6488) target = $region48
      $region47: #{conv_layers_forward.1} parent=43 // pred_region
        %p6491 = scmp.lt.s32.totalorder %s16, 1
        %s6492 = scalar_select %p6491, %s16, 1
        %s6493 = smul.addr %s6492, 100
        %s6494 = smul.addr %s6493, 4
        %s6495 = scalar_lea.vmem %s4, %s6494
      $region48: #{conv_layers_forward.1} parent=43 // pred_fallthru
        _
    $region44: #{conv_layers_forward.1} parent=5 // pred_fallthru
      _
  $region6: #{conv_layers_forward.1} parent=0 // loop_footer
    %s14 = sadd.s32 1, %s10
  $region7: #{conv_layers_forward.1} parent=0 // loop_footer_branch
    %9 = sbr.rel target = $region3
  $region8: #{conv_layers_forward.1} parent=0 // loop_exit
    _

</llo_original>
